<compile_context>
chip_gen: v5e
topology: v5e:2x2
jax: 0.10.0
libtpu: 0.0.40
codegen_flags: <defaults>
</compile_context>

<pallas_src>
import functools

import jax
import jax.numpy as jnp
from jax.experimental import pallas as pl
from jax.experimental.pallas import tpu as pltpu


# --------------------------------------------------------------------------
# Fused PSI forward kernel (one batch TILE per grid step)
# --------------------------------------------------------------------------
def _psi_kernel(ra_in_ref, masks_ref,
                ra1_w, ra1_b, ra2_w, ra2_b, ra3_w, ra3_b,
                phi1_w, phi1_b, phi2_w, phi2_b, phi3_w, phi3_b,
                out_ref, *, W):
    n_ra = ra_in_ref.shape[-1]        # 2 * b_tile * H * W  (RA lane width)
    n_phi = n_ra // 2                 # b_tile * H * W      (PHI lane width)

    # Static (k, dy, dx) tap enumeration, matching the host-built mask rows.
    offsets = [(3 * dy + dx, dy, dx) for dy in range(3) for dx in range(3)]

    def conv3x3(x, w_ref, b_ref, act):
        """3x3 'same' conv over images flattened on the lane axis.

        x:     (Cin, N) f32, N = n_img*H*W (images tiled along lanes).
        w_ref: (Cout, 9*Cin) bf16, taps outer / input channels inner.
        b_ref: (Cout, 1) f32.
        Spatial taps come from pltpu.roll (XLU slot) + precomputed boundary
        masks (one VPU multiply) -- no halo padding, no strided relayouts.
        """
        cin, n = x.shape

        def masked_tap(k, dy, dx):
            s = (dy - 1) * W + (dx - 1)          # flattened tap offset
            shifted = x if s == 0 else pltpu.roll(x, shift=(-s) % n, axis=1)
            return (shifted * masks_ref[k:k + 1, :n]).astype(jnp.bfloat16)

        if cin <= 4:
            # Tiny Cin (1 or 2): single im2col matmul; patches are <= 18 rows.
            patches = jnp.concatenate(
                [masked_tap(k, dy, dx) for k, dy, dx in offsets], axis=0)
            acc = jnp.dot(w_ref[...], patches,
                          preferred_element_type=jnp.float32)
        else:
            # Hidden layers: per-tap accumulation, only one tap live at a time
            # (no (9*Cin, N) temporary, no 9-way concat).
            acc = None
            for k, dy, dx in offsets:
                part = jnp.dot(w_ref[:, k * cin:(k + 1) * cin],
                               masked_tap(k, dy, dx),
                               preferred_element_type=jnp.float32)
                acc = part if acc is None else acc + part

        acc = acc + b_ref[...]                   # (Cout, 1) lane-broadcast
        if act == "relu":
            return jnp.maximum(acc, 0.0)
        return jax.nn.sigmoid(acc)               # EUP

    # ---- RA on both streams at once (shared weights): N = n_ra -------------
    x = ra_in_ref[0]                             # (1, n_ra): [x_s1 | x_s2]
    h = conv3x3(x, ra1_w, ra1_b, "relu")
    h = conv3x3(h, ra2_w, ra2_b, "relu")
    rec = conv3x3(h, ra3_w, ra3_b, "sigmoid")    # (1, n_ra)
    x_s1_rec = rec[:, :n_phi]                    # clean 128-multiple splits
    x_s2_rec = rec[:, n_phi:]
    x2 = x[:, n_phi:]                            # original x_s2 lanes

    # ---- PHI on channel-concat([x_s2, x_s1_]): (2, n_phi) -------------------
    g = jnp.concatenate([x2, x_s1_rec], axis=0)  # ch0 = x_s2, ch1 = x_s1_
    g = conv3x3(g, phi1_w, phi1_b, "relu")
    g = conv3x3(g, phi2_w, phi2_b, "relu")
    phi = conv3x3(g, phi3_w, phi3_b, "sigmoid")  # (1, n_phi)

    # Single lane-dense packed store: rows = [x_s1_, x_s1_phi, x_s2_re].
    out_ref[...] = jnp.concatenate([x_s1_rec, phi, x_s2_rec],
                                   axis=0).reshape(1, 3, n_phi)


# --------------------------------------------------------------------------
# Host-side helpers: boundary masks + deterministic parameters
# --------------------------------------------------------------------------
def _tap_masks(H, W, n_rep):
    """(9, n_rep*H*W) f32 {0,1} validity masks, tap-major (dy, dx) order."""
    HW = H * W
    p = jnp.arange(HW, dtype=jnp.int32)
    y, xc = p // W, p % W
    rows = []
    for dy in (-1, 0, 1):
        for dx in (-1, 0, 1):
            rows.append((y + dy >= 0) & (y + dy < H)
                        & (xc + dx >= 0) & (xc + dx < W))
    base = jnp.stack(rows, axis=0).astype(jnp.float32)       # (9, HW)
    return jnp.tile(base, (1, n_rep))                         # (9, n_rep*HW)


def _init_conv(key, cin, cout, scale=0.1):
    kw, kb = jax.random.split(key)
    w = scale * jax.random.normal(kw, (3, 3, cin, cout), jnp.float32)
    b = scale * jax.random.normal(kb, (cout,), jnp.float32)
    # (Cout, 9*Cin): taps (dy,dx) outer, input channels inner (matches kernel).
    w_flat = jnp.transpose(w, (3, 0, 1, 2)).reshape(cout, 9 * cin)
    return w_flat.astype(jnp.bfloat16), b.reshape(cout, 1)


def init_psi_params(key, cdim=1, hidden=16, zdim=128):
    ks = jax.random.split(key, 6)
    return {
        # RA stand-in: cdim -> hidden -> hidden -> cdim (sigmoid recon)
        "ra1": _init_conv(ks[0], cdim, hidden),
        "ra2": _init_conv(ks[1], hidden, hidden),
        "ra3": _init_conv(ks[2], hidden, cdim),
        # PHI stand-in: 2 -> hidden -> hidden -> 1 (sigmoid)
        "phi1": _init_conv(ks[3], 2, hidden),
        "phi2": _init_conv(ks[4], hidden, hidden),
        "phi3": _init_conv(ks[5], hidden, 1),
        "zdim": zdim,   # kept for fidelity; latent is discarded by forward()
    }


# --------------------------------------------------------------------------
# Public forward (all hot work inside one pallas_call)
# --------------------------------------------------------------------------
def psi_forward(params, x_s1_nchw, x_s2_nchw, *, b_tile=None):
    B, C, H, W = x_s1_nchw.shape
    assert C == 1, "kernel specialized for cdim=1 (module default)"
    HW = H * W
    if b_tile is None:
        b_tile = B          # fold whole batch -> grid=(1,); use B//2 on v7x
    assert B % b_tile == 0
    n_tiles = B // b_tile
    n_phi = b_tile * HW
    n_ra = 2 * n_phi

    # Fold batch onto the lane axis (pure reshapes + one tiny XLA concat).
    x1 = x_s1_nchw.reshape(n_tiles, n_phi)
    x2 = x_s2_nchw.reshape(n_tiles, n_phi)
    ra_in = jnp.concatenate([x1, x2], axis=1).reshape(n_tiles, 1, n_ra)

    # Boundary masks built once outside the kernel; VMEM-resident across grid.
    masks = _tap_masks(H, W, 2 * b_tile)                      # (9, n_ra) f32

    args = [ra_in, masks]
    in_specs = [pl.BlockSpec((1, 1, n_ra), lambda i: (i, 0, 0)),
                pl.BlockSpec((9, n_ra), lambda i: (0, 0))]
    w_bytes = 0
    for name in ("ra1", "ra2", "ra3", "phi1", "phi2", "phi3"):
        w, b = params[name]
        args += [w, b]
        in_specs += [pl.BlockSpec(w.shape, lambda i: (0, 0)),
                     pl.BlockSpec(b.shape, lambda i: (0, 0))]
        w_bytes += w.size * 2 + b.size * 4

    # Advisory cost estimate (kernel is tiny; helps XLA schedule around it).
    hid = params["ra2"][0].shape[0]
    cflops = lambda cin, cout, n: 2 * 9 * cin * cout * n
    flops = n_tiles * (cflops(1, hid, n_ra) + cflops(hid, hid, n_ra)
                       + cflops(hid, 1, n_ra) + cflops(2, hid, n_phi)
                       + cflops(hid, hid, n_phi) + cflops(hid, 1, n_phi))
    bytes_accessed = ((ra_in.size + masks.size) * 4 + w_bytes
                      + n_tiles * 3 * n_phi * 4)
    cost = pl.CostEstimate(flops=flops,
                           transcendentals=n_tiles * (n_ra + n_phi),
                           bytes_accessed=bytes_accessed)

    kernel = functools.partial(_psi_kernel, W=W)
    out = pl.pallas_call(
        kernel,
        out_shape=jax.ShapeDtypeStruct((n_tiles, 3, n_phi), jnp.float32),
        grid=(n_tiles,),
        in_specs=in_specs,
        out_specs=pl.BlockSpec((1, 3, n_phi), lambda i: (i, 0, 0)),
        compiler_params=pltpu.CompilerParams(
            dimension_semantics=("parallel",)),
        cost_estimate=cost,
    )(*args)

    # Unpack the (rows = [x_s1_, x_s1_phi, x_s2_re]) slab back to NCHW.
    x_s1_rec = out[:, 0, :].reshape(B, 1, H, W)
    x_s1_phi = out[:, 1, :].reshape(B, 1, H, W)
    x_s2_re = out[:, 2, :].reshape(B, 1, H, W)
    return (x_s1_rec, x_s1_phi, x_s2_re, {"useless_dict": 0})


if __name__ == "__main__":
    key = jax.random.PRNGKey(0)
    k_par, k1, k2 = jax.random.split(key, 3)

    B, C, H, W = 2, 1, 16, 16          # cdim=1 per module default
    params = init_psi_params(k_par, cdim=C, hidden=16, zdim=128)

    x_s1 = jax.random.uniform(k1, (B, C, H, W), jnp.float32)
    x_s2 = jax.random.uniform(k2, (B, C, H, W), jnp.float32)

    fwd = jax.jit(psi_forward)
    x_s1_, x_s1_phi, x_s2_re, aux = fwd(params, x_s1, x_s2)
    jax.block_until_ready((x_s1_, x_s1_phi, x_s2_re))

    assert x_s1_.shape == (B, C, H, W)
    assert x_s1_phi.shape == (B, 1, H, W)
    assert x_s2_re.shape == (B, C, H, W)
    assert bool(jnp.all(jnp.isfinite(x_s1_)))
    assert bool(jnp.all(jnp.isfinite(x_s1_phi)))
    assert bool(jnp.all(jnp.isfinite(x_s2_re)))
    assert aux["useless_dict"] == 0
    print("KERNEL_OK")
</pallas_src>

<mosaic_0001>
module attributes {stable_mosaic.version = 11 : i64} {
  func.func @_psi_kernel(%arg0: i32, %arg1: memref<1x1x1024xf32, #tpu.memory_space<vmem>>, %arg2: memref<9x1024xf32, #tpu.memory_space<vmem>>, %arg3: memref<16x9xbf16, #tpu.memory_space<vmem>>, %arg4: memref<16x1xf32, #tpu.memory_space<vmem>>, %arg5: memref<16x144xbf16, #tpu.memory_space<vmem>>, %arg6: memref<16x1xf32, #tpu.memory_space<vmem>>, %arg7: memref<1x144xbf16, #tpu.memory_space<vmem>>, %arg8: memref<1x1xf32, #tpu.memory_space<vmem>>, %arg9: memref<16x18xbf16, #tpu.memory_space<vmem>>, %arg10: memref<16x1xf32, #tpu.memory_space<vmem>>, %arg11: memref<16x144xbf16, #tpu.memory_space<vmem>>, %arg12: memref<16x1xf32, #tpu.memory_space<vmem>>, %arg13: memref<1x144xbf16, #tpu.memory_space<vmem>>, %arg14: memref<1x1xf32, #tpu.memory_space<vmem>>, %arg15: memref<1x3x512xf32, #tpu.memory_space<vmem>>) attributes {dimension_semantics = [#tpu.dimension_semantics<parallel>], iteration_bounds = array<i64: 1>, scalar_prefetch = 0 : i64, scratch_operands = 0 : i64, tpu.core_type = #tpu.core_type<tc>, window_params = [{transform_indices = @transform_0, window_bounds = array<i64: 1, 1, 1024>}, {pipeline_mode = #tpu.pipeline_mode<synchronous>, transform_indices = @transform_1, window_bounds = array<i64: 9, 1024>}, {pipeline_mode = #tpu.pipeline_mode<synchronous>, transform_indices = @transform_2, window_bounds = array<i64: 16, 9>}, {pipeline_mode = #tpu.pipeline_mode<synchronous>, transform_indices = @transform_3, window_bounds = array<i64: 16, 1>}, {pipeline_mode = #tpu.pipeline_mode<synchronous>, transform_indices = @transform_4, window_bounds = array<i64: 16, 144>}, {pipeline_mode = #tpu.pipeline_mode<synchronous>, transform_indices = @transform_5, window_bounds = array<i64: 16, 1>}, {pipeline_mode = #tpu.pipeline_mode<synchronous>, transform_indices = @transform_6, window_bounds = array<i64: 1, 144>}, {pipeline_mode = #tpu.pipeline_mode<synchronous>, transform_indices = @transform_7, window_bounds = array<i64: 1, 1>}, {pipeline_mode = #tpu.pipeline_mode<synchronous>, transform_indices = @transform_8, window_bounds = array<i64: 16, 18>}, {pipeline_mode = #tpu.pipeline_mode<synchronous>, transform_indices = @transform_9, window_bounds = array<i64: 16, 1>}, {pipeline_mode = #tpu.pipeline_mode<synchronous>, transform_indices = @transform_10, window_bounds = array<i64: 16, 144>}, {pipeline_mode = #tpu.pipeline_mode<synchronous>, transform_indices = @transform_11, window_bounds = array<i64: 16, 1>}, {pipeline_mode = #tpu.pipeline_mode<synchronous>, transform_indices = @transform_12, window_bounds = array<i64: 1, 144>}, {pipeline_mode = #tpu.pipeline_mode<synchronous>, transform_indices = @transform_13, window_bounds = array<i64: 1, 1>}, {transform_indices = @transform_14, window_bounds = array<i64: 1, 3, 512>}]} {
    %c0 = arith.constant 0 : index
    %c0_0 = arith.constant 0 : index
    %c0_1 = arith.constant 0 : index
    %0 = vector.load %arg1[%c0, %c0_0, %c0_1] : memref<1x1x1024xf32, #tpu.memory_space<vmem>>, vector<1x1x1024xf32>
    %1 = vector.shape_cast %0 : vector<1x1x1024xf32> to vector<1x1024xf32>
    %c17_i32 = arith.constant 17 : i32
    %2 = tpu.dynamic_rotate %1 by %c17_i32 dim 1 : vector<1x1024xf32>, i32 -> vector<1x1024xf32>
    %c0_2 = arith.constant 0 : index
    %c0_3 = arith.constant 0 : index
    %3 = vector.load %arg2[%c0_2, %c0_3] : memref<9x1024xf32, #tpu.memory_space<vmem>>, vector<1x1024xf32>
    %4 = arith.mulf %2, %3 : vector<1x1024xf32>
    %5 = arith.truncf %4 : vector<1x1024xf32> to vector<1x1024xbf16>
    %c16_i32 = arith.constant 16 : i32
    %6 = tpu.dynamic_rotate %1 by %c16_i32 dim 1 : vector<1x1024xf32>, i32 -> vector<1x1024xf32>
    %c1 = arith.constant 1 : index
    %c0_4 = arith.constant 0 : index
    %7 = vector.load %arg2[%c1, %c0_4] : memref<9x1024xf32, #tpu.memory_space<vmem>>, vector<1x1024xf32>
    %8 = arith.mulf %6, %7 : vector<1x1024xf32>
    %9 = arith.truncf %8 : vector<1x1024xf32> to vector<1x1024xbf16>
    %c15_i32 = arith.constant 15 : i32
    %10 = tpu.dynamic_rotate %1 by %c15_i32 dim 1 : vector<1x1024xf32>, i32 -> vector<1x1024xf32>
    %c2 = arith.constant 2 : index
    %c0_5 = arith.constant 0 : index
    %11 = vector.load %arg2[%c2, %c0_5] : memref<9x1024xf32, #tpu.memory_space<vmem>>, vector<1x1024xf32>
    %12 = arith.mulf %10, %11 : vector<1x1024xf32>
    %13 = arith.truncf %12 : vector<1x1024xf32> to vector<1x1024xbf16>
    %c1_i32 = arith.constant 1 : i32
    %14 = tpu.dynamic_rotate %1 by %c1_i32 dim 1 : vector<1x1024xf32>, i32 -> vector<1x1024xf32>
    %c3 = arith.constant 3 : index
    %c0_6 = arith.constant 0 : index
    %15 = vector.load %arg2[%c3, %c0_6] : memref<9x1024xf32, #tpu.memory_space<vmem>>, vector<1x1024xf32>
    %16 = arith.mulf %14, %15 : vector<1x1024xf32>
    %17 = arith.truncf %16 : vector<1x1024xf32> to vector<1x1024xbf16>
    %c4 = arith.constant 4 : index
    %c0_7 = arith.constant 0 : index
    %18 = vector.load %arg2[%c4, %c0_7] : memref<9x1024xf32, #tpu.memory_space<vmem>>, vector<1x1024xf32>
    %19 = arith.mulf %1, %18 : vector<1x1024xf32>
    %20 = arith.truncf %19 : vector<1x1024xf32> to vector<1x1024xbf16>
    %c1023_i32 = arith.constant 1023 : i32
    %21 = tpu.dynamic_rotate %1 by %c1023_i32 dim 1 : vector<1x1024xf32>, i32 -> vector<1x1024xf32>
    %c5 = arith.constant 5 : index
    %c0_8 = arith.constant 0 : index
    %22 = vector.load %arg2[%c5, %c0_8] : memref<9x1024xf32, #tpu.memory_space<vmem>>, vector<1x1024xf32>
    %23 = arith.mulf %21, %22 : vector<1x1024xf32>
    %24 = arith.truncf %23 : vector<1x1024xf32> to vector<1x1024xbf16>
    %c1009_i32 = arith.constant 1009 : i32
    %25 = tpu.dynamic_rotate %1 by %c1009_i32 dim 1 : vector<1x1024xf32>, i32 -> vector<1x1024xf32>
    %c6 = arith.constant 6 : index
    %c0_9 = arith.constant 0 : index
    %26 = vector.load %arg2[%c6, %c0_9] : memref<9x1024xf32, #tpu.memory_space<vmem>>, vector<1x1024xf32>
    %27 = arith.mulf %25, %26 : vector<1x1024xf32>
    %28 = arith.truncf %27 : vector<1x1024xf32> to vector<1x1024xbf16>
    %c1008_i32 = arith.constant 1008 : i32
    %29 = tpu.dynamic_rotate %1 by %c1008_i32 dim 1 : vector<1x1024xf32>, i32 -> vector<1x1024xf32>
    %c7 = arith.constant 7 : index
    %c0_10 = arith.constant 0 : index
    %30 = vector.load %arg2[%c7, %c0_10] : memref<9x1024xf32, #tpu.memory_space<vmem>>, vector<1x1024xf32>
    %31 = arith.mulf %29, %30 : vector<1x1024xf32>
    %32 = arith.truncf %31 : vector<1x1024xf32> to vector<1x1024xbf16>
    %c1007_i32 = arith.constant 1007 : i32
    %33 = tpu.dynamic_rotate %1 by %c1007_i32 dim 1 : vector<1x1024xf32>, i32 -> vector<1x1024xf32>
    %c8 = arith.constant 8 : index
    %c0_11 = arith.constant 0 : index
    %34 = vector.load %arg2[%c8, %c0_11] : memref<9x1024xf32, #tpu.memory_space<vmem>>, vector<1x1024xf32>
    %35 = arith.mulf %33, %34 : vector<1x1024xf32>
    %36 = arith.truncf %35 : vector<1x1024xf32> to vector<1x1024xbf16>
    %37 = tpu.concatenate %5, %9, %13, %17, %20, %24, %28, %32, %36 in 0 : vector<1x1024xbf16>, vector<1x1024xbf16>, vector<1x1024xbf16>, vector<1x1024xbf16>, vector<1x1024xbf16>, vector<1x1024xbf16>, vector<1x1024xbf16>, vector<1x1024xbf16>, vector<1x1024xbf16> -> vector<9x1024xbf16>
    %c0_12 = arith.constant 0 : index
    %c0_13 = arith.constant 0 : index
    %38 = vector.load %arg3[%c0_12, %c0_13] : memref<16x9xbf16, #tpu.memory_space<vmem>>, vector<16x9xbf16>
    %cst = arith.constant dense<0.000000e+00> : vector<16x1024xf32>
    %39 = tpu.matmul %38, %37, %cst {dimension_numbers = #tpu.dot_dimension_numbers<[1], [0], [0], [1], [0, 0, 1, 1], [], []>} : vector<16x9xbf16>, vector<9x1024xbf16>, vector<16x1024xf32> -> vector<16x1024xf32>
    %c0_14 = arith.constant 0 : index
    %c0_15 = arith.constant 0 : index
    %40 = vector.load %arg4[%c0_14, %c0_15] : memref<16x1xf32, #tpu.memory_space<vmem>>, vector<16x1xf32>
    %41 = vector.broadcast %40 : vector<16x1xf32> to vector<16x1024xf32>
    %42 = arith.addf %39, %41 : vector<16x1024xf32>
    %cst_16 = arith.constant 0.000000e+00 : f32
    %43 = vector.broadcast %cst_16 : f32 to vector<16x1024xf32>
    %44 = arith.maximumf %42, %43 : vector<16x1024xf32>
    %c0_17 = arith.constant 0 : index
    %c0_18 = arith.constant 0 : index
    %45 = vector.load %arg5[%c0_17, %c0_18] : memref<16x144xbf16, #tpu.memory_space<vmem>>, vector<16x16xbf16>
    %c17_i32_19 = arith.constant 17 : i32
    %46 = tpu.dynamic_rotate %44 by %c17_i32_19 dim 1 : vector<16x1024xf32>, i32 -> vector<16x1024xf32>
    %c0_20 = arith.constant 0 : index
    %c0_21 = arith.constant 0 : index
    %47 = vector.load %arg2[%c0_20, %c0_21] : memref<9x1024xf32, #tpu.memory_space<vmem>>, vector<1x1024xf32>
    %48 = vector.broadcast %47 : vector<1x1024xf32> to vector<16x1024xf32>
    %49 = arith.mulf %46, %48 : vector<16x1024xf32>
    %50 = arith.truncf %49 : vector<16x1024xf32> to vector<16x1024xbf16>
    %cst_22 = arith.constant dense<0.000000e+00> : vector<16x1024xf32>
    %51 = tpu.matmul %45, %50, %cst_22 {dimension_numbers = #tpu.dot_dimension_numbers<[1], [0], [0], [1], [0, 0, 1, 1], [], []>} : vector<16x16xbf16>, vector<16x1024xbf16>, vector<16x1024xf32> -> vector<16x1024xf32>
    %c0_23 = arith.constant 0 : index
    %c16 = arith.constant 16 : index
    %52 = vector.load %arg5[%c0_23, %c16] : memref<16x144xbf16, #tpu.memory_space<vmem>>, vector<16x16xbf16>
    %c16_i32_24 = arith.constant 16 : i32
    %53 = tpu.dynamic_rotate %44 by %c16_i32_24 dim 1 : vector<16x1024xf32>, i32 -> vector<16x1024xf32>
    %c1_25 = arith.constant 1 : index
    %c0_26 = arith.constant 0 : index
    %54 = vector.load %arg2[%c1_25, %c0_26] : memref<9x1024xf32, #tpu.memory_space<vmem>>, vector<1x1024xf32>
    %55 = vector.broadcast %54 : vector<1x1024xf32> to vector<16x1024xf32>
    %56 = arith.mulf %53, %55 : vector<16x1024xf32>
    %57 = arith.truncf %56 : vector<16x1024xf32> to vector<16x1024xbf16>
    %cst_27 = arith.constant dense<0.000000e+00> : vector<16x1024xf32>
    %58 = tpu.matmul %52, %57, %cst_27 {dimension_numbers = #tpu.dot_dimension_numbers<[1], [0], [0], [1], [0, 0, 1, 1], [], []>} : vector<16x16xbf16>, vector<16x1024xbf16>, vector<16x1024xf32> -> vector<16x1024xf32>
    %59 = arith.addf %51, %58 : vector<16x1024xf32>
    %c0_28 = arith.constant 0 : index
    %c32 = arith.constant 32 : index
    %60 = vector.load %arg5[%c0_28, %c32] : memref<16x144xbf16, #tpu.memory_space<vmem>>, vector<16x16xbf16>
    %c15_i32_29 = arith.constant 15 : i32
    %61 = tpu.dynamic_rotate %44 by %c15_i32_29 dim 1 : vector<16x1024xf32>, i32 -> vector<16x1024xf32>
    %c2_30 = arith.constant 2 : index
    %c0_31 = arith.constant 0 : index
    %62 = vector.load %arg2[%c2_30, %c0_31] : memref<9x1024xf32, #tpu.memory_space<vmem>>, vector<1x1024xf32>
    %63 = vector.broadcast %62 : vector<1x1024xf32> to vector<16x1024xf32>
    %64 = arith.mulf %61, %63 : vector<16x1024xf32>
    %65 = arith.truncf %64 : vector<16x1024xf32> to vector<16x1024xbf16>
    %cst_32 = arith.constant dense<0.000000e+00> : vector<16x1024xf32>
    %66 = tpu.matmul %60, %65, %cst_32 {dimension_numbers = #tpu.dot_dimension_numbers<[1], [0], [0], [1], [0, 0, 1, 1], [], []>} : vector<16x16xbf16>, vector<16x1024xbf16>, vector<16x1024xf32> -> vector<16x1024xf32>
    %67 = arith.addf %59, %66 : vector<16x1024xf32>
    %c0_33 = arith.constant 0 : index
    %c48 = arith.constant 48 : index
    %68 = vector.load %arg5[%c0_33, %c48] : memref<16x144xbf16, #tpu.memory_space<vmem>>, vector<16x16xbf16>
    %c1_i32_34 = arith.constant 1 : i32
    %69 = tpu.dynamic_rotate %44 by %c1_i32_34 dim 1 : vector<16x1024xf32>, i32 -> vector<16x1024xf32>
    %c3_35 = arith.constant 3 : index
    %c0_36 = arith.constant 0 : index
    %70 = vector.load %arg2[%c3_35, %c0_36] : memref<9x1024xf32, #tpu.memory_space<vmem>>, vector<1x1024xf32>
    %71 = vector.broadcast %70 : vector<1x1024xf32> to vector<16x1024xf32>
    %72 = arith.mulf %69, %71 : vector<16x1024xf32>
    %73 = arith.truncf %72 : vector<16x1024xf32> to vector<16x1024xbf16>
    %cst_37 = arith.constant dense<0.000000e+00> : vector<16x1024xf32>
    %74 = tpu.matmul %68, %73, %cst_37 {dimension_numbers = #tpu.dot_dimension_numbers<[1], [0], [0], [1], [0, 0, 1, 1], [], []>} : vector<16x16xbf16>, vector<16x1024xbf16>, vector<16x1024xf32> -> vector<16x1024xf32>
    %75 = arith.addf %67, %74 : vector<16x1024xf32>
    %c0_38 = arith.constant 0 : index
    %c64 = arith.constant 64 : index
    %76 = vector.load %arg5[%c0_38, %c64] : memref<16x144xbf16, #tpu.memory_space<vmem>>, vector<16x16xbf16>
    %c4_39 = arith.constant 4 : index
    %c0_40 = arith.constant 0 : index
    %77 = vector.load %arg2[%c4_39, %c0_40] : memref<9x1024xf32, #tpu.memory_space<vmem>>, vector<1x1024xf32>
    %78 = vector.broadcast %77 : vector<1x1024xf32> to vector<16x1024xf32>
    %79 = arith.mulf %44, %78 : vector<16x1024xf32>
    %80 = arith.truncf %79 : vector<16x1024xf32> to vector<16x1024xbf16>
    %cst_41 = arith.constant dense<0.000000e+00> : vector<16x1024xf32>
    %81 = tpu.matmul %76, %80, %cst_41 {dimension_numbers = #tpu.dot_dimension_numbers<[1], [0], [0], [1], [0, 0, 1, 1], [], []>} : vector<16x16xbf16>, vector<16x1024xbf16>, vector<16x1024xf32> -> vector<16x1024xf32>
    %82 = arith.addf %75, %81 : vector<16x1024xf32>
    %c0_42 = arith.constant 0 : index
    %c80 = arith.constant 80 : index
    %83 = vector.load %arg5[%c0_42, %c80] : memref<16x144xbf16, #tpu.memory_space<vmem>>, vector<16x16xbf16>
    %c1023_i32_43 = arith.constant 1023 : i32
    %84 = tpu.dynamic_rotate %44 by %c1023_i32_43 dim 1 : vector<16x1024xf32>, i32 -> vector<16x1024xf32>
    %c5_44 = arith.constant 5 : index
    %c0_45 = arith.constant 0 : index
    %85 = vector.load %arg2[%c5_44, %c0_45] : memref<9x1024xf32, #tpu.memory_space<vmem>>, vector<1x1024xf32>
    %86 = vector.broadcast %85 : vector<1x1024xf32> to vector<16x1024xf32>
    %87 = arith.mulf %84, %86 : vector<16x1024xf32>
    %88 = arith.truncf %87 : vector<16x1024xf32> to vector<16x1024xbf16>
    %cst_46 = arith.constant dense<0.000000e+00> : vector<16x1024xf32>
    %89 = tpu.matmul %83, %88, %cst_46 {dimension_numbers = #tpu.dot_dimension_numbers<[1], [0], [0], [1], [0, 0, 1, 1], [], []>} : vector<16x16xbf16>, vector<16x1024xbf16>, vector<16x1024xf32> -> vector<16x1024xf32>
    %90 = arith.addf %82, %89 : vector<16x1024xf32>
    %c0_47 = arith.constant 0 : index
    %c96 = arith.constant 96 : index
    %91 = vector.load %arg5[%c0_47, %c96] : memref<16x144xbf16, #tpu.memory_space<vmem>>, vector<16x16xbf16>
    %c1009_i32_48 = arith.constant 1009 : i32
    %92 = tpu.dynamic_rotate %44 by %c1009_i32_48 dim 1 : vector<16x1024xf32>, i32 -> vector<16x1024xf32>
    %c6_49 = arith.constant 6 : index
    %c0_50 = arith.constant 0 : index
    %93 = vector.load %arg2[%c6_49, %c0_50] : memref<9x1024xf32, #tpu.memory_space<vmem>>, vector<1x1024xf32>
    %94 = vector.broadcast %93 : vector<1x1024xf32> to vector<16x1024xf32>
    %95 = arith.mulf %92, %94 : vector<16x1024xf32>
    %96 = arith.truncf %95 : vector<16x1024xf32> to vector<16x1024xbf16>
    %cst_51 = arith.constant dense<0.000000e+00> : vector<16x1024xf32>
    %97 = tpu.matmul %91, %96, %cst_51 {dimension_numbers = #tpu.dot_dimension_numbers<[1], [0], [0], [1], [0, 0, 1, 1], [], []>} : vector<16x16xbf16>, vector<16x1024xbf16>, vector<16x1024xf32> -> vector<16x1024xf32>
    %98 = arith.addf %90, %97 : vector<16x1024xf32>
    %c0_52 = arith.constant 0 : index
    %c112 = arith.constant 112 : index
    %99 = vector.load %arg5[%c0_52, %c112] : memref<16x144xbf16, #tpu.memory_space<vmem>>, vector<16x16xbf16>
    %c1008_i32_53 = arith.constant 1008 : i32
    %100 = tpu.dynamic_rotate %44 by %c1008_i32_53 dim 1 : vector<16x1024xf32>, i32 -> vector<16x1024xf32>
    %c7_54 = arith.constant 7 : index
    %c0_55 = arith.constant 0 : index
    %101 = vector.load %arg2[%c7_54, %c0_55] : memref<9x1024xf32, #tpu.memory_space<vmem>>, vector<1x1024xf32>
    %102 = vector.broadcast %101 : vector<1x1024xf32> to vector<16x1024xf32>
    %103 = arith.mulf %100, %102 : vector<16x1024xf32>
    %104 = arith.truncf %103 : vector<16x1024xf32> to vector<16x1024xbf16>
    %cst_56 = arith.constant dense<0.000000e+00> : vector<16x1024xf32>
    %105 = tpu.matmul %99, %104, %cst_56 {dimension_numbers = #tpu.dot_dimension_numbers<[1], [0], [0], [1], [0, 0, 1, 1], [], []>} : vector<16x16xbf16>, vector<16x1024xbf16>, vector<16x1024xf32> -> vector<16x1024xf32>
    %106 = arith.addf %98, %105 : vector<16x1024xf32>
    %c0_57 = arith.constant 0 : index
    %c128 = arith.constant 128 : index
    %107 = vector.load %arg5[%c0_57, %c128] : memref<16x144xbf16, #tpu.memory_space<vmem>>, vector<16x16xbf16>
    %c1007_i32_58 = arith.constant 1007 : i32
    %108 = tpu.dynamic_rotate %44 by %c1007_i32_58 dim 1 : vector<16x1024xf32>, i32 -> vector<16x1024xf32>
    %c8_59 = arith.constant 8 : index
    %c0_60 = arith.constant 0 : index
    %109 = vector.load %arg2[%c8_59, %c0_60] : memref<9x1024xf32, #tpu.memory_space<vmem>>, vector<1x1024xf32>
    %110 = vector.broadcast %109 : vector<1x1024xf32> to vector<16x1024xf32>
    %111 = arith.mulf %108, %110 : vector<16x1024xf32>
    %112 = arith.truncf %111 : vector<16x1024xf32> to vector<16x1024xbf16>
    %cst_61 = arith.constant dense<0.000000e+00> : vector<16x1024xf32>
    %113 = tpu.matmul %107, %112, %cst_61 {dimension_numbers = #tpu.dot_dimension_numbers<[1], [0], [0], [1], [0, 0, 1, 1], [], []>} : vector<16x16xbf16>, vector<16x1024xbf16>, vector<16x1024xf32> -> vector<16x1024xf32>
    %114 = arith.addf %106, %113 : vector<16x1024xf32>
    %c0_62 = arith.constant 0 : index
    %c0_63 = arith.constant 0 : index
    %115 = vector.load %arg6[%c0_62, %c0_63] : memref<16x1xf32, #tpu.memory_space<vmem>>, vector<16x1xf32>
    %116 = vector.broadcast %115 : vector<16x1xf32> to vector<16x1024xf32>
    %117 = arith.addf %114, %116 : vector<16x1024xf32>
    %cst_64 = arith.constant 0.000000e+00 : f32
    %118 = vector.broadcast %cst_64 : f32 to vector<16x1024xf32>
    %119 = arith.maximumf %117, %118 : vector<16x1024xf32>
    %c0_65 = arith.constant 0 : index
    %c0_66 = arith.constant 0 : index
    %120 = vector.load %arg7[%c0_65, %c0_66] : memref<1x144xbf16, #tpu.memory_space<vmem>>, vector<1x16xbf16>
    %c17_i32_67 = arith.constant 17 : i32
    %121 = tpu.dynamic_rotate %119 by %c17_i32_67 dim 1 : vector<16x1024xf32>, i32 -> vector<16x1024xf32>
    %c0_68 = arith.constant 0 : index
    %c0_69 = arith.constant 0 : index
    %122 = vector.load %arg2[%c0_68, %c0_69] : memref<9x1024xf32, #tpu.memory_space<vmem>>, vector<1x1024xf32>
    %123 = vector.broadcast %122 : vector<1x1024xf32> to vector<16x1024xf32>
    %124 = arith.mulf %121, %123 : vector<16x1024xf32>
    %125 = arith.truncf %124 : vector<16x1024xf32> to vector<16x1024xbf16>
    %cst_70 = arith.constant dense<0.000000e+00> : vector<1x1024xf32>
    %126 = tpu.matmul %120, %125, %cst_70 {dimension_numbers = #tpu.dot_dimension_numbers<[1], [0], [0], [1], [0, 0, 1, 1], [], []>} : vector<1x16xbf16>, vector<16x1024xbf16>, vector<1x1024xf32> -> vector<1x1024xf32>
    %c0_71 = arith.constant 0 : index
    %c16_72 = arith.constant 16 : index
    %127 = vector.load %arg7[%c0_71, %c16_72] : memref<1x144xbf16, #tpu.memory_space<vmem>>, vector<1x16xbf16>
    %c16_i32_73 = arith.constant 16 : i32
    %128 = tpu.dynamic_rotate %119 by %c16_i32_73 dim 1 : vector<16x1024xf32>, i32 -> vector<16x1024xf32>
    %c1_74 = arith.constant 1 : index
    %c0_75 = arith.constant 0 : index
    %129 = vector.load %arg2[%c1_74, %c0_75] : memref<9x1024xf32, #tpu.memory_space<vmem>>, vector<1x1024xf32>
    %130 = vector.broadcast %129 : vector<1x1024xf32> to vector<16x1024xf32>
    %131 = arith.mulf %128, %130 : vector<16x1024xf32>
    %132 = arith.truncf %131 : vector<16x1024xf32> to vector<16x1024xbf16>
    %cst_76 = arith.constant dense<0.000000e+00> : vector<1x1024xf32>
    %133 = tpu.matmul %127, %132, %cst_76 {dimension_numbers = #tpu.dot_dimension_numbers<[1], [0], [0], [1], [0, 0, 1, 1], [], []>} : vector<1x16xbf16>, vector<16x1024xbf16>, vector<1x1024xf32> -> vector<1x1024xf32>
    %134 = arith.addf %126, %133 : vector<1x1024xf32>
    %c0_77 = arith.constant 0 : index
    %c32_78 = arith.constant 32 : index
    %135 = vector.load %arg7[%c0_77, %c32_78] : memref<1x144xbf16, #tpu.memory_space<vmem>>, vector<1x16xbf16>
    %c15_i32_79 = arith.constant 15 : i32
    %136 = tpu.dynamic_rotate %119 by %c15_i32_79 dim 1 : vector<16x1024xf32>, i32 -> vector<16x1024xf32>
    %c2_80 = arith.constant 2 : index
    %c0_81 = arith.constant 0 : index
    %137 = vector.load %arg2[%c2_80, %c0_81] : memref<9x1024xf32, #tpu.memory_space<vmem>>, vector<1x1024xf32>
    %138 = vector.broadcast %137 : vector<1x1024xf32> to vector<16x1024xf32>
    %139 = arith.mulf %136, %138 : vector<16x1024xf32>
    %140 = arith.truncf %139 : vector<16x1024xf32> to vector<16x1024xbf16>
    %cst_82 = arith.constant dense<0.000000e+00> : vector<1x1024xf32>
    %141 = tpu.matmul %135, %140, %cst_82 {dimension_numbers = #tpu.dot_dimension_numbers<[1], [0], [0], [1], [0, 0, 1, 1], [], []>} : vector<1x16xbf16>, vector<16x1024xbf16>, vector<1x1024xf32> -> vector<1x1024xf32>
    %142 = arith.addf %134, %141 : vector<1x1024xf32>
    %c0_83 = arith.constant 0 : index
    %c48_84 = arith.constant 48 : index
    %143 = vector.load %arg7[%c0_83, %c48_84] : memref<1x144xbf16, #tpu.memory_space<vmem>>, vector<1x16xbf16>
    %c1_i32_85 = arith.constant 1 : i32
    %144 = tpu.dynamic_rotate %119 by %c1_i32_85 dim 1 : vector<16x1024xf32>, i32 -> vector<16x1024xf32>
    %c3_86 = arith.constant 3 : index
    %c0_87 = arith.constant 0 : index
    %145 = vector.load %arg2[%c3_86, %c0_87] : memref<9x1024xf32, #tpu.memory_space<vmem>>, vector<1x1024xf32>
    %146 = vector.broadcast %145 : vector<1x1024xf32> to vector<16x1024xf32>
    %147 = arith.mulf %144, %146 : vector<16x1024xf32>
    %148 = arith.truncf %147 : vector<16x1024xf32> to vector<16x1024xbf16>
    %cst_88 = arith.constant dense<0.000000e+00> : vector<1x1024xf32>
    %149 = tpu.matmul %143, %148, %cst_88 {dimension_numbers = #tpu.dot_dimension_numbers<[1], [0], [0], [1], [0, 0, 1, 1], [], []>} : vector<1x16xbf16>, vector<16x1024xbf16>, vector<1x1024xf32> -> vector<1x1024xf32>
    %150 = arith.addf %142, %149 : vector<1x1024xf32>
    %c0_89 = arith.constant 0 : index
    %c64_90 = arith.constant 64 : index
    %151 = vector.load %arg7[%c0_89, %c64_90] : memref<1x144xbf16, #tpu.memory_space<vmem>>, vector<1x16xbf16>
    %c4_91 = arith.constant 4 : index
    %c0_92 = arith.constant 0 : index
    %152 = vector.load %arg2[%c4_91, %c0_92] : memref<9x1024xf32, #tpu.memory_space<vmem>>, vector<1x1024xf32>
    %153 = vector.broadcast %152 : vector<1x1024xf32> to vector<16x1024xf32>
    %154 = arith.mulf %119, %153 : vector<16x1024xf32>
    %155 = arith.truncf %154 : vector<16x1024xf32> to vector<16x1024xbf16>
    %cst_93 = arith.constant dense<0.000000e+00> : vector<1x1024xf32>
    %156 = tpu.matmul %151, %155, %cst_93 {dimension_numbers = #tpu.dot_dimension_numbers<[1], [0], [0], [1], [0, 0, 1, 1], [], []>} : vector<1x16xbf16>, vector<16x1024xbf16>, vector<1x1024xf32> -> vector<1x1024xf32>
    %157 = arith.addf %150, %156 : vector<1x1024xf32>
    %c0_94 = arith.constant 0 : index
    %c80_95 = arith.constant 80 : index
    %158 = vector.load %arg7[%c0_94, %c80_95] : memref<1x144xbf16, #tpu.memory_space<vmem>>, vector<1x16xbf16>
    %c1023_i32_96 = arith.constant 1023 : i32
    %159 = tpu.dynamic_rotate %119 by %c1023_i32_96 dim 1 : vector<16x1024xf32>, i32 -> vector<16x1024xf32>
    %c5_97 = arith.constant 5 : index
    %c0_98 = arith.constant 0 : index
    %160 = vector.load %arg2[%c5_97, %c0_98] : memref<9x1024xf32, #tpu.memory_space<vmem>>, vector<1x1024xf32>
    %161 = vector.broadcast %160 : vector<1x1024xf32> to vector<16x1024xf32>
    %162 = arith.mulf %159, %161 : vector<16x1024xf32>
    %163 = arith.truncf %162 : vector<16x1024xf32> to vector<16x1024xbf16>
    %cst_99 = arith.constant dense<0.000000e+00> : vector<1x1024xf32>
    %164 = tpu.matmul %158, %163, %cst_99 {dimension_numbers = #tpu.dot_dimension_numbers<[1], [0], [0], [1], [0, 0, 1, 1], [], []>} : vector<1x16xbf16>, vector<16x1024xbf16>, vector<1x1024xf32> -> vector<1x1024xf32>
    %165 = arith.addf %157, %164 : vector<1x1024xf32>
    %c0_100 = arith.constant 0 : index
    %c96_101 = arith.constant 96 : index
    %166 = vector.load %arg7[%c0_100, %c96_101] : memref<1x144xbf16, #tpu.memory_space<vmem>>, vector<1x16xbf16>
    %c1009_i32_102 = arith.constant 1009 : i32
    %167 = tpu.dynamic_rotate %119 by %c1009_i32_102 dim 1 : vector<16x1024xf32>, i32 -> vector<16x1024xf32>
    %c6_103 = arith.constant 6 : index
    %c0_104 = arith.constant 0 : index
    %168 = vector.load %arg2[%c6_103, %c0_104] : memref<9x1024xf32, #tpu.memory_space<vmem>>, vector<1x1024xf32>
    %169 = vector.broadcast %168 : vector<1x1024xf32> to vector<16x1024xf32>
    %170 = arith.mulf %167, %169 : vector<16x1024xf32>
    %171 = arith.truncf %170 : vector<16x1024xf32> to vector<16x1024xbf16>
    %cst_105 = arith.constant dense<0.000000e+00> : vector<1x1024xf32>
    %172 = tpu.matmul %166, %171, %cst_105 {dimension_numbers = #tpu.dot_dimension_numbers<[1], [0], [0], [1], [0, 0, 1, 1], [], []>} : vector<1x16xbf16>, vector<16x1024xbf16>, vector<1x1024xf32> -> vector<1x1024xf32>
    %173 = arith.addf %165, %172 : vector<1x1024xf32>
    %c0_106 = arith.constant 0 : index
    %c112_107 = arith.constant 112 : index
    %174 = vector.load %arg7[%c0_106, %c112_107] : memref<1x144xbf16, #tpu.memory_space<vmem>>, vector<1x16xbf16>
    %c1008_i32_108 = arith.constant 1008 : i32
    %175 = tpu.dynamic_rotate %119 by %c1008_i32_108 dim 1 : vector<16x1024xf32>, i32 -> vector<16x1024xf32>
    %c7_109 = arith.constant 7 : index
    %c0_110 = arith.constant 0 : index
    %176 = vector.load %arg2[%c7_109, %c0_110] : memref<9x1024xf32, #tpu.memory_space<vmem>>, vector<1x1024xf32>
    %177 = vector.broadcast %176 : vector<1x1024xf32> to vector<16x1024xf32>
    %178 = arith.mulf %175, %177 : vector<16x1024xf32>
    %179 = arith.truncf %178 : vector<16x1024xf32> to vector<16x1024xbf16>
    %cst_111 = arith.constant dense<0.000000e+00> : vector<1x1024xf32>
    %180 = tpu.matmul %174, %179, %cst_111 {dimension_numbers = #tpu.dot_dimension_numbers<[1], [0], [0], [1], [0, 0, 1, 1], [], []>} : vector<1x16xbf16>, vector<16x1024xbf16>, vector<1x1024xf32> -> vector<1x1024xf32>
    %181 = arith.addf %173, %180 : vector<1x1024xf32>
    %c0_112 = arith.constant 0 : index
    %c128_113 = arith.constant 128 : index
    %182 = vector.load %arg7[%c0_112, %c128_113] : memref<1x144xbf16, #tpu.memory_space<vmem>>, vector<1x16xbf16>
    %c1007_i32_114 = arith.constant 1007 : i32
    %183 = tpu.dynamic_rotate %119 by %c1007_i32_114 dim 1 : vector<16x1024xf32>, i32 -> vector<16x1024xf32>
    %c8_115 = arith.constant 8 : index
    %c0_116 = arith.constant 0 : index
    %184 = vector.load %arg2[%c8_115, %c0_116] : memref<9x1024xf32, #tpu.memory_space<vmem>>, vector<1x1024xf32>
    %185 = vector.broadcast %184 : vector<1x1024xf32> to vector<16x1024xf32>
    %186 = arith.mulf %183, %185 : vector<16x1024xf32>
    %187 = arith.truncf %186 : vector<16x1024xf32> to vector<16x1024xbf16>
    %cst_117 = arith.constant dense<0.000000e+00> : vector<1x1024xf32>
    %188 = tpu.matmul %182, %187, %cst_117 {dimension_numbers = #tpu.dot_dimension_numbers<[1], [0], [0], [1], [0, 0, 1, 1], [], []>} : vector<1x16xbf16>, vector<16x1024xbf16>, vector<1x1024xf32> -> vector<1x1024xf32>
    %189 = arith.addf %181, %188 : vector<1x1024xf32>
    %c0_118 = arith.constant 0 : index
    %c0_119 = arith.constant 0 : index
    %190 = vector.load %arg8[%c0_118, %c0_119] : memref<1x1xf32, #tpu.memory_space<vmem>>, vector<1x1xf32>
    %191 = vector.broadcast %190 : vector<1x1xf32> to vector<1x1024xf32>
    %192 = arith.addf %189, %191 : vector<1x1024xf32>
    %193 = arith.negf %192 : vector<1x1024xf32>
    %194 = math.exp %193 : vector<1x1024xf32>
    %cst_120 = arith.constant 1.000000e+00 : f32
    %195 = vector.broadcast %cst_120 : f32 to vector<1x1024xf32>
    %196 = arith.addf %195, %194 : vector<1x1024xf32>
    %197 = arith.divf %195, %196 : vector<1x1024xf32>
    %198 = vector.extract_strided_slice %197 {offsets = [0, 0], sizes = [1, 512], strides = [1, 1]} : vector<1x1024xf32> to vector<1x512xf32>
    %199 = vector.extract_strided_slice %197 {offsets = [0, 512], sizes = [1, 512], strides = [1, 1]} : vector<1x1024xf32> to vector<1x512xf32>
    %200 = vector.extract_strided_slice %1 {offsets = [0, 512], sizes = [1, 512], strides = [1, 1]} : vector<1x1024xf32> to vector<1x512xf32>
    %201 = tpu.concatenate %200, %198 in 0 : vector<1x512xf32>, vector<1x512xf32> -> vector<2x512xf32>
    %c17_i32_121 = arith.constant 17 : i32
    %202 = tpu.dynamic_rotate %201 by %c17_i32_121 dim 1 : vector<2x512xf32>, i32 -> vector<2x512xf32>
    %c0_122 = arith.constant 0 : index
    %c0_123 = arith.constant 0 : index
    %203 = vector.load %arg2[%c0_122, %c0_123] : memref<9x1024xf32, #tpu.memory_space<vmem>>, vector<1x512xf32>
    %204 = vector.broadcast %203 : vector<1x512xf32> to vector<2x512xf32>
    %205 = arith.mulf %202, %204 : vector<2x512xf32>
    %206 = arith.truncf %205 : vector<2x512xf32> to vector<2x512xbf16>
    %c16_i32_124 = arith.constant 16 : i32
    %207 = tpu.dynamic_rotate %201 by %c16_i32_124 dim 1 : vector<2x512xf32>, i32 -> vector<2x512xf32>
    %c1_125 = arith.constant 1 : index
    %c0_126 = arith.constant 0 : index
    %208 = vector.load %arg2[%c1_125, %c0_126] : memref<9x1024xf32, #tpu.memory_space<vmem>>, vector<1x512xf32>
    %209 = vector.broadcast %208 : vector<1x512xf32> to vector<2x512xf32>
    %210 = arith.mulf %207, %209 : vector<2x512xf32>
    %211 = arith.truncf %210 : vector<2x512xf32> to vector<2x512xbf16>
    %c15_i32_127 = arith.constant 15 : i32
    %212 = tpu.dynamic_rotate %201 by %c15_i32_127 dim 1 : vector<2x512xf32>, i32 -> vector<2x512xf32>
    %c2_128 = arith.constant 2 : index
    %c0_129 = arith.constant 0 : index
    %213 = vector.load %arg2[%c2_128, %c0_129] : memref<9x1024xf32, #tpu.memory_space<vmem>>, vector<1x512xf32>
    %214 = vector.broadcast %213 : vector<1x512xf32> to vector<2x512xf32>
    %215 = arith.mulf %212, %214 : vector<2x512xf32>
    %216 = arith.truncf %215 : vector<2x512xf32> to vector<2x512xbf16>
    %c1_i32_130 = arith.constant 1 : i32
    %217 = tpu.dynamic_rotate %201 by %c1_i32_130 dim 1 : vector<2x512xf32>, i32 -> vector<2x512xf32>
    %c3_131 = arith.constant 3 : index
    %c0_132 = arith.constant 0 : index
    %218 = vector.load %arg2[%c3_131, %c0_132] : memref<9x1024xf32, #tpu.memory_space<vmem>>, vector<1x512xf32>
    %219 = vector.broadcast %218 : vector<1x512xf32> to vector<2x512xf32>
    %220 = arith.mulf %217, %219 : vector<2x512xf32>
    %221 = arith.truncf %220 : vector<2x512xf32> to vector<2x512xbf16>
    %c4_133 = arith.constant 4 : index
    %c0_134 = arith.constant 0 : index
    %222 = vector.load %arg2[%c4_133, %c0_134] : memref<9x1024xf32, #tpu.memory_space<vmem>>, vector<1x512xf32>
    %223 = vector.broadcast %222 : vector<1x512xf32> to vector<2x512xf32>
    %224 = arith.mulf %201, %223 : vector<2x512xf32>
    %225 = arith.truncf %224 : vector<2x512xf32> to vector<2x512xbf16>
    %c511_i32 = arith.constant 511 : i32
    %226 = tpu.dynamic_rotate %201 by %c511_i32 dim 1 : vector<2x512xf32>, i32 -> vector<2x512xf32>
    %c5_135 = arith.constant 5 : index
    %c0_136 = arith.constant 0 : index
    %227 = vector.load %arg2[%c5_135, %c0_136] : memref<9x1024xf32, #tpu.memory_space<vmem>>, vector<1x512xf32>
    %228 = vector.broadcast %227 : vector<1x512xf32> to vector<2x512xf32>
    %229 = arith.mulf %226, %228 : vector<2x512xf32>
    %230 = arith.truncf %229 : vector<2x512xf32> to vector<2x512xbf16>
    %c497_i32 = arith.constant 497 : i32
    %231 = tpu.dynamic_rotate %201 by %c497_i32 dim 1 : vector<2x512xf32>, i32 -> vector<2x512xf32>
    %c6_137 = arith.constant 6 : index
    %c0_138 = arith.constant 0 : index
    %232 = vector.load %arg2[%c6_137, %c0_138] : memref<9x1024xf32, #tpu.memory_space<vmem>>, vector<1x512xf32>
    %233 = vector.broadcast %232 : vector<1x512xf32> to vector<2x512xf32>
    %234 = arith.mulf %231, %233 : vector<2x512xf32>
    %235 = arith.truncf %234 : vector<2x512xf32> to vector<2x512xbf16>
    %c496_i32 = arith.constant 496 : i32
    %236 = tpu.dynamic_rotate %201 by %c496_i32 dim 1 : vector<2x512xf32>, i32 -> vector<2x512xf32>
    %c7_139 = arith.constant 7 : index
    %c0_140 = arith.constant 0 : index
    %237 = vector.load %arg2[%c7_139, %c0_140] : memref<9x1024xf32, #tpu.memory_space<vmem>>, vector<1x512xf32>
    %238 = vector.broadcast %237 : vector<1x512xf32> to vector<2x512xf32>
    %239 = arith.mulf %236, %238 : vector<2x512xf32>
    %240 = arith.truncf %239 : vector<2x512xf32> to vector<2x512xbf16>
    %c495_i32 = arith.constant 495 : i32
    %241 = tpu.dynamic_rotate %201 by %c495_i32 dim 1 : vector<2x512xf32>, i32 -> vector<2x512xf32>
    %c8_141 = arith.constant 8 : index
    %c0_142 = arith.constant 0 : index
    %242 = vector.load %arg2[%c8_141, %c0_142] : memref<9x1024xf32, #tpu.memory_space<vmem>>, vector<1x512xf32>
    %243 = vector.broadcast %242 : vector<1x512xf32> to vector<2x512xf32>
    %244 = arith.mulf %241, %243 : vector<2x512xf32>
    %245 = arith.truncf %244 : vector<2x512xf32> to vector<2x512xbf16>
    %246 = tpu.concatenate %206, %211, %216, %221, %225, %230, %235, %240, %245 in 0 : vector<2x512xbf16>, vector<2x512xbf16>, vector<2x512xbf16>, vector<2x512xbf16>, vector<2x512xbf16>, vector<2x512xbf16>, vector<2x512xbf16>, vector<2x512xbf16>, vector<2x512xbf16> -> vector<18x512xbf16>
    %c0_143 = arith.constant 0 : index
    %c0_144 = arith.constant 0 : index
    %247 = vector.load %arg9[%c0_143, %c0_144] : memref<16x18xbf16, #tpu.memory_space<vmem>>, vector<16x18xbf16>
    %cst_145 = arith.constant dense<0.000000e+00> : vector<16x512xf32>
    %248 = tpu.matmul %247, %246, %cst_145 {dimension_numbers = #tpu.dot_dimension_numbers<[1], [0], [0], [1], [0, 0, 1, 1], [], []>} : vector<16x18xbf16>, vector<18x512xbf16>, vector<16x512xf32> -> vector<16x512xf32>
    %c0_146 = arith.constant 0 : index
    %c0_147 = arith.constant 0 : index
    %249 = vector.load %arg10[%c0_146, %c0_147] : memref<16x1xf32, #tpu.memory_space<vmem>>, vector<16x1xf32>
    %250 = vector.broadcast %249 : vector<16x1xf32> to vector<16x512xf32>
    %251 = arith.addf %248, %250 : vector<16x512xf32>
    %cst_148 = arith.constant 0.000000e+00 : f32
    %252 = vector.broadcast %cst_148 : f32 to vector<16x512xf32>
    %253 = arith.maximumf %251, %252 : vector<16x512xf32>
    %c0_149 = arith.constant 0 : index
    %c0_150 = arith.constant 0 : index
    %254 = vector.load %arg11[%c0_149, %c0_150] : memref<16x144xbf16, #tpu.memory_space<vmem>>, vector<16x16xbf16>
    %c17_i32_151 = arith.constant 17 : i32
    %255 = tpu.dynamic_rotate %253 by %c17_i32_151 dim 1 : vector<16x512xf32>, i32 -> vector<16x512xf32>
    %c0_152 = arith.constant 0 : index
    %c0_153 = arith.constant 0 : index
    %256 = vector.load %arg2[%c0_152, %c0_153] : memref<9x1024xf32, #tpu.memory_space<vmem>>, vector<1x512xf32>
    %257 = vector.broadcast %256 : vector<1x512xf32> to vector<16x512xf32>
    %258 = arith.mulf %255, %257 : vector<16x512xf32>
    %259 = arith.truncf %258 : vector<16x512xf32> to vector<16x512xbf16>
    %cst_154 = arith.constant dense<0.000000e+00> : vector<16x512xf32>
    %260 = tpu.matmul %254, %259, %cst_154 {dimension_numbers = #tpu.dot_dimension_numbers<[1], [0], [0], [1], [0, 0, 1, 1], [], []>} : vector<16x16xbf16>, vector<16x512xbf16>, vector<16x512xf32> -> vector<16x512xf32>
    %c0_155 = arith.constant 0 : index
    %c16_156 = arith.constant 16 : index
    %261 = vector.load %arg11[%c0_155, %c16_156] : memref<16x144xbf16, #tpu.memory_space<vmem>>, vector<16x16xbf16>
    %c16_i32_157 = arith.constant 16 : i32
    %262 = tpu.dynamic_rotate %253 by %c16_i32_157 dim 1 : vector<16x512xf32>, i32 -> vector<16x512xf32>
    %c1_158 = arith.constant 1 : index
    %c0_159 = arith.constant 0 : index
    %263 = vector.load %arg2[%c1_158, %c0_159] : memref<9x1024xf32, #tpu.memory_space<vmem>>, vector<1x512xf32>
    %264 = vector.broadcast %263 : vector<1x512xf32> to vector<16x512xf32>
    %265 = arith.mulf %262, %264 : vector<16x512xf32>
    %266 = arith.truncf %265 : vector<16x512xf32> to vector<16x512xbf16>
    %cst_160 = arith.constant dense<0.000000e+00> : vector<16x512xf32>
    %267 = tpu.matmul %261, %266, %cst_160 {dimension_numbers = #tpu.dot_dimension_numbers<[1], [0], [0], [1], [0, 0, 1, 1], [], []>} : vector<16x16xbf16>, vector<16x512xbf16>, vector<16x512xf32> -> vector<16x512xf32>
    %268 = arith.addf %260, %267 : vector<16x512xf32>
    %c0_161 = arith.constant 0 : index
    %c32_162 = arith.constant 32 : index
    %269 = vector.load %arg11[%c0_161, %c32_162] : memref<16x144xbf16, #tpu.memory_space<vmem>>, vector<16x16xbf16>
    %c15_i32_163 = arith.constant 15 : i32
    %270 = tpu.dynamic_rotate %253 by %c15_i32_163 dim 1 : vector<16x512xf32>, i32 -> vector<16x512xf32>
    %c2_164 = arith.constant 2 : index
    %c0_165 = arith.constant 0 : index
    %271 = vector.load %arg2[%c2_164, %c0_165] : memref<9x1024xf32, #tpu.memory_space<vmem>>, vector<1x512xf32>
    %272 = vector.broadcast %271 : vector<1x512xf32> to vector<16x512xf32>
    %273 = arith.mulf %270, %272 : vector<16x512xf32>
    %274 = arith.truncf %273 : vector<16x512xf32> to vector<16x512xbf16>
    %cst_166 = arith.constant dense<0.000000e+00> : vector<16x512xf32>
    %275 = tpu.matmul %269, %274, %cst_166 {dimension_numbers = #tpu.dot_dimension_numbers<[1], [0], [0], [1], [0, 0, 1, 1], [], []>} : vector<16x16xbf16>, vector<16x512xbf16>, vector<16x512xf32> -> vector<16x512xf32>
    %276 = arith.addf %268, %275 : vector<16x512xf32>
    %c0_167 = arith.constant 0 : index
    %c48_168 = arith.constant 48 : index
    %277 = vector.load %arg11[%c0_167, %c48_168] : memref<16x144xbf16, #tpu.memory_space<vmem>>, vector<16x16xbf16>
    %c1_i32_169 = arith.constant 1 : i32
    %278 = tpu.dynamic_rotate %253 by %c1_i32_169 dim 1 : vector<16x512xf32>, i32 -> vector<16x512xf32>
    %c3_170 = arith.constant 3 : index
    %c0_171 = arith.constant 0 : index
    %279 = vector.load %arg2[%c3_170, %c0_171] : memref<9x1024xf32, #tpu.memory_space<vmem>>, vector<1x512xf32>
    %280 = vector.broadcast %279 : vector<1x512xf32> to vector<16x512xf32>
    %281 = arith.mulf %278, %280 : vector<16x512xf32>
    %282 = arith.truncf %281 : vector<16x512xf32> to vector<16x512xbf16>
    %cst_172 = arith.constant dense<0.000000e+00> : vector<16x512xf32>
    %283 = tpu.matmul %277, %282, %cst_172 {dimension_numbers = #tpu.dot_dimension_numbers<[1], [0], [0], [1], [0, 0, 1, 1], [], []>} : vector<16x16xbf16>, vector<16x512xbf16>, vector<16x512xf32> -> vector<16x512xf32>
    %284 = arith.addf %276, %283 : vector<16x512xf32>
    %c0_173 = arith.constant 0 : index
    %c64_174 = arith.constant 64 : index
    %285 = vector.load %arg11[%c0_173, %c64_174] : memref<16x144xbf16, #tpu.memory_space<vmem>>, vector<16x16xbf16>
    %c4_175 = arith.constant 4 : index
    %c0_176 = arith.constant 0 : index
    %286 = vector.load %arg2[%c4_175, %c0_176] : memref<9x1024xf32, #tpu.memory_space<vmem>>, vector<1x512xf32>
    %287 = vector.broadcast %286 : vector<1x512xf32> to vector<16x512xf32>
    %288 = arith.mulf %253, %287 : vector<16x512xf32>
    %289 = arith.truncf %288 : vector<16x512xf32> to vector<16x512xbf16>
    %cst_177 = arith.constant dense<0.000000e+00> : vector<16x512xf32>
    %290 = tpu.matmul %285, %289, %cst_177 {dimension_numbers = #tpu.dot_dimension_numbers<[1], [0], [0], [1], [0, 0, 1, 1], [], []>} : vector<16x16xbf16>, vector<16x512xbf16>, vector<16x512xf32> -> vector<16x512xf32>
    %291 = arith.addf %284, %290 : vector<16x512xf32>
    %c0_178 = arith.constant 0 : index
    %c80_179 = arith.constant 80 : index
    %292 = vector.load %arg11[%c0_178, %c80_179] : memref<16x144xbf16, #tpu.memory_space<vmem>>, vector<16x16xbf16>
    %c511_i32_180 = arith.constant 511 : i32
    %293 = tpu.dynamic_rotate %253 by %c511_i32_180 dim 1 : vector<16x512xf32>, i32 -> vector<16x512xf32>
    %c5_181 = arith.constant 5 : index
    %c0_182 = arith.constant 0 : index
    %294 = vector.load %arg2[%c5_181, %c0_182] : memref<9x1024xf32, #tpu.memory_space<vmem>>, vector<1x512xf32>
    %295 = vector.broadcast %294 : vector<1x512xf32> to vector<16x512xf32>
    %296 = arith.mulf %293, %295 : vector<16x512xf32>
    %297 = arith.truncf %296 : vector<16x512xf32> to vector<16x512xbf16>
    %cst_183 = arith.constant dense<0.000000e+00> : vector<16x512xf32>
    %298 = tpu.matmul %292, %297, %cst_183 {dimension_numbers = #tpu.dot_dimension_numbers<[1], [0], [0], [1], [0, 0, 1, 1], [], []>} : vector<16x16xbf16>, vector<16x512xbf16>, vector<16x512xf32> -> vector<16x512xf32>
    %299 = arith.addf %291, %298 : vector<16x512xf32>
    %c0_184 = arith.constant 0 : index
    %c96_185 = arith.constant 96 : index
    %300 = vector.load %arg11[%c0_184, %c96_185] : memref<16x144xbf16, #tpu.memory_space<vmem>>, vector<16x16xbf16>
    %c497_i32_186 = arith.constant 497 : i32
    %301 = tpu.dynamic_rotate %253 by %c497_i32_186 dim 1 : vector<16x512xf32>, i32 -> vector<16x512xf32>
    %c6_187 = arith.constant 6 : index
    %c0_188 = arith.constant 0 : index
    %302 = vector.load %arg2[%c6_187, %c0_188] : memref<9x1024xf32, #tpu.memory_space<vmem>>, vector<1x512xf32>
    %303 = vector.broadcast %302 : vector<1x512xf32> to vector<16x512xf32>
    %304 = arith.mulf %301, %303 : vector<16x512xf32>
    %305 = arith.truncf %304 : vector<16x512xf32> to vector<16x512xbf16>
    %cst_189 = arith.constant dense<0.000000e+00> : vector<16x512xf32>
    %306 = tpu.matmul %300, %305, %cst_189 {dimension_numbers = #tpu.dot_dimension_numbers<[1], [0], [0], [1], [0, 0, 1, 1], [], []>} : vector<16x16xbf16>, vector<16x512xbf16>, vector<16x512xf32> -> vector<16x512xf32>
    %307 = arith.addf %299, %306 : vector<16x512xf32>
    %c0_190 = arith.constant 0 : index
    %c112_191 = arith.constant 112 : index
    %308 = vector.load %arg11[%c0_190, %c112_191] : memref<16x144xbf16, #tpu.memory_space<vmem>>, vector<16x16xbf16>
    %c496_i32_192 = arith.constant 496 : i32
    %309 = tpu.dynamic_rotate %253 by %c496_i32_192 dim 1 : vector<16x512xf32>, i32 -> vector<16x512xf32>
    %c7_193 = arith.constant 7 : index
    %c0_194 = arith.constant 0 : index
    %310 = vector.load %arg2[%c7_193, %c0_194] : memref<9x1024xf32, #tpu.memory_space<vmem>>, vector<1x512xf32>
    %311 = vector.broadcast %310 : vector<1x512xf32> to vector<16x512xf32>
    %312 = arith.mulf %309, %311 : vector<16x512xf32>
    %313 = arith.truncf %312 : vector<16x512xf32> to vector<16x512xbf16>
    %cst_195 = arith.constant dense<0.000000e+00> : vector<16x512xf32>
    %314 = tpu.matmul %308, %313, %cst_195 {dimension_numbers = #tpu.dot_dimension_numbers<[1], [0], [0], [1], [0, 0, 1, 1], [], []>} : vector<16x16xbf16>, vector<16x512xbf16>, vector<16x512xf32> -> vector<16x512xf32>
    %315 = arith.addf %307, %314 : vector<16x512xf32>
    %c0_196 = arith.constant 0 : index
    %c128_197 = arith.constant 128 : index
    %316 = vector.load %arg11[%c0_196, %c128_197] : memref<16x144xbf16, #tpu.memory_space<vmem>>, vector<16x16xbf16>
    %c495_i32_198 = arith.constant 495 : i32
    %317 = tpu.dynamic_rotate %253 by %c495_i32_198 dim 1 : vector<16x512xf32>, i32 -> vector<16x512xf32>
    %c8_199 = arith.constant 8 : index
    %c0_200 = arith.constant 0 : index
    %318 = vector.load %arg2[%c8_199, %c0_200] : memref<9x1024xf32, #tpu.memory_space<vmem>>, vector<1x512xf32>
    %319 = vector.broadcast %318 : vector<1x512xf32> to vector<16x512xf32>
    %320 = arith.mulf %317, %319 : vector<16x512xf32>
    %321 = arith.truncf %320 : vector<16x512xf32> to vector<16x512xbf16>
    %cst_201 = arith.constant dense<0.000000e+00> : vector<16x512xf32>
    %322 = tpu.matmul %316, %321, %cst_201 {dimension_numbers = #tpu.dot_dimension_numbers<[1], [0], [0], [1], [0, 0, 1, 1], [], []>} : vector<16x16xbf16>, vector<16x512xbf16>, vector<16x512xf32> -> vector<16x512xf32>
    %323 = arith.addf %315, %322 : vector<16x512xf32>
    %c0_202 = arith.constant 0 : index
    %c0_203 = arith.constant 0 : index
    %324 = vector.load %arg12[%c0_202, %c0_203] : memref<16x1xf32, #tpu.memory_space<vmem>>, vector<16x1xf32>
    %325 = vector.broadcast %324 : vector<16x1xf32> to vector<16x512xf32>
    %326 = arith.addf %323, %325 : vector<16x512xf32>
    %cst_204 = arith.constant 0.000000e+00 : f32
    %327 = vector.broadcast %cst_204 : f32 to vector<16x512xf32>
    %328 = arith.maximumf %326, %327 : vector<16x512xf32>
    %c0_205 = arith.constant 0 : index
    %c0_206 = arith.constant 0 : index
    %329 = vector.load %arg13[%c0_205, %c0_206] : memref<1x144xbf16, #tpu.memory_space<vmem>>, vector<1x16xbf16>
    %c17_i32_207 = arith.constant 17 : i32
    %330 = tpu.dynamic_rotate %328 by %c17_i32_207 dim 1 : vector<16x512xf32>, i32 -> vector<16x512xf32>
    %c0_208 = arith.constant 0 : index
    %c0_209 = arith.constant 0 : index
    %331 = vector.load %arg2[%c0_208, %c0_209] : memref<9x1024xf32, #tpu.memory_space<vmem>>, vector<1x512xf32>
    %332 = vector.broadcast %331 : vector<1x512xf32> to vector<16x512xf32>
    %333 = arith.mulf %330, %332 : vector<16x512xf32>
    %334 = arith.truncf %333 : vector<16x512xf32> to vector<16x512xbf16>
    %cst_210 = arith.constant dense<0.000000e+00> : vector<1x512xf32>
    %335 = tpu.matmul %329, %334, %cst_210 {dimension_numbers = #tpu.dot_dimension_numbers<[1], [0], [0], [1], [0, 0, 1, 1], [], []>} : vector<1x16xbf16>, vector<16x512xbf16>, vector<1x512xf32> -> vector<1x512xf32>
    %c0_211 = arith.constant 0 : index
    %c16_212 = arith.constant 16 : index
    %336 = vector.load %arg13[%c0_211, %c16_212] : memref<1x144xbf16, #tpu.memory_space<vmem>>, vector<1x16xbf16>
    %c16_i32_213 = arith.constant 16 : i32
    %337 = tpu.dynamic_rotate %328 by %c16_i32_213 dim 1 : vector<16x512xf32>, i32 -> vector<16x512xf32>
    %c1_214 = arith.constant 1 : index
    %c0_215 = arith.constant 0 : index
    %338 = vector.load %arg2[%c1_214, %c0_215] : memref<9x1024xf32, #tpu.memory_space<vmem>>, vector<1x512xf32>
    %339 = vector.broadcast %338 : vector<1x512xf32> to vector<16x512xf32>
    %340 = arith.mulf %337, %339 : vector<16x512xf32>
    %341 = arith.truncf %340 : vector<16x512xf32> to vector<16x512xbf16>
    %cst_216 = arith.constant dense<0.000000e+00> : vector<1x512xf32>
    %342 = tpu.matmul %336, %341, %cst_216 {dimension_numbers = #tpu.dot_dimension_numbers<[1], [0], [0], [1], [0, 0, 1, 1], [], []>} : vector<1x16xbf16>, vector<16x512xbf16>, vector<1x512xf32> -> vector<1x512xf32>
    %343 = arith.addf %335, %342 : vector<1x512xf32>
    %c0_217 = arith.constant 0 : index
    %c32_218 = arith.constant 32 : index
    %344 = vector.load %arg13[%c0_217, %c32_218] : memref<1x144xbf16, #tpu.memory_space<vmem>>, vector<1x16xbf16>
    %c15_i32_219 = arith.constant 15 : i32
    %345 = tpu.dynamic_rotate %328 by %c15_i32_219 dim 1 : vector<16x512xf32>, i32 -> vector<16x512xf32>
    %c2_220 = arith.constant 2 : index
    %c0_221 = arith.constant 0 : index
    %346 = vector.load %arg2[%c2_220, %c0_221] : memref<9x1024xf32, #tpu.memory_space<vmem>>, vector<1x512xf32>
    %347 = vector.broadcast %346 : vector<1x512xf32> to vector<16x512xf32>
    %348 = arith.mulf %345, %347 : vector<16x512xf32>
    %349 = arith.truncf %348 : vector<16x512xf32> to vector<16x512xbf16>
    %cst_222 = arith.constant dense<0.000000e+00> : vector<1x512xf32>
    %350 = tpu.matmul %344, %349, %cst_222 {dimension_numbers = #tpu.dot_dimension_numbers<[1], [0], [0], [1], [0, 0, 1, 1], [], []>} : vector<1x16xbf16>, vector<16x512xbf16>, vector<1x512xf32> -> vector<1x512xf32>
    %351 = arith.addf %343, %350 : vector<1x512xf32>
    %c0_223 = arith.constant 0 : index
    %c48_224 = arith.constant 48 : index
    %352 = vector.load %arg13[%c0_223, %c48_224] : memref<1x144xbf16, #tpu.memory_space<vmem>>, vector<1x16xbf16>
    %c1_i32_225 = arith.constant 1 : i32
    %353 = tpu.dynamic_rotate %328 by %c1_i32_225 dim 1 : vector<16x512xf32>, i32 -> vector<16x512xf32>
    %c3_226 = arith.constant 3 : index
    %c0_227 = arith.constant 0 : index
    %354 = vector.load %arg2[%c3_226, %c0_227] : memref<9x1024xf32, #tpu.memory_space<vmem>>, vector<1x512xf32>
    %355 = vector.broadcast %354 : vector<1x512xf32> to vector<16x512xf32>
    %356 = arith.mulf %353, %355 : vector<16x512xf32>
    %357 = arith.truncf %356 : vector<16x512xf32> to vector<16x512xbf16>
    %cst_228 = arith.constant dense<0.000000e+00> : vector<1x512xf32>
    %358 = tpu.matmul %352, %357, %cst_228 {dimension_numbers = #tpu.dot_dimension_numbers<[1], [0], [0], [1], [0, 0, 1, 1], [], []>} : vector<1x16xbf16>, vector<16x512xbf16>, vector<1x512xf32> -> vector<1x512xf32>
    %359 = arith.addf %351, %358 : vector<1x512xf32>
    %c0_229 = arith.constant 0 : index
    %c64_230 = arith.constant 64 : index
    %360 = vector.load %arg13[%c0_229, %c64_230] : memref<1x144xbf16, #tpu.memory_space<vmem>>, vector<1x16xbf16>
    %c4_231 = arith.constant 4 : index
    %c0_232 = arith.constant 0 : index
    %361 = vector.load %arg2[%c4_231, %c0_232] : memref<9x1024xf32, #tpu.memory_space<vmem>>, vector<1x512xf32>
    %362 = vector.broadcast %361 : vector<1x512xf32> to vector<16x512xf32>
    %363 = arith.mulf %328, %362 : vector<16x512xf32>
    %364 = arith.truncf %363 : vector<16x512xf32> to vector<16x512xbf16>
    %cst_233 = arith.constant dense<0.000000e+00> : vector<1x512xf32>
    %365 = tpu.matmul %360, %364, %cst_233 {dimension_numbers = #tpu.dot_dimension_numbers<[1], [0], [0], [1], [0, 0, 1, 1], [], []>} : vector<1x16xbf16>, vector<16x512xbf16>, vector<1x512xf32> -> vector<1x512xf32>
    %366 = arith.addf %359, %365 : vector<1x512xf32>
    %c0_234 = arith.constant 0 : index
    %c80_235 = arith.constant 80 : index
    %367 = vector.load %arg13[%c0_234, %c80_235] : memref<1x144xbf16, #tpu.memory_space<vmem>>, vector<1x16xbf16>
    %c511_i32_236 = arith.constant 511 : i32
    %368 = tpu.dynamic_rotate %328 by %c511_i32_236 dim 1 : vector<16x512xf32>, i32 -> vector<16x512xf32>
    %c5_237 = arith.constant 5 : index
    %c0_238 = arith.constant 0 : index
    %369 = vector.load %arg2[%c5_237, %c0_238] : memref<9x1024xf32, #tpu.memory_space<vmem>>, vector<1x512xf32>
    %370 = vector.broadcast %369 : vector<1x512xf32> to vector<16x512xf32>
    %371 = arith.mulf %368, %370 : vector<16x512xf32>
    %372 = arith.truncf %371 : vector<16x512xf32> to vector<16x512xbf16>
    %cst_239 = arith.constant dense<0.000000e+00> : vector<1x512xf32>
    %373 = tpu.matmul %367, %372, %cst_239 {dimension_numbers = #tpu.dot_dimension_numbers<[1], [0], [0], [1], [0, 0, 1, 1], [], []>} : vector<1x16xbf16>, vector<16x512xbf16>, vector<1x512xf32> -> vector<1x512xf32>
    %374 = arith.addf %366, %373 : vector<1x512xf32>
    %c0_240 = arith.constant 0 : index
    %c96_241 = arith.constant 96 : index
    %375 = vector.load %arg13[%c0_240, %c96_241] : memref<1x144xbf16, #tpu.memory_space<vmem>>, vector<1x16xbf16>
    %c497_i32_242 = arith.constant 497 : i32
    %376 = tpu.dynamic_rotate %328 by %c497_i32_242 dim 1 : vector<16x512xf32>, i32 -> vector<16x512xf32>
    %c6_243 = arith.constant 6 : index
    %c0_244 = arith.constant 0 : index
    %377 = vector.load %arg2[%c6_243, %c0_244] : memref<9x1024xf32, #tpu.memory_space<vmem>>, vector<1x512xf32>
    %378 = vector.broadcast %377 : vector<1x512xf32> to vector<16x512xf32>
    %379 = arith.mulf %376, %378 : vector<16x512xf32>
    %380 = arith.truncf %379 : vector<16x512xf32> to vector<16x512xbf16>
    %cst_245 = arith.constant dense<0.000000e+00> : vector<1x512xf32>
    %381 = tpu.matmul %375, %380, %cst_245 {dimension_numbers = #tpu.dot_dimension_numbers<[1], [0], [0], [1], [0, 0, 1, 1], [], []>} : vector<1x16xbf16>, vector<16x512xbf16>, vector<1x512xf32> -> vector<1x512xf32>
    %382 = arith.addf %374, %381 : vector<1x512xf32>
    %c0_246 = arith.constant 0 : index
    %c112_247 = arith.constant 112 : index
    %383 = vector.load %arg13[%c0_246, %c112_247] : memref<1x144xbf16, #tpu.memory_space<vmem>>, vector<1x16xbf16>
    %c496_i32_248 = arith.constant 496 : i32
    %384 = tpu.dynamic_rotate %328 by %c496_i32_248 dim 1 : vector<16x512xf32>, i32 -> vector<16x512xf32>
    %c7_249 = arith.constant 7 : index
    %c0_250 = arith.constant 0 : index
    %385 = vector.load %arg2[%c7_249, %c0_250] : memref<9x1024xf32, #tpu.memory_space<vmem>>, vector<1x512xf32>
    %386 = vector.broadcast %385 : vector<1x512xf32> to vector<16x512xf32>
    %387 = arith.mulf %384, %386 : vector<16x512xf32>
    %388 = arith.truncf %387 : vector<16x512xf32> to vector<16x512xbf16>
    %cst_251 = arith.constant dense<0.000000e+00> : vector<1x512xf32>
    %389 = tpu.matmul %383, %388, %cst_251 {dimension_numbers = #tpu.dot_dimension_numbers<[1], [0], [0], [1], [0, 0, 1, 1], [], []>} : vector<1x16xbf16>, vector<16x512xbf16>, vector<1x512xf32> -> vector<1x512xf32>
    %390 = arith.addf %382, %389 : vector<1x512xf32>
    %c0_252 = arith.constant 0 : index
    %c128_253 = arith.constant 128 : index
    %391 = vector.load %arg13[%c0_252, %c128_253] : memref<1x144xbf16, #tpu.memory_space<vmem>>, vector<1x16xbf16>
    %c495_i32_254 = arith.constant 495 : i32
    %392 = tpu.dynamic_rotate %328 by %c495_i32_254 dim 1 : vector<16x512xf32>, i32 -> vector<16x512xf32>
    %c8_255 = arith.constant 8 : index
    %c0_256 = arith.constant 0 : index
    %393 = vector.load %arg2[%c8_255, %c0_256] : memref<9x1024xf32, #tpu.memory_space<vmem>>, vector<1x512xf32>
    %394 = vector.broadcast %393 : vector<1x512xf32> to vector<16x512xf32>
    %395 = arith.mulf %392, %394 : vector<16x512xf32>
    %396 = arith.truncf %395 : vector<16x512xf32> to vector<16x512xbf16>
    %cst_257 = arith.constant dense<0.000000e+00> : vector<1x512xf32>
    %397 = tpu.matmul %391, %396, %cst_257 {dimension_numbers = #tpu.dot_dimension_numbers<[1], [0], [0], [1], [0, 0, 1, 1], [], []>} : vector<1x16xbf16>, vector<16x512xbf16>, vector<1x512xf32> -> vector<1x512xf32>
    %398 = arith.addf %390, %397 : vector<1x512xf32>
    %c0_258 = arith.constant 0 : index
    %c0_259 = arith.constant 0 : index
    %399 = vector.load %arg14[%c0_258, %c0_259] : memref<1x1xf32, #tpu.memory_space<vmem>>, vector<1x1xf32>
    %400 = vector.broadcast %399 : vector<1x1xf32> to vector<1x512xf32>
    %401 = arith.addf %398, %400 : vector<1x512xf32>
    %402 = arith.negf %401 : vector<1x512xf32>
    %403 = math.exp %402 : vector<1x512xf32>
    %cst_260 = arith.constant 1.000000e+00 : f32
    %404 = vector.broadcast %cst_260 : f32 to vector<1x512xf32>
    %405 = arith.addf %404, %403 : vector<1x512xf32>
    %406 = arith.divf %404, %405 : vector<1x512xf32>
    %407 = tpu.concatenate %198, %406, %199 in 0 : vector<1x512xf32>, vector<1x512xf32>, vector<1x512xf32> -> vector<3x512xf32>
    %408 = vector.shape_cast %407 : vector<3x512xf32> to vector<1x3x512xf32>
    %c0_261 = arith.constant 0 : index
    %c0_262 = arith.constant 0 : index
    %c0_263 = arith.constant 0 : index
    %409 = vector.load %arg15[%c0_261, %c0_262, %c0_263] : memref<1x3x512xf32, #tpu.memory_space<vmem>>, vector<1x3x512xf32>
    tpu.vector_store %arg15[%c0_261, %c0_262, %c0_263], %408 {strides = array<i32>} : memref<1x3x512xf32, #tpu.memory_space<vmem>>, vector<1x3x512xf32>,
    return
  }
  func.func @transform_0(%arg0: i32) -> (i32, i32, i32) {
    %c0_i32 = arith.constant 0 : i32
    %c0_i32_0 = arith.constant 0 : i32
    %c0_i32_1 = arith.constant 0 : i32
    return %arg0, %c0_i32, %c0_i32_0 : i32, i32, i32
  }
  func.func @transform_1(%arg0: i32) -> (i32, i32) {
    %c0_i32 = arith.constant 0 : i32
    %c0_i32_0 = arith.constant 0 : i32
    %c0_i32_1 = arith.constant 0 : i32
    return %c0_i32, %c0_i32_0 : i32, i32
  }
  func.func @transform_2(%arg0: i32) -> (i32, i32) {
    %c0_i32 = arith.constant 0 : i32
    %c0_i32_0 = arith.constant 0 : i32
    %c0_i32_1 = arith.constant 0 : i32
    return %c0_i32, %c0_i32_0 : i32, i32
  }
  func.func @transform_3(%arg0: i32) -> (i32, i32) {
    %c0_i32 = arith.constant 0 : i32
    %c0_i32_0 = arith.constant 0 : i32
    %c0_i32_1 = arith.constant 0 : i32
    return %c0_i32, %c0_i32_0 : i32, i32
  }
  func.func @transform_4(%arg0: i32) -> (i32, i32) {
    %c0_i32 = arith.constant 0 : i32
    %c0_i32_0 = arith.constant 0 : i32
    %c0_i32_1 = arith.constant 0 : i32
    return %c0_i32, %c0_i32_0 : i32, i32
  }
  func.func @transform_5(%arg0: i32) -> (i32, i32) {
    %c0_i32 = arith.constant 0 : i32
    %c0_i32_0 = arith.constant 0 : i32
    %c0_i32_1 = arith.constant 0 : i32
    return %c0_i32, %c0_i32_0 : i32, i32
  }
  func.func @transform_6(%arg0: i32) -> (i32, i32) {
    %c0_i32 = arith.constant 0 : i32
    %c0_i32_0 = arith.constant 0 : i32
    %c0_i32_1 = arith.constant 0 : i32
    return %c0_i32, %c0_i32_0 : i32, i32
  }
  func.func @transform_7(%arg0: i32) -> (i32, i32) {
    %c0_i32 = arith.constant 0 : i32
    %c0_i32_0 = arith.constant 0 : i32
    %c0_i32_1 = arith.constant 0 : i32
    return %c0_i32, %c0_i32_0 : i32, i32
  }
  func.func @transform_8(%arg0: i32) -> (i32, i32) {
    %c0_i32 = arith.constant 0 : i32
    %c0_i32_0 = arith.constant 0 : i32
    %c0_i32_1 = arith.constant 0 : i32
    return %c0_i32, %c0_i32_0 : i32, i32
  }
  func.func @transform_9(%arg0: i32) -> (i32, i32) {
    %c0_i32 = arith.constant 0 : i32
    %c0_i32_0 = arith.constant 0 : i32
    %c0_i32_1 = arith.constant 0 : i32
    return %c0_i32, %c0_i32_0 : i32, i32
  }
  func.func @transform_10(%arg0: i32) -> (i32, i32) {
    %c0_i32 = arith.constant 0 : i32
    %c0_i32_0 = arith.constant 0 : i32
    %c0_i32_1 = arith.constant 0 : i32
    return %c0_i32, %c0_i32_0 : i32, i32
  }
  func.func @transform_11(%arg0: i32) -> (i32, i32) {
    %c0_i32 = arith.constant 0 : i32
    %c0_i32_0 = arith.constant 0 : i32
    %c0_i32_1 = arith.constant 0 : i32
    return %c0_i32, %c0_i32_0 : i32, i32
  }
  func.func @transform_12(%arg0: i32) -> (i32, i32) {
    %c0_i32 = arith.constant 0 : i32
    %c0_i32_0 = arith.constant 0 : i32
    %c0_i32_1 = arith.constant 0 : i32
    return %c0_i32, %c0_i32_0 : i32, i32
  }
  func.func @transform_13(%arg0: i32) -> (i32, i32) {
    %c0_i32 = arith.constant 0 : i32
    %c0_i32_0 = arith.constant 0 : i32
    %c0_i32_1 = arith.constant 0 : i32
    return %c0_i32, %c0_i32_0 : i32, i32
  }
  func.func @transform_14(%arg0: i32) -> (i32, i32, i32) {
    %c0_i32 = arith.constant 0 : i32
    %c0_i32_0 = arith.constant 0 : i32
    %c0_i32_1 = arith.constant 0 : i32
    return %arg0, %c0_i32, %c0_i32_0 : i32, i32, i32
  }
}

</mosaic_0001>

<llo_original>
// kernel: squeeze.3
$region0: #{squeeze.3}
  %s0 = inlined_call_operand.vmem [shape: f32[512], index: 0, kind: input, shape index: {}]
  %s1 = inlined_call_operand.hbm [shape: f32[2,1,16,16], index: 1, kind: output, shape index: {}]
  $region1: #{squeeze.3} parent=0
    #allocation0 [shape = 'u8[16384]{0}', space=vmem, size = 0x4000, scoped, tag = 'operand span for operand 1']
    #allocation1 [shape = 's32[1]{0}', space=sflag, size = 0x4, scoped, tag = 'scoped memory for squeeze.3']
    #allocation2 [shape = 'u8[4096]{0}', space=vmem, size = 0x1000, scoped, tag = 'scoped mem for input reshape']
    %2 = vsyncpa [#allocation1], 0
    %s4 = ssub.s32 16, 1
    %v5 = vld [vmem:[%s0] sm:%s4]
    %6 = vst [vmem:[#allocation2] sm:%s4] %v5
    %v7 = vld [vmem:[#allocation2] sm:$0xf]
    %vm8 = vcmask 130048
    %9 = vst.msk [vmem:[#allocation0] ss:$8 sm:$0xf] %vm8, %v7
    %v10 = vld [vmem:[#allocation2] sm:$0xf]
    %11 = vrot.lane.b32.xlu0 %v10, 112
    %v12 = vpop.permute.xlu0 %11
    %vm13 = vcmask 130048
    %s14 = scalar_lea.vmem [#allocation0], 1
    %15 = vst.msk [vmem:[%s14] ss:$8 sm:$0xf] %vm13, %v12
    %v16 = vld [vmem:[#allocation2] sm:$0xf]
    %17 = vrot.lane.b32.xlu0 %v16, 96
    %v18 = vpop.permute.xlu0 %17
    %vm19 = vcmask 130048
    %s20 = scalar_lea.vmem [#allocation0], 2
    %21 = vst.msk [vmem:[%s20] ss:$8 sm:$0xf] %vm19, %v18
    %v22 = vld [vmem:[#allocation2] sm:$0xf]
    %23 = vrot.lane.b32.xlu0 %v22, 80
    %v24 = vpop.permute.xlu0 %23
    %vm25 = vcmask 130048
    %s26 = scalar_lea.vmem [#allocation0], 3
    %27 = vst.msk [vmem:[%s26] ss:$8 sm:$0xf] %vm25, %v24
    %v28 = vld [vmem:[#allocation2] sm:$0xf]
    %29 = vrot.lane.b32.xlu0 %v28, 64
    %v30 = vpop.permute.xlu0 %29
    %vm31 = vcmask 130048
    %s32 = scalar_lea.vmem [#allocation0], 4
    %33 = vst.msk [vmem:[%s32] ss:$8 sm:$0xf] %vm31, %v30
    %v34 = vld [vmem:[#allocation2] sm:$0xf]
    %35 = vrot.lane.b32.xlu0 %v34, 48
    %v36 = vpop.permute.xlu0 %35
    %vm37 = vcmask 130048
    %s38 = scalar_lea.vmem [#allocation0], 5
    %39 = vst.msk [vmem:[%s38] ss:$8 sm:$0xf] %vm37, %v36
    %v40 = vld [vmem:[#allocation2] sm:$0xf]
    %41 = vrot.lane.b32.xlu0 %v40, 32
    %v42 = vpop.permute.xlu0 %41
    %vm43 = vcmask 130048
    %s44 = scalar_lea.vmem [#allocation0], 6
    %45 = vst.msk [vmem:[%s44] ss:$8 sm:$0xf] %vm43, %v42
    %v46 = vld [vmem:[#allocation2] sm:$0xf]
    %47 = vrot.lane.b32.xlu0 %v46, 16
    %v48 = vpop.permute.xlu0 %47
    %vm49 = vcmask 130048
    %s50 = scalar_lea.vmem [#allocation0], 7
    %51 = vst.msk [vmem:[%s50] ss:$8 sm:$0xf] %vm49, %v48
    %53 = vsyncadd [#allocation1], 0
    %s55 = sshll.u32 [#allocation0], 4
    %s56 = int_to_ptr.vmem [resolvable:$true] %s55
    %s57 = sshll.u32 %s1, 4
    %s58 = int_to_ptr.hbm [resolvable:$true] %s57
    %60 = dma.vmem_to_hbm [thread:$0]  %s56, 512, %s58, [#allocation1]
    %62 = dma.done [#allocation1], 512
    %63 = vsyncpa [#allocation1], 1

// kernel: psi_forward.1
$region0: #{psi_forward.1}
  #allocation0 [shape = 'u32[]', space=smem, size = 0x4, offset = 0x4, fixed_abs, tag = 'smem constant byte address 0x4 - core index']
  #allocation1 [shape = 'u32[72,128]{1,0:T(1,128)}', space=vmem, size = 0x9000, scoped, tag = 'internal scratch']
  #allocation2 [shape = 'f32[1,1]{1,0:T(1,128)S(1)}', space=vmem, size = 0x200, scoped, tag = 'scoped memory for psi_forward.1']
  #allocation3 [shape = 'f32[1,1]{1,0:T(1,128)S(1)}', space=vmem, size = 0x200, scoped, tag = 'scoped memory for psi_forward.1']
  %s0 = inlined_call_operand.vmem [shape: f32[1,1,1024], index: 0, kind: input, shape index: {}]
  %s1 = inlined_call_operand.vmem [shape: f32[9,1024], index: 1, kind: input, shape index: {}]
  %s2 = inlined_call_operand.vmem [shape: bf16[16,9], index: 2, kind: input, shape index: {}]
  %s3 = inlined_call_operand.vmem [shape: f32[16,1], index: 3, kind: input, shape index: {}]
  %s4 = inlined_call_operand.vmem [shape: bf16[16,144], index: 4, kind: input, shape index: {}]
  %s5 = inlined_call_operand.vmem [shape: f32[16,1], index: 5, kind: input, shape index: {}]
  %s6 = inlined_call_operand.vmem [shape: bf16[1,144], index: 6, kind: input, shape index: {}]
  %s7 = inlined_call_operand.<no memory space> [shape: f32[1,1], index: 7, kind: input, shape index: {}]
  %s8 = inlined_call_operand.vmem [shape: bf16[16,18], index: 8, kind: input, shape index: {}]
  %s9 = inlined_call_operand.vmem [shape: f32[16,1], index: 9, kind: input, shape index: {}]
  %s10 = inlined_call_operand.vmem [shape: bf16[16,144], index: 10, kind: input, shape index: {}]
  %s11 = inlined_call_operand.vmem [shape: f32[16,1], index: 11, kind: input, shape index: {}]
  %s12 = inlined_call_operand.vmem [shape: bf16[1,144], index: 12, kind: input, shape index: {}]
  %s13 = inlined_call_operand.<no memory space> [shape: f32[1,1], index: 13, kind: input, shape index: {}]
  %s14 = inlined_call_operand.vmem [shape: f32[1,3,512], index: 14, kind: output, shape index: {}]
  %s15 = sld [smem:[#allocation0]]
  $region66: #{psi_forward.1} parent=0
    _
  %s17 = ssub.s32 1, %s15
  %s18 = scalar_select 0, %s17, %s15
  %v19 = vstv %s7
  %20 = vst [vmem:[#allocation2] sm:$0x1] %v19
  %v21 = vstv %s13
  %22 = vst [vmem:[#allocation3] sm:$0x1] %v21
  // Predicated region
  $region2: #{psi_forward.1} parent=0 // pred_check
    _
  $region3: #{psi_forward.1} parent=0 // pred_check_branch
    %24 = sbr.rel (0) target = $region5
  $region4: #{psi_forward.1} parent=0 // pred_region
    _
  $region5: #{psi_forward.1} parent=0 // pred_fallthru
    _
  // Predicated region
  $region6: #{psi_forward.1} parent=0 // pred_check
    _
  $region7: #{psi_forward.1} parent=0 // pred_check_branch
    %26 = sbr.rel (0) target = $region9
  $region8: #{psi_forward.1} parent=0 // pred_region
    _
  $region9: #{psi_forward.1} parent=0 // pred_fallthru
    _
  // Predicated region
  $region10: #{psi_forward.1} parent=0 // pred_check
    _
  $region11: #{psi_forward.1} parent=0 // pred_check_branch
    %28 = sbr.rel (0) target = $region13
  $region12: #{psi_forward.1} parent=0 // pred_region
    _
  $region13: #{psi_forward.1} parent=0 // pred_fallthru
    _
  // Predicated region
  $region14: #{psi_forward.1} parent=0 // pred_check
    _
  $region15: #{psi_forward.1} parent=0 // pred_check_branch
    %30 = sbr.rel (0) target = $region17
  $region16: #{psi_forward.1} parent=0 // pred_region
    _
  $region17: #{psi_forward.1} parent=0 // pred_fallthru
    _
  // Predicated region
  $region18: #{psi_forward.1} parent=0 // pred_check
    _
  $region19: #{psi_forward.1} parent=0 // pred_check_branch
    %32 = sbr.rel (0) target = $region21
  $region20: #{psi_forward.1} parent=0 // pred_region
    _
  $region21: #{psi_forward.1} parent=0 // pred_fallthru
    _
  // Predicated region
  $region22: #{psi_forward.1} parent=0 // pred_check
    _
  $region23: #{psi_forward.1} parent=0 // pred_check_branch
    %34 = sbr.rel (0) target = $region25
  $region24: #{psi_forward.1} parent=0 // pred_region
    _
  $region25: #{psi_forward.1} parent=0 // pred_fallthru
    _
  // Predicated region
  $region26: #{psi_forward.1} parent=0 // pred_check
    _
  $region27: #{psi_forward.1} parent=0 // pred_check_branch
    %36 = sbr.rel (0) target = $region29
  $region28: #{psi_forward.1} parent=0 // pred_region
    _
  $region29: #{psi_forward.1} parent=0 // pred_fallthru
    _
  // Predicated region
  $region30: #{psi_forward.1} parent=0 // pred_check
    _
  $region31: #{psi_forward.1} parent=0 // pred_check_branch
    %38 = sbr.rel (0) target = $region33
  $region32: #{psi_forward.1} parent=0 // pred_region
    _
  $region33: #{psi_forward.1} parent=0 // pred_fallthru
    _
  // Predicated region
  $region34: #{psi_forward.1} parent=0 // pred_check
    _
  $region35: #{psi_forward.1} parent=0 // pred_check_branch
    %40 = sbr.rel (0) target = $region37
  $region36: #{psi_forward.1} parent=0 // pred_region
    _
  $region37: #{psi_forward.1} parent=0 // pred_fallthru
    _
  // Predicated region
  $region38: #{psi_forward.1} parent=0 // pred_check
    _
  $region39: #{psi_forward.1} parent=0 // pred_check_branch
    %42 = sbr.rel (0) target = $region41
  $region40: #{psi_forward.1} parent=0 // pred_region
    _
  $region41: #{psi_forward.1} parent=0 // pred_fallthru
    _
  // Predicated region
  $region42: #{psi_forward.1} parent=0 // pred_check
    _
  $region43: #{psi_forward.1} parent=0 // pred_check_branch
    %44 = sbr.rel (0) target = $region45
  $region44: #{psi_forward.1} parent=0 // pred_region
    _
  $region45: #{psi_forward.1} parent=0 // pred_fallthru
    _
  // Predicated region
  $region46: #{psi_forward.1} parent=0 // pred_check
    _
  $region47: #{psi_forward.1} parent=0 // pred_check_branch
    %46 = sbr.rel (0) target = $region49
  $region48: #{psi_forward.1} parent=0 // pred_region
    _
  $region49: #{psi_forward.1} parent=0 // pred_fallthru
    _
  // Predicated region
  $region50: #{psi_forward.1} parent=0 // pred_check
    _
  $region51: #{psi_forward.1} parent=0 // pred_check_branch
    %48 = sbr.rel (0) target = $region53
  $region52: #{psi_forward.1} parent=0 // pred_region
    _
  $region53: #{psi_forward.1} parent=0 // pred_fallthru
    _
  // Predicated region
  $region54: #{psi_forward.1} parent=0 // pred_check
    _
  $region55: #{psi_forward.1} parent=0 // pred_check_branch
    %50 = sbr.rel (0) target = $region57
  $region56: #{psi_forward.1} parent=0 // pred_region
    _
  $region57: #{psi_forward.1} parent=0 // pred_fallthru
    _
  %v52 = vld [vmem:[%s0] sm:$0xff]
  %v54 = vperm.slane %v52, 0
  %v55 = vperm.slane %v52, 1
  %v56 = vperm.slane %v52, 2
  %v57 = vperm.slane %v52, 3
  %v58 = vperm.slane %v52, 4
  %v59 = vperm.slane %v52, 5
  %v60 = vperm.slane %v52, 6
  %v61 = vperm.slane %v52, 7
  %70 = vrot.lane.b32.xlu0 %v54, 17
  %v71 = vpop.permute.xlu0 %70
  %72 = vrot.lane.b32.xlu0 %v55, 17
  %v73 = vpop.permute.xlu0 %72
  %74 = vrot.lane.b32.xlu0 %v56, 17
  %v75 = vpop.permute.xlu0 %74
  %76 = vrot.lane.b32.xlu0 %v57, 17
  %v77 = vpop.permute.xlu0 %76
  %78 = vrot.lane.b32.xlu0 %v58, 17
  %v79 = vpop.permute.xlu0 %78
  %80 = vrot.lane.b32.xlu0 %v59, 17
  %v81 = vpop.permute.xlu0 %80
  %82 = vrot.lane.b32.xlu0 %v60, 17
  %v83 = vpop.permute.xlu0 %82
  %84 = vrot.lane.b32.xlu0 %v61, 17
  %v85 = vpop.permute.xlu0 %84
  %v86 = vlaneseq
  %v87 = vand.u32 %v86, 127
  %vm88 = vcmp.lt.s32.totalorder %v87, 17
  %v89 = vsel %vm88, %v83, %v85
  %v90 = vsel %vm88, %v81, %v83
  %v91 = vsel %vm88, %v79, %v81
  %v92 = vsel %vm88, %v77, %v79
  %v93 = vsel %vm88, %v75, %v77
  %v94 = vsel %vm88, %v73, %v75
  %v95 = vsel %vm88, %v71, %v73
  %v96 = vsel %vm88, %v85, %v71
  %v97 = vld [vmem:[%s1] ss:$8 sm:$0xf]
  %v98 = vld [vmem:[%s1] ss:$8 sm:$0xf0]
  %v99 = vor.u32 %v97, %v98
  %v101 = vperm.slane %v99, 0
  %v102 = vperm.slane %v99, 1
  %v103 = vperm.slane %v99, 2
  %v104 = vperm.slane %v99, 3
  %v105 = vperm.slane %v99, 4
  %v106 = vperm.slane %v99, 5
  %v107 = vperm.slane %v99, 6
  %v108 = vperm.slane %v99, 7
  %v117 = vmul.f32 %v96, %v101
  %v118 = vmul.f32 %v95, %v102
  %v119 = vmul.f32 %v94, %v103
  %v120 = vmul.f32 %v93, %v104
  %v121 = vmul.f32 %v92, %v105
  %v122 = vmul.f32 %v91, %v106
  %v123 = vmul.f32 %v90, %v107
  %v124 = vmul.f32 %v89, %v108
  %v125 = vpack.c.bf16 %v118, %v117
  %v126 = vpack.c.bf16 %v120, %v119
  %v127 = vpack.c.bf16 %v122, %v121
  %v128 = vpack.c.bf16 %v124, %v123
  %129 = vrot.lane.b32.xlu0 %v54, 16
  %v130 = vpop.permute.xlu0 %129
  %131 = vrot.lane.b32.xlu0 %v55, 16
  %v132 = vpop.permute.xlu0 %131
  %133 = vrot.lane.b32.xlu0 %v56, 16
  %v134 = vpop.permute.xlu0 %133
  %135 = vrot.lane.b32.xlu0 %v57, 16
  %v136 = vpop.permute.xlu0 %135
  %137 = vrot.lane.b32.xlu0 %v58, 16
  %v138 = vpop.permute.xlu0 %137
  %139 = vrot.lane.b32.xlu0 %v59, 16
  %v140 = vpop.permute.xlu0 %139
  %141 = vrot.lane.b32.xlu0 %v60, 16
  %v142 = vpop.permute.xlu0 %141
  %143 = vrot.lane.b32.xlu0 %v61, 16
  %v144 = vpop.permute.xlu0 %143
  %vm145 = vcmp.lt.s32.totalorder %v87, 16
  %v146 = vsel %vm145, %v142, %v144
  %v147 = vsel %vm145, %v140, %v142
  %v148 = vsel %vm145, %v138, %v140
  %v149 = vsel %vm145, %v136, %v138
  %v150 = vsel %vm145, %v134, %v136
  %v151 = vsel %vm145, %v132, %v134
  %v152 = vsel %vm145, %v130, %v132
  %v153 = vsel %vm145, %v144, %v130
  %s154 = scalar_lea.vmem %s1, 1
  %v155 = vld [vmem:[%s154] ss:$8 sm:$0xf]
  %v156 = vld [vmem:[%s154] ss:$8 sm:$0xf0]
  %v157 = vor.u32 %v155, %v156
  %v159 = vperm.slane %v157, 0
  %v160 = vperm.slane %v157, 1
  %v161 = vperm.slane %v157, 2
  %v162 = vperm.slane %v157, 3
  %v163 = vperm.slane %v157, 4
  %v164 = vperm.slane %v157, 5
  %v165 = vperm.slane %v157, 6
  %v166 = vperm.slane %v157, 7
  %v175 = vmul.f32 %v153, %v159
  %v176 = vmul.f32 %v152, %v160
  %v177 = vmul.f32 %v151, %v161
  %v178 = vmul.f32 %v150, %v162
  %v179 = vmul.f32 %v149, %v163
  %v180 = vmul.f32 %v148, %v164
  %v181 = vmul.f32 %v147, %v165
  %v182 = vmul.f32 %v146, %v166
  %v183 = vpack.c.bf16 %v176, %v175
  %v184 = vpack.c.bf16 %v178, %v177
  %v185 = vpack.c.bf16 %v180, %v179
  %v186 = vpack.c.bf16 %v182, %v181
  %187 = vrot.lane.b32.xlu0 %v54, 15
  %v188 = vpop.permute.xlu0 %187
  %189 = vrot.lane.b32.xlu0 %v55, 15
  %v190 = vpop.permute.xlu0 %189
  %191 = vrot.lane.b32.xlu0 %v56, 15
  %v192 = vpop.permute.xlu0 %191
  %193 = vrot.lane.b32.xlu0 %v57, 15
  %v194 = vpop.permute.xlu0 %193
  %195 = vrot.lane.b32.xlu0 %v58, 15
  %v196 = vpop.permute.xlu0 %195
  %197 = vrot.lane.b32.xlu0 %v59, 15
  %v198 = vpop.permute.xlu0 %197
  %199 = vrot.lane.b32.xlu0 %v60, 15
  %v200 = vpop.permute.xlu0 %199
  %201 = vrot.lane.b32.xlu0 %v61, 15
  %v202 = vpop.permute.xlu0 %201
  %vm203 = vcmp.lt.s32.totalorder %v87, 15
  %v204 = vsel %vm203, %v200, %v202
  %v205 = vsel %vm203, %v198, %v200
  %v206 = vsel %vm203, %v196, %v198
  %v207 = vsel %vm203, %v194, %v196
  %v208 = vsel %vm203, %v192, %v194
  %v209 = vsel %vm203, %v190, %v192
  %v210 = vsel %vm203, %v188, %v190
  %v211 = vsel %vm203, %v202, %v188
  %s212 = scalar_lea.vmem %s1, 2
  %v213 = vld [vmem:[%s212] ss:$8 sm:$0xf]
  %v214 = vld [vmem:[%s212] ss:$8 sm:$0xf0]
  %v215 = vor.u32 %v213, %v214
  %v217 = vperm.slane %v215, 0
  %v218 = vperm.slane %v215, 1
  %v219 = vperm.slane %v215, 2
  %v220 = vperm.slane %v215, 3
  %v221 = vperm.slane %v215, 4
  %v222 = vperm.slane %v215, 5
  %v223 = vperm.slane %v215, 6
  %v224 = vperm.slane %v215, 7
  %v233 = vmul.f32 %v211, %v217
  %v234 = vmul.f32 %v210, %v218
  %v235 = vmul.f32 %v209, %v219
  %v236 = vmul.f32 %v208, %v220
  %v237 = vmul.f32 %v207, %v221
  %v238 = vmul.f32 %v206, %v222
  %v239 = vmul.f32 %v205, %v223
  %v240 = vmul.f32 %v204, %v224
  %v241 = vpack.c.bf16 %v234, %v233
  %v242 = vpack.c.bf16 %v236, %v235
  %v243 = vpack.c.bf16 %v238, %v237
  %v244 = vpack.c.bf16 %v240, %v239
  %245 = vrot.lane.b32.xlu0 %v54, 1
  %v246 = vpop.permute.xlu0 %245
  %247 = vrot.lane.b32.xlu0 %v55, 1
  %v248 = vpop.permute.xlu0 %247
  %249 = vrot.lane.b32.xlu0 %v56, 1
  %v250 = vpop.permute.xlu0 %249
  %251 = vrot.lane.b32.xlu0 %v57, 1
  %v252 = vpop.permute.xlu0 %251
  %253 = vrot.lane.b32.xlu0 %v58, 1
  %v254 = vpop.permute.xlu0 %253
  %255 = vrot.lane.b32.xlu0 %v59, 1
  %v256 = vpop.permute.xlu0 %255
  %257 = vrot.lane.b32.xlu0 %v60, 1
  %v258 = vpop.permute.xlu0 %257
  %259 = vrot.lane.b32.xlu0 %v61, 1
  %v260 = vpop.permute.xlu0 %259
  %vm261 = vcmp.lt.s32.totalorder %v87, 1
  %v262 = vsel %vm261, %v258, %v260
  %v263 = vsel %vm261, %v256, %v258
  %v264 = vsel %vm261, %v254, %v256
  %v265 = vsel %vm261, %v252, %v254
  %v266 = vsel %vm261, %v250, %v252
  %v267 = vsel %vm261, %v248, %v250
  %v268 = vsel %vm261, %v246, %v248
  %v269 = vsel %vm261, %v260, %v246
  %s270 = scalar_lea.vmem %s1, 3
  %v271 = vld [vmem:[%s270] ss:$8 sm:$0xf]
  %v272 = vld [vmem:[%s270] ss:$8 sm:$0xf0]
  %v273 = vor.u32 %v271, %v272
  %v275 = vperm.slane %v273, 0
  %v276 = vperm.slane %v273, 1
  %v277 = vperm.slane %v273, 2
  %v278 = vperm.slane %v273, 3
  %v279 = vperm.slane %v273, 4
  %v280 = vperm.slane %v273, 5
  %v281 = vperm.slane %v273, 6
  %v282 = vperm.slane %v273, 7
  %v291 = vmul.f32 %v269, %v275
  %v292 = vmul.f32 %v268, %v276
  %v293 = vmul.f32 %v267, %v277
  %v294 = vmul.f32 %v266, %v278
  %v295 = vmul.f32 %v265, %v279
  %v296 = vmul.f32 %v264, %v280
  %v297 = vmul.f32 %v263, %v281
  %v298 = vmul.f32 %v262, %v282
  %v299 = vpack.c.bf16 %v292, %v291
  %v300 = vpack.c.bf16 %v294, %v293
  %v301 = vpack.c.bf16 %v296, %v295
  %v302 = vpack.c.bf16 %v298, %v297
  %s303 = scalar_lea.vmem %s1, 4
  %v304 = vld [vmem:[%s303] ss:$8 sm:$0xf]
  %v305 = vld [vmem:[%s303] ss:$8 sm:$0xf0]
  %v306 = vor.u32 %v304, %v305
  %v307 = vmul.f32 %v52, %v306
  %v309 = vperm.slane %v307, 0
  %v310 = vperm.slane %v307, 1
  %v311 = vperm.slane %v307, 2
  %v312 = vperm.slane %v307, 3
  %v313 = vperm.slane %v307, 4
  %v314 = vperm.slane %v307, 5
  %v315 = vperm.slane %v307, 6
  %v316 = vperm.slane %v307, 7
  %v325 = vpack.c.bf16 %v310, %v309
  %v326 = vpack.c.bf16 %v312, %v311
  %v327 = vpack.c.bf16 %v314, %v313
  %v328 = vpack.c.bf16 %v316, %v315
  %329 = vrot.lane.b32.xlu0 %v54, 127
  %v330 = vpop.permute.xlu0 %329
  %331 = vrot.lane.b32.xlu0 %v55, 127
  %v332 = vpop.permute.xlu0 %331
  %333 = vrot.lane.b32.xlu0 %v56, 127
  %v334 = vpop.permute.xlu0 %333
  %335 = vrot.lane.b32.xlu0 %v57, 127
  %v336 = vpop.permute.xlu0 %335
  %337 = vrot.lane.b32.xlu0 %v58, 127
  %v338 = vpop.permute.xlu0 %337
  %339 = vrot.lane.b32.xlu0 %v59, 127
  %v340 = vpop.permute.xlu0 %339
  %341 = vrot.lane.b32.xlu0 %v60, 127
  %v342 = vpop.permute.xlu0 %341
  %343 = vrot.lane.b32.xlu0 %v61, 127
  %v344 = vpop.permute.xlu0 %343
  %vm345 = vcmp.lt.s32.totalorder %v87, 127
  %v346 = vsel %vm345, %v342, %v344
  %v347 = vsel %vm345, %v340, %v342
  %v348 = vsel %vm345, %v338, %v340
  %v349 = vsel %vm345, %v336, %v338
  %v350 = vsel %vm345, %v334, %v336
  %v351 = vsel %vm345, %v332, %v334
  %v352 = vsel %vm345, %v330, %v332
  %v353 = vsel %vm345, %v344, %v330
  %s354 = scalar_lea.vmem %s1, 5
  %v355 = vld [vmem:[%s354] ss:$8 sm:$0xf]
  %v356 = vld [vmem:[%s354] ss:$8 sm:$0xf0]
  %v357 = vor.u32 %v355, %v356
  %v359 = vperm.slane %v357, 0
  %v360 = vperm.slane %v357, 1
  %v361 = vperm.slane %v357, 2
  %v362 = vperm.slane %v357, 3
  %v363 = vperm.slane %v357, 4
  %v364 = vperm.slane %v357, 5
  %v365 = vperm.slane %v357, 6
  %v366 = vperm.slane %v357, 7
  %v375 = vmul.f32 %v352, %v359
  %v376 = vmul.f32 %v351, %v360
  %v377 = vmul.f32 %v350, %v361
  %v378 = vmul.f32 %v349, %v362
  %v379 = vmul.f32 %v348, %v363
  %v380 = vmul.f32 %v347, %v364
  %v381 = vmul.f32 %v346, %v365
  %v382 = vmul.f32 %v353, %v366
  %v383 = vpack.c.bf16 %v376, %v375
  %v384 = vpack.c.bf16 %v378, %v377
  %v385 = vpack.c.bf16 %v380, %v379
  %v386 = vpack.c.bf16 %v382, %v381
  %387 = vrot.lane.b32.xlu0 %v54, 113
  %v388 = vpop.permute.xlu0 %387
  %389 = vrot.lane.b32.xlu0 %v55, 113
  %v390 = vpop.permute.xlu0 %389
  %391 = vrot.lane.b32.xlu0 %v56, 113
  %v392 = vpop.permute.xlu0 %391
  %393 = vrot.lane.b32.xlu0 %v57, 113
  %v394 = vpop.permute.xlu0 %393
  %395 = vrot.lane.b32.xlu0 %v58, 113
  %v396 = vpop.permute.xlu0 %395
  %397 = vrot.lane.b32.xlu0 %v59, 113
  %v398 = vpop.permute.xlu0 %397
  %399 = vrot.lane.b32.xlu0 %v60, 113
  %v400 = vpop.permute.xlu0 %399
  %401 = vrot.lane.b32.xlu0 %v61, 113
  %v402 = vpop.permute.xlu0 %401
  %vm403 = vcmp.lt.s32.totalorder %v87, 113
  %v404 = vsel %vm403, %v400, %v402
  %v405 = vsel %vm403, %v398, %v400
  %v406 = vsel %vm403, %v396, %v398
  %v407 = vsel %vm403, %v394, %v396
  %v408 = vsel %vm403, %v392, %v394
  %v409 = vsel %vm403, %v390, %v392
  %v410 = vsel %vm403, %v388, %v390
  %v411 = vsel %vm403, %v402, %v388
  %s412 = scalar_lea.vmem %s1, 6
  %v413 = vld [vmem:[%s412] ss:$8 sm:$0xf]
  %v414 = vld [vmem:[%s412] ss:$8 sm:$0xf0]
  %v415 = vor.u32 %v413, %v414
  %v417 = vperm.slane %v415, 0
  %v418 = vperm.slane %v415, 1
  %v419 = vperm.slane %v415, 2
  %v420 = vperm.slane %v415, 3
  %v421 = vperm.slane %v415, 4
  %v422 = vperm.slane %v415, 5
  %v423 = vperm.slane %v415, 6
  %v424 = vperm.slane %v415, 7
  %v433 = vmul.f32 %v410, %v417
  %v434 = vmul.f32 %v409, %v418
  %v435 = vmul.f32 %v408, %v419
  %v436 = vmul.f32 %v407, %v420
  %v437 = vmul.f32 %v406, %v421
  %v438 = vmul.f32 %v405, %v422
  %v439 = vmul.f32 %v404, %v423
  %v440 = vmul.f32 %v411, %v424
  %v441 = vpack.c.bf16 %v434, %v433
  %v442 = vpack.c.bf16 %v436, %v435
  %v443 = vpack.c.bf16 %v438, %v437
  %v444 = vpack.c.bf16 %v440, %v439
  %445 = vrot.lane.b32.xlu0 %v54, 112
  %v446 = vpop.permute.xlu0 %445
  %447 = vrot.lane.b32.xlu0 %v55, 112
  %v448 = vpop.permute.xlu0 %447
  %449 = vrot.lane.b32.xlu0 %v56, 112
  %v450 = vpop.permute.xlu0 %449
  %451 = vrot.lane.b32.xlu0 %v57, 112
  %v452 = vpop.permute.xlu0 %451
  %453 = vrot.lane.b32.xlu0 %v58, 112
  %v454 = vpop.permute.xlu0 %453
  %455 = vrot.lane.b32.xlu0 %v59, 112
  %v456 = vpop.permute.xlu0 %455
  %457 = vrot.lane.b32.xlu0 %v60, 112
  %v458 = vpop.permute.xlu0 %457
  %459 = vrot.lane.b32.xlu0 %v61, 112
  %v460 = vpop.permute.xlu0 %459
  %vm461 = vcmp.lt.s32.totalorder %v87, 112
  %v462 = vsel %vm461, %v458, %v460
  %v463 = vsel %vm461, %v456, %v458
  %v464 = vsel %vm461, %v454, %v456
  %v465 = vsel %vm461, %v452, %v454
  %v466 = vsel %vm461, %v450, %v452
  %v467 = vsel %vm461, %v448, %v450
  %v468 = vsel %vm461, %v446, %v448
  %v469 = vsel %vm461, %v460, %v446
  %s470 = scalar_lea.vmem %s1, 7
  %v471 = vld [vmem:[%s470] ss:$8 sm:$0xf]
  %v472 = vld [vmem:[%s470] ss:$8 sm:$0xf0]
  %v473 = vor.u32 %v471, %v472
  %v475 = vperm.slane %v473, 0
  %v476 = vperm.slane %v473, 1
  %v477 = vperm.slane %v473, 2
  %v478 = vperm.slane %v473, 3
  %v479 = vperm.slane %v473, 4
  %v480 = vperm.slane %v473, 5
  %v481 = vperm.slane %v473, 6
  %v482 = vperm.slane %v473, 7
  %v491 = vmul.f32 %v468, %v475
  %v492 = vmul.f32 %v467, %v476
  %v493 = vmul.f32 %v466, %v477
  %v494 = vmul.f32 %v465, %v478
  %v495 = vmul.f32 %v464, %v479
  %v496 = vmul.f32 %v463, %v480
  %v497 = vmul.f32 %v462, %v481
  %v498 = vmul.f32 %v469, %v482
  %v499 = vpack.c.bf16 %v492, %v491
  %v500 = vpack.c.bf16 %v494, %v493
  %v501 = vpack.c.bf16 %v496, %v495
  %v502 = vpack.c.bf16 %v498, %v497
  %503 = vrot.lane.b32.xlu0 %v54, 111
  %v504 = vpop.permute.xlu0 %503
  %505 = vrot.lane.b32.xlu0 %v55, 111
  %v506 = vpop.permute.xlu0 %505
  %507 = vrot.lane.b32.xlu0 %v56, 111
  %v508 = vpop.permute.xlu0 %507
  %509 = vrot.lane.b32.xlu0 %v57, 111
  %v510 = vpop.permute.xlu0 %509
  %511 = vrot.lane.b32.xlu0 %v58, 111
  %v512 = vpop.permute.xlu0 %511
  %513 = vrot.lane.b32.xlu0 %v59, 111
  %v514 = vpop.permute.xlu0 %513
  %515 = vrot.lane.b32.xlu0 %v60, 111
  %v516 = vpop.permute.xlu0 %515
  %517 = vrot.lane.b32.xlu0 %v61, 111
  %v518 = vpop.permute.xlu0 %517
  %vm519 = vcmp.lt.s32.totalorder %v87, 111
  %v520 = vsel %vm519, %v516, %v518
  %v521 = vsel %vm519, %v514, %v516
  %v522 = vsel %vm519, %v512, %v514
  %v523 = vsel %vm519, %v510, %v512
  %v524 = vsel %vm519, %v508, %v510
  %v525 = vsel %vm519, %v506, %v508
  %v526 = vsel %vm519, %v504, %v506
  %v527 = vsel %vm519, %v518, %v504
  %s528 = scalar_lea.vmem %s1, 64
  %v529 = vld [vmem:[%s528] ss:$8 sm:$0xf]
  %v530 = vld [vmem:[%s528] ss:$8 sm:$0xf0]
  %v531 = vor.u32 %v529, %v530
  %v533 = vperm.slane %v531, 0
  %v534 = vperm.slane %v531, 1
  %v535 = vperm.slane %v531, 2
  %v536 = vperm.slane %v531, 3
  %v537 = vperm.slane %v531, 4
  %v538 = vperm.slane %v531, 5
  %v539 = vperm.slane %v531, 6
  %v540 = vperm.slane %v531, 7
  %v549 = vmul.f32 %v526, %v533
  %v550 = vmul.f32 %v525, %v534
  %v551 = vmul.f32 %v524, %v535
  %v552 = vmul.f32 %v523, %v536
  %v553 = vmul.f32 %v522, %v537
  %v554 = vmul.f32 %v521, %v538
  %v555 = vmul.f32 %v520, %v539
  %v556 = vmul.f32 %v527, %v540
  %v557 = vpack.c.bf16 %v550, %v549
  %v558 = vpack.c.bf16 %v552, %v551
  %v559 = vpack.c.bf16 %v554, %v553
  %v560 = vpack.c.bf16 %v556, %v555
  %v565 = vunpack.c.l.b16 %v125
  %v566 = vunpack.c.h.b16 %v125
  %v567 = vunpack.c.l.b16 %v126
  %v568 = vunpack.c.h.b16 %v126
  %v569 = vunpack.c.l.b16 %v127
  %v570 = vunpack.c.h.b16 %v127
  %v571 = vunpack.c.l.b16 %v128
  %v572 = vunpack.c.h.b16 %v128
  %v573 = vpack.c.b16 %v565, %v565
  %v574 = vpack.c.b16 %v566, %v566
  %v575 = vpack.c.b16 %v567, %v567
  %v576 = vpack.c.b16 %v568, %v568
  %v577 = vpack.c.b16 %v569, %v569
  %v578 = vpack.c.b16 %v570, %v570
  %v579 = vpack.c.b16 %v571, %v571
  %v580 = vpack.c.b16 %v572, %v572
  %v593 = vunpack.c.l.b16 %v183
  %v594 = vunpack.c.h.b16 %v183
  %v595 = vunpack.c.l.b16 %v184
  %v596 = vunpack.c.h.b16 %v184
  %v597 = vunpack.c.l.b16 %v185
  %v598 = vunpack.c.h.b16 %v185
  %v599 = vunpack.c.l.b16 %v186
  %v600 = vunpack.c.h.b16 %v186
  %v601 = vpack.c.b16 %v593, %v593
  %v602 = vpack.c.b16 %v594, %v594
  %v603 = vpack.c.b16 %v595, %v595
  %v604 = vpack.c.b16 %v596, %v596
  %v605 = vpack.c.b16 %v597, %v597
  %v606 = vpack.c.b16 %v598, %v598
  %v607 = vpack.c.b16 %v599, %v599
  %v608 = vpack.c.b16 %v600, %v600
  %v610 = vshll.u32 %v601, 16
  %v613 = vshll.u32 %v602, 16
  %v616 = vshll.u32 %v603, 16
  %v619 = vshll.u32 %v604, 16
  %v622 = vshll.u32 %v605, 16
  %v625 = vshll.u32 %v606, 16
  %v628 = vshll.u32 %v607, 16
  %v631 = vshll.u32 %v608, 16
  %v645 = vunpack.c.l.b16 %v241
  %v646 = vunpack.c.h.b16 %v241
  %v647 = vunpack.c.l.b16 %v242
  %v648 = vunpack.c.h.b16 %v242
  %v649 = vunpack.c.l.b16 %v243
  %v650 = vunpack.c.h.b16 %v243
  %v651 = vunpack.c.l.b16 %v244
  %v652 = vunpack.c.h.b16 %v244
  %v653 = vpack.c.b16 %v645, %v645
  %v654 = vpack.c.b16 %v646, %v646
  %v655 = vpack.c.b16 %v647, %v647
  %v656 = vpack.c.b16 %v648, %v648
  %v657 = vpack.c.b16 %v649, %v649
  %v658 = vpack.c.b16 %v650, %v650
  %v659 = vpack.c.b16 %v651, %v651
  %v660 = vpack.c.b16 %v652, %v652
  %v661 = vrot.slane %v653, 7
  %v662 = vrot.slane %v654, 7
  %v663 = vrot.slane %v655, 7
  %v664 = vrot.slane %v656, 7
  %v665 = vrot.slane %v657, 7
  %v666 = vrot.slane %v658, 7
  %v667 = vrot.slane %v659, 7
  %v668 = vrot.slane %v660, 7
  %v673 = vunpack.c.l.b16 %v299
  %v674 = vunpack.c.h.b16 %v299
  %v675 = vunpack.c.l.b16 %v300
  %v676 = vunpack.c.h.b16 %v300
  %v677 = vunpack.c.l.b16 %v301
  %v678 = vunpack.c.h.b16 %v301
  %v679 = vunpack.c.l.b16 %v302
  %v680 = vunpack.c.h.b16 %v302
  %v681 = vpack.c.b16 %v673, %v673
  %v682 = vpack.c.b16 %v674, %v674
  %v683 = vpack.c.b16 %v675, %v675
  %v684 = vpack.c.b16 %v676, %v676
  %v685 = vpack.c.b16 %v677, %v677
  %v686 = vpack.c.b16 %v678, %v678
  %v687 = vpack.c.b16 %v679, %v679
  %v688 = vpack.c.b16 %v680, %v680
  %v690 = vshll.u32 %v681, 16
  %v692 = vrot.slane %v690, 7
  %v694 = vshll.u32 %v682, 16
  %v696 = vrot.slane %v694, 7
  %v698 = vshll.u32 %v683, 16
  %v700 = vrot.slane %v698, 7
  %v702 = vshll.u32 %v684, 16
  %v704 = vrot.slane %v702, 7
  %v706 = vshll.u32 %v685, 16
  %v708 = vrot.slane %v706, 7
  %v710 = vshll.u32 %v686, 16
  %v712 = vrot.slane %v710, 7
  %v714 = vshll.u32 %v687, 16
  %v716 = vrot.slane %v714, 7
  %v718 = vshll.u32 %v688, 16
  %v720 = vrot.slane %v718, 7
  %v733 = vunpack.c.l.b16 %v325
  %v734 = vunpack.c.h.b16 %v325
  %v735 = vunpack.c.l.b16 %v326
  %v736 = vunpack.c.h.b16 %v326
  %v737 = vunpack.c.l.b16 %v327
  %v738 = vunpack.c.h.b16 %v327
  %v739 = vunpack.c.l.b16 %v328
  %v740 = vunpack.c.h.b16 %v328
  %v741 = vpack.c.b16 %v733, %v733
  %v742 = vpack.c.b16 %v734, %v734
  %v743 = vpack.c.b16 %v735, %v735
  %v744 = vpack.c.b16 %v736, %v736
  %v745 = vpack.c.b16 %v737, %v737
  %v746 = vpack.c.b16 %v738, %v738
  %v747 = vpack.c.b16 %v739, %v739
  %v748 = vpack.c.b16 %v740, %v740
  %v749 = vrot.slane %v741, 6
  %v750 = vrot.slane %v742, 6
  %v751 = vrot.slane %v743, 6
  %v752 = vrot.slane %v744, 6
  %v753 = vrot.slane %v745, 6
  %v754 = vrot.slane %v746, 6
  %v755 = vrot.slane %v747, 6
  %v756 = vrot.slane %v748, 6
  %v761 = vunpack.c.l.b16 %v383
  %v762 = vunpack.c.h.b16 %v383
  %v763 = vunpack.c.l.b16 %v384
  %v764 = vunpack.c.h.b16 %v384
  %v765 = vunpack.c.l.b16 %v385
  %v766 = vunpack.c.h.b16 %v385
  %v767 = vunpack.c.l.b16 %v386
  %v768 = vunpack.c.h.b16 %v386
  %v769 = vpack.c.b16 %v761, %v761
  %v770 = vpack.c.b16 %v762, %v762
  %v771 = vpack.c.b16 %v763, %v763
  %v772 = vpack.c.b16 %v764, %v764
  %v773 = vpack.c.b16 %v765, %v765
  %v774 = vpack.c.b16 %v766, %v766
  %v775 = vpack.c.b16 %v767, %v767
  %v776 = vpack.c.b16 %v768, %v768
  %v778 = vshll.u32 %v769, 16
  %v780 = vrot.slane %v778, 6
  %v782 = vshll.u32 %v770, 16
  %v784 = vrot.slane %v782, 6
  %v786 = vshll.u32 %v771, 16
  %v788 = vrot.slane %v786, 6
  %v790 = vshll.u32 %v772, 16
  %v792 = vrot.slane %v790, 6
  %v794 = vshll.u32 %v773, 16
  %v796 = vrot.slane %v794, 6
  %v798 = vshll.u32 %v774, 16
  %v800 = vrot.slane %v798, 6
  %v802 = vshll.u32 %v775, 16
  %v804 = vrot.slane %v802, 6
  %v806 = vshll.u32 %v776, 16
  %v808 = vrot.slane %v806, 6
  %v821 = vunpack.c.l.b16 %v441
  %v822 = vunpack.c.h.b16 %v441
  %v823 = vunpack.c.l.b16 %v442
  %v824 = vunpack.c.h.b16 %v442
  %v825 = vunpack.c.l.b16 %v443
  %v826 = vunpack.c.h.b16 %v443
  %v827 = vunpack.c.l.b16 %v444
  %v828 = vunpack.c.h.b16 %v444
  %v829 = vpack.c.b16 %v821, %v821
  %v830 = vpack.c.b16 %v822, %v822
  %v831 = vpack.c.b16 %v823, %v823
  %v832 = vpack.c.b16 %v824, %v824
  %v833 = vpack.c.b16 %v825, %v825
  %v834 = vpack.c.b16 %v826, %v826
  %v835 = vpack.c.b16 %v827, %v827
  %v836 = vpack.c.b16 %v828, %v828
  %v837 = vrot.slane %v829, 5
  %v838 = vrot.slane %v830, 5
  %v839 = vrot.slane %v831, 5
  %v840 = vrot.slane %v832, 5
  %v841 = vrot.slane %v833, 5
  %v842 = vrot.slane %v834, 5
  %v843 = vrot.slane %v835, 5
  %v844 = vrot.slane %v836, 5
  %v849 = vunpack.c.l.b16 %v499
  %v850 = vunpack.c.h.b16 %v499
  %v851 = vunpack.c.l.b16 %v500
  %v852 = vunpack.c.h.b16 %v500
  %v853 = vunpack.c.l.b16 %v501
  %v854 = vunpack.c.h.b16 %v501
  %v855 = vunpack.c.l.b16 %v502
  %v856 = vunpack.c.h.b16 %v502
  %v857 = vpack.c.b16 %v849, %v849
  %v858 = vpack.c.b16 %v850, %v850
  %v859 = vpack.c.b16 %v851, %v851
  %v860 = vpack.c.b16 %v852, %v852
  %v861 = vpack.c.b16 %v853, %v853
  %v862 = vpack.c.b16 %v854, %v854
  %v863 = vpack.c.b16 %v855, %v855
  %v864 = vpack.c.b16 %v856, %v856
  %v866 = vshll.u32 %v857, 16
  %v868 = vrot.slane %v866, 5
  %v870 = vshll.u32 %v858, 16
  %v872 = vrot.slane %v870, 5
  %v874 = vshll.u32 %v859, 16
  %v876 = vrot.slane %v874, 5
  %v878 = vshll.u32 %v860, 16
  %v880 = vrot.slane %v878, 5
  %v882 = vshll.u32 %v861, 16
  %v884 = vrot.slane %v882, 5
  %v886 = vshll.u32 %v862, 16
  %v888 = vrot.slane %v886, 5
  %v890 = vshll.u32 %v863, 16
  %v892 = vrot.slane %v890, 5
  %v894 = vshll.u32 %v864, 16
  %v896 = vrot.slane %v894, 5
  %v909 = vunpack.c.l.b16 %v557
  %v910 = vunpack.c.h.b16 %v557
  %v911 = vunpack.c.l.b16 %v558
  %v912 = vunpack.c.h.b16 %v558
  %v913 = vunpack.c.l.b16 %v559
  %v914 = vunpack.c.h.b16 %v559
  %v915 = vunpack.c.l.b16 %v560
  %v916 = vunpack.c.h.b16 %v560
  %v917 = vpack.c.b16 %v909, %v909
  %v918 = vpack.c.b16 %v910, %v910
  %v919 = vpack.c.b16 %v911, %v911
  %v920 = vpack.c.b16 %v912, %v912
  %v921 = vpack.c.b16 %v913, %v913
  %v922 = vpack.c.b16 %v914, %v914
  %v923 = vpack.c.b16 %v915, %v915
  %v924 = vpack.c.b16 %v916, %v916
  %vm925 = vcmask 1040384
  %vm926 = vsmask.f32 256
  %vm927 = vmand %vm925, %vm926
  %v928 = vsel %vm927, %v573, %v610
  %v929 = vsel %vm927, %v574, %v613
  %v930 = vsel %vm927, %v575, %v616
  %v931 = vsel %vm927, %v576, %v619
  %v932 = vsel %vm927, %v577, %v622
  %v933 = vsel %vm927, %v578, %v625
  %v934 = vsel %vm927, %v579, %v628
  %v935 = vsel %vm927, %v580, %v631
  %vm936 = vcmask 1040384
  %v939 = vsel %vm936, %v928, %v661
  %v943 = vsel %vm936, %v929, %v662
  %v947 = vsel %vm936, %v930, %v663
  %v951 = vsel %vm936, %v931, %v664
  %v955 = vsel %vm936, %v932, %v665
  %v959 = vsel %vm936, %v933, %v666
  %v963 = vsel %vm936, %v934, %v667
  %v967 = vsel %vm936, %v935, %v668
  %vm969 = vcmask 1041408
  %vm970 = vsmask.f32 1280
  %vm971 = vmand %vm969, %vm970
  %v972 = vsel %vm971, %v939, %v692
  %v973 = vsel %vm971, %v943, %v696
  %v974 = vsel %vm971, %v947, %v700
  %v975 = vsel %vm971, %v951, %v704
  %v976 = vsel %vm971, %v955, %v708
  %v977 = vsel %vm971, %v959, %v712
  %v978 = vsel %vm971, %v963, %v716
  %v979 = vsel %vm971, %v967, %v720
  %vm980 = vcmask 1041408
  %v983 = vsel %vm980, %v972, %v749
  %v987 = vsel %vm980, %v973, %v750
  %v991 = vsel %vm980, %v974, %v751
  %v995 = vsel %vm980, %v975, %v752
  %v999 = vsel %vm980, %v976, %v753
  %v1003 = vsel %vm980, %v977, %v754
  %v1007 = vsel %vm980, %v978, %v755
  %v1011 = vsel %vm980, %v979, %v756
  %vm1013 = vcmask 1042432
  %vm1014 = vsmask.f32 2304
  %vm1015 = vmand %vm1013, %vm1014
  %v1016 = vsel %vm1015, %v983, %v780
  %v1017 = vsel %vm1015, %v987, %v784
  %v1018 = vsel %vm1015, %v991, %v788
  %v1019 = vsel %vm1015, %v995, %v792
  %v1020 = vsel %vm1015, %v999, %v796
  %v1021 = vsel %vm1015, %v1003, %v800
  %v1022 = vsel %vm1015, %v1007, %v804
  %v1023 = vsel %vm1015, %v1011, %v808
  %vm1024 = vcmask 1042432
  %v1027 = vsel %vm1024, %v1016, %v837
  %v1031 = vsel %vm1024, %v1017, %v838
  %v1035 = vsel %vm1024, %v1018, %v839
  %v1039 = vsel %vm1024, %v1019, %v840
  %v1043 = vsel %vm1024, %v1020, %v841
  %v1047 = vsel %vm1024, %v1021, %v842
  %v1051 = vsel %vm1024, %v1022, %v843
  %v1055 = vsel %vm1024, %v1023, %v844
  %vm1057 = vcmask 1043456
  %vm1058 = vsmask.f32 3328
  %vm1059 = vmand %vm1057, %vm1058
  %v1060 = vsel %vm1059, %v1027, %v868
  %v1061 = vsel %vm1059, %v1031, %v872
  %v1062 = vsel %vm1059, %v1035, %v876
  %v1063 = vsel %vm1059, %v1039, %v880
  %v1064 = vsel %vm1059, %v1043, %v884
  %v1065 = vsel %vm1059, %v1047, %v888
  %v1066 = vsel %vm1059, %v1051, %v892
  %v1067 = vsel %vm1059, %v1055, %v896
  %vm1068 = vcmask 1043456
  %v1071 = vsel %vm1068, %v1060, %v917
  %v1074 = vsel %vm1068, %v1061, %v918
  %v1077 = vsel %vm1068, %v1062, %v919
  %v1080 = vsel %vm1068, %v1063, %v920
  %v1083 = vsel %vm1068, %v1064, %v921
  %v1086 = vsel %vm1068, %v1065, %v922
  %v1089 = vsel %vm1068, %v1066, %v923
  %v1092 = vsel %vm1068, %v1067, %v924
  %v1093 = vld [vmem:[%s2] sm:$0xf]
  %v1094 = vld [vmem:[%s2 + $0x4] sm:$0xf]
  %v1095 = vld [vmem:[%s3] sm:$0xff]
  %v1096 = vld [vmem:[%s3 + $0x8] sm:$0xff]
  %1098 = vset.pattern.permute.xlu0 0
  %1099 = vperm.xlu0 %1098, %v1095
  %v1100 = vpop.permute.xlu0 %1099
  %1103 = vset.pattern.permute.xlu0 0
  %1104 = vperm.xlu0 %1103, %v1096
  %v1105 = vpop.permute.xlu0 %1104
  %v1109 = vunpack.c.l.b16 %v1093
  %v1110 = vunpack.c.l.b16 %v1094
  %v1111 = vpack.c.b16 %v1110, %v1109
  %vm1112 = vcmask 72704
  %v1114 = vsel %vm1112, %v1111, 0
  %vm1116 = vcmask 1044480
  %v1117 = vsel %vm1068, 4294967295, 65535
  %v1118 = vsel %vm1116, %v1117, 0
  %v1119 = vand.u32 %v1071, %v1118
  %v1121 = vand.u32 %v1074, %v1118
  %v1123 = vand.u32 %v1077, %v1118
  %v1125 = vand.u32 %v1080, %v1118
  %v1127 = vand.u32 %v1083, %v1118
  %v1129 = vand.u32 %v1086, %v1118
  %v1131 = vand.u32 %v1089, %v1118
  %v1133 = vand.u32 %v1092, %v1118
  %1135 = vmatpush.bf16.msra.mxu0 0
  %1136 = vmatpush.bf16.msra.mxu0 0
  %1137 = vmatpush.bf16.msra.mxu0 0
  %1138 = vmatpush.bf16.msra.mxu0 0
  %1139 = vmatpush.bf16.msra.mxu0 0
  %1140 = vmatpush.bf16.msra.mxu0 0
  %1141 = vmatpush.bf16.msra.mxu0 0
  %1142 = vmatpush.bf16.msra.mxu0 %v1119
  %1143 = vmatmul.bf16.gmra.mxu0 %v1114
  %v1144 = vpop.f32.mrf.mxu0
  %v1145 = vadd.f32 %v1100, %v1144
  %v1146 = vpop.f32.mrf.mxu0
  %v1147 = vadd.f32 %v1105, %v1146
  %1148 = vdwg.mxu0
  %1149 = vmatpush.bf16.msra.mxu0 0
  %1150 = vmatpush.bf16.msra.mxu0 0
  %1151 = vmatpush.bf16.msra.mxu0 0
  %1152 = vmatpush.bf16.msra.mxu0 0
  %1153 = vmatpush.bf16.msra.mxu0 0
  %1154 = vmatpush.bf16.msra.mxu0 0
  %1155 = vmatpush.bf16.msra.mxu0 0
  %1156 = vmatpush.bf16.msra.mxu0 %v1121
  %1157 = vmatmul.bf16.gmra.mxu0 %v1114
  %v1158 = vpop.f32.mrf.mxu0
  %v1159 = vadd.f32 %v1100, %v1158
  %v1160 = vpop.f32.mrf.mxu0
  %v1161 = vadd.f32 %v1105, %v1160
  %1162 = vdwg.mxu0
  %1163 = vmatpush.bf16.msra.mxu0 0
  %1164 = vmatpush.bf16.msra.mxu0 0
  %1165 = vmatpush.bf16.msra.mxu0 0
  %1166 = vmatpush.bf16.msra.mxu0 0
  %1167 = vmatpush.bf16.msra.mxu0 0
  %1168 = vmatpush.bf16.msra.mxu0 0
  %1169 = vmatpush.bf16.msra.mxu0 0
  %1170 = vmatpush.bf16.msra.mxu0 %v1123
  %1171 = vmatmul.bf16.gmra.mxu0 %v1114
  %v1172 = vpop.f32.mrf.mxu0
  %v1173 = vadd.f32 %v1100, %v1172
  %v1174 = vpop.f32.mrf.mxu0
  %v1175 = vadd.f32 %v1105, %v1174
  %1176 = vdwg.mxu0
  %1177 = vmatpush.bf16.msra.mxu0 0
  %1178 = vmatpush.bf16.msra.mxu0 0
  %1179 = vmatpush.bf16.msra.mxu0 0
  %1180 = vmatpush.bf16.msra.mxu0 0
  %1181 = vmatpush.bf16.msra.mxu0 0
  %1182 = vmatpush.bf16.msra.mxu0 0
  %1183 = vmatpush.bf16.msra.mxu0 0
  %1184 = vmatpush.bf16.msra.mxu0 %v1125
  %1185 = vmatmul.bf16.gmra.mxu0 %v1114
  %v1186 = vpop.f32.mrf.mxu0
  %v1187 = vadd.f32 %v1100, %v1186
  %v1188 = vpop.f32.mrf.mxu0
  %v1189 = vadd.f32 %v1105, %v1188
  %1190 = vdwg.mxu0
  %1191 = vmatpush.bf16.msra.mxu0 0
  %1192 = vmatpush.bf16.msra.mxu0 0
  %1193 = vmatpush.bf16.msra.mxu0 0
  %1194 = vmatpush.bf16.msra.mxu0 0
  %1195 = vmatpush.bf16.msra.mxu0 0
  %1196 = vmatpush.bf16.msra.mxu0 0
  %1197 = vmatpush.bf16.msra.mxu0 0
  %1198 = vmatpush.bf16.msra.mxu0 %v1127
  %1199 = vmatmul.bf16.gmra.mxu0 %v1114
  %v1200 = vpop.f32.mrf.mxu0
  %v1201 = vadd.f32 %v1100, %v1200
  %v1202 = vpop.f32.mrf.mxu0
  %v1203 = vadd.f32 %v1105, %v1202
  %1204 = vdwg.mxu0
  %1205 = vmatpush.bf16.msra.mxu0 0
  %1206 = vmatpush.bf16.msra.mxu0 0
  %1207 = vmatpush.bf16.msra.mxu0 0
  %1208 = vmatpush.bf16.msra.mxu0 0
  %1209 = vmatpush.bf16.msra.mxu0 0
  %1210 = vmatpush.bf16.msra.mxu0 0
  %1211 = vmatpush.bf16.msra.mxu0 0
  %1212 = vmatpush.bf16.msra.mxu0 %v1129
  %1213 = vmatmul.bf16.gmra.mxu0 %v1114
  %v1214 = vpop.f32.mrf.mxu0
  %v1215 = vadd.f32 %v1100, %v1214
  %v1216 = vpop.f32.mrf.mxu0
  %v1217 = vadd.f32 %v1105, %v1216
  %1218 = vdwg.mxu0
  %1219 = vmatpush.bf16.msra.mxu0 0
  %1220 = vmatpush.bf16.msra.mxu0 0
  %1221 = vmatpush.bf16.msra.mxu0 0
  %1222 = vmatpush.bf16.msra.mxu0 0
  %1223 = vmatpush.bf16.msra.mxu0 0
  %1224 = vmatpush.bf16.msra.mxu0 0
  %1225 = vmatpush.bf16.msra.mxu0 0
  %1226 = vmatpush.bf16.msra.mxu0 %v1131
  %1227 = vmatmul.bf16.gmra.mxu0 %v1114
  %v1228 = vpop.f32.mrf.mxu0
  %v1229 = vadd.f32 %v1100, %v1228
  %v1230 = vpop.f32.mrf.mxu0
  %v1231 = vadd.f32 %v1105, %v1230
  %1232 = vdwg.mxu0
  %1233 = vmatpush.bf16.msra.mxu0 0
  %1234 = vmatpush.bf16.msra.mxu0 0
  %1235 = vmatpush.bf16.msra.mxu0 0
  %1236 = vmatpush.bf16.msra.mxu0 0
  %1237 = vmatpush.bf16.msra.mxu0 0
  %1238 = vmatpush.bf16.msra.mxu0 0
  %1239 = vmatpush.bf16.msra.mxu0 0
  %1240 = vmatpush.bf16.msra.mxu0 %v1133
  %1241 = vmatmul.bf16.gmra.mxu0 %v1114
  %v1242 = vpop.f32.mrf.mxu0
  %v1243 = vadd.f32 %v1100, %v1242
  %v1244 = vpop.f32.mrf.mxu0
  %v1245 = vadd.f32 %v1105, %v1244
  %1246 = vdwg.mxu0
  %v1247 = vmax.f32 %v1145, 0.0
  %v1248 = vmax.f32 %v1159, 0.0
  %v1249 = vmax.f32 %v1173, 0.0
  %v1250 = vmax.f32 %v1187, 0.0
  %v1251 = vmax.f32 %v1201, 0.0
  %v1252 = vmax.f32 %v1215, 0.0
  %v1253 = vmax.f32 %v1229, 0.0
  %v1254 = vmax.f32 %v1243, 0.0
  %v1255 = vmax.f32 %v1147, 0.0
  %v1256 = vmax.f32 %v1161, 0.0
  %v1257 = vmax.f32 %v1175, 0.0
  %v1258 = vmax.f32 %v1189, 0.0
  %v1259 = vmax.f32 %v1203, 0.0
  %v1260 = vmax.f32 %v1217, 0.0
  %v1261 = vmax.f32 %v1231, 0.0
  %v1262 = vmax.f32 %v1245, 0.0
  %v1263 = vld [vmem:[%s4] sm:$0xf]
  %v1264 = vld [vmem:[%s4 + $0x8] sm:$0xf]
  %1265 = vrot.lane.b32.xlu0 %v1247, 17
  %v1266 = vpop.permute.xlu0 %1265
  %1267 = vrot.lane.b32.xlu0 %v1255, 17
  %v1268 = vpop.permute.xlu0 %1267
  %1269 = vrot.lane.b32.xlu0 %v1248, 17
  %v1270 = vpop.permute.xlu0 %1269
  %1271 = vrot.lane.b32.xlu0 %v1256, 17
  %v1272 = vpop.permute.xlu0 %1271
  %1273 = vrot.lane.b32.xlu0 %v1249, 17
  %v1274 = vpop.permute.xlu0 %1273
  %1275 = vrot.lane.b32.xlu0 %v1257, 17
  %v1276 = vpop.permute.xlu0 %1275
  %1277 = vrot.lane.b32.xlu0 %v1250, 17
  %v1278 = vpop.permute.xlu0 %1277
  %1279 = vrot.lane.b32.xlu0 %v1258, 17
  %v1280 = vpop.permute.xlu0 %1279
  %1281 = vrot.lane.b32.xlu0 %v1251, 17
  %v1282 = vpop.permute.xlu0 %1281
  %1283 = vrot.lane.b32.xlu0 %v1259, 17
  %v1284 = vpop.permute.xlu0 %1283
  %1285 = vrot.lane.b32.xlu0 %v1252, 17
  %v1286 = vpop.permute.xlu0 %1285
  %1287 = vrot.lane.b32.xlu0 %v1260, 17
  %v1288 = vpop.permute.xlu0 %1287
  %1289 = vrot.lane.b32.xlu0 %v1253, 17
  %v1290 = vpop.permute.xlu0 %1289
  %1291 = vrot.lane.b32.xlu0 %v1261, 17
  %v1292 = vpop.permute.xlu0 %1291
  %1293 = vrot.lane.b32.xlu0 %v1254, 17
  %v1294 = vpop.permute.xlu0 %1293
  %1295 = vrot.lane.b32.xlu0 %v1262, 17
  %v1296 = vpop.permute.xlu0 %1295
  %v1297 = vsel %vm88, %v1290, %v1294
  %v1298 = vsel %vm88, %v1292, %v1296
  %v1299 = vsel %vm88, %v1286, %v1290
  %v1300 = vsel %vm88, %v1288, %v1292
  %v1301 = vsel %vm88, %v1282, %v1286
  %v1302 = vsel %vm88, %v1284, %v1288
  %v1303 = vsel %vm88, %v1278, %v1282
  %v1304 = vsel %vm88, %v1280, %v1284
  %v1305 = vsel %vm88, %v1274, %v1278
  %v1306 = vsel %vm88, %v1276, %v1280
  %v1307 = vsel %vm88, %v1270, %v1274
  %v1308 = vsel %vm88, %v1272, %v1276
  %v1309 = vsel %vm88, %v1266, %v1270
  %v1310 = vsel %vm88, %v1268, %v1272
  %v1311 = vsel %vm88, %v1294, %v1266
  %v1312 = vsel %vm88, %v1296, %v1268
  %v1313 = vmul.f32 %v1311, %v101
  %v1314 = vmul.f32 %v1309, %v102
  %v1315 = vmul.f32 %v1307, %v103
  %v1316 = vmul.f32 %v1305, %v104
  %v1317 = vmul.f32 %v1303, %v105
  %v1318 = vmul.f32 %v1301, %v106
  %v1319 = vmul.f32 %v1299, %v107
  %v1320 = vmul.f32 %v1297, %v108
  %v1321 = vmul.f32 %v1312, %v101
  %v1322 = vmul.f32 %v1310, %v102
  %v1323 = vmul.f32 %v1308, %v103
  %v1324 = vmul.f32 %v1306, %v104
  %v1325 = vmul.f32 %v1304, %v105
  %v1326 = vmul.f32 %v1302, %v106
  %v1327 = vmul.f32 %v1300, %v107
  %v1328 = vmul.f32 %v1298, %v108
  %v1329 = vpack.c.bf16 %v1321, %v1313
  %v1330 = vpack.c.bf16 %v1322, %v1314
  %v1331 = vpack.c.bf16 %v1323, %v1315
  %v1332 = vpack.c.bf16 %v1324, %v1316
  %v1333 = vpack.c.bf16 %v1325, %v1317
  %v1334 = vpack.c.bf16 %v1326, %v1318
  %v1335 = vpack.c.bf16 %v1327, %v1319
  %v1336 = vpack.c.bf16 %v1328, %v1320
  %1337 = vrot.lane.b32.xlu0 %v1247, 16
  %v1338 = vpop.permute.xlu0 %1337
  %1339 = vrot.lane.b32.xlu0 %v1255, 16
  %v1340 = vpop.permute.xlu0 %1339
  %1341 = vrot.lane.b32.xlu0 %v1248, 16
  %v1342 = vpop.permute.xlu0 %1341
  %1343 = vrot.lane.b32.xlu0 %v1256, 16
  %v1344 = vpop.permute.xlu0 %1343
  %1345 = vrot.lane.b32.xlu0 %v1249, 16
  %v1346 = vpop.permute.xlu0 %1345
  %1347 = vrot.lane.b32.xlu0 %v1257, 16
  %v1348 = vpop.permute.xlu0 %1347
  %1349 = vrot.lane.b32.xlu0 %v1250, 16
  %v1350 = vpop.permute.xlu0 %1349
  %1351 = vrot.lane.b32.xlu0 %v1258, 16
  %v1352 = vpop.permute.xlu0 %1351
  %1353 = vrot.lane.b32.xlu0 %v1251, 16
  %v1354 = vpop.permute.xlu0 %1353
  %1355 = vrot.lane.b32.xlu0 %v1259, 16
  %v1356 = vpop.permute.xlu0 %1355
  %1357 = vrot.lane.b32.xlu0 %v1252, 16
  %v1358 = vpop.permute.xlu0 %1357
  %1359 = vrot.lane.b32.xlu0 %v1260, 16
  %v1360 = vpop.permute.xlu0 %1359
  %1361 = vrot.lane.b32.xlu0 %v1253, 16
  %v1362 = vpop.permute.xlu0 %1361
  %1363 = vrot.lane.b32.xlu0 %v1261, 16
  %v1364 = vpop.permute.xlu0 %1363
  %1365 = vrot.lane.b32.xlu0 %v1254, 16
  %v1366 = vpop.permute.xlu0 %1365
  %1367 = vrot.lane.b32.xlu0 %v1262, 16
  %v1368 = vpop.permute.xlu0 %1367
  %v1369 = vsel %vm145, %v1362, %v1366
  %v1370 = vsel %vm145, %v1364, %v1368
  %v1371 = vsel %vm145, %v1358, %v1362
  %v1372 = vsel %vm145, %v1360, %v1364
  %v1373 = vsel %vm145, %v1354, %v1358
  %v1374 = vsel %vm145, %v1356, %v1360
  %v1375 = vsel %vm145, %v1350, %v1354
  %v1376 = vsel %vm145, %v1352, %v1356
  %v1377 = vsel %vm145, %v1346, %v1350
  %v1378 = vsel %vm145, %v1348, %v1352
  %v1379 = vsel %vm145, %v1342, %v1346
  %v1380 = vsel %vm145, %v1344, %v1348
  %v1381 = vsel %vm145, %v1338, %v1342
  %v1382 = vsel %vm145, %v1340, %v1344
  %v1383 = vsel %vm145, %v1366, %v1338
  %v1384 = vsel %vm145, %v1368, %v1340
  %v1385 = vmul.f32 %v1383, %v159
  %v1386 = vmul.f32 %v1381, %v160
  %v1387 = vmul.f32 %v1379, %v161
  %v1388 = vmul.f32 %v1377, %v162
  %v1389 = vmul.f32 %v1375, %v163
  %v1390 = vmul.f32 %v1373, %v164
  %v1391 = vmul.f32 %v1371, %v165
  %v1392 = vmul.f32 %v1369, %v166
  %v1393 = vmul.f32 %v1384, %v159
  %v1394 = vmul.f32 %v1382, %v160
  %v1395 = vmul.f32 %v1380, %v161
  %v1396 = vmul.f32 %v1378, %v162
  %v1397 = vmul.f32 %v1376, %v163
  %v1398 = vmul.f32 %v1374, %v164
  %v1399 = vmul.f32 %v1372, %v165
  %v1400 = vmul.f32 %v1370, %v166
  %v1401 = vpack.c.bf16 %v1393, %v1385
  %v1402 = vpack.c.bf16 %v1394, %v1386
  %v1403 = vpack.c.bf16 %v1395, %v1387
  %v1404 = vpack.c.bf16 %v1396, %v1388
  %v1405 = vpack.c.bf16 %v1397, %v1389
  %v1406 = vpack.c.bf16 %v1398, %v1390
  %v1407 = vpack.c.bf16 %v1399, %v1391
  %v1408 = vpack.c.bf16 %v1400, %v1392
  %v1411 = vunpack.c.l.b16 %v1263
  %v1412 = vunpack.c.l.b16 %v1264
  %v1413 = vpack.c.b16 %v1412, %v1411
  %1414 = vrot.lane.b32.xlu0 %v1413, 112
  %v1415 = vpop.permute.xlu0 %1414
  %vm1416 = vcmask 130048
  %v1418 = vsel %vm1416, %v1415, 0
  %1420 = vmatpush.bf16.msra.mxu0 0
  %1421 = vmatpush.bf16.msra.mxu0 0
  %1422 = vmatpush.bf16.msra.mxu0 0
  %1423 = vmatpush.bf16.msra.mxu0 0
  %1424 = vmatpush.bf16.msra.mxu0 0
  %1425 = vmatpush.bf16.msra.mxu0 0
  %1426 = vmatpush.bf16.msra.mxu0 0
  %1427 = vmatpush.bf16.msra.mxu0 %v1401
  %1428 = vmatmul.bf16.gmra.mxu0 %v1418
  %v1429 = vpop.f32.mrf.mxu0
  %v1430 = vadd.f32 0.0, %v1429
  %v1431 = vpop.f32.mrf.mxu0
  %v1432 = vadd.f32 0.0, %v1431
  %1433 = vdwg.mxu0
  %1434 = vmatpush.bf16.msra.mxu0 0
  %1435 = vmatpush.bf16.msra.mxu0 0
  %1436 = vmatpush.bf16.msra.mxu0 0
  %1437 = vmatpush.bf16.msra.mxu0 0
  %1438 = vmatpush.bf16.msra.mxu0 0
  %1439 = vmatpush.bf16.msra.mxu0 0
  %1440 = vmatpush.bf16.msra.mxu0 0
  %1441 = vmatpush.bf16.msra.mxu0 %v1402
  %1442 = vmatmul.bf16.gmra.mxu0 %v1418
  %v1443 = vpop.f32.mrf.mxu0
  %v1444 = vadd.f32 0.0, %v1443
  %v1445 = vpop.f32.mrf.mxu0
  %v1446 = vadd.f32 0.0, %v1445
  %1447 = vdwg.mxu0
  %1448 = vmatpush.bf16.msra.mxu0 0
  %1449 = vmatpush.bf16.msra.mxu0 0
  %1450 = vmatpush.bf16.msra.mxu0 0
  %1451 = vmatpush.bf16.msra.mxu0 0
  %1452 = vmatpush.bf16.msra.mxu0 0
  %1453 = vmatpush.bf16.msra.mxu0 0
  %1454 = vmatpush.bf16.msra.mxu0 0
  %1455 = vmatpush.bf16.msra.mxu0 %v1403
  %1456 = vmatmul.bf16.gmra.mxu0 %v1418
  %v1457 = vpop.f32.mrf.mxu0
  %v1458 = vadd.f32 0.0, %v1457
  %v1459 = vpop.f32.mrf.mxu0
  %v1460 = vadd.f32 0.0, %v1459
  %1461 = vdwg.mxu0
  %1462 = vmatpush.bf16.msra.mxu0 0
  %1463 = vmatpush.bf16.msra.mxu0 0
  %1464 = vmatpush.bf16.msra.mxu0 0
  %1465 = vmatpush.bf16.msra.mxu0 0
  %1466 = vmatpush.bf16.msra.mxu0 0
  %1467 = vmatpush.bf16.msra.mxu0 0
  %1468 = vmatpush.bf16.msra.mxu0 0
  %1469 = vmatpush.bf16.msra.mxu0 %v1404
  %1470 = vmatmul.bf16.gmra.mxu0 %v1418
  %v1471 = vpop.f32.mrf.mxu0
  %v1472 = vadd.f32 0.0, %v1471
  %v1473 = vpop.f32.mrf.mxu0
  %v1474 = vadd.f32 0.0, %v1473
  %1475 = vdwg.mxu0
  %1476 = vmatpush.bf16.msra.mxu0 0
  %1477 = vmatpush.bf16.msra.mxu0 0
  %1478 = vmatpush.bf16.msra.mxu0 0
  %1479 = vmatpush.bf16.msra.mxu0 0
  %1480 = vmatpush.bf16.msra.mxu0 0
  %1481 = vmatpush.bf16.msra.mxu0 0
  %1482 = vmatpush.bf16.msra.mxu0 0
  %1483 = vmatpush.bf16.msra.mxu0 %v1405
  %1484 = vmatmul.bf16.gmra.mxu0 %v1418
  %v1485 = vpop.f32.mrf.mxu0
  %v1486 = vadd.f32 0.0, %v1485
  %v1487 = vpop.f32.mrf.mxu0
  %v1488 = vadd.f32 0.0, %v1487
  %1489 = vdwg.mxu0
  %1490 = vmatpush.bf16.msra.mxu0 0
  %1491 = vmatpush.bf16.msra.mxu0 0
  %1492 = vmatpush.bf16.msra.mxu0 0
  %1493 = vmatpush.bf16.msra.mxu0 0
  %1494 = vmatpush.bf16.msra.mxu0 0
  %1495 = vmatpush.bf16.msra.mxu0 0
  %1496 = vmatpush.bf16.msra.mxu0 0
  %1497 = vmatpush.bf16.msra.mxu0 %v1406
  %1498 = vmatmul.bf16.gmra.mxu0 %v1418
  %v1499 = vpop.f32.mrf.mxu0
  %v1500 = vadd.f32 0.0, %v1499
  %v1501 = vpop.f32.mrf.mxu0
  %v1502 = vadd.f32 0.0, %v1501
  %1503 = vdwg.mxu0
  %1504 = vmatpush.bf16.msra.mxu0 0
  %1505 = vmatpush.bf16.msra.mxu0 0
  %1506 = vmatpush.bf16.msra.mxu0 0
  %1507 = vmatpush.bf16.msra.mxu0 0
  %1508 = vmatpush.bf16.msra.mxu0 0
  %1509 = vmatpush.bf16.msra.mxu0 0
  %1510 = vmatpush.bf16.msra.mxu0 0
  %1511 = vmatpush.bf16.msra.mxu0 %v1407
  %1512 = vmatmul.bf16.gmra.mxu0 %v1418
  %v1513 = vpop.f32.mrf.mxu0
  %v1514 = vadd.f32 0.0, %v1513
  %v1515 = vpop.f32.mrf.mxu0
  %v1516 = vadd.f32 0.0, %v1515
  %1517 = vdwg.mxu0
  %1518 = vmatpush.bf16.msra.mxu0 0
  %1519 = vmatpush.bf16.msra.mxu0 0
  %1520 = vmatpush.bf16.msra.mxu0 0
  %1521 = vmatpush.bf16.msra.mxu0 0
  %1522 = vmatpush.bf16.msra.mxu0 0
  %1523 = vmatpush.bf16.msra.mxu0 0
  %1524 = vmatpush.bf16.msra.mxu0 0
  %1525 = vmatpush.bf16.msra.mxu0 %v1408
  %1526 = vmatmul.bf16.gmra.mxu0 %v1418
  %v1527 = vpop.f32.mrf.mxu0
  %v1528 = vadd.f32 0.0, %v1527
  %v1529 = vpop.f32.mrf.mxu0
  %v1530 = vadd.f32 0.0, %v1529
  %1531 = vdwg.mxu0
  %v1533 = vsel %vm1416, %v1413, 0
  %1535 = vmatpush.bf16.msra.mxu0 0
  %1536 = vmatpush.bf16.msra.mxu0 0
  %1537 = vmatpush.bf16.msra.mxu0 0
  %1538 = vmatpush.bf16.msra.mxu0 0
  %1539 = vmatpush.bf16.msra.mxu0 0
  %1540 = vmatpush.bf16.msra.mxu0 0
  %1541 = vmatpush.bf16.msra.mxu0 0
  %1542 = vmatpush.bf16.msra.mxu0 %v1329
  %1543 = vmatmul.bf16.gmra.mxu0 %v1533
  %v1544 = vpop.f32.mrf.mxu0
  %v1545 = vadd.f32 %v1430, %v1544
  %v1546 = vpop.f32.mrf.mxu0
  %v1547 = vadd.f32 %v1432, %v1546
  %1548 = vdwg.mxu0
  %1549 = vmatpush.bf16.msra.mxu0 0
  %1550 = vmatpush.bf16.msra.mxu0 0
  %1551 = vmatpush.bf16.msra.mxu0 0
  %1552 = vmatpush.bf16.msra.mxu0 0
  %1553 = vmatpush.bf16.msra.mxu0 0
  %1554 = vmatpush.bf16.msra.mxu0 0
  %1555 = vmatpush.bf16.msra.mxu0 0
  %1556 = vmatpush.bf16.msra.mxu0 %v1330
  %1557 = vmatmul.bf16.gmra.mxu0 %v1533
  %v1558 = vpop.f32.mrf.mxu0
  %v1559 = vadd.f32 %v1444, %v1558
  %v1560 = vpop.f32.mrf.mxu0
  %v1561 = vadd.f32 %v1446, %v1560
  %1562 = vdwg.mxu0
  %1563 = vmatpush.bf16.msra.mxu0 0
  %1564 = vmatpush.bf16.msra.mxu0 0
  %1565 = vmatpush.bf16.msra.mxu0 0
  %1566 = vmatpush.bf16.msra.mxu0 0
  %1567 = vmatpush.bf16.msra.mxu0 0
  %1568 = vmatpush.bf16.msra.mxu0 0
  %1569 = vmatpush.bf16.msra.mxu0 0
  %1570 = vmatpush.bf16.msra.mxu0 %v1331
  %1571 = vmatmul.bf16.gmra.mxu0 %v1533
  %v1572 = vpop.f32.mrf.mxu0
  %v1573 = vadd.f32 %v1458, %v1572
  %v1574 = vpop.f32.mrf.mxu0
  %v1575 = vadd.f32 %v1460, %v1574
  %1576 = vdwg.mxu0
  %1577 = vmatpush.bf16.msra.mxu0 0
  %1578 = vmatpush.bf16.msra.mxu0 0
  %1579 = vmatpush.bf16.msra.mxu0 0
  %1580 = vmatpush.bf16.msra.mxu0 0
  %1581 = vmatpush.bf16.msra.mxu0 0
  %1582 = vmatpush.bf16.msra.mxu0 0
  %1583 = vmatpush.bf16.msra.mxu0 0
  %1584 = vmatpush.bf16.msra.mxu0 %v1332
  %1585 = vmatmul.bf16.gmra.mxu0 %v1533
  %v1586 = vpop.f32.mrf.mxu0
  %v1587 = vadd.f32 %v1472, %v1586
  %v1588 = vpop.f32.mrf.mxu0
  %v1589 = vadd.f32 %v1474, %v1588
  %1590 = vdwg.mxu0
  %1591 = vmatpush.bf16.msra.mxu0 0
  %1592 = vmatpush.bf16.msra.mxu0 0
  %1593 = vmatpush.bf16.msra.mxu0 0
  %1594 = vmatpush.bf16.msra.mxu0 0
  %1595 = vmatpush.bf16.msra.mxu0 0
  %1596 = vmatpush.bf16.msra.mxu0 0
  %1597 = vmatpush.bf16.msra.mxu0 0
  %1598 = vmatpush.bf16.msra.mxu0 %v1333
  %1599 = vmatmul.bf16.gmra.mxu0 %v1533
  %v1600 = vpop.f32.mrf.mxu0
  %v1601 = vadd.f32 %v1486, %v1600
  %v1602 = vpop.f32.mrf.mxu0
  %v1603 = vadd.f32 %v1488, %v1602
  %1604 = vdwg.mxu0
  %1605 = vmatpush.bf16.msra.mxu0 0
  %1606 = vmatpush.bf16.msra.mxu0 0
  %1607 = vmatpush.bf16.msra.mxu0 0
  %1608 = vmatpush.bf16.msra.mxu0 0
  %1609 = vmatpush.bf16.msra.mxu0 0
  %1610 = vmatpush.bf16.msra.mxu0 0
  %1611 = vmatpush.bf16.msra.mxu0 0
  %1612 = vmatpush.bf16.msra.mxu0 %v1334
  %1613 = vmatmul.bf16.gmra.mxu0 %v1533
  %v1614 = vpop.f32.mrf.mxu0
  %v1615 = vadd.f32 %v1500, %v1614
  %v1616 = vpop.f32.mrf.mxu0
  %v1617 = vadd.f32 %v1502, %v1616
  %1618 = vdwg.mxu0
  %1619 = vmatpush.bf16.msra.mxu0 0
  %1620 = vmatpush.bf16.msra.mxu0 0
  %1621 = vmatpush.bf16.msra.mxu0 0
  %1622 = vmatpush.bf16.msra.mxu0 0
  %1623 = vmatpush.bf16.msra.mxu0 0
  %1624 = vmatpush.bf16.msra.mxu0 0
  %1625 = vmatpush.bf16.msra.mxu0 0
  %1626 = vmatpush.bf16.msra.mxu0 %v1335
  %1627 = vmatmul.bf16.gmra.mxu0 %v1533
  %v1628 = vpop.f32.mrf.mxu0
  %v1629 = vadd.f32 %v1514, %v1628
  %v1630 = vpop.f32.mrf.mxu0
  %v1631 = vadd.f32 %v1516, %v1630
  %1632 = vdwg.mxu0
  %1633 = vmatpush.bf16.msra.mxu0 0
  %1634 = vmatpush.bf16.msra.mxu0 0
  %1635 = vmatpush.bf16.msra.mxu0 0
  %1636 = vmatpush.bf16.msra.mxu0 0
  %1637 = vmatpush.bf16.msra.mxu0 0
  %1638 = vmatpush.bf16.msra.mxu0 0
  %1639 = vmatpush.bf16.msra.mxu0 0
  %1640 = vmatpush.bf16.msra.mxu0 %v1336
  %1641 = vmatmul.bf16.gmra.mxu0 %v1533
  %v1642 = vpop.f32.mrf.mxu0
  %v1643 = vadd.f32 %v1528, %v1642
  %v1644 = vpop.f32.mrf.mxu0
  %v1645 = vadd.f32 %v1530, %v1644
  %1646 = vdwg.mxu0
  %1647 = vrot.lane.b32.xlu0 %v1247, 15
  %v1648 = vpop.permute.xlu0 %1647
  %1649 = vrot.lane.b32.xlu0 %v1255, 15
  %v1650 = vpop.permute.xlu0 %1649
  %1651 = vrot.lane.b32.xlu0 %v1248, 15
  %v1652 = vpop.permute.xlu0 %1651
  %1653 = vrot.lane.b32.xlu0 %v1256, 15
  %v1654 = vpop.permute.xlu0 %1653
  %1655 = vrot.lane.b32.xlu0 %v1249, 15
  %v1656 = vpop.permute.xlu0 %1655
  %1657 = vrot.lane.b32.xlu0 %v1257, 15
  %v1658 = vpop.permute.xlu0 %1657
  %1659 = vrot.lane.b32.xlu0 %v1250, 15
  %v1660 = vpop.permute.xlu0 %1659
  %1661 = vrot.lane.b32.xlu0 %v1258, 15
  %v1662 = vpop.permute.xlu0 %1661
  %1663 = vrot.lane.b32.xlu0 %v1251, 15
  %v1664 = vpop.permute.xlu0 %1663
  %1665 = vrot.lane.b32.xlu0 %v1259, 15
  %v1666 = vpop.permute.xlu0 %1665
  %1667 = vrot.lane.b32.xlu0 %v1252, 15
  %v1668 = vpop.permute.xlu0 %1667
  %1669 = vrot.lane.b32.xlu0 %v1260, 15
  %v1670 = vpop.permute.xlu0 %1669
  %1671 = vrot.lane.b32.xlu0 %v1253, 15
  %v1672 = vpop.permute.xlu0 %1671
  %1673 = vrot.lane.b32.xlu0 %v1261, 15
  %v1674 = vpop.permute.xlu0 %1673
  %1675 = vrot.lane.b32.xlu0 %v1254, 15
  %v1676 = vpop.permute.xlu0 %1675
  %1677 = vrot.lane.b32.xlu0 %v1262, 15
  %v1678 = vpop.permute.xlu0 %1677
  %v1679 = vsel %vm203, %v1672, %v1676
  %v1680 = vsel %vm203, %v1674, %v1678
  %v1681 = vsel %vm203, %v1668, %v1672
  %v1682 = vsel %vm203, %v1670, %v1674
  %v1683 = vsel %vm203, %v1664, %v1668
  %v1684 = vsel %vm203, %v1666, %v1670
  %v1685 = vsel %vm203, %v1660, %v1664
  %v1686 = vsel %vm203, %v1662, %v1666
  %v1687 = vsel %vm203, %v1656, %v1660
  %v1688 = vsel %vm203, %v1658, %v1662
  %v1689 = vsel %vm203, %v1652, %v1656
  %v1690 = vsel %vm203, %v1654, %v1658
  %v1691 = vsel %vm203, %v1648, %v1652
  %v1692 = vsel %vm203, %v1650, %v1654
  %v1693 = vsel %vm203, %v1676, %v1648
  %v1694 = vsel %vm203, %v1678, %v1650
  %v1695 = vmul.f32 %v1693, %v217
  %v1696 = vmul.f32 %v1691, %v218
  %v1697 = vmul.f32 %v1689, %v219
  %v1698 = vmul.f32 %v1687, %v220
  %v1699 = vmul.f32 %v1685, %v221
  %v1700 = vmul.f32 %v1683, %v222
  %v1701 = vmul.f32 %v1681, %v223
  %v1702 = vmul.f32 %v1679, %v224
  %v1703 = vmul.f32 %v1694, %v217
  %v1704 = vmul.f32 %v1692, %v218
  %v1705 = vmul.f32 %v1690, %v219
  %v1706 = vmul.f32 %v1688, %v220
  %v1707 = vmul.f32 %v1686, %v221
  %v1708 = vmul.f32 %v1684, %v222
  %v1709 = vmul.f32 %v1682, %v223
  %v1710 = vmul.f32 %v1680, %v224
  %v1711 = vpack.c.bf16 %v1703, %v1695
  %v1712 = vpack.c.bf16 %v1704, %v1696
  %v1713 = vpack.c.bf16 %v1705, %v1697
  %v1714 = vpack.c.bf16 %v1706, %v1698
  %v1715 = vpack.c.bf16 %v1707, %v1699
  %v1716 = vpack.c.bf16 %v1708, %v1700
  %v1717 = vpack.c.bf16 %v1709, %v1701
  %v1718 = vpack.c.bf16 %v1710, %v1702
  %1719 = vrot.lane.b32.xlu0 %v1413, 96
  %v1720 = vpop.permute.xlu0 %1719
  %v1722 = vsel %vm1416, %v1720, 0
  %1724 = vmatpush.bf16.msra.mxu0 0
  %1725 = vmatpush.bf16.msra.mxu0 0
  %1726 = vmatpush.bf16.msra.mxu0 0
  %1727 = vmatpush.bf16.msra.mxu0 0
  %1728 = vmatpush.bf16.msra.mxu0 0
  %1729 = vmatpush.bf16.msra.mxu0 0
  %1730 = vmatpush.bf16.msra.mxu0 0
  %1731 = vmatpush.bf16.msra.mxu0 %v1711
  %1732 = vmatmul.bf16.gmra.mxu0 %v1722
  %v1733 = vpop.f32.mrf.mxu0
  %v1734 = vadd.f32 0.0, %v1733
  %v1735 = vpop.f32.mrf.mxu0
  %v1736 = vadd.f32 0.0, %v1735
  %1737 = vdwg.mxu0
  %1738 = vmatpush.bf16.msra.mxu0 0
  %1739 = vmatpush.bf16.msra.mxu0 0
  %1740 = vmatpush.bf16.msra.mxu0 0
  %1741 = vmatpush.bf16.msra.mxu0 0
  %1742 = vmatpush.bf16.msra.mxu0 0
  %1743 = vmatpush.bf16.msra.mxu0 0
  %1744 = vmatpush.bf16.msra.mxu0 0
  %1745 = vmatpush.bf16.msra.mxu0 %v1712
  %1746 = vmatmul.bf16.gmra.mxu0 %v1722
  %v1747 = vpop.f32.mrf.mxu0
  %v1748 = vadd.f32 0.0, %v1747
  %v1749 = vpop.f32.mrf.mxu0
  %v1750 = vadd.f32 0.0, %v1749
  %1751 = vdwg.mxu0
  %1752 = vmatpush.bf16.msra.mxu0 0
  %1753 = vmatpush.bf16.msra.mxu0 0
  %1754 = vmatpush.bf16.msra.mxu0 0
  %1755 = vmatpush.bf16.msra.mxu0 0
  %1756 = vmatpush.bf16.msra.mxu0 0
  %1757 = vmatpush.bf16.msra.mxu0 0
  %1758 = vmatpush.bf16.msra.mxu0 0
  %1759 = vmatpush.bf16.msra.mxu0 %v1713
  %1760 = vmatmul.bf16.gmra.mxu0 %v1722
  %v1761 = vpop.f32.mrf.mxu0
  %v1762 = vadd.f32 0.0, %v1761
  %v1763 = vpop.f32.mrf.mxu0
  %v1764 = vadd.f32 0.0, %v1763
  %1765 = vdwg.mxu0
  %1766 = vmatpush.bf16.msra.mxu0 0
  %1767 = vmatpush.bf16.msra.mxu0 0
  %1768 = vmatpush.bf16.msra.mxu0 0
  %1769 = vmatpush.bf16.msra.mxu0 0
  %1770 = vmatpush.bf16.msra.mxu0 0
  %1771 = vmatpush.bf16.msra.mxu0 0
  %1772 = vmatpush.bf16.msra.mxu0 0
  %1773 = vmatpush.bf16.msra.mxu0 %v1714
  %1774 = vmatmul.bf16.gmra.mxu0 %v1722
  %v1775 = vpop.f32.mrf.mxu0
  %v1776 = vadd.f32 0.0, %v1775
  %v1777 = vpop.f32.mrf.mxu0
  %v1778 = vadd.f32 0.0, %v1777
  %1779 = vdwg.mxu0
  %1780 = vmatpush.bf16.msra.mxu0 0
  %1781 = vmatpush.bf16.msra.mxu0 0
  %1782 = vmatpush.bf16.msra.mxu0 0
  %1783 = vmatpush.bf16.msra.mxu0 0
  %1784 = vmatpush.bf16.msra.mxu0 0
  %1785 = vmatpush.bf16.msra.mxu0 0
  %1786 = vmatpush.bf16.msra.mxu0 0
  %1787 = vmatpush.bf16.msra.mxu0 %v1715
  %1788 = vmatmul.bf16.gmra.mxu0 %v1722
  %v1789 = vpop.f32.mrf.mxu0
  %v1790 = vadd.f32 0.0, %v1789
  %v1791 = vpop.f32.mrf.mxu0
  %v1792 = vadd.f32 0.0, %v1791
  %1793 = vdwg.mxu0
  %1794 = vmatpush.bf16.msra.mxu0 0
  %1795 = vmatpush.bf16.msra.mxu0 0
  %1796 = vmatpush.bf16.msra.mxu0 0
  %1797 = vmatpush.bf16.msra.mxu0 0
  %1798 = vmatpush.bf16.msra.mxu0 0
  %1799 = vmatpush.bf16.msra.mxu0 0
  %1800 = vmatpush.bf16.msra.mxu0 0
  %1801 = vmatpush.bf16.msra.mxu0 %v1716
  %1802 = vmatmul.bf16.gmra.mxu0 %v1722
  %v1803 = vpop.f32.mrf.mxu0
  %v1804 = vadd.f32 0.0, %v1803
  %v1805 = vpop.f32.mrf.mxu0
  %v1806 = vadd.f32 0.0, %v1805
  %1807 = vdwg.mxu0
  %1808 = vmatpush.bf16.msra.mxu0 0
  %1809 = vmatpush.bf16.msra.mxu0 0
  %1810 = vmatpush.bf16.msra.mxu0 0
  %1811 = vmatpush.bf16.msra.mxu0 0
  %1812 = vmatpush.bf16.msra.mxu0 0
  %1813 = vmatpush.bf16.msra.mxu0 0
  %1814 = vmatpush.bf16.msra.mxu0 0
  %1815 = vmatpush.bf16.msra.mxu0 %v1717
  %1816 = vmatmul.bf16.gmra.mxu0 %v1722
  %v1817 = vpop.f32.mrf.mxu0
  %v1818 = vadd.f32 0.0, %v1817
  %v1819 = vpop.f32.mrf.mxu0
  %v1820 = vadd.f32 0.0, %v1819
  %1821 = vdwg.mxu0
  %1822 = vmatpush.bf16.msra.mxu0 0
  %1823 = vmatpush.bf16.msra.mxu0 0
  %1824 = vmatpush.bf16.msra.mxu0 0
  %1825 = vmatpush.bf16.msra.mxu0 0
  %1826 = vmatpush.bf16.msra.mxu0 0
  %1827 = vmatpush.bf16.msra.mxu0 0
  %1828 = vmatpush.bf16.msra.mxu0 0
  %1829 = vmatpush.bf16.msra.mxu0 %v1718
  %1830 = vmatmul.bf16.gmra.mxu0 %v1722
  %v1831 = vpop.f32.mrf.mxu0
  %v1832 = vadd.f32 0.0, %v1831
  %v1833 = vpop.f32.mrf.mxu0
  %v1834 = vadd.f32 0.0, %v1833
  %1835 = vdwg.mxu0
  %v1836 = vadd.f32 %v1545, %v1734
  %v1837 = vadd.f32 %v1559, %v1748
  %v1838 = vadd.f32 %v1573, %v1762
  %v1839 = vadd.f32 %v1587, %v1776
  %v1840 = vadd.f32 %v1601, %v1790
  %v1841 = vadd.f32 %v1615, %v1804
  %v1842 = vadd.f32 %v1629, %v1818
  %v1843 = vadd.f32 %v1643, %v1832
  %v1844 = vadd.f32 %v1547, %v1736
  %v1845 = vadd.f32 %v1561, %v1750
  %v1846 = vadd.f32 %v1575, %v1764
  %v1847 = vadd.f32 %v1589, %v1778
  %v1848 = vadd.f32 %v1603, %v1792
  %v1849 = vadd.f32 %v1617, %v1806
  %v1850 = vadd.f32 %v1631, %v1820
  %v1851 = vadd.f32 %v1645, %v1834
  %1852 = vrot.lane.b32.xlu0 %v1247, 1
  %v1853 = vpop.permute.xlu0 %1852
  %1854 = vrot.lane.b32.xlu0 %v1255, 1
  %v1855 = vpop.permute.xlu0 %1854
  %1856 = vrot.lane.b32.xlu0 %v1248, 1
  %v1857 = vpop.permute.xlu0 %1856
  %1858 = vrot.lane.b32.xlu0 %v1256, 1
  %v1859 = vpop.permute.xlu0 %1858
  %1860 = vrot.lane.b32.xlu0 %v1249, 1
  %v1861 = vpop.permute.xlu0 %1860
  %1862 = vrot.lane.b32.xlu0 %v1257, 1
  %v1863 = vpop.permute.xlu0 %1862
  %1864 = vrot.lane.b32.xlu0 %v1250, 1
  %v1865 = vpop.permute.xlu0 %1864
  %1866 = vrot.lane.b32.xlu0 %v1258, 1
  %v1867 = vpop.permute.xlu0 %1866
  %1868 = vrot.lane.b32.xlu0 %v1251, 1
  %v1869 = vpop.permute.xlu0 %1868
  %1870 = vrot.lane.b32.xlu0 %v1259, 1
  %v1871 = vpop.permute.xlu0 %1870
  %1872 = vrot.lane.b32.xlu0 %v1252, 1
  %v1873 = vpop.permute.xlu0 %1872
  %1874 = vrot.lane.b32.xlu0 %v1260, 1
  %v1875 = vpop.permute.xlu0 %1874
  %1876 = vrot.lane.b32.xlu0 %v1253, 1
  %v1877 = vpop.permute.xlu0 %1876
  %1878 = vrot.lane.b32.xlu0 %v1261, 1
  %v1879 = vpop.permute.xlu0 %1878
  %1880 = vrot.lane.b32.xlu0 %v1254, 1
  %v1881 = vpop.permute.xlu0 %1880
  %1882 = vrot.lane.b32.xlu0 %v1262, 1
  %v1883 = vpop.permute.xlu0 %1882
  %v1884 = vsel %vm261, %v1877, %v1881
  %v1885 = vsel %vm261, %v1879, %v1883
  %v1886 = vsel %vm261, %v1873, %v1877
  %v1887 = vsel %vm261, %v1875, %v1879
  %v1888 = vsel %vm261, %v1869, %v1873
  %v1889 = vsel %vm261, %v1871, %v1875
  %v1890 = vsel %vm261, %v1865, %v1869
  %v1891 = vsel %vm261, %v1867, %v1871
  %v1892 = vsel %vm261, %v1861, %v1865
  %v1893 = vsel %vm261, %v1863, %v1867
  %v1894 = vsel %vm261, %v1857, %v1861
  %v1895 = vsel %vm261, %v1859, %v1863
  %v1896 = vsel %vm261, %v1853, %v1857
  %v1897 = vsel %vm261, %v1855, %v1859
  %v1898 = vsel %vm261, %v1881, %v1853
  %v1899 = vsel %vm261, %v1883, %v1855
  %v1900 = vmul.f32 %v1898, %v275
  %v1901 = vmul.f32 %v1896, %v276
  %v1902 = vmul.f32 %v1894, %v277
  %v1903 = vmul.f32 %v1892, %v278
  %v1904 = vmul.f32 %v1890, %v279
  %v1905 = vmul.f32 %v1888, %v280
  %v1906 = vmul.f32 %v1886, %v281
  %v1907 = vmul.f32 %v1884, %v282
  %v1908 = vmul.f32 %v1899, %v275
  %v1909 = vmul.f32 %v1897, %v276
  %v1910 = vmul.f32 %v1895, %v277
  %v1911 = vmul.f32 %v1893, %v278
  %v1912 = vmul.f32 %v1891, %v279
  %v1913 = vmul.f32 %v1889, %v280
  %v1914 = vmul.f32 %v1887, %v281
  %v1915 = vmul.f32 %v1885, %v282
  %v1916 = vpack.c.bf16 %v1908, %v1900
  %v1917 = vpack.c.bf16 %v1909, %v1901
  %v1918 = vpack.c.bf16 %v1910, %v1902
  %v1919 = vpack.c.bf16 %v1911, %v1903
  %v1920 = vpack.c.bf16 %v1912, %v1904
  %v1921 = vpack.c.bf16 %v1913, %v1905
  %v1922 = vpack.c.bf16 %v1914, %v1906
  %v1923 = vpack.c.bf16 %v1915, %v1907
  %1924 = vrot.lane.b32.xlu0 %v1413, 80
  %v1925 = vpop.permute.xlu0 %1924
  %v1927 = vsel %vm1416, %v1925, 0
  %1929 = vmatpush.bf16.msra.mxu0 0
  %1930 = vmatpush.bf16.msra.mxu0 0
  %1931 = vmatpush.bf16.msra.mxu0 0
  %1932 = vmatpush.bf16.msra.mxu0 0
  %1933 = vmatpush.bf16.msra.mxu0 0
  %1934 = vmatpush.bf16.msra.mxu0 0
  %1935 = vmatpush.bf16.msra.mxu0 0
  %1936 = vmatpush.bf16.msra.mxu0 %v1916
  %1937 = vmatmul.bf16.gmra.mxu0 %v1927
  %v1938 = vpop.f32.mrf.mxu0
  %v1939 = vadd.f32 0.0, %v1938
  %v1940 = vpop.f32.mrf.mxu0
  %v1941 = vadd.f32 0.0, %v1940
  %1942 = vdwg.mxu0
  %1943 = vmatpush.bf16.msra.mxu0 0
  %1944 = vmatpush.bf16.msra.mxu0 0
  %1945 = vmatpush.bf16.msra.mxu0 0
  %1946 = vmatpush.bf16.msra.mxu0 0
  %1947 = vmatpush.bf16.msra.mxu0 0
  %1948 = vmatpush.bf16.msra.mxu0 0
  %1949 = vmatpush.bf16.msra.mxu0 0
  %1950 = vmatpush.bf16.msra.mxu0 %v1917
  %1951 = vmatmul.bf16.gmra.mxu0 %v1927
  %v1952 = vpop.f32.mrf.mxu0
  %v1953 = vadd.f32 0.0, %v1952
  %v1954 = vpop.f32.mrf.mxu0
  %v1955 = vadd.f32 0.0, %v1954
  %1956 = vdwg.mxu0
  %1957 = vmatpush.bf16.msra.mxu0 0
  %1958 = vmatpush.bf16.msra.mxu0 0
  %1959 = vmatpush.bf16.msra.mxu0 0
  %1960 = vmatpush.bf16.msra.mxu0 0
  %1961 = vmatpush.bf16.msra.mxu0 0
  %1962 = vmatpush.bf16.msra.mxu0 0
  %1963 = vmatpush.bf16.msra.mxu0 0
  %1964 = vmatpush.bf16.msra.mxu0 %v1918
  %1965 = vmatmul.bf16.gmra.mxu0 %v1927
  %v1966 = vpop.f32.mrf.mxu0
  %v1967 = vadd.f32 0.0, %v1966
  %v1968 = vpop.f32.mrf.mxu0
  %v1969 = vadd.f32 0.0, %v1968
  %1970 = vdwg.mxu0
  %1971 = vmatpush.bf16.msra.mxu0 0
  %1972 = vmatpush.bf16.msra.mxu0 0
  %1973 = vmatpush.bf16.msra.mxu0 0
  %1974 = vmatpush.bf16.msra.mxu0 0
  %1975 = vmatpush.bf16.msra.mxu0 0
  %1976 = vmatpush.bf16.msra.mxu0 0
  %1977 = vmatpush.bf16.msra.mxu0 0
  %1978 = vmatpush.bf16.msra.mxu0 %v1919
  %1979 = vmatmul.bf16.gmra.mxu0 %v1927
  %v1980 = vpop.f32.mrf.mxu0
  %v1981 = vadd.f32 0.0, %v1980
  %v1982 = vpop.f32.mrf.mxu0
  %v1983 = vadd.f32 0.0, %v1982
  %1984 = vdwg.mxu0
  %1985 = vmatpush.bf16.msra.mxu0 0
  %1986 = vmatpush.bf16.msra.mxu0 0
  %1987 = vmatpush.bf16.msra.mxu0 0
  %1988 = vmatpush.bf16.msra.mxu0 0
  %1989 = vmatpush.bf16.msra.mxu0 0
  %1990 = vmatpush.bf16.msra.mxu0 0
  %1991 = vmatpush.bf16.msra.mxu0 0
  %1992 = vmatpush.bf16.msra.mxu0 %v1920
  %1993 = vmatmul.bf16.gmra.mxu0 %v1927
  %v1994 = vpop.f32.mrf.mxu0
  %v1995 = vadd.f32 0.0, %v1994
  %v1996 = vpop.f32.mrf.mxu0
  %v1997 = vadd.f32 0.0, %v1996
  %1998 = vdwg.mxu0
  %1999 = vmatpush.bf16.msra.mxu0 0
  %2000 = vmatpush.bf16.msra.mxu0 0
  %2001 = vmatpush.bf16.msra.mxu0 0
  %2002 = vmatpush.bf16.msra.mxu0 0
  %2003 = vmatpush.bf16.msra.mxu0 0
  %2004 = vmatpush.bf16.msra.mxu0 0
  %2005 = vmatpush.bf16.msra.mxu0 0
  %2006 = vmatpush.bf16.msra.mxu0 %v1921
  %2007 = vmatmul.bf16.gmra.mxu0 %v1927
  %v2008 = vpop.f32.mrf.mxu0
  %v2009 = vadd.f32 0.0, %v2008
  %v2010 = vpop.f32.mrf.mxu0
  %v2011 = vadd.f32 0.0, %v2010
  %2012 = vdwg.mxu0
  %2013 = vmatpush.bf16.msra.mxu0 0
  %2014 = vmatpush.bf16.msra.mxu0 0
  %2015 = vmatpush.bf16.msra.mxu0 0
  %2016 = vmatpush.bf16.msra.mxu0 0
  %2017 = vmatpush.bf16.msra.mxu0 0
  %2018 = vmatpush.bf16.msra.mxu0 0
  %2019 = vmatpush.bf16.msra.mxu0 0
  %2020 = vmatpush.bf16.msra.mxu0 %v1922
  %2021 = vmatmul.bf16.gmra.mxu0 %v1927
  %v2022 = vpop.f32.mrf.mxu0
  %v2023 = vadd.f32 0.0, %v2022
  %v2024 = vpop.f32.mrf.mxu0
  %v2025 = vadd.f32 0.0, %v2024
  %2026 = vdwg.mxu0
  %2027 = vmatpush.bf16.msra.mxu0 0
  %2028 = vmatpush.bf16.msra.mxu0 0
  %2029 = vmatpush.bf16.msra.mxu0 0
  %2030 = vmatpush.bf16.msra.mxu0 0
  %2031 = vmatpush.bf16.msra.mxu0 0
  %2032 = vmatpush.bf16.msra.mxu0 0
  %2033 = vmatpush.bf16.msra.mxu0 0
  %2034 = vmatpush.bf16.msra.mxu0 %v1923
  %2035 = vmatmul.bf16.gmra.mxu0 %v1927
  %v2036 = vpop.f32.mrf.mxu0
  %v2037 = vadd.f32 0.0, %v2036
  %v2038 = vpop.f32.mrf.mxu0
  %v2039 = vadd.f32 0.0, %v2038
  %2040 = vdwg.mxu0
  %v2041 = vadd.f32 %v1836, %v1939
  %v2042 = vadd.f32 %v1837, %v1953
  %v2043 = vadd.f32 %v1838, %v1967
  %v2044 = vadd.f32 %v1839, %v1981
  %v2045 = vadd.f32 %v1840, %v1995
  %v2046 = vadd.f32 %v1841, %v2009
  %v2047 = vadd.f32 %v1842, %v2023
  %v2048 = vadd.f32 %v1843, %v2037
  %v2049 = vadd.f32 %v1844, %v1941
  %v2050 = vadd.f32 %v1845, %v1955
  %v2051 = vadd.f32 %v1846, %v1969
  %v2052 = vadd.f32 %v1847, %v1983
  %v2053 = vadd.f32 %v1848, %v1997
  %v2054 = vadd.f32 %v1849, %v2011
  %v2055 = vadd.f32 %v1850, %v2025
  %v2056 = vadd.f32 %v1851, %v2039
  %v2058 = vperm.slane %v306, 0
  %v2059 = vperm.slane %v306, 1
  %v2060 = vperm.slane %v306, 2
  %v2061 = vperm.slane %v306, 3
  %v2062 = vperm.slane %v306, 4
  %v2063 = vperm.slane %v306, 5
  %v2064 = vperm.slane %v306, 6
  %v2065 = vperm.slane %v306, 7
  %v2074 = vmul.f32 %v1247, %v2058
  %v2075 = vmul.f32 %v1248, %v2059
  %v2076 = vmul.f32 %v1249, %v2060
  %v2077 = vmul.f32 %v1250, %v2061
  %v2078 = vmul.f32 %v1251, %v2062
  %v2079 = vmul.f32 %v1252, %v2063
  %v2080 = vmul.f32 %v1253, %v2064
  %v2081 = vmul.f32 %v1254, %v2065
  %v2082 = vmul.f32 %v1255, %v2058
  %v2083 = vmul.f32 %v1256, %v2059
  %v2084 = vmul.f32 %v1257, %v2060
  %v2085 = vmul.f32 %v1258, %v2061
  %v2086 = vmul.f32 %v1259, %v2062
  %v2087 = vmul.f32 %v1260, %v2063
  %v2088 = vmul.f32 %v1261, %v2064
  %v2089 = vmul.f32 %v1262, %v2065
  %v2090 = vpack.c.bf16 %v2082, %v2074
  %v2091 = vpack.c.bf16 %v2083, %v2075
  %v2092 = vpack.c.bf16 %v2084, %v2076
  %v2093 = vpack.c.bf16 %v2085, %v2077
  %v2094 = vpack.c.bf16 %v2086, %v2078
  %v2095 = vpack.c.bf16 %v2087, %v2079
  %v2096 = vpack.c.bf16 %v2088, %v2080
  %v2097 = vpack.c.bf16 %v2089, %v2081
  %2098 = vrot.lane.b32.xlu0 %v1413, 64
  %v2099 = vpop.permute.xlu0 %2098
  %v2101 = vsel %vm1416, %v2099, 0
  %2103 = vmatpush.bf16.msra.mxu0 0
  %2104 = vmatpush.bf16.msra.mxu0 0
  %2105 = vmatpush.bf16.msra.mxu0 0
  %2106 = vmatpush.bf16.msra.mxu0 0
  %2107 = vmatpush.bf16.msra.mxu0 0
  %2108 = vmatpush.bf16.msra.mxu0 0
  %2109 = vmatpush.bf16.msra.mxu0 0
  %2110 = vmatpush.bf16.msra.mxu0 %v2090
  %2111 = vmatmul.bf16.gmra.mxu0 %v2101
  %v2112 = vpop.f32.mrf.mxu0
  %v2113 = vadd.f32 0.0, %v2112
  %v2114 = vpop.f32.mrf.mxu0
  %v2115 = vadd.f32 0.0, %v2114
  %2116 = vdwg.mxu0
  %2117 = vmatpush.bf16.msra.mxu0 0
  %2118 = vmatpush.bf16.msra.mxu0 0
  %2119 = vmatpush.bf16.msra.mxu0 0
  %2120 = vmatpush.bf16.msra.mxu0 0
  %2121 = vmatpush.bf16.msra.mxu0 0
  %2122 = vmatpush.bf16.msra.mxu0 0
  %2123 = vmatpush.bf16.msra.mxu0 0
  %2124 = vmatpush.bf16.msra.mxu0 %v2091
  %2125 = vmatmul.bf16.gmra.mxu0 %v2101
  %v2126 = vpop.f32.mrf.mxu0
  %v2127 = vadd.f32 0.0, %v2126
  %v2128 = vpop.f32.mrf.mxu0
  %v2129 = vadd.f32 0.0, %v2128
  %2130 = vdwg.mxu0
  %2131 = vmatpush.bf16.msra.mxu0 0
  %2132 = vmatpush.bf16.msra.mxu0 0
  %2133 = vmatpush.bf16.msra.mxu0 0
  %2134 = vmatpush.bf16.msra.mxu0 0
  %2135 = vmatpush.bf16.msra.mxu0 0
  %2136 = vmatpush.bf16.msra.mxu0 0
  %2137 = vmatpush.bf16.msra.mxu0 0
  %2138 = vmatpush.bf16.msra.mxu0 %v2092
  %2139 = vmatmul.bf16.gmra.mxu0 %v2101
  %v2140 = vpop.f32.mrf.mxu0
  %v2141 = vadd.f32 0.0, %v2140
  %v2142 = vpop.f32.mrf.mxu0
  %v2143 = vadd.f32 0.0, %v2142
  %2144 = vdwg.mxu0
  %2145 = vmatpush.bf16.msra.mxu0 0
  %2146 = vmatpush.bf16.msra.mxu0 0
  %2147 = vmatpush.bf16.msra.mxu0 0
  %2148 = vmatpush.bf16.msra.mxu0 0
  %2149 = vmatpush.bf16.msra.mxu0 0
  %2150 = vmatpush.bf16.msra.mxu0 0
  %2151 = vmatpush.bf16.msra.mxu0 0
  %2152 = vmatpush.bf16.msra.mxu0 %v2093
  %2153 = vmatmul.bf16.gmra.mxu0 %v2101
  %v2154 = vpop.f32.mrf.mxu0
  %v2155 = vadd.f32 0.0, %v2154
  %v2156 = vpop.f32.mrf.mxu0
  %v2157 = vadd.f32 0.0, %v2156
  %2158 = vdwg.mxu0
  %2159 = vmatpush.bf16.msra.mxu0 0
  %2160 = vmatpush.bf16.msra.mxu0 0
  %2161 = vmatpush.bf16.msra.mxu0 0
  %2162 = vmatpush.bf16.msra.mxu0 0
  %2163 = vmatpush.bf16.msra.mxu0 0
  %2164 = vmatpush.bf16.msra.mxu0 0
  %2165 = vmatpush.bf16.msra.mxu0 0
  %2166 = vmatpush.bf16.msra.mxu0 %v2094
  %2167 = vmatmul.bf16.gmra.mxu0 %v2101
  %v2168 = vpop.f32.mrf.mxu0
  %v2169 = vadd.f32 0.0, %v2168
  %v2170 = vpop.f32.mrf.mxu0
  %v2171 = vadd.f32 0.0, %v2170
  %2172 = vdwg.mxu0
  %2173 = vmatpush.bf16.msra.mxu0 0
  %2174 = vmatpush.bf16.msra.mxu0 0
  %2175 = vmatpush.bf16.msra.mxu0 0
  %2176 = vmatpush.bf16.msra.mxu0 0
  %2177 = vmatpush.bf16.msra.mxu0 0
  %2178 = vmatpush.bf16.msra.mxu0 0
  %2179 = vmatpush.bf16.msra.mxu0 0
  %2180 = vmatpush.bf16.msra.mxu0 %v2095
  %2181 = vmatmul.bf16.gmra.mxu0 %v2101
  %v2182 = vpop.f32.mrf.mxu0
  %v2183 = vadd.f32 0.0, %v2182
  %v2184 = vpop.f32.mrf.mxu0
  %v2185 = vadd.f32 0.0, %v2184
  %2186 = vdwg.mxu0
  %2187 = vmatpush.bf16.msra.mxu0 0
  %2188 = vmatpush.bf16.msra.mxu0 0
  %2189 = vmatpush.bf16.msra.mxu0 0
  %2190 = vmatpush.bf16.msra.mxu0 0
  %2191 = vmatpush.bf16.msra.mxu0 0
  %2192 = vmatpush.bf16.msra.mxu0 0
  %2193 = vmatpush.bf16.msra.mxu0 0
  %2194 = vmatpush.bf16.msra.mxu0 %v2096
  %2195 = vmatmul.bf16.gmra.mxu0 %v2101
  %v2196 = vpop.f32.mrf.mxu0
  %v2197 = vadd.f32 0.0, %v2196
  %v2198 = vpop.f32.mrf.mxu0
  %v2199 = vadd.f32 0.0, %v2198
  %2200 = vdwg.mxu0
  %2201 = vmatpush.bf16.msra.mxu0 0
  %2202 = vmatpush.bf16.msra.mxu0 0
  %2203 = vmatpush.bf16.msra.mxu0 0
  %2204 = vmatpush.bf16.msra.mxu0 0
  %2205 = vmatpush.bf16.msra.mxu0 0
  %2206 = vmatpush.bf16.msra.mxu0 0
  %2207 = vmatpush.bf16.msra.mxu0 0
  %2208 = vmatpush.bf16.msra.mxu0 %v2097
  %2209 = vmatmul.bf16.gmra.mxu0 %v2101
  %v2210 = vpop.f32.mrf.mxu0
  %v2211 = vadd.f32 0.0, %v2210
  %v2212 = vpop.f32.mrf.mxu0
  %v2213 = vadd.f32 0.0, %v2212
  %2214 = vdwg.mxu0
  %v2215 = vadd.f32 %v2041, %v2113
  %v2216 = vadd.f32 %v2042, %v2127
  %v2217 = vadd.f32 %v2043, %v2141
  %v2218 = vadd.f32 %v2044, %v2155
  %v2219 = vadd.f32 %v2045, %v2169
  %v2220 = vadd.f32 %v2046, %v2183
  %v2221 = vadd.f32 %v2047, %v2197
  %v2222 = vadd.f32 %v2048, %v2211
  %v2223 = vadd.f32 %v2049, %v2115
  %v2224 = vadd.f32 %v2050, %v2129
  %v2225 = vadd.f32 %v2051, %v2143
  %v2226 = vadd.f32 %v2052, %v2157
  %v2227 = vadd.f32 %v2053, %v2171
  %v2228 = vadd.f32 %v2054, %v2185
  %v2229 = vadd.f32 %v2055, %v2199
  %v2230 = vadd.f32 %v2056, %v2213
  %2231 = vrot.lane.b32.xlu0 %v1247, 127
  %v2232 = vpop.permute.xlu0 %2231
  %2233 = vrot.lane.b32.xlu0 %v1255, 127
  %v2234 = vpop.permute.xlu0 %2233
  %2235 = vrot.lane.b32.xlu0 %v1248, 127
  %v2236 = vpop.permute.xlu0 %2235
  %2237 = vrot.lane.b32.xlu0 %v1256, 127
  %v2238 = vpop.permute.xlu0 %2237
  %2239 = vrot.lane.b32.xlu0 %v1249, 127
  %v2240 = vpop.permute.xlu0 %2239
  %2241 = vrot.lane.b32.xlu0 %v1257, 127
  %v2242 = vpop.permute.xlu0 %2241
  %2243 = vrot.lane.b32.xlu0 %v1250, 127
  %v2244 = vpop.permute.xlu0 %2243
  %2245 = vrot.lane.b32.xlu0 %v1258, 127
  %v2246 = vpop.permute.xlu0 %2245
  %2247 = vrot.lane.b32.xlu0 %v1251, 127
  %v2248 = vpop.permute.xlu0 %2247
  %2249 = vrot.lane.b32.xlu0 %v1259, 127
  %v2250 = vpop.permute.xlu0 %2249
  %2251 = vrot.lane.b32.xlu0 %v1252, 127
  %v2252 = vpop.permute.xlu0 %2251
  %2253 = vrot.lane.b32.xlu0 %v1260, 127
  %v2254 = vpop.permute.xlu0 %2253
  %2255 = vrot.lane.b32.xlu0 %v1253, 127
  %v2256 = vpop.permute.xlu0 %2255
  %2257 = vrot.lane.b32.xlu0 %v1261, 127
  %v2258 = vpop.permute.xlu0 %2257
  %2259 = vrot.lane.b32.xlu0 %v1254, 127
  %v2260 = vpop.permute.xlu0 %2259
  %2261 = vrot.lane.b32.xlu0 %v1262, 127
  %v2262 = vpop.permute.xlu0 %2261
  %v2263 = vsel %vm345, %v2256, %v2260
  %v2264 = vsel %vm345, %v2258, %v2262
  %v2265 = vsel %vm345, %v2252, %v2256
  %v2266 = vsel %vm345, %v2254, %v2258
  %v2267 = vsel %vm345, %v2248, %v2252
  %v2268 = vsel %vm345, %v2250, %v2254
  %v2269 = vsel %vm345, %v2244, %v2248
  %v2270 = vsel %vm345, %v2246, %v2250
  %v2271 = vsel %vm345, %v2240, %v2244
  %v2272 = vsel %vm345, %v2242, %v2246
  %v2273 = vsel %vm345, %v2236, %v2240
  %v2274 = vsel %vm345, %v2238, %v2242
  %v2275 = vsel %vm345, %v2232, %v2236
  %v2276 = vsel %vm345, %v2234, %v2238
  %v2277 = vsel %vm345, %v2260, %v2232
  %v2278 = vsel %vm345, %v2262, %v2234
  %v2279 = vmul.f32 %v2275, %v359
  %v2280 = vmul.f32 %v2273, %v360
  %v2281 = vmul.f32 %v2271, %v361
  %v2282 = vmul.f32 %v2269, %v362
  %v2283 = vmul.f32 %v2267, %v363
  %v2284 = vmul.f32 %v2265, %v364
  %v2285 = vmul.f32 %v2263, %v365
  %v2286 = vmul.f32 %v2277, %v366
  %v2287 = vmul.f32 %v2276, %v359
  %v2288 = vmul.f32 %v2274, %v360
  %v2289 = vmul.f32 %v2272, %v361
  %v2290 = vmul.f32 %v2270, %v362
  %v2291 = vmul.f32 %v2268, %v363
  %v2292 = vmul.f32 %v2266, %v364
  %v2293 = vmul.f32 %v2264, %v365
  %v2294 = vmul.f32 %v2278, %v366
  %v2295 = vpack.c.bf16 %v2287, %v2279
  %v2296 = vpack.c.bf16 %v2288, %v2280
  %v2297 = vpack.c.bf16 %v2289, %v2281
  %v2298 = vpack.c.bf16 %v2290, %v2282
  %v2299 = vpack.c.bf16 %v2291, %v2283
  %v2300 = vpack.c.bf16 %v2292, %v2284
  %v2301 = vpack.c.bf16 %v2293, %v2285
  %v2302 = vpack.c.bf16 %v2294, %v2286
  %2303 = vrot.lane.b32.xlu0 %v1413, 48
  %v2304 = vpop.permute.xlu0 %2303
  %v2306 = vsel %vm1416, %v2304, 0
  %2308 = vmatpush.bf16.msra.mxu0 0
  %2309 = vmatpush.bf16.msra.mxu0 0
  %2310 = vmatpush.bf16.msra.mxu0 0
  %2311 = vmatpush.bf16.msra.mxu0 0
  %2312 = vmatpush.bf16.msra.mxu0 0
  %2313 = vmatpush.bf16.msra.mxu0 0
  %2314 = vmatpush.bf16.msra.mxu0 0
  %2315 = vmatpush.bf16.msra.mxu0 %v2295
  %2316 = vmatmul.bf16.gmra.mxu0 %v2306
  %v2317 = vpop.f32.mrf.mxu0
  %v2318 = vadd.f32 0.0, %v2317
  %v2319 = vpop.f32.mrf.mxu0
  %v2320 = vadd.f32 0.0, %v2319
  %2321 = vdwg.mxu0
  %2322 = vmatpush.bf16.msra.mxu0 0
  %2323 = vmatpush.bf16.msra.mxu0 0
  %2324 = vmatpush.bf16.msra.mxu0 0
  %2325 = vmatpush.bf16.msra.mxu0 0
  %2326 = vmatpush.bf16.msra.mxu0 0
  %2327 = vmatpush.bf16.msra.mxu0 0
  %2328 = vmatpush.bf16.msra.mxu0 0
  %2329 = vmatpush.bf16.msra.mxu0 %v2296
  %2330 = vmatmul.bf16.gmra.mxu0 %v2306
  %v2331 = vpop.f32.mrf.mxu0
  %v2332 = vadd.f32 0.0, %v2331
  %v2333 = vpop.f32.mrf.mxu0
  %v2334 = vadd.f32 0.0, %v2333
  %2335 = vdwg.mxu0
  %2336 = vmatpush.bf16.msra.mxu0 0
  %2337 = vmatpush.bf16.msra.mxu0 0
  %2338 = vmatpush.bf16.msra.mxu0 0
  %2339 = vmatpush.bf16.msra.mxu0 0
  %2340 = vmatpush.bf16.msra.mxu0 0
  %2341 = vmatpush.bf16.msra.mxu0 0
  %2342 = vmatpush.bf16.msra.mxu0 0
  %2343 = vmatpush.bf16.msra.mxu0 %v2297
  %2344 = vmatmul.bf16.gmra.mxu0 %v2306
  %v2345 = vpop.f32.mrf.mxu0
  %v2346 = vadd.f32 0.0, %v2345
  %v2347 = vpop.f32.mrf.mxu0
  %v2348 = vadd.f32 0.0, %v2347
  %2349 = vdwg.mxu0
  %2350 = vmatpush.bf16.msra.mxu0 0
  %2351 = vmatpush.bf16.msra.mxu0 0
  %2352 = vmatpush.bf16.msra.mxu0 0
  %2353 = vmatpush.bf16.msra.mxu0 0
  %2354 = vmatpush.bf16.msra.mxu0 0
  %2355 = vmatpush.bf16.msra.mxu0 0
  %2356 = vmatpush.bf16.msra.mxu0 0
  %2357 = vmatpush.bf16.msra.mxu0 %v2298
  %2358 = vmatmul.bf16.gmra.mxu0 %v2306
  %v2359 = vpop.f32.mrf.mxu0
  %v2360 = vadd.f32 0.0, %v2359
  %v2361 = vpop.f32.mrf.mxu0
  %v2362 = vadd.f32 0.0, %v2361
  %2363 = vdwg.mxu0
  %2364 = vmatpush.bf16.msra.mxu0 0
  %2365 = vmatpush.bf16.msra.mxu0 0
  %2366 = vmatpush.bf16.msra.mxu0 0
  %2367 = vmatpush.bf16.msra.mxu0 0
  %2368 = vmatpush.bf16.msra.mxu0 0
  %2369 = vmatpush.bf16.msra.mxu0 0
  %2370 = vmatpush.bf16.msra.mxu0 0
  %2371 = vmatpush.bf16.msra.mxu0 %v2299
  %2372 = vmatmul.bf16.gmra.mxu0 %v2306
  %v2373 = vpop.f32.mrf.mxu0
  %v2374 = vadd.f32 0.0, %v2373
  %v2375 = vpop.f32.mrf.mxu0
  %v2376 = vadd.f32 0.0, %v2375
  %2377 = vdwg.mxu0
  %2378 = vmatpush.bf16.msra.mxu0 0
  %2379 = vmatpush.bf16.msra.mxu0 0
  %2380 = vmatpush.bf16.msra.mxu0 0
  %2381 = vmatpush.bf16.msra.mxu0 0
  %2382 = vmatpush.bf16.msra.mxu0 0
  %2383 = vmatpush.bf16.msra.mxu0 0
  %2384 = vmatpush.bf16.msra.mxu0 0
  %2385 = vmatpush.bf16.msra.mxu0 %v2300
  %2386 = vmatmul.bf16.gmra.mxu0 %v2306
  %v2387 = vpop.f32.mrf.mxu0
  %v2388 = vadd.f32 0.0, %v2387
  %v2389 = vpop.f32.mrf.mxu0
  %v2390 = vadd.f32 0.0, %v2389
  %2391 = vdwg.mxu0
  %2392 = vmatpush.bf16.msra.mxu0 0
  %2393 = vmatpush.bf16.msra.mxu0 0
  %2394 = vmatpush.bf16.msra.mxu0 0
  %2395 = vmatpush.bf16.msra.mxu0 0
  %2396 = vmatpush.bf16.msra.mxu0 0
  %2397 = vmatpush.bf16.msra.mxu0 0
  %2398 = vmatpush.bf16.msra.mxu0 0
  %2399 = vmatpush.bf16.msra.mxu0 %v2301
  %2400 = vmatmul.bf16.gmra.mxu0 %v2306
  %v2401 = vpop.f32.mrf.mxu0
  %v2402 = vadd.f32 0.0, %v2401
  %v2403 = vpop.f32.mrf.mxu0
  %v2404 = vadd.f32 0.0, %v2403
  %2405 = vdwg.mxu0
  %2406 = vmatpush.bf16.msra.mxu0 0
  %2407 = vmatpush.bf16.msra.mxu0 0
  %2408 = vmatpush.bf16.msra.mxu0 0
  %2409 = vmatpush.bf16.msra.mxu0 0
  %2410 = vmatpush.bf16.msra.mxu0 0
  %2411 = vmatpush.bf16.msra.mxu0 0
  %2412 = vmatpush.bf16.msra.mxu0 0
  %2413 = vmatpush.bf16.msra.mxu0 %v2302
  %2414 = vmatmul.bf16.gmra.mxu0 %v2306
  %v2415 = vpop.f32.mrf.mxu0
  %v2416 = vadd.f32 0.0, %v2415
  %v2417 = vpop.f32.mrf.mxu0
  %v2418 = vadd.f32 0.0, %v2417
  %2419 = vdwg.mxu0
  %v2420 = vadd.f32 %v2215, %v2318
  %v2421 = vadd.f32 %v2216, %v2332
  %v2422 = vadd.f32 %v2217, %v2346
  %v2423 = vadd.f32 %v2218, %v2360
  %v2424 = vadd.f32 %v2219, %v2374
  %v2425 = vadd.f32 %v2220, %v2388
  %v2426 = vadd.f32 %v2221, %v2402
  %v2427 = vadd.f32 %v2222, %v2416
  %v2428 = vadd.f32 %v2223, %v2320
  %v2429 = vadd.f32 %v2224, %v2334
  %v2430 = vadd.f32 %v2225, %v2348
  %v2431 = vadd.f32 %v2226, %v2362
  %v2432 = vadd.f32 %v2227, %v2376
  %v2433 = vadd.f32 %v2228, %v2390
  %v2434 = vadd.f32 %v2229, %v2404
  %v2435 = vadd.f32 %v2230, %v2418
  %2436 = vrot.lane.b32.xlu0 %v1247, 113
  %v2437 = vpop.permute.xlu0 %2436
  %2438 = vrot.lane.b32.xlu0 %v1255, 113
  %v2439 = vpop.permute.xlu0 %2438
  %2440 = vrot.lane.b32.xlu0 %v1248, 113
  %v2441 = vpop.permute.xlu0 %2440
  %2442 = vrot.lane.b32.xlu0 %v1256, 113
  %v2443 = vpop.permute.xlu0 %2442
  %2444 = vrot.lane.b32.xlu0 %v1249, 113
  %v2445 = vpop.permute.xlu0 %2444
  %2446 = vrot.lane.b32.xlu0 %v1257, 113
  %v2447 = vpop.permute.xlu0 %2446
  %2448 = vrot.lane.b32.xlu0 %v1250, 113
  %v2449 = vpop.permute.xlu0 %2448
  %2450 = vrot.lane.b32.xlu0 %v1258, 113
  %v2451 = vpop.permute.xlu0 %2450
  %2452 = vrot.lane.b32.xlu0 %v1251, 113
  %v2453 = vpop.permute.xlu0 %2452
  %2454 = vrot.lane.b32.xlu0 %v1259, 113
  %v2455 = vpop.permute.xlu0 %2454
  %2456 = vrot.lane.b32.xlu0 %v1252, 113
  %v2457 = vpop.permute.xlu0 %2456
  %2458 = vrot.lane.b32.xlu0 %v1260, 113
  %v2459 = vpop.permute.xlu0 %2458
  %2460 = vrot.lane.b32.xlu0 %v1253, 113
  %v2461 = vpop.permute.xlu0 %2460
  %2462 = vrot.lane.b32.xlu0 %v1261, 113
  %v2463 = vpop.permute.xlu0 %2462
  %2464 = vrot.lane.b32.xlu0 %v1254, 113
  %v2465 = vpop.permute.xlu0 %2464
  %2466 = vrot.lane.b32.xlu0 %v1262, 113
  %v2467 = vpop.permute.xlu0 %2466
  %v2468 = vsel %vm403, %v2461, %v2465
  %v2469 = vsel %vm403, %v2463, %v2467
  %v2470 = vsel %vm403, %v2457, %v2461
  %v2471 = vsel %vm403, %v2459, %v2463
  %v2472 = vsel %vm403, %v2453, %v2457
  %v2473 = vsel %vm403, %v2455, %v2459
  %v2474 = vsel %vm403, %v2449, %v2453
  %v2475 = vsel %vm403, %v2451, %v2455
  %v2476 = vsel %vm403, %v2445, %v2449
  %v2477 = vsel %vm403, %v2447, %v2451
  %v2478 = vsel %vm403, %v2441, %v2445
  %v2479 = vsel %vm403, %v2443, %v2447
  %v2480 = vsel %vm403, %v2437, %v2441
  %v2481 = vsel %vm403, %v2439, %v2443
  %v2482 = vsel %vm403, %v2465, %v2437
  %v2483 = vsel %vm403, %v2467, %v2439
  %v2484 = vmul.f32 %v2480, %v417
  %v2485 = vmul.f32 %v2478, %v418
  %v2486 = vmul.f32 %v2476, %v419
  %v2487 = vmul.f32 %v2474, %v420
  %v2488 = vmul.f32 %v2472, %v421
  %v2489 = vmul.f32 %v2470, %v422
  %v2490 = vmul.f32 %v2468, %v423
  %v2491 = vmul.f32 %v2482, %v424
  %v2492 = vmul.f32 %v2481, %v417
  %v2493 = vmul.f32 %v2479, %v418
  %v2494 = vmul.f32 %v2477, %v419
  %v2495 = vmul.f32 %v2475, %v420
  %v2496 = vmul.f32 %v2473, %v421
  %v2497 = vmul.f32 %v2471, %v422
  %v2498 = vmul.f32 %v2469, %v423
  %v2499 = vmul.f32 %v2483, %v424
  %v2500 = vpack.c.bf16 %v2492, %v2484
  %v2501 = vpack.c.bf16 %v2493, %v2485
  %v2502 = vpack.c.bf16 %v2494, %v2486
  %v2503 = vpack.c.bf16 %v2495, %v2487
  %v2504 = vpack.c.bf16 %v2496, %v2488
  %v2505 = vpack.c.bf16 %v2497, %v2489
  %v2506 = vpack.c.bf16 %v2498, %v2490
  %v2507 = vpack.c.bf16 %v2499, %v2491
  %2508 = vrot.lane.b32.xlu0 %v1413, 32
  %v2509 = vpop.permute.xlu0 %2508
  %v2511 = vsel %vm1416, %v2509, 0
  %2513 = vmatpush.bf16.msra.mxu0 0
  %2514 = vmatpush.bf16.msra.mxu0 0
  %2515 = vmatpush.bf16.msra.mxu0 0
  %2516 = vmatpush.bf16.msra.mxu0 0
  %2517 = vmatpush.bf16.msra.mxu0 0
  %2518 = vmatpush.bf16.msra.mxu0 0
  %2519 = vmatpush.bf16.msra.mxu0 0
  %2520 = vmatpush.bf16.msra.mxu0 %v2500
  %2521 = vmatmul.bf16.gmra.mxu0 %v2511
  %v2522 = vpop.f32.mrf.mxu0
  %v2523 = vadd.f32 0.0, %v2522
  %v2524 = vpop.f32.mrf.mxu0
  %v2525 = vadd.f32 0.0, %v2524
  %2526 = vdwg.mxu0
  %2527 = vmatpush.bf16.msra.mxu0 0
  %2528 = vmatpush.bf16.msra.mxu0 0
  %2529 = vmatpush.bf16.msra.mxu0 0
  %2530 = vmatpush.bf16.msra.mxu0 0
  %2531 = vmatpush.bf16.msra.mxu0 0
  %2532 = vmatpush.bf16.msra.mxu0 0
  %2533 = vmatpush.bf16.msra.mxu0 0
  %2534 = vmatpush.bf16.msra.mxu0 %v2501
  %2535 = vmatmul.bf16.gmra.mxu0 %v2511
  %v2536 = vpop.f32.mrf.mxu0
  %v2537 = vadd.f32 0.0, %v2536
  %v2538 = vpop.f32.mrf.mxu0
  %v2539 = vadd.f32 0.0, %v2538
  %2540 = vdwg.mxu0
  %2541 = vmatpush.bf16.msra.mxu0 0
  %2542 = vmatpush.bf16.msra.mxu0 0
  %2543 = vmatpush.bf16.msra.mxu0 0
  %2544 = vmatpush.bf16.msra.mxu0 0
  %2545 = vmatpush.bf16.msra.mxu0 0
  %2546 = vmatpush.bf16.msra.mxu0 0
  %2547 = vmatpush.bf16.msra.mxu0 0
  %2548 = vmatpush.bf16.msra.mxu0 %v2502
  %2549 = vmatmul.bf16.gmra.mxu0 %v2511
  %v2550 = vpop.f32.mrf.mxu0
  %v2551 = vadd.f32 0.0, %v2550
  %v2552 = vpop.f32.mrf.mxu0
  %v2553 = vadd.f32 0.0, %v2552
  %2554 = vdwg.mxu0
  %2555 = vmatpush.bf16.msra.mxu0 0
  %2556 = vmatpush.bf16.msra.mxu0 0
  %2557 = vmatpush.bf16.msra.mxu0 0
  %2558 = vmatpush.bf16.msra.mxu0 0
  %2559 = vmatpush.bf16.msra.mxu0 0
  %2560 = vmatpush.bf16.msra.mxu0 0
  %2561 = vmatpush.bf16.msra.mxu0 0
  %2562 = vmatpush.bf16.msra.mxu0 %v2503
  %2563 = vmatmul.bf16.gmra.mxu0 %v2511
  %v2564 = vpop.f32.mrf.mxu0
  %v2565 = vadd.f32 0.0, %v2564
  %v2566 = vpop.f32.mrf.mxu0
  %v2567 = vadd.f32 0.0, %v2566
  %2568 = vdwg.mxu0
  %2569 = vmatpush.bf16.msra.mxu0 0
  %2570 = vmatpush.bf16.msra.mxu0 0
  %2571 = vmatpush.bf16.msra.mxu0 0
  %2572 = vmatpush.bf16.msra.mxu0 0
  %2573 = vmatpush.bf16.msra.mxu0 0
  %2574 = vmatpush.bf16.msra.mxu0 0
  %2575 = vmatpush.bf16.msra.mxu0 0
  %2576 = vmatpush.bf16.msra.mxu0 %v2504
  %2577 = vmatmul.bf16.gmra.mxu0 %v2511
  %v2578 = vpop.f32.mrf.mxu0
  %v2579 = vadd.f32 0.0, %v2578
  %v2580 = vpop.f32.mrf.mxu0
  %v2581 = vadd.f32 0.0, %v2580
  %2582 = vdwg.mxu0
  %2583 = vmatpush.bf16.msra.mxu0 0
  %2584 = vmatpush.bf16.msra.mxu0 0
  %2585 = vmatpush.bf16.msra.mxu0 0
  %2586 = vmatpush.bf16.msra.mxu0 0
  %2587 = vmatpush.bf16.msra.mxu0 0
  %2588 = vmatpush.bf16.msra.mxu0 0
  %2589 = vmatpush.bf16.msra.mxu0 0
  %2590 = vmatpush.bf16.msra.mxu0 %v2505
  %2591 = vmatmul.bf16.gmra.mxu0 %v2511
  %v2592 = vpop.f32.mrf.mxu0
  %v2593 = vadd.f32 0.0, %v2592
  %v2594 = vpop.f32.mrf.mxu0
  %v2595 = vadd.f32 0.0, %v2594
  %2596 = vdwg.mxu0
  %2597 = vmatpush.bf16.msra.mxu0 0
  %2598 = vmatpush.bf16.msra.mxu0 0
  %2599 = vmatpush.bf16.msra.mxu0 0
  %2600 = vmatpush.bf16.msra.mxu0 0
  %2601 = vmatpush.bf16.msra.mxu0 0
  %2602 = vmatpush.bf16.msra.mxu0 0
  %2603 = vmatpush.bf16.msra.mxu0 0
  %2604 = vmatpush.bf16.msra.mxu0 %v2506
  %2605 = vmatmul.bf16.gmra.mxu0 %v2511
  %v2606 = vpop.f32.mrf.mxu0
  %v2607 = vadd.f32 0.0, %v2606
  %v2608 = vpop.f32.mrf.mxu0
  %v2609 = vadd.f32 0.0, %v2608
  %2610 = vdwg.mxu0
  %2611 = vmatpush.bf16.msra.mxu0 0
  %2612 = vmatpush.bf16.msra.mxu0 0
  %2613 = vmatpush.bf16.msra.mxu0 0
  %2614 = vmatpush.bf16.msra.mxu0 0
  %2615 = vmatpush.bf16.msra.mxu0 0
  %2616 = vmatpush.bf16.msra.mxu0 0
  %2617 = vmatpush.bf16.msra.mxu0 0
  %2618 = vmatpush.bf16.msra.mxu0 %v2507
  %2619 = vmatmul.bf16.gmra.mxu0 %v2511
  %v2620 = vpop.f32.mrf.mxu0
  %v2621 = vadd.f32 0.0, %v2620
  %v2622 = vpop.f32.mrf.mxu0
  %v2623 = vadd.f32 0.0, %v2622
  %2624 = vdwg.mxu0
  %v2625 = vadd.f32 %v2420, %v2523
  %v2626 = vadd.f32 %v2421, %v2537
  %v2627 = vadd.f32 %v2422, %v2551
  %v2628 = vadd.f32 %v2423, %v2565
  %v2629 = vadd.f32 %v2424, %v2579
  %v2630 = vadd.f32 %v2425, %v2593
  %v2631 = vadd.f32 %v2426, %v2607
  %v2632 = vadd.f32 %v2427, %v2621
  %v2633 = vadd.f32 %v2428, %v2525
  %v2634 = vadd.f32 %v2429, %v2539
  %v2635 = vadd.f32 %v2430, %v2553
  %v2636 = vadd.f32 %v2431, %v2567
  %v2637 = vadd.f32 %v2432, %v2581
  %v2638 = vadd.f32 %v2433, %v2595
  %v2639 = vadd.f32 %v2434, %v2609
  %v2640 = vadd.f32 %v2435, %v2623
  %2641 = vrot.lane.b32.xlu0 %v1247, 112
  %v2642 = vpop.permute.xlu0 %2641
  %2643 = vrot.lane.b32.xlu0 %v1255, 112
  %v2644 = vpop.permute.xlu0 %2643
  %2645 = vrot.lane.b32.xlu0 %v1248, 112
  %v2646 = vpop.permute.xlu0 %2645
  %2647 = vrot.lane.b32.xlu0 %v1256, 112
  %v2648 = vpop.permute.xlu0 %2647
  %2649 = vrot.lane.b32.xlu0 %v1249, 112
  %v2650 = vpop.permute.xlu0 %2649
  %2651 = vrot.lane.b32.xlu0 %v1257, 112
  %v2652 = vpop.permute.xlu0 %2651
  %2653 = vrot.lane.b32.xlu0 %v1250, 112
  %v2654 = vpop.permute.xlu0 %2653
  %2655 = vrot.lane.b32.xlu0 %v1258, 112
  %v2656 = vpop.permute.xlu0 %2655
  %2657 = vrot.lane.b32.xlu0 %v1251, 112
  %v2658 = vpop.permute.xlu0 %2657
  %2659 = vrot.lane.b32.xlu0 %v1259, 112
  %v2660 = vpop.permute.xlu0 %2659
  %2661 = vrot.lane.b32.xlu0 %v1252, 112
  %v2662 = vpop.permute.xlu0 %2661
  %2663 = vrot.lane.b32.xlu0 %v1260, 112
  %v2664 = vpop.permute.xlu0 %2663
  %2665 = vrot.lane.b32.xlu0 %v1253, 112
  %v2666 = vpop.permute.xlu0 %2665
  %2667 = vrot.lane.b32.xlu0 %v1261, 112
  %v2668 = vpop.permute.xlu0 %2667
  %2669 = vrot.lane.b32.xlu0 %v1254, 112
  %v2670 = vpop.permute.xlu0 %2669
  %2671 = vrot.lane.b32.xlu0 %v1262, 112
  %v2672 = vpop.permute.xlu0 %2671
  %v2673 = vsel %vm461, %v2666, %v2670
  %v2674 = vsel %vm461, %v2668, %v2672
  %v2675 = vsel %vm461, %v2662, %v2666
  %v2676 = vsel %vm461, %v2664, %v2668
  %v2677 = vsel %vm461, %v2658, %v2662
  %v2678 = vsel %vm461, %v2660, %v2664
  %v2679 = vsel %vm461, %v2654, %v2658
  %v2680 = vsel %vm461, %v2656, %v2660
  %v2681 = vsel %vm461, %v2650, %v2654
  %v2682 = vsel %vm461, %v2652, %v2656
  %v2683 = vsel %vm461, %v2646, %v2650
  %v2684 = vsel %vm461, %v2648, %v2652
  %v2685 = vsel %vm461, %v2642, %v2646
  %v2686 = vsel %vm461, %v2644, %v2648
  %v2687 = vsel %vm461, %v2670, %v2642
  %v2688 = vsel %vm461, %v2672, %v2644
  %v2689 = vmul.f32 %v2685, %v475
  %v2690 = vmul.f32 %v2683, %v476
  %v2691 = vmul.f32 %v2681, %v477
  %v2692 = vmul.f32 %v2679, %v478
  %v2693 = vmul.f32 %v2677, %v479
  %v2694 = vmul.f32 %v2675, %v480
  %v2695 = vmul.f32 %v2673, %v481
  %v2696 = vmul.f32 %v2687, %v482
  %v2697 = vmul.f32 %v2686, %v475
  %v2698 = vmul.f32 %v2684, %v476
  %v2699 = vmul.f32 %v2682, %v477
  %v2700 = vmul.f32 %v2680, %v478
  %v2701 = vmul.f32 %v2678, %v479
  %v2702 = vmul.f32 %v2676, %v480
  %v2703 = vmul.f32 %v2674, %v481
  %v2704 = vmul.f32 %v2688, %v482
  %v2705 = vpack.c.bf16 %v2697, %v2689
  %v2706 = vpack.c.bf16 %v2698, %v2690
  %v2707 = vpack.c.bf16 %v2699, %v2691
  %v2708 = vpack.c.bf16 %v2700, %v2692
  %v2709 = vpack.c.bf16 %v2701, %v2693
  %v2710 = vpack.c.bf16 %v2702, %v2694
  %v2711 = vpack.c.bf16 %v2703, %v2695
  %v2712 = vpack.c.bf16 %v2704, %v2696
  %2713 = vrot.lane.b32.xlu0 %v1413, 16
  %v2714 = vpop.permute.xlu0 %2713
  %v2716 = vsel %vm1416, %v2714, 0
  %2718 = vmatpush.bf16.msra.mxu0 0
  %2719 = vmatpush.bf16.msra.mxu0 0
  %2720 = vmatpush.bf16.msra.mxu0 0
  %2721 = vmatpush.bf16.msra.mxu0 0
  %2722 = vmatpush.bf16.msra.mxu0 0
  %2723 = vmatpush.bf16.msra.mxu0 0
  %2724 = vmatpush.bf16.msra.mxu0 0
  %2725 = vmatpush.bf16.msra.mxu0 %v2705
  %2726 = vmatmul.bf16.gmra.mxu0 %v2716
  %v2727 = vpop.f32.mrf.mxu0
  %v2728 = vadd.f32 0.0, %v2727
  %v2729 = vpop.f32.mrf.mxu0
  %v2730 = vadd.f32 0.0, %v2729
  %2731 = vdwg.mxu0
  %2732 = vmatpush.bf16.msra.mxu0 0
  %2733 = vmatpush.bf16.msra.mxu0 0
  %2734 = vmatpush.bf16.msra.mxu0 0
  %2735 = vmatpush.bf16.msra.mxu0 0
  %2736 = vmatpush.bf16.msra.mxu0 0
  %2737 = vmatpush.bf16.msra.mxu0 0
  %2738 = vmatpush.bf16.msra.mxu0 0
  %2739 = vmatpush.bf16.msra.mxu0 %v2706
  %2740 = vmatmul.bf16.gmra.mxu0 %v2716
  %v2741 = vpop.f32.mrf.mxu0
  %v2742 = vadd.f32 0.0, %v2741
  %v2743 = vpop.f32.mrf.mxu0
  %v2744 = vadd.f32 0.0, %v2743
  %2745 = vdwg.mxu0
  %2746 = vmatpush.bf16.msra.mxu0 0
  %2747 = vmatpush.bf16.msra.mxu0 0
  %2748 = vmatpush.bf16.msra.mxu0 0
  %2749 = vmatpush.bf16.msra.mxu0 0
  %2750 = vmatpush.bf16.msra.mxu0 0
  %2751 = vmatpush.bf16.msra.mxu0 0
  %2752 = vmatpush.bf16.msra.mxu0 0
  %2753 = vmatpush.bf16.msra.mxu0 %v2707
  %2754 = vmatmul.bf16.gmra.mxu0 %v2716
  %v2755 = vpop.f32.mrf.mxu0
  %v2756 = vadd.f32 0.0, %v2755
  %v2757 = vpop.f32.mrf.mxu0
  %v2758 = vadd.f32 0.0, %v2757
  %2759 = vdwg.mxu0
  %2760 = vmatpush.bf16.msra.mxu0 0
  %2761 = vmatpush.bf16.msra.mxu0 0
  %2762 = vmatpush.bf16.msra.mxu0 0
  %2763 = vmatpush.bf16.msra.mxu0 0
  %2764 = vmatpush.bf16.msra.mxu0 0
  %2765 = vmatpush.bf16.msra.mxu0 0
  %2766 = vmatpush.bf16.msra.mxu0 0
  %2767 = vmatpush.bf16.msra.mxu0 %v2708
  %2768 = vmatmul.bf16.gmra.mxu0 %v2716
  %v2769 = vpop.f32.mrf.mxu0
  %v2770 = vadd.f32 0.0, %v2769
  %v2771 = vpop.f32.mrf.mxu0
  %v2772 = vadd.f32 0.0, %v2771
  %2773 = vdwg.mxu0
  %2774 = vmatpush.bf16.msra.mxu0 0
  %2775 = vmatpush.bf16.msra.mxu0 0
  %2776 = vmatpush.bf16.msra.mxu0 0
  %2777 = vmatpush.bf16.msra.mxu0 0
  %2778 = vmatpush.bf16.msra.mxu0 0
  %2779 = vmatpush.bf16.msra.mxu0 0
  %2780 = vmatpush.bf16.msra.mxu0 0
  %2781 = vmatpush.bf16.msra.mxu0 %v2709
  %2782 = vmatmul.bf16.gmra.mxu0 %v2716
  %v2783 = vpop.f32.mrf.mxu0
  %v2784 = vadd.f32 0.0, %v2783
  %v2785 = vpop.f32.mrf.mxu0
  %v2786 = vadd.f32 0.0, %v2785
  %2787 = vdwg.mxu0
  %2788 = vmatpush.bf16.msra.mxu0 0
  %2789 = vmatpush.bf16.msra.mxu0 0
  %2790 = vmatpush.bf16.msra.mxu0 0
  %2791 = vmatpush.bf16.msra.mxu0 0
  %2792 = vmatpush.bf16.msra.mxu0 0
  %2793 = vmatpush.bf16.msra.mxu0 0
  %2794 = vmatpush.bf16.msra.mxu0 0
  %2795 = vmatpush.bf16.msra.mxu0 %v2710
  %2796 = vmatmul.bf16.gmra.mxu0 %v2716
  %v2797 = vpop.f32.mrf.mxu0
  %v2798 = vadd.f32 0.0, %v2797
  %v2799 = vpop.f32.mrf.mxu0
  %v2800 = vadd.f32 0.0, %v2799
  %2801 = vdwg.mxu0
  %2802 = vmatpush.bf16.msra.mxu0 0
  %2803 = vmatpush.bf16.msra.mxu0 0
  %2804 = vmatpush.bf16.msra.mxu0 0
  %2805 = vmatpush.bf16.msra.mxu0 0
  %2806 = vmatpush.bf16.msra.mxu0 0
  %2807 = vmatpush.bf16.msra.mxu0 0
  %2808 = vmatpush.bf16.msra.mxu0 0
  %2809 = vmatpush.bf16.msra.mxu0 %v2711
  %2810 = vmatmul.bf16.gmra.mxu0 %v2716
  %v2811 = vpop.f32.mrf.mxu0
  %v2812 = vadd.f32 0.0, %v2811
  %v2813 = vpop.f32.mrf.mxu0
  %v2814 = vadd.f32 0.0, %v2813
  %2815 = vdwg.mxu0
  %2816 = vmatpush.bf16.msra.mxu0 0
  %2817 = vmatpush.bf16.msra.mxu0 0
  %2818 = vmatpush.bf16.msra.mxu0 0
  %2819 = vmatpush.bf16.msra.mxu0 0
  %2820 = vmatpush.bf16.msra.mxu0 0
  %2821 = vmatpush.bf16.msra.mxu0 0
  %2822 = vmatpush.bf16.msra.mxu0 0
  %2823 = vmatpush.bf16.msra.mxu0 %v2712
  %2824 = vmatmul.bf16.gmra.mxu0 %v2716
  %v2825 = vpop.f32.mrf.mxu0
  %v2826 = vadd.f32 0.0, %v2825
  %v2827 = vpop.f32.mrf.mxu0
  %v2828 = vadd.f32 0.0, %v2827
  %2829 = vdwg.mxu0
  %v2830 = vadd.f32 %v2625, %v2728
  %v2831 = vadd.f32 %v2626, %v2742
  %v2832 = vadd.f32 %v2627, %v2756
  %v2833 = vadd.f32 %v2628, %v2770
  %v2834 = vadd.f32 %v2629, %v2784
  %v2835 = vadd.f32 %v2630, %v2798
  %v2836 = vadd.f32 %v2631, %v2812
  %v2837 = vadd.f32 %v2632, %v2826
  %v2838 = vadd.f32 %v2633, %v2730
  %v2839 = vadd.f32 %v2634, %v2744
  %v2840 = vadd.f32 %v2635, %v2758
  %v2841 = vadd.f32 %v2636, %v2772
  %v2842 = vadd.f32 %v2637, %v2786
  %v2843 = vadd.f32 %v2638, %v2800
  %v2844 = vadd.f32 %v2639, %v2814
  %v2845 = vadd.f32 %v2640, %v2828
  %v2846 = vld [vmem:[%s4 + $0x4] sm:$0xf]
  %v2847 = vld [vmem:[%s4 + $0xc] sm:$0xf]
  %2848 = vrot.lane.b32.xlu0 %v1247, 111
  %v2849 = vpop.permute.xlu0 %2848
  %2850 = vrot.lane.b32.xlu0 %v1255, 111
  %v2851 = vpop.permute.xlu0 %2850
  %2852 = vrot.lane.b32.xlu0 %v1248, 111
  %v2853 = vpop.permute.xlu0 %2852
  %2854 = vrot.lane.b32.xlu0 %v1256, 111
  %v2855 = vpop.permute.xlu0 %2854
  %2856 = vrot.lane.b32.xlu0 %v1249, 111
  %v2857 = vpop.permute.xlu0 %2856
  %2858 = vrot.lane.b32.xlu0 %v1257, 111
  %v2859 = vpop.permute.xlu0 %2858
  %2860 = vrot.lane.b32.xlu0 %v1250, 111
  %v2861 = vpop.permute.xlu0 %2860
  %2862 = vrot.lane.b32.xlu0 %v1258, 111
  %v2863 = vpop.permute.xlu0 %2862
  %2864 = vrot.lane.b32.xlu0 %v1251, 111
  %v2865 = vpop.permute.xlu0 %2864
  %2866 = vrot.lane.b32.xlu0 %v1259, 111
  %v2867 = vpop.permute.xlu0 %2866
  %2868 = vrot.lane.b32.xlu0 %v1252, 111
  %v2869 = vpop.permute.xlu0 %2868
  %2870 = vrot.lane.b32.xlu0 %v1260, 111
  %v2871 = vpop.permute.xlu0 %2870
  %2872 = vrot.lane.b32.xlu0 %v1253, 111
  %v2873 = vpop.permute.xlu0 %2872
  %2874 = vrot.lane.b32.xlu0 %v1261, 111
  %v2875 = vpop.permute.xlu0 %2874
  %2876 = vrot.lane.b32.xlu0 %v1254, 111
  %v2877 = vpop.permute.xlu0 %2876
  %2878 = vrot.lane.b32.xlu0 %v1262, 111
  %v2879 = vpop.permute.xlu0 %2878
  %v2880 = vsel %vm519, %v2873, %v2877
  %v2881 = vsel %vm519, %v2875, %v2879
  %v2882 = vsel %vm519, %v2869, %v2873
  %v2883 = vsel %vm519, %v2871, %v2875
  %v2884 = vsel %vm519, %v2865, %v2869
  %v2885 = vsel %vm519, %v2867, %v2871
  %v2886 = vsel %vm519, %v2861, %v2865
  %v2887 = vsel %vm519, %v2863, %v2867
  %v2888 = vsel %vm519, %v2857, %v2861
  %v2889 = vsel %vm519, %v2859, %v2863
  %v2890 = vsel %vm519, %v2853, %v2857
  %v2891 = vsel %vm519, %v2855, %v2859
  %v2892 = vsel %vm519, %v2849, %v2853
  %v2893 = vsel %vm519, %v2851, %v2855
  %v2894 = vsel %vm519, %v2877, %v2849
  %v2895 = vsel %vm519, %v2879, %v2851
  %v2896 = vmul.f32 %v2892, %v533
  %v2897 = vmul.f32 %v2890, %v534
  %v2898 = vmul.f32 %v2888, %v535
  %v2899 = vmul.f32 %v2886, %v536
  %v2900 = vmul.f32 %v2884, %v537
  %v2901 = vmul.f32 %v2882, %v538
  %v2902 = vmul.f32 %v2880, %v539
  %v2903 = vmul.f32 %v2894, %v540
  %v2904 = vmul.f32 %v2893, %v533
  %v2905 = vmul.f32 %v2891, %v534
  %v2906 = vmul.f32 %v2889, %v535
  %v2907 = vmul.f32 %v2887, %v536
  %v2908 = vmul.f32 %v2885, %v537
  %v2909 = vmul.f32 %v2883, %v538
  %v2910 = vmul.f32 %v2881, %v539
  %v2911 = vmul.f32 %v2895, %v540
  %v2912 = vpack.c.bf16 %v2904, %v2896
  %v2913 = vpack.c.bf16 %v2905, %v2897
  %v2914 = vpack.c.bf16 %v2906, %v2898
  %v2915 = vpack.c.bf16 %v2907, %v2899
  %v2916 = vpack.c.bf16 %v2908, %v2900
  %v2917 = vpack.c.bf16 %v2909, %v2901
  %v2918 = vpack.c.bf16 %v2910, %v2902
  %v2919 = vpack.c.bf16 %v2911, %v2903
  %v2922 = vunpack.c.l.b16 %v2846
  %v2923 = vunpack.c.l.b16 %v2847
  %v2924 = vpack.c.b16 %v2923, %v2922
  %v2926 = vsel %vm1416, %v2924, 0
  %2928 = vmatpush.bf16.msra.mxu0 0
  %2929 = vmatpush.bf16.msra.mxu0 0
  %2930 = vmatpush.bf16.msra.mxu0 0
  %2931 = vmatpush.bf16.msra.mxu0 0
  %2932 = vmatpush.bf16.msra.mxu0 0
  %2933 = vmatpush.bf16.msra.mxu0 0
  %2934 = vmatpush.bf16.msra.mxu0 0
  %2935 = vmatpush.bf16.msra.mxu0 %v2912
  %2936 = vmatmul.bf16.gmra.mxu0 %v2926
  %v2937 = vpop.f32.mrf.mxu0
  %v2938 = vadd.f32 0.0, %v2937
  %v2939 = vpop.f32.mrf.mxu0
  %v2940 = vadd.f32 0.0, %v2939
  %2941 = vdwg.mxu0
  %2942 = vmatpush.bf16.msra.mxu0 0
  %2943 = vmatpush.bf16.msra.mxu0 0
  %2944 = vmatpush.bf16.msra.mxu0 0
  %2945 = vmatpush.bf16.msra.mxu0 0
  %2946 = vmatpush.bf16.msra.mxu0 0
  %2947 = vmatpush.bf16.msra.mxu0 0
  %2948 = vmatpush.bf16.msra.mxu0 0
  %2949 = vmatpush.bf16.msra.mxu0 %v2913
  %2950 = vmatmul.bf16.gmra.mxu0 %v2926
  %v2951 = vpop.f32.mrf.mxu0
  %v2952 = vadd.f32 0.0, %v2951
  %v2953 = vpop.f32.mrf.mxu0
  %v2954 = vadd.f32 0.0, %v2953
  %2955 = vdwg.mxu0
  %2956 = vmatpush.bf16.msra.mxu0 0
  %2957 = vmatpush.bf16.msra.mxu0 0
  %2958 = vmatpush.bf16.msra.mxu0 0
  %2959 = vmatpush.bf16.msra.mxu0 0
  %2960 = vmatpush.bf16.msra.mxu0 0
  %2961 = vmatpush.bf16.msra.mxu0 0
  %2962 = vmatpush.bf16.msra.mxu0 0
  %2963 = vmatpush.bf16.msra.mxu0 %v2914
  %2964 = vmatmul.bf16.gmra.mxu0 %v2926
  %v2965 = vpop.f32.mrf.mxu0
  %v2966 = vadd.f32 0.0, %v2965
  %v2967 = vpop.f32.mrf.mxu0
  %v2968 = vadd.f32 0.0, %v2967
  %2969 = vdwg.mxu0
  %2970 = vmatpush.bf16.msra.mxu0 0
  %2971 = vmatpush.bf16.msra.mxu0 0
  %2972 = vmatpush.bf16.msra.mxu0 0
  %2973 = vmatpush.bf16.msra.mxu0 0
  %2974 = vmatpush.bf16.msra.mxu0 0
  %2975 = vmatpush.bf16.msra.mxu0 0
  %2976 = vmatpush.bf16.msra.mxu0 0
  %2977 = vmatpush.bf16.msra.mxu0 %v2915
  %2978 = vmatmul.bf16.gmra.mxu0 %v2926
  %v2979 = vpop.f32.mrf.mxu0
  %v2980 = vadd.f32 0.0, %v2979
  %v2981 = vpop.f32.mrf.mxu0
  %v2982 = vadd.f32 0.0, %v2981
  %2983 = vdwg.mxu0
  %2984 = vmatpush.bf16.msra.mxu0 0
  %2985 = vmatpush.bf16.msra.mxu0 0
  %2986 = vmatpush.bf16.msra.mxu0 0
  %2987 = vmatpush.bf16.msra.mxu0 0
  %2988 = vmatpush.bf16.msra.mxu0 0
  %2989 = vmatpush.bf16.msra.mxu0 0
  %2990 = vmatpush.bf16.msra.mxu0 0
  %2991 = vmatpush.bf16.msra.mxu0 %v2916
  %2992 = vmatmul.bf16.gmra.mxu0 %v2926
  %v2993 = vpop.f32.mrf.mxu0
  %v2994 = vadd.f32 0.0, %v2993
  %v2995 = vpop.f32.mrf.mxu0
  %v2996 = vadd.f32 0.0, %v2995
  %2997 = vdwg.mxu0
  %2998 = vmatpush.bf16.msra.mxu0 0
  %2999 = vmatpush.bf16.msra.mxu0 0
  %3000 = vmatpush.bf16.msra.mxu0 0
  %3001 = vmatpush.bf16.msra.mxu0 0
  %3002 = vmatpush.bf16.msra.mxu0 0
  %3003 = vmatpush.bf16.msra.mxu0 0
  %3004 = vmatpush.bf16.msra.mxu0 0
  %3005 = vmatpush.bf16.msra.mxu0 %v2917
  %3006 = vmatmul.bf16.gmra.mxu0 %v2926
  %v3007 = vpop.f32.mrf.mxu0
  %v3008 = vadd.f32 0.0, %v3007
  %v3009 = vpop.f32.mrf.mxu0
  %v3010 = vadd.f32 0.0, %v3009
  %3011 = vdwg.mxu0
  %3012 = vmatpush.bf16.msra.mxu0 0
  %3013 = vmatpush.bf16.msra.mxu0 0
  %3014 = vmatpush.bf16.msra.mxu0 0
  %3015 = vmatpush.bf16.msra.mxu0 0
  %3016 = vmatpush.bf16.msra.mxu0 0
  %3017 = vmatpush.bf16.msra.mxu0 0
  %3018 = vmatpush.bf16.msra.mxu0 0
  %3019 = vmatpush.bf16.msra.mxu0 %v2918
  %3020 = vmatmul.bf16.gmra.mxu0 %v2926
  %v3021 = vpop.f32.mrf.mxu0
  %v3022 = vadd.f32 0.0, %v3021
  %v3023 = vpop.f32.mrf.mxu0
  %v3024 = vadd.f32 0.0, %v3023
  %3025 = vdwg.mxu0
  %3026 = vmatpush.bf16.msra.mxu0 0
  %3027 = vmatpush.bf16.msra.mxu0 0
  %3028 = vmatpush.bf16.msra.mxu0 0
  %3029 = vmatpush.bf16.msra.mxu0 0
  %3030 = vmatpush.bf16.msra.mxu0 0
  %3031 = vmatpush.bf16.msra.mxu0 0
  %3032 = vmatpush.bf16.msra.mxu0 0
  %3033 = vmatpush.bf16.msra.mxu0 %v2919
  %3034 = vmatmul.bf16.gmra.mxu0 %v2926
  %v3035 = vpop.f32.mrf.mxu0
  %v3036 = vadd.f32 0.0, %v3035
  %v3037 = vpop.f32.mrf.mxu0
  %v3038 = vadd.f32 0.0, %v3037
  %3039 = vdwg.mxu0
  %v3040 = vadd.f32 %v2830, %v2938
  %v3041 = vadd.f32 %v2831, %v2952
  %v3042 = vadd.f32 %v2832, %v2966
  %v3043 = vadd.f32 %v2833, %v2980
  %v3044 = vadd.f32 %v2834, %v2994
  %v3045 = vadd.f32 %v2835, %v3008
  %v3046 = vadd.f32 %v2836, %v3022
  %v3047 = vadd.f32 %v2837, %v3036
  %v3048 = vadd.f32 %v2838, %v2940
  %v3049 = vadd.f32 %v2839, %v2954
  %v3050 = vadd.f32 %v2840, %v2968
  %v3051 = vadd.f32 %v2841, %v2982
  %v3052 = vadd.f32 %v2842, %v2996
  %v3053 = vadd.f32 %v2843, %v3010
  %v3054 = vadd.f32 %v2844, %v3024
  %v3055 = vadd.f32 %v2845, %v3038
  %v3056 = vld [vmem:[%s5] sm:$0xff]
  %v3057 = vld [vmem:[%s5 + $0x8] sm:$0xff]
  %3059 = vset.pattern.permute.xlu0 0
  %3060 = vperm.xlu0 %3059, %v3056
  %v3061 = vpop.permute.xlu0 %3060
  %3064 = vset.pattern.permute.xlu0 0
  %3065 = vperm.xlu0 %3064, %v3057
  %v3066 = vpop.permute.xlu0 %3065
  %v3068 = vadd.f32 %v3040, %v3061
  %v3069 = vadd.f32 %v3041, %v3061
  %v3070 = vadd.f32 %v3042, %v3061
  %v3071 = vadd.f32 %v3043, %v3061
  %v3072 = vadd.f32 %v3044, %v3061
  %v3073 = vadd.f32 %v3045, %v3061
  %v3074 = vadd.f32 %v3046, %v3061
  %v3075 = vadd.f32 %v3047, %v3061
  %v3076 = vadd.f32 %v3048, %v3066
  %v3077 = vadd.f32 %v3049, %v3066
  %v3078 = vadd.f32 %v3050, %v3066
  %v3079 = vadd.f32 %v3051, %v3066
  %v3080 = vadd.f32 %v3052, %v3066
  %v3081 = vadd.f32 %v3053, %v3066
  %v3082 = vadd.f32 %v3054, %v3066
  %v3083 = vadd.f32 %v3055, %v3066
  %v3084 = vmax.f32 %v3068, 0.0
  %v3085 = vmax.f32 %v3069, 0.0
  %v3086 = vmax.f32 %v3070, 0.0
  %v3087 = vmax.f32 %v3071, 0.0
  %v3088 = vmax.f32 %v3072, 0.0
  %v3089 = vmax.f32 %v3073, 0.0
  %v3090 = vmax.f32 %v3074, 0.0
  %v3091 = vmax.f32 %v3075, 0.0
  %v3092 = vmax.f32 %v3076, 0.0
  %v3093 = vmax.f32 %v3077, 0.0
  %v3094 = vmax.f32 %v3078, 0.0
  %v3095 = vmax.f32 %v3079, 0.0
  %v3096 = vmax.f32 %v3080, 0.0
  %v3097 = vmax.f32 %v3081, 0.0
  %v3098 = vmax.f32 %v3082, 0.0
  %v3099 = vmax.f32 %v3083, 0.0
  %v3100 = vld [vmem:[%s6] sm:$0x1]
  %3101 = vrot.lane.b32.xlu0 %v3084, 17
  %v3102 = vpop.permute.xlu0 %3101
  %3103 = vrot.lane.b32.xlu0 %v3092, 17
  %v3104 = vpop.permute.xlu0 %3103
  %3105 = vrot.lane.b32.xlu0 %v3085, 17
  %v3106 = vpop.permute.xlu0 %3105
  %3107 = vrot.lane.b32.xlu0 %v3093, 17
  %v3108 = vpop.permute.xlu0 %3107
  %3109 = vrot.lane.b32.xlu0 %v3086, 17
  %v3110 = vpop.permute.xlu0 %3109
  %3111 = vrot.lane.b32.xlu0 %v3094, 17
  %v3112 = vpop.permute.xlu0 %3111
  %3113 = vrot.lane.b32.xlu0 %v3087, 17
  %v3114 = vpop.permute.xlu0 %3113
  %3115 = vrot.lane.b32.xlu0 %v3095, 17
  %v3116 = vpop.permute.xlu0 %3115
  %3117 = vrot.lane.b32.xlu0 %v3088, 17
  %v3118 = vpop.permute.xlu0 %3117
  %3119 = vrot.lane.b32.xlu0 %v3096, 17
  %v3120 = vpop.permute.xlu0 %3119
  %3121 = vrot.lane.b32.xlu0 %v3089, 17
  %v3122 = vpop.permute.xlu0 %3121
  %3123 = vrot.lane.b32.xlu0 %v3097, 17
  %v3124 = vpop.permute.xlu0 %3123
  %3125 = vrot.lane.b32.xlu0 %v3090, 17
  %v3126 = vpop.permute.xlu0 %3125
  %3127 = vrot.lane.b32.xlu0 %v3098, 17
  %v3128 = vpop.permute.xlu0 %3127
  %3129 = vrot.lane.b32.xlu0 %v3091, 17
  %v3130 = vpop.permute.xlu0 %3129
  %3131 = vrot.lane.b32.xlu0 %v3099, 17
  %v3132 = vpop.permute.xlu0 %3131
  %v3133 = vsel %vm88, %v3126, %v3130
  %v3134 = vsel %vm88, %v3128, %v3132
  %v3135 = vsel %vm88, %v3122, %v3126
  %v3136 = vsel %vm88, %v3124, %v3128
  %v3137 = vsel %vm88, %v3118, %v3122
  %v3138 = vsel %vm88, %v3120, %v3124
  %v3139 = vsel %vm88, %v3114, %v3118
  %v3140 = vsel %vm88, %v3116, %v3120
  %v3141 = vsel %vm88, %v3110, %v3114
  %v3142 = vsel %vm88, %v3112, %v3116
  %v3143 = vsel %vm88, %v3106, %v3110
  %v3144 = vsel %vm88, %v3108, %v3112
  %v3145 = vsel %vm88, %v3102, %v3106
  %v3146 = vsel %vm88, %v3104, %v3108
  %v3147 = vsel %vm88, %v3130, %v3102
  %v3148 = vsel %vm88, %v3132, %v3104
  %v3149 = vmul.f32 %v3147, %v101
  %v3150 = vmul.f32 %v3145, %v102
  %v3151 = vmul.f32 %v3143, %v103
  %v3152 = vmul.f32 %v3141, %v104
  %v3153 = vmul.f32 %v3139, %v105
  %v3154 = vmul.f32 %v3137, %v106
  %v3155 = vmul.f32 %v3135, %v107
  %v3156 = vmul.f32 %v3133, %v108
  %v3157 = vmul.f32 %v3148, %v101
  %v3158 = vmul.f32 %v3146, %v102
  %v3159 = vmul.f32 %v3144, %v103
  %v3160 = vmul.f32 %v3142, %v104
  %v3161 = vmul.f32 %v3140, %v105
  %v3162 = vmul.f32 %v3138, %v106
  %v3163 = vmul.f32 %v3136, %v107
  %v3164 = vmul.f32 %v3134, %v108
  %v3165 = vpack.c.bf16 %v3157, %v3149
  %v3166 = vpack.c.bf16 %v3158, %v3150
  %v3167 = vpack.c.bf16 %v3159, %v3151
  %v3168 = vpack.c.bf16 %v3160, %v3152
  %v3169 = vpack.c.bf16 %v3161, %v3153
  %v3170 = vpack.c.bf16 %v3162, %v3154
  %v3171 = vpack.c.bf16 %v3163, %v3155
  %v3172 = vpack.c.bf16 %v3164, %v3156
  %3173 = vrot.lane.b32.xlu0 %v3084, 16
  %v3174 = vpop.permute.xlu0 %3173
  %3175 = vrot.lane.b32.xlu0 %v3092, 16
  %v3176 = vpop.permute.xlu0 %3175
  %3177 = vrot.lane.b32.xlu0 %v3085, 16
  %v3178 = vpop.permute.xlu0 %3177
  %3179 = vrot.lane.b32.xlu0 %v3093, 16
  %v3180 = vpop.permute.xlu0 %3179
  %3181 = vrot.lane.b32.xlu0 %v3086, 16
  %v3182 = vpop.permute.xlu0 %3181
  %3183 = vrot.lane.b32.xlu0 %v3094, 16
  %v3184 = vpop.permute.xlu0 %3183
  %3185 = vrot.lane.b32.xlu0 %v3087, 16
  %v3186 = vpop.permute.xlu0 %3185
  %3187 = vrot.lane.b32.xlu0 %v3095, 16
  %v3188 = vpop.permute.xlu0 %3187
  %3189 = vrot.lane.b32.xlu0 %v3088, 16
  %v3190 = vpop.permute.xlu0 %3189
  %3191 = vrot.lane.b32.xlu0 %v3096, 16
  %v3192 = vpop.permute.xlu0 %3191
  %3193 = vrot.lane.b32.xlu0 %v3089, 16
  %v3194 = vpop.permute.xlu0 %3193
  %3195 = vrot.lane.b32.xlu0 %v3097, 16
  %v3196 = vpop.permute.xlu0 %3195
  %3197 = vrot.lane.b32.xlu0 %v3090, 16
  %v3198 = vpop.permute.xlu0 %3197
  %3199 = vrot.lane.b32.xlu0 %v3098, 16
  %v3200 = vpop.permute.xlu0 %3199
  %3201 = vrot.lane.b32.xlu0 %v3091, 16
  %v3202 = vpop.permute.xlu0 %3201
  %3203 = vrot.lane.b32.xlu0 %v3099, 16
  %v3204 = vpop.permute.xlu0 %3203
  %v3205 = vsel %vm145, %v3198, %v3202
  %v3206 = vsel %vm145, %v3200, %v3204
  %v3207 = vsel %vm145, %v3194, %v3198
  %v3208 = vsel %vm145, %v3196, %v3200
  %v3209 = vsel %vm145, %v3190, %v3194
  %v3210 = vsel %vm145, %v3192, %v3196
  %v3211 = vsel %vm145, %v3186, %v3190
  %v3212 = vsel %vm145, %v3188, %v3192
  %v3213 = vsel %vm145, %v3182, %v3186
  %v3214 = vsel %vm145, %v3184, %v3188
  %v3215 = vsel %vm145, %v3178, %v3182
  %v3216 = vsel %vm145, %v3180, %v3184
  %v3217 = vsel %vm145, %v3174, %v3178
  %v3218 = vsel %vm145, %v3176, %v3180
  %v3219 = vsel %vm145, %v3202, %v3174
  %v3220 = vsel %vm145, %v3204, %v3176
  %v3221 = vmul.f32 %v3219, %v159
  %v3222 = vmul.f32 %v3217, %v160
  %v3223 = vmul.f32 %v3215, %v161
  %v3224 = vmul.f32 %v3213, %v162
  %v3225 = vmul.f32 %v3211, %v163
  %v3226 = vmul.f32 %v3209, %v164
  %v3227 = vmul.f32 %v3207, %v165
  %v3228 = vmul.f32 %v3205, %v166
  %v3229 = vmul.f32 %v3220, %v159
  %v3230 = vmul.f32 %v3218, %v160
  %v3231 = vmul.f32 %v3216, %v161
  %v3232 = vmul.f32 %v3214, %v162
  %v3233 = vmul.f32 %v3212, %v163
  %v3234 = vmul.f32 %v3210, %v164
  %v3235 = vmul.f32 %v3208, %v165
  %v3236 = vmul.f32 %v3206, %v166
  %v3237 = vpack.c.bf16 %v3229, %v3221
  %v3238 = vpack.c.bf16 %v3230, %v3222
  %v3239 = vpack.c.bf16 %v3231, %v3223
  %v3240 = vpack.c.bf16 %v3232, %v3224
  %v3241 = vpack.c.bf16 %v3233, %v3225
  %v3242 = vpack.c.bf16 %v3234, %v3226
  %v3243 = vpack.c.bf16 %v3235, %v3227
  %v3244 = vpack.c.bf16 %v3236, %v3228
  %3246 = vst [vmem:[#allocation1] ss:$9 sm:$0xff] %v3100
  %v3247 = vld [vmem:[#allocation1] sm:$0xff]
  %3249 = vrot.lane.b32.xlu0 %v3247, 112
  %v3250 = vpop.permute.xlu0 %3249
  %v3252 = vsel %vm1416, %v3250, 0
  %3254 = vmatpush.bf16.msra.mxu0 0
  %3255 = vmatpush.bf16.msra.mxu0 0
  %3256 = vmatpush.bf16.msra.mxu0 0
  %3257 = vmatpush.bf16.msra.mxu0 0
  %3258 = vmatpush.bf16.msra.mxu0 0
  %3259 = vmatpush.bf16.msra.mxu0 0
  %3260 = vmatpush.bf16.msra.mxu0 0
  %3261 = vmatpush.bf16.msra.mxu0 %v3237
  %3262 = vmatmul.bf16.gmra.mxu0 %v3252
  %v3263 = vpop.f32.mrf.mxu0
  %v3264 = vadd.f32 0.0, %v3263
  %v3265 = vpop.f32.mrf.mxu0
  %3266 = vdwg.mxu0
  %3267 = vmatpush.bf16.msra.mxu0 0
  %3268 = vmatpush.bf16.msra.mxu0 0
  %3269 = vmatpush.bf16.msra.mxu0 0
  %3270 = vmatpush.bf16.msra.mxu0 0
  %3271 = vmatpush.bf16.msra.mxu0 0
  %3272 = vmatpush.bf16.msra.mxu0 0
  %3273 = vmatpush.bf16.msra.mxu0 0
  %3274 = vmatpush.bf16.msra.mxu0 %v3238
  %3275 = vmatmul.bf16.gmra.mxu0 %v3252
  %v3276 = vpop.f32.mrf.mxu0
  %v3277 = vadd.f32 0.0, %v3276
  %v3278 = vpop.f32.mrf.mxu0
  %3279 = vdwg.mxu0
  %3280 = vmatpush.bf16.msra.mxu0 0
  %3281 = vmatpush.bf16.msra.mxu0 0
  %3282 = vmatpush.bf16.msra.mxu0 0
  %3283 = vmatpush.bf16.msra.mxu0 0
  %3284 = vmatpush.bf16.msra.mxu0 0
  %3285 = vmatpush.bf16.msra.mxu0 0
  %3286 = vmatpush.bf16.msra.mxu0 0
  %3287 = vmatpush.bf16.msra.mxu0 %v3239
  %3288 = vmatmul.bf16.gmra.mxu0 %v3252
  %v3289 = vpop.f32.mrf.mxu0
  %v3290 = vadd.f32 0.0, %v3289
  %v3291 = vpop.f32.mrf.mxu0
  %3292 = vdwg.mxu0
  %3293 = vmatpush.bf16.msra.mxu0 0
  %3294 = vmatpush.bf16.msra.mxu0 0
  %3295 = vmatpush.bf16.msra.mxu0 0
  %3296 = vmatpush.bf16.msra.mxu0 0
  %3297 = vmatpush.bf16.msra.mxu0 0
  %3298 = vmatpush.bf16.msra.mxu0 0
  %3299 = vmatpush.bf16.msra.mxu0 0
  %3300 = vmatpush.bf16.msra.mxu0 %v3240
  %3301 = vmatmul.bf16.gmra.mxu0 %v3252
  %v3302 = vpop.f32.mrf.mxu0
  %v3303 = vadd.f32 0.0, %v3302
  %v3304 = vpop.f32.mrf.mxu0
  %3305 = vdwg.mxu0
  %3306 = vmatpush.bf16.msra.mxu0 0
  %3307 = vmatpush.bf16.msra.mxu0 0
  %3308 = vmatpush.bf16.msra.mxu0 0
  %3309 = vmatpush.bf16.msra.mxu0 0
  %3310 = vmatpush.bf16.msra.mxu0 0
  %3311 = vmatpush.bf16.msra.mxu0 0
  %3312 = vmatpush.bf16.msra.mxu0 0
  %3313 = vmatpush.bf16.msra.mxu0 %v3241
  %3314 = vmatmul.bf16.gmra.mxu0 %v3252
  %v3315 = vpop.f32.mrf.mxu0
  %v3316 = vadd.f32 0.0, %v3315
  %v3317 = vpop.f32.mrf.mxu0
  %3318 = vdwg.mxu0
  %3319 = vmatpush.bf16.msra.mxu0 0
  %3320 = vmatpush.bf16.msra.mxu0 0
  %3321 = vmatpush.bf16.msra.mxu0 0
  %3322 = vmatpush.bf16.msra.mxu0 0
  %3323 = vmatpush.bf16.msra.mxu0 0
  %3324 = vmatpush.bf16.msra.mxu0 0
  %3325 = vmatpush.bf16.msra.mxu0 0
  %3326 = vmatpush.bf16.msra.mxu0 %v3242
  %3327 = vmatmul.bf16.gmra.mxu0 %v3252
  %v3328 = vpop.f32.mrf.mxu0
  %v3329 = vadd.f32 0.0, %v3328
  %v3330 = vpop.f32.mrf.mxu0
  %3331 = vdwg.mxu0
  %3332 = vmatpush.bf16.msra.mxu0 0
  %3333 = vmatpush.bf16.msra.mxu0 0
  %3334 = vmatpush.bf16.msra.mxu0 0
  %3335 = vmatpush.bf16.msra.mxu0 0
  %3336 = vmatpush.bf16.msra.mxu0 0
  %3337 = vmatpush.bf16.msra.mxu0 0
  %3338 = vmatpush.bf16.msra.mxu0 0
  %3339 = vmatpush.bf16.msra.mxu0 %v3243
  %3340 = vmatmul.bf16.gmra.mxu0 %v3252
  %v3341 = vpop.f32.mrf.mxu0
  %v3342 = vadd.f32 0.0, %v3341
  %v3343 = vpop.f32.mrf.mxu0
  %3344 = vdwg.mxu0
  %3345 = vmatpush.bf16.msra.mxu0 0
  %3346 = vmatpush.bf16.msra.mxu0 0
  %3347 = vmatpush.bf16.msra.mxu0 0
  %3348 = vmatpush.bf16.msra.mxu0 0
  %3349 = vmatpush.bf16.msra.mxu0 0
  %3350 = vmatpush.bf16.msra.mxu0 0
  %3351 = vmatpush.bf16.msra.mxu0 0
  %3352 = vmatpush.bf16.msra.mxu0 %v3244
  %3353 = vmatmul.bf16.gmra.mxu0 %v3252
  %v3354 = vpop.f32.mrf.mxu0
  %v3355 = vadd.f32 0.0, %v3354
  %v3356 = vpop.f32.mrf.mxu0
  %3357 = vdwg.mxu0
  %v3358 = vsel %vm1416, %v3100, 0
  %3360 = vmatpush.bf16.msra.mxu0 0
  %3361 = vmatpush.bf16.msra.mxu0 0
  %3362 = vmatpush.bf16.msra.mxu0 0
  %3363 = vmatpush.bf16.msra.mxu0 0
  %3364 = vmatpush.bf16.msra.mxu0 0
  %3365 = vmatpush.bf16.msra.mxu0 0
  %3366 = vmatpush.bf16.msra.mxu0 0
  %3367 = vmatpush.bf16.msra.mxu0 %v3165
  %3368 = vmatmul.bf16.gmra.mxu0 %v3358
  %v3369 = vpop.f32.mrf.mxu0
  %v3370 = vadd.f32 %v3264, %v3369
  %v3371 = vpop.f32.mrf.mxu0
  %3372 = vdwg.mxu0
  %3373 = vmatpush.bf16.msra.mxu0 0
  %3374 = vmatpush.bf16.msra.mxu0 0
  %3375 = vmatpush.bf16.msra.mxu0 0
  %3376 = vmatpush.bf16.msra.mxu0 0
  %3377 = vmatpush.bf16.msra.mxu0 0
  %3378 = vmatpush.bf16.msra.mxu0 0
  %3379 = vmatpush.bf16.msra.mxu0 0
  %3380 = vmatpush.bf16.msra.mxu0 %v3166
  %3381 = vmatmul.bf16.gmra.mxu0 %v3358
  %v3382 = vpop.f32.mrf.mxu0
  %v3383 = vadd.f32 %v3277, %v3382
  %v3384 = vpop.f32.mrf.mxu0
  %3385 = vdwg.mxu0
  %3386 = vmatpush.bf16.msra.mxu0 0
  %3387 = vmatpush.bf16.msra.mxu0 0
  %3388 = vmatpush.bf16.msra.mxu0 0
  %3389 = vmatpush.bf16.msra.mxu0 0
  %3390 = vmatpush.bf16.msra.mxu0 0
  %3391 = vmatpush.bf16.msra.mxu0 0
  %3392 = vmatpush.bf16.msra.mxu0 0
  %3393 = vmatpush.bf16.msra.mxu0 %v3167
  %3394 = vmatmul.bf16.gmra.mxu0 %v3358
  %v3395 = vpop.f32.mrf.mxu0
  %v3396 = vadd.f32 %v3290, %v3395
  %v3397 = vpop.f32.mrf.mxu0
  %3398 = vdwg.mxu0
  %3399 = vmatpush.bf16.msra.mxu0 0
  %3400 = vmatpush.bf16.msra.mxu0 0
  %3401 = vmatpush.bf16.msra.mxu0 0
  %3402 = vmatpush.bf16.msra.mxu0 0
  %3403 = vmatpush.bf16.msra.mxu0 0
  %3404 = vmatpush.bf16.msra.mxu0 0
  %3405 = vmatpush.bf16.msra.mxu0 0
  %3406 = vmatpush.bf16.msra.mxu0 %v3168
  %3407 = vmatmul.bf16.gmra.mxu0 %v3358
  %v3408 = vpop.f32.mrf.mxu0
  %v3409 = vadd.f32 %v3303, %v3408
  %v3410 = vpop.f32.mrf.mxu0
  %3411 = vdwg.mxu0
  %3412 = vmatpush.bf16.msra.mxu0 0
  %3413 = vmatpush.bf16.msra.mxu0 0
  %3414 = vmatpush.bf16.msra.mxu0 0
  %3415 = vmatpush.bf16.msra.mxu0 0
  %3416 = vmatpush.bf16.msra.mxu0 0
  %3417 = vmatpush.bf16.msra.mxu0 0
  %3418 = vmatpush.bf16.msra.mxu0 0
  %3419 = vmatpush.bf16.msra.mxu0 %v3169
  %3420 = vmatmul.bf16.gmra.mxu0 %v3358
  %v3421 = vpop.f32.mrf.mxu0
  %v3422 = vadd.f32 %v3316, %v3421
  %v3423 = vpop.f32.mrf.mxu0
  %3424 = vdwg.mxu0
  %3425 = vmatpush.bf16.msra.mxu0 0
  %3426 = vmatpush.bf16.msra.mxu0 0
  %3427 = vmatpush.bf16.msra.mxu0 0
  %3428 = vmatpush.bf16.msra.mxu0 0
  %3429 = vmatpush.bf16.msra.mxu0 0
  %3430 = vmatpush.bf16.msra.mxu0 0
  %3431 = vmatpush.bf16.msra.mxu0 0
  %3432 = vmatpush.bf16.msra.mxu0 %v3170
  %3433 = vmatmul.bf16.gmra.mxu0 %v3358
  %v3434 = vpop.f32.mrf.mxu0
  %v3435 = vadd.f32 %v3329, %v3434
  %v3436 = vpop.f32.mrf.mxu0
  %3437 = vdwg.mxu0
  %3438 = vmatpush.bf16.msra.mxu0 0
  %3439 = vmatpush.bf16.msra.mxu0 0
  %3440 = vmatpush.bf16.msra.mxu0 0
  %3441 = vmatpush.bf16.msra.mxu0 0
  %3442 = vmatpush.bf16.msra.mxu0 0
  %3443 = vmatpush.bf16.msra.mxu0 0
  %3444 = vmatpush.bf16.msra.mxu0 0
  %3445 = vmatpush.bf16.msra.mxu0 %v3171
  %3446 = vmatmul.bf16.gmra.mxu0 %v3358
  %v3447 = vpop.f32.mrf.mxu0
  %v3448 = vadd.f32 %v3342, %v3447
  %v3449 = vpop.f32.mrf.mxu0
  %3450 = vdwg.mxu0
  %3451 = vmatpush.bf16.msra.mxu0 0
  %3452 = vmatpush.bf16.msra.mxu0 0
  %3453 = vmatpush.bf16.msra.mxu0 0
  %3454 = vmatpush.bf16.msra.mxu0 0
  %3455 = vmatpush.bf16.msra.mxu0 0
  %3456 = vmatpush.bf16.msra.mxu0 0
  %3457 = vmatpush.bf16.msra.mxu0 0
  %3458 = vmatpush.bf16.msra.mxu0 %v3172
  %3459 = vmatmul.bf16.gmra.mxu0 %v3358
  %v3460 = vpop.f32.mrf.mxu0
  %v3461 = vadd.f32 %v3355, %v3460
  %v3462 = vpop.f32.mrf.mxu0
  %3463 = vdwg.mxu0
  %v3464 = vld [vmem:[%s6] sm:$0x1]
  %3465 = vrot.lane.b32.xlu0 %v3084, 15
  %v3466 = vpop.permute.xlu0 %3465
  %3467 = vrot.lane.b32.xlu0 %v3092, 15
  %v3468 = vpop.permute.xlu0 %3467
  %3469 = vrot.lane.b32.xlu0 %v3085, 15
  %v3470 = vpop.permute.xlu0 %3469
  %3471 = vrot.lane.b32.xlu0 %v3093, 15
  %v3472 = vpop.permute.xlu0 %3471
  %3473 = vrot.lane.b32.xlu0 %v3086, 15
  %v3474 = vpop.permute.xlu0 %3473
  %3475 = vrot.lane.b32.xlu0 %v3094, 15
  %v3476 = vpop.permute.xlu0 %3475
  %3477 = vrot.lane.b32.xlu0 %v3087, 15
  %v3478 = vpop.permute.xlu0 %3477
  %3479 = vrot.lane.b32.xlu0 %v3095, 15
  %v3480 = vpop.permute.xlu0 %3479
  %3481 = vrot.lane.b32.xlu0 %v3088, 15
  %v3482 = vpop.permute.xlu0 %3481
  %3483 = vrot.lane.b32.xlu0 %v3096, 15
  %v3484 = vpop.permute.xlu0 %3483
  %3485 = vrot.lane.b32.xlu0 %v3089, 15
  %v3486 = vpop.permute.xlu0 %3485
  %3487 = vrot.lane.b32.xlu0 %v3097, 15
  %v3488 = vpop.permute.xlu0 %3487
  %3489 = vrot.lane.b32.xlu0 %v3090, 15
  %v3490 = vpop.permute.xlu0 %3489
  %3491 = vrot.lane.b32.xlu0 %v3098, 15
  %v3492 = vpop.permute.xlu0 %3491
  %3493 = vrot.lane.b32.xlu0 %v3091, 15
  %v3494 = vpop.permute.xlu0 %3493
  %3495 = vrot.lane.b32.xlu0 %v3099, 15
  %v3496 = vpop.permute.xlu0 %3495
  %v3497 = vsel %vm203, %v3490, %v3494
  %v3498 = vsel %vm203, %v3492, %v3496
  %v3499 = vsel %vm203, %v3486, %v3490
  %v3500 = vsel %vm203, %v3488, %v3492
  %v3501 = vsel %vm203, %v3482, %v3486
  %v3502 = vsel %vm203, %v3484, %v3488
  %v3503 = vsel %vm203, %v3478, %v3482
  %v3504 = vsel %vm203, %v3480, %v3484
  %v3505 = vsel %vm203, %v3474, %v3478
  %v3506 = vsel %vm203, %v3476, %v3480
  %v3507 = vsel %vm203, %v3470, %v3474
  %v3508 = vsel %vm203, %v3472, %v3476
  %v3509 = vsel %vm203, %v3466, %v3470
  %v3510 = vsel %vm203, %v3468, %v3472
  %v3511 = vsel %vm203, %v3494, %v3466
  %v3512 = vsel %vm203, %v3496, %v3468
  %v3513 = vmul.f32 %v3511, %v217
  %v3514 = vmul.f32 %v3509, %v218
  %v3515 = vmul.f32 %v3507, %v219
  %v3516 = vmul.f32 %v3505, %v220
  %v3517 = vmul.f32 %v3503, %v221
  %v3518 = vmul.f32 %v3501, %v222
  %v3519 = vmul.f32 %v3499, %v223
  %v3520 = vmul.f32 %v3497, %v224
  %v3521 = vmul.f32 %v3512, %v217
  %v3522 = vmul.f32 %v3510, %v218
  %v3523 = vmul.f32 %v3508, %v219
  %v3524 = vmul.f32 %v3506, %v220
  %v3525 = vmul.f32 %v3504, %v221
  %v3526 = vmul.f32 %v3502, %v222
  %v3527 = vmul.f32 %v3500, %v223
  %v3528 = vmul.f32 %v3498, %v224
  %v3529 = vpack.c.bf16 %v3521, %v3513
  %v3530 = vpack.c.bf16 %v3522, %v3514
  %v3531 = vpack.c.bf16 %v3523, %v3515
  %v3532 = vpack.c.bf16 %v3524, %v3516
  %v3533 = vpack.c.bf16 %v3525, %v3517
  %v3534 = vpack.c.bf16 %v3526, %v3518
  %v3535 = vpack.c.bf16 %v3527, %v3519
  %v3536 = vpack.c.bf16 %v3528, %v3520
  %3538 = vst [vmem:[#allocation1] ss:$9 sm:$0xff] %v3464
  %v3539 = vld [vmem:[#allocation1] sm:$0xff]
  %3541 = vrot.lane.b32.xlu0 %v3539, 96
  %v3542 = vpop.permute.xlu0 %3541
  %v3544 = vsel %vm1416, %v3542, 0
  %3546 = vmatpush.bf16.msra.mxu0 0
  %3547 = vmatpush.bf16.msra.mxu0 0
  %3548 = vmatpush.bf16.msra.mxu0 0
  %3549 = vmatpush.bf16.msra.mxu0 0
  %3550 = vmatpush.bf16.msra.mxu0 0
  %3551 = vmatpush.bf16.msra.mxu0 0
  %3552 = vmatpush.bf16.msra.mxu0 0
  %3553 = vmatpush.bf16.msra.mxu0 %v3529
  %3554 = vmatmul.bf16.gmra.mxu0 %v3544
  %v3555 = vpop.f32.mrf.mxu0
  %v3556 = vadd.f32 0.0, %v3555
  %v3557 = vpop.f32.mrf.mxu0
  %3558 = vdwg.mxu0
  %3559 = vmatpush.bf16.msra.mxu0 0
  %3560 = vmatpush.bf16.msra.mxu0 0
  %3561 = vmatpush.bf16.msra.mxu0 0
  %3562 = vmatpush.bf16.msra.mxu0 0
  %3563 = vmatpush.bf16.msra.mxu0 0
  %3564 = vmatpush.bf16.msra.mxu0 0
  %3565 = vmatpush.bf16.msra.mxu0 0
  %3566 = vmatpush.bf16.msra.mxu0 %v3530
  %3567 = vmatmul.bf16.gmra.mxu0 %v3544
  %v3568 = vpop.f32.mrf.mxu0
  %v3569 = vadd.f32 0.0, %v3568
  %v3570 = vpop.f32.mrf.mxu0
  %3571 = vdwg.mxu0
  %3572 = vmatpush.bf16.msra.mxu0 0
  %3573 = vmatpush.bf16.msra.mxu0 0
  %3574 = vmatpush.bf16.msra.mxu0 0
  %3575 = vmatpush.bf16.msra.mxu0 0
  %3576 = vmatpush.bf16.msra.mxu0 0
  %3577 = vmatpush.bf16.msra.mxu0 0
  %3578 = vmatpush.bf16.msra.mxu0 0
  %3579 = vmatpush.bf16.msra.mxu0 %v3531
  %3580 = vmatmul.bf16.gmra.mxu0 %v3544
  %v3581 = vpop.f32.mrf.mxu0
  %v3582 = vadd.f32 0.0, %v3581
  %v3583 = vpop.f32.mrf.mxu0
  %3584 = vdwg.mxu0
  %3585 = vmatpush.bf16.msra.mxu0 0
  %3586 = vmatpush.bf16.msra.mxu0 0
  %3587 = vmatpush.bf16.msra.mxu0 0
  %3588 = vmatpush.bf16.msra.mxu0 0
  %3589 = vmatpush.bf16.msra.mxu0 0
  %3590 = vmatpush.bf16.msra.mxu0 0
  %3591 = vmatpush.bf16.msra.mxu0 0
  %3592 = vmatpush.bf16.msra.mxu0 %v3532
  %3593 = vmatmul.bf16.gmra.mxu0 %v3544
  %v3594 = vpop.f32.mrf.mxu0
  %v3595 = vadd.f32 0.0, %v3594
  %v3596 = vpop.f32.mrf.mxu0
  %3597 = vdwg.mxu0
  %3598 = vmatpush.bf16.msra.mxu0 0
  %3599 = vmatpush.bf16.msra.mxu0 0
  %3600 = vmatpush.bf16.msra.mxu0 0
  %3601 = vmatpush.bf16.msra.mxu0 0
  %3602 = vmatpush.bf16.msra.mxu0 0
  %3603 = vmatpush.bf16.msra.mxu0 0
  %3604 = vmatpush.bf16.msra.mxu0 0
  %3605 = vmatpush.bf16.msra.mxu0 %v3533
  %3606 = vmatmul.bf16.gmra.mxu0 %v3544
  %v3607 = vpop.f32.mrf.mxu0
  %v3608 = vadd.f32 0.0, %v3607
  %v3609 = vpop.f32.mrf.mxu0
  %3610 = vdwg.mxu0
  %3611 = vmatpush.bf16.msra.mxu0 0
  %3612 = vmatpush.bf16.msra.mxu0 0
  %3613 = vmatpush.bf16.msra.mxu0 0
  %3614 = vmatpush.bf16.msra.mxu0 0
  %3615 = vmatpush.bf16.msra.mxu0 0
  %3616 = vmatpush.bf16.msra.mxu0 0
  %3617 = vmatpush.bf16.msra.mxu0 0
  %3618 = vmatpush.bf16.msra.mxu0 %v3534
  %3619 = vmatmul.bf16.gmra.mxu0 %v3544
  %v3620 = vpop.f32.mrf.mxu0
  %v3621 = vadd.f32 0.0, %v3620
  %v3622 = vpop.f32.mrf.mxu0
  %3623 = vdwg.mxu0
  %3624 = vmatpush.bf16.msra.mxu0 0
  %3625 = vmatpush.bf16.msra.mxu0 0
  %3626 = vmatpush.bf16.msra.mxu0 0
  %3627 = vmatpush.bf16.msra.mxu0 0
  %3628 = vmatpush.bf16.msra.mxu0 0
  %3629 = vmatpush.bf16.msra.mxu0 0
  %3630 = vmatpush.bf16.msra.mxu0 0
  %3631 = vmatpush.bf16.msra.mxu0 %v3535
  %3632 = vmatmul.bf16.gmra.mxu0 %v3544
  %v3633 = vpop.f32.mrf.mxu0
  %v3634 = vadd.f32 0.0, %v3633
  %v3635 = vpop.f32.mrf.mxu0
  %3636 = vdwg.mxu0
  %3637 = vmatpush.bf16.msra.mxu0 0
  %3638 = vmatpush.bf16.msra.mxu0 0
  %3639 = vmatpush.bf16.msra.mxu0 0
  %3640 = vmatpush.bf16.msra.mxu0 0
  %3641 = vmatpush.bf16.msra.mxu0 0
  %3642 = vmatpush.bf16.msra.mxu0 0
  %3643 = vmatpush.bf16.msra.mxu0 0
  %3644 = vmatpush.bf16.msra.mxu0 %v3536
  %3645 = vmatmul.bf16.gmra.mxu0 %v3544
  %v3646 = vpop.f32.mrf.mxu0
  %v3647 = vadd.f32 0.0, %v3646
  %v3648 = vpop.f32.mrf.mxu0
  %3649 = vdwg.mxu0
  %v3650 = vadd.f32 %v3370, %v3556
  %v3651 = vadd.f32 %v3383, %v3569
  %v3652 = vadd.f32 %v3396, %v3582
  %v3653 = vadd.f32 %v3409, %v3595
  %v3654 = vadd.f32 %v3422, %v3608
  %v3655 = vadd.f32 %v3435, %v3621
  %v3656 = vadd.f32 %v3448, %v3634
  %v3657 = vadd.f32 %v3461, %v3647
  %v3658 = vld [vmem:[%s6] sm:$0x1]
  %3659 = vrot.lane.b32.xlu0 %v3084, 1
  %v3660 = vpop.permute.xlu0 %3659
  %3661 = vrot.lane.b32.xlu0 %v3092, 1
  %v3662 = vpop.permute.xlu0 %3661
  %3663 = vrot.lane.b32.xlu0 %v3085, 1
  %v3664 = vpop.permute.xlu0 %3663
  %3665 = vrot.lane.b32.xlu0 %v3093, 1
  %v3666 = vpop.permute.xlu0 %3665
  %3667 = vrot.lane.b32.xlu0 %v3086, 1
  %v3668 = vpop.permute.xlu0 %3667
  %3669 = vrot.lane.b32.xlu0 %v3094, 1
  %v3670 = vpop.permute.xlu0 %3669
  %3671 = vrot.lane.b32.xlu0 %v3087, 1
  %v3672 = vpop.permute.xlu0 %3671
  %3673 = vrot.lane.b32.xlu0 %v3095, 1
  %v3674 = vpop.permute.xlu0 %3673
  %3675 = vrot.lane.b32.xlu0 %v3088, 1
  %v3676 = vpop.permute.xlu0 %3675
  %3677 = vrot.lane.b32.xlu0 %v3096, 1
  %v3678 = vpop.permute.xlu0 %3677
  %3679 = vrot.lane.b32.xlu0 %v3089, 1
  %v3680 = vpop.permute.xlu0 %3679
  %3681 = vrot.lane.b32.xlu0 %v3097, 1
  %v3682 = vpop.permute.xlu0 %3681
  %3683 = vrot.lane.b32.xlu0 %v3090, 1
  %v3684 = vpop.permute.xlu0 %3683
  %3685 = vrot.lane.b32.xlu0 %v3098, 1
  %v3686 = vpop.permute.xlu0 %3685
  %3687 = vrot.lane.b32.xlu0 %v3091, 1
  %v3688 = vpop.permute.xlu0 %3687
  %3689 = vrot.lane.b32.xlu0 %v3099, 1
  %v3690 = vpop.permute.xlu0 %3689
  %v3691 = vsel %vm261, %v3684, %v3688
  %v3692 = vsel %vm261, %v3686, %v3690
  %v3693 = vsel %vm261, %v3680, %v3684
  %v3694 = vsel %vm261, %v3682, %v3686
  %v3695 = vsel %vm261, %v3676, %v3680
  %v3696 = vsel %vm261, %v3678, %v3682
  %v3697 = vsel %vm261, %v3672, %v3676
  %v3698 = vsel %vm261, %v3674, %v3678
  %v3699 = vsel %vm261, %v3668, %v3672
  %v3700 = vsel %vm261, %v3670, %v3674
  %v3701 = vsel %vm261, %v3664, %v3668
  %v3702 = vsel %vm261, %v3666, %v3670
  %v3703 = vsel %vm261, %v3660, %v3664
  %v3704 = vsel %vm261, %v3662, %v3666
  %v3705 = vsel %vm261, %v3688, %v3660
  %v3706 = vsel %vm261, %v3690, %v3662
  %v3707 = vmul.f32 %v3705, %v275
  %v3708 = vmul.f32 %v3703, %v276
  %v3709 = vmul.f32 %v3701, %v277
  %v3710 = vmul.f32 %v3699, %v278
  %v3711 = vmul.f32 %v3697, %v279
  %v3712 = vmul.f32 %v3695, %v280
  %v3713 = vmul.f32 %v3693, %v281
  %v3714 = vmul.f32 %v3691, %v282
  %v3715 = vmul.f32 %v3706, %v275
  %v3716 = vmul.f32 %v3704, %v276
  %v3717 = vmul.f32 %v3702, %v277
  %v3718 = vmul.f32 %v3700, %v278
  %v3719 = vmul.f32 %v3698, %v279
  %v3720 = vmul.f32 %v3696, %v280
  %v3721 = vmul.f32 %v3694, %v281
  %v3722 = vmul.f32 %v3692, %v282
  %v3723 = vpack.c.bf16 %v3715, %v3707
  %v3724 = vpack.c.bf16 %v3716, %v3708
  %v3725 = vpack.c.bf16 %v3717, %v3709
  %v3726 = vpack.c.bf16 %v3718, %v3710
  %v3727 = vpack.c.bf16 %v3719, %v3711
  %v3728 = vpack.c.bf16 %v3720, %v3712
  %v3729 = vpack.c.bf16 %v3721, %v3713
  %v3730 = vpack.c.bf16 %v3722, %v3714
  %3732 = vst [vmem:[#allocation1] ss:$9 sm:$0xff] %v3658
  %v3733 = vld [vmem:[#allocation1] sm:$0xff]
  %3735 = vrot.lane.b32.xlu0 %v3733, 80
  %v3736 = vpop.permute.xlu0 %3735
  %v3738 = vsel %vm1416, %v3736, 0
  %3740 = vmatpush.bf16.msra.mxu0 0
  %3741 = vmatpush.bf16.msra.mxu0 0
  %3742 = vmatpush.bf16.msra.mxu0 0
  %3743 = vmatpush.bf16.msra.mxu0 0
  %3744 = vmatpush.bf16.msra.mxu0 0
  %3745 = vmatpush.bf16.msra.mxu0 0
  %3746 = vmatpush.bf16.msra.mxu0 0
  %3747 = vmatpush.bf16.msra.mxu0 %v3723
  %3748 = vmatmul.bf16.gmra.mxu0 %v3738
  %v3749 = vpop.f32.mrf.mxu0
  %v3750 = vadd.f32 0.0, %v3749
  %v3751 = vpop.f32.mrf.mxu0
  %3752 = vdwg.mxu0
  %3753 = vmatpush.bf16.msra.mxu0 0
  %3754 = vmatpush.bf16.msra.mxu0 0
  %3755 = vmatpush.bf16.msra.mxu0 0
  %3756 = vmatpush.bf16.msra.mxu0 0
  %3757 = vmatpush.bf16.msra.mxu0 0
  %3758 = vmatpush.bf16.msra.mxu0 0
  %3759 = vmatpush.bf16.msra.mxu0 0
  %3760 = vmatpush.bf16.msra.mxu0 %v3724
  %3761 = vmatmul.bf16.gmra.mxu0 %v3738
  %v3762 = vpop.f32.mrf.mxu0
  %v3763 = vadd.f32 0.0, %v3762
  %v3764 = vpop.f32.mrf.mxu0
  %3765 = vdwg.mxu0
  %3766 = vmatpush.bf16.msra.mxu0 0
  %3767 = vmatpush.bf16.msra.mxu0 0
  %3768 = vmatpush.bf16.msra.mxu0 0
  %3769 = vmatpush.bf16.msra.mxu0 0
  %3770 = vmatpush.bf16.msra.mxu0 0
  %3771 = vmatpush.bf16.msra.mxu0 0
  %3772 = vmatpush.bf16.msra.mxu0 0
  %3773 = vmatpush.bf16.msra.mxu0 %v3725
  %3774 = vmatmul.bf16.gmra.mxu0 %v3738
  %v3775 = vpop.f32.mrf.mxu0
  %v3776 = vadd.f32 0.0, %v3775
  %v3777 = vpop.f32.mrf.mxu0
  %3778 = vdwg.mxu0
  %3779 = vmatpush.bf16.msra.mxu0 0
  %3780 = vmatpush.bf16.msra.mxu0 0
  %3781 = vmatpush.bf16.msra.mxu0 0
  %3782 = vmatpush.bf16.msra.mxu0 0
  %3783 = vmatpush.bf16.msra.mxu0 0
  %3784 = vmatpush.bf16.msra.mxu0 0
  %3785 = vmatpush.bf16.msra.mxu0 0
  %3786 = vmatpush.bf16.msra.mxu0 %v3726
  %3787 = vmatmul.bf16.gmra.mxu0 %v3738
  %v3788 = vpop.f32.mrf.mxu0
  %v3789 = vadd.f32 0.0, %v3788
  %v3790 = vpop.f32.mrf.mxu0
  %3791 = vdwg.mxu0
  %3792 = vmatpush.bf16.msra.mxu0 0
  %3793 = vmatpush.bf16.msra.mxu0 0
  %3794 = vmatpush.bf16.msra.mxu0 0
  %3795 = vmatpush.bf16.msra.mxu0 0
  %3796 = vmatpush.bf16.msra.mxu0 0
  %3797 = vmatpush.bf16.msra.mxu0 0
  %3798 = vmatpush.bf16.msra.mxu0 0
  %3799 = vmatpush.bf16.msra.mxu0 %v3727
  %3800 = vmatmul.bf16.gmra.mxu0 %v3738
  %v3801 = vpop.f32.mrf.mxu0
  %v3802 = vadd.f32 0.0, %v3801
  %v3803 = vpop.f32.mrf.mxu0
  %3804 = vdwg.mxu0
  %3805 = vmatpush.bf16.msra.mxu0 0
  %3806 = vmatpush.bf16.msra.mxu0 0
  %3807 = vmatpush.bf16.msra.mxu0 0
  %3808 = vmatpush.bf16.msra.mxu0 0
  %3809 = vmatpush.bf16.msra.mxu0 0
  %3810 = vmatpush.bf16.msra.mxu0 0
  %3811 = vmatpush.bf16.msra.mxu0 0
  %3812 = vmatpush.bf16.msra.mxu0 %v3728
  %3813 = vmatmul.bf16.gmra.mxu0 %v3738
  %v3814 = vpop.f32.mrf.mxu0
  %v3815 = vadd.f32 0.0, %v3814
  %v3816 = vpop.f32.mrf.mxu0
  %3817 = vdwg.mxu0
  %3818 = vmatpush.bf16.msra.mxu0 0
  %3819 = vmatpush.bf16.msra.mxu0 0
  %3820 = vmatpush.bf16.msra.mxu0 0
  %3821 = vmatpush.bf16.msra.mxu0 0
  %3822 = vmatpush.bf16.msra.mxu0 0
  %3823 = vmatpush.bf16.msra.mxu0 0
  %3824 = vmatpush.bf16.msra.mxu0 0
  %3825 = vmatpush.bf16.msra.mxu0 %v3729
  %3826 = vmatmul.bf16.gmra.mxu0 %v3738
  %v3827 = vpop.f32.mrf.mxu0
  %v3828 = vadd.f32 0.0, %v3827
  %v3829 = vpop.f32.mrf.mxu0
  %3830 = vdwg.mxu0
  %3831 = vmatpush.bf16.msra.mxu0 0
  %3832 = vmatpush.bf16.msra.mxu0 0
  %3833 = vmatpush.bf16.msra.mxu0 0
  %3834 = vmatpush.bf16.msra.mxu0 0
  %3835 = vmatpush.bf16.msra.mxu0 0
  %3836 = vmatpush.bf16.msra.mxu0 0
  %3837 = vmatpush.bf16.msra.mxu0 0
  %3838 = vmatpush.bf16.msra.mxu0 %v3730
  %3839 = vmatmul.bf16.gmra.mxu0 %v3738
  %v3840 = vpop.f32.mrf.mxu0
  %v3841 = vadd.f32 0.0, %v3840
  %v3842 = vpop.f32.mrf.mxu0
  %3843 = vdwg.mxu0
  %v3844 = vadd.f32 %v3650, %v3750
  %v3845 = vadd.f32 %v3651, %v3763
  %v3846 = vadd.f32 %v3652, %v3776
  %v3847 = vadd.f32 %v3653, %v3789
  %v3848 = vadd.f32 %v3654, %v3802
  %v3849 = vadd.f32 %v3655, %v3815
  %v3850 = vadd.f32 %v3656, %v3828
  %v3851 = vadd.f32 %v3657, %v3841
  %v3852 = vld [vmem:[%s6] sm:$0x1]
  %v3853 = vmul.f32 %v3084, %v2058
  %v3854 = vmul.f32 %v3085, %v2059
  %v3855 = vmul.f32 %v3086, %v2060
  %v3856 = vmul.f32 %v3087, %v2061
  %v3857 = vmul.f32 %v3088, %v2062
  %v3858 = vmul.f32 %v3089, %v2063
  %v3859 = vmul.f32 %v3090, %v2064
  %v3860 = vmul.f32 %v3091, %v2065
  %v3861 = vmul.f32 %v3092, %v2058
  %v3862 = vmul.f32 %v3093, %v2059
  %v3863 = vmul.f32 %v3094, %v2060
  %v3864 = vmul.f32 %v3095, %v2061
  %v3865 = vmul.f32 %v3096, %v2062
  %v3866 = vmul.f32 %v3097, %v2063
  %v3867 = vmul.f32 %v3098, %v2064
  %v3868 = vmul.f32 %v3099, %v2065
  %v3869 = vpack.c.bf16 %v3861, %v3853
  %v3870 = vpack.c.bf16 %v3862, %v3854
  %v3871 = vpack.c.bf16 %v3863, %v3855
  %v3872 = vpack.c.bf16 %v3864, %v3856
  %v3873 = vpack.c.bf16 %v3865, %v3857
  %v3874 = vpack.c.bf16 %v3866, %v3858
  %v3875 = vpack.c.bf16 %v3867, %v3859
  %v3876 = vpack.c.bf16 %v3868, %v3860
  %3878 = vst [vmem:[#allocation1] ss:$9 sm:$0xff] %v3852
  %v3879 = vld [vmem:[#allocation1] sm:$0xff]
  %3881 = vrot.lane.b32.xlu0 %v3879, 64
  %v3882 = vpop.permute.xlu0 %3881
  %v3884 = vsel %vm1416, %v3882, 0
  %3886 = vmatpush.bf16.msra.mxu0 0
  %3887 = vmatpush.bf16.msra.mxu0 0
  %3888 = vmatpush.bf16.msra.mxu0 0
  %3889 = vmatpush.bf16.msra.mxu0 0
  %3890 = vmatpush.bf16.msra.mxu0 0
  %3891 = vmatpush.bf16.msra.mxu0 0
  %3892 = vmatpush.bf16.msra.mxu0 0
  %3893 = vmatpush.bf16.msra.mxu0 %v3869
  %3894 = vmatmul.bf16.gmra.mxu0 %v3884
  %v3895 = vpop.f32.mrf.mxu0
  %v3896 = vadd.f32 0.0, %v3895
  %v3897 = vpop.f32.mrf.mxu0
  %3898 = vdwg.mxu0
  %3899 = vmatpush.bf16.msra.mxu0 0
  %3900 = vmatpush.bf16.msra.mxu0 0
  %3901 = vmatpush.bf16.msra.mxu0 0
  %3902 = vmatpush.bf16.msra.mxu0 0
  %3903 = vmatpush.bf16.msra.mxu0 0
  %3904 = vmatpush.bf16.msra.mxu0 0
  %3905 = vmatpush.bf16.msra.mxu0 0
  %3906 = vmatpush.bf16.msra.mxu0 %v3870
  %3907 = vmatmul.bf16.gmra.mxu0 %v3884
  %v3908 = vpop.f32.mrf.mxu0
  %v3909 = vadd.f32 0.0, %v3908
  %v3910 = vpop.f32.mrf.mxu0
  %3911 = vdwg.mxu0
  %3912 = vmatpush.bf16.msra.mxu0 0
  %3913 = vmatpush.bf16.msra.mxu0 0
  %3914 = vmatpush.bf16.msra.mxu0 0
  %3915 = vmatpush.bf16.msra.mxu0 0
  %3916 = vmatpush.bf16.msra.mxu0 0
  %3917 = vmatpush.bf16.msra.mxu0 0
  %3918 = vmatpush.bf16.msra.mxu0 0
  %3919 = vmatpush.bf16.msra.mxu0 %v3871
  %3920 = vmatmul.bf16.gmra.mxu0 %v3884
  %v3921 = vpop.f32.mrf.mxu0
  %v3922 = vadd.f32 0.0, %v3921
  %v3923 = vpop.f32.mrf.mxu0
  %3924 = vdwg.mxu0
  %3925 = vmatpush.bf16.msra.mxu0 0
  %3926 = vmatpush.bf16.msra.mxu0 0
  %3927 = vmatpush.bf16.msra.mxu0 0
  %3928 = vmatpush.bf16.msra.mxu0 0
  %3929 = vmatpush.bf16.msra.mxu0 0
  %3930 = vmatpush.bf16.msra.mxu0 0
  %3931 = vmatpush.bf16.msra.mxu0 0
  %3932 = vmatpush.bf16.msra.mxu0 %v3872
  %3933 = vmatmul.bf16.gmra.mxu0 %v3884
  %v3934 = vpop.f32.mrf.mxu0
  %v3935 = vadd.f32 0.0, %v3934
  %v3936 = vpop.f32.mrf.mxu0
  %3937 = vdwg.mxu0
  %3938 = vmatpush.bf16.msra.mxu0 0
  %3939 = vmatpush.bf16.msra.mxu0 0
  %3940 = vmatpush.bf16.msra.mxu0 0
  %3941 = vmatpush.bf16.msra.mxu0 0
  %3942 = vmatpush.bf16.msra.mxu0 0
  %3943 = vmatpush.bf16.msra.mxu0 0
  %3944 = vmatpush.bf16.msra.mxu0 0
  %3945 = vmatpush.bf16.msra.mxu0 %v3873
  %3946 = vmatmul.bf16.gmra.mxu0 %v3884
  %v3947 = vpop.f32.mrf.mxu0
  %v3948 = vadd.f32 0.0, %v3947
  %v3949 = vpop.f32.mrf.mxu0
  %3950 = vdwg.mxu0
  %3951 = vmatpush.bf16.msra.mxu0 0
  %3952 = vmatpush.bf16.msra.mxu0 0
  %3953 = vmatpush.bf16.msra.mxu0 0
  %3954 = vmatpush.bf16.msra.mxu0 0
  %3955 = vmatpush.bf16.msra.mxu0 0
  %3956 = vmatpush.bf16.msra.mxu0 0
  %3957 = vmatpush.bf16.msra.mxu0 0
  %3958 = vmatpush.bf16.msra.mxu0 %v3874
  %3959 = vmatmul.bf16.gmra.mxu0 %v3884
  %v3960 = vpop.f32.mrf.mxu0
  %v3961 = vadd.f32 0.0, %v3960
  %v3962 = vpop.f32.mrf.mxu0
  %3963 = vdwg.mxu0
  %3964 = vmatpush.bf16.msra.mxu0 0
  %3965 = vmatpush.bf16.msra.mxu0 0
  %3966 = vmatpush.bf16.msra.mxu0 0
  %3967 = vmatpush.bf16.msra.mxu0 0
  %3968 = vmatpush.bf16.msra.mxu0 0
  %3969 = vmatpush.bf16.msra.mxu0 0
  %3970 = vmatpush.bf16.msra.mxu0 0
  %3971 = vmatpush.bf16.msra.mxu0 %v3875
  %3972 = vmatmul.bf16.gmra.mxu0 %v3884
  %v3973 = vpop.f32.mrf.mxu0
  %v3974 = vadd.f32 0.0, %v3973
  %v3975 = vpop.f32.mrf.mxu0
  %3976 = vdwg.mxu0
  %3977 = vmatpush.bf16.msra.mxu0 0
  %3978 = vmatpush.bf16.msra.mxu0 0
  %3979 = vmatpush.bf16.msra.mxu0 0
  %3980 = vmatpush.bf16.msra.mxu0 0
  %3981 = vmatpush.bf16.msra.mxu0 0
  %3982 = vmatpush.bf16.msra.mxu0 0
  %3983 = vmatpush.bf16.msra.mxu0 0
  %3984 = vmatpush.bf16.msra.mxu0 %v3876
  %3985 = vmatmul.bf16.gmra.mxu0 %v3884
  %v3986 = vpop.f32.mrf.mxu0
  %v3987 = vadd.f32 0.0, %v3986
  %v3988 = vpop.f32.mrf.mxu0
  %3989 = vdwg.mxu0
  %v3990 = vadd.f32 %v3844, %v3896
  %v3991 = vadd.f32 %v3845, %v3909
  %v3992 = vadd.f32 %v3846, %v3922
  %v3993 = vadd.f32 %v3847, %v3935
  %v3994 = vadd.f32 %v3848, %v3948
  %v3995 = vadd.f32 %v3849, %v3961
  %v3996 = vadd.f32 %v3850, %v3974
  %v3997 = vadd.f32 %v3851, %v3987
  %v3998 = vld [vmem:[%s6] sm:$0x1]
  %3999 = vrot.lane.b32.xlu0 %v3084, 127
  %v4000 = vpop.permute.xlu0 %3999
  %4001 = vrot.lane.b32.xlu0 %v3092, 127
  %v4002 = vpop.permute.xlu0 %4001
  %4003 = vrot.lane.b32.xlu0 %v3085, 127
  %v4004 = vpop.permute.xlu0 %4003
  %4005 = vrot.lane.b32.xlu0 %v3093, 127
  %v4006 = vpop.permute.xlu0 %4005
  %4007 = vrot.lane.b32.xlu0 %v3086, 127
  %v4008 = vpop.permute.xlu0 %4007
  %4009 = vrot.lane.b32.xlu0 %v3094, 127
  %v4010 = vpop.permute.xlu0 %4009
  %4011 = vrot.lane.b32.xlu0 %v3087, 127
  %v4012 = vpop.permute.xlu0 %4011
  %4013 = vrot.lane.b32.xlu0 %v3095, 127
  %v4014 = vpop.permute.xlu0 %4013
  %4015 = vrot.lane.b32.xlu0 %v3088, 127
  %v4016 = vpop.permute.xlu0 %4015
  %4017 = vrot.lane.b32.xlu0 %v3096, 127
  %v4018 = vpop.permute.xlu0 %4017
  %4019 = vrot.lane.b32.xlu0 %v3089, 127
  %v4020 = vpop.permute.xlu0 %4019
  %4021 = vrot.lane.b32.xlu0 %v3097, 127
  %v4022 = vpop.permute.xlu0 %4021
  %4023 = vrot.lane.b32.xlu0 %v3090, 127
  %v4024 = vpop.permute.xlu0 %4023
  %4025 = vrot.lane.b32.xlu0 %v3098, 127
  %v4026 = vpop.permute.xlu0 %4025
  %4027 = vrot.lane.b32.xlu0 %v3091, 127
  %v4028 = vpop.permute.xlu0 %4027
  %4029 = vrot.lane.b32.xlu0 %v3099, 127
  %v4030 = vpop.permute.xlu0 %4029
  %v4031 = vsel %vm345, %v4024, %v4028
  %v4032 = vsel %vm345, %v4026, %v4030
  %v4033 = vsel %vm345, %v4020, %v4024
  %v4034 = vsel %vm345, %v4022, %v4026
  %v4035 = vsel %vm345, %v4016, %v4020
  %v4036 = vsel %vm345, %v4018, %v4022
  %v4037 = vsel %vm345, %v4012, %v4016
  %v4038 = vsel %vm345, %v4014, %v4018
  %v4039 = vsel %vm345, %v4008, %v4012
  %v4040 = vsel %vm345, %v4010, %v4014
  %v4041 = vsel %vm345, %v4004, %v4008
  %v4042 = vsel %vm345, %v4006, %v4010
  %v4043 = vsel %vm345, %v4000, %v4004
  %v4044 = vsel %vm345, %v4002, %v4006
  %v4045 = vsel %vm345, %v4028, %v4000
  %v4046 = vsel %vm345, %v4030, %v4002
  %v4047 = vmul.f32 %v4043, %v359
  %v4048 = vmul.f32 %v4041, %v360
  %v4049 = vmul.f32 %v4039, %v361
  %v4050 = vmul.f32 %v4037, %v362
  %v4051 = vmul.f32 %v4035, %v363
  %v4052 = vmul.f32 %v4033, %v364
  %v4053 = vmul.f32 %v4031, %v365
  %v4054 = vmul.f32 %v4045, %v366
  %v4055 = vmul.f32 %v4044, %v359
  %v4056 = vmul.f32 %v4042, %v360
  %v4057 = vmul.f32 %v4040, %v361
  %v4058 = vmul.f32 %v4038, %v362
  %v4059 = vmul.f32 %v4036, %v363
  %v4060 = vmul.f32 %v4034, %v364
  %v4061 = vmul.f32 %v4032, %v365
  %v4062 = vmul.f32 %v4046, %v366
  %v4063 = vpack.c.bf16 %v4055, %v4047
  %v4064 = vpack.c.bf16 %v4056, %v4048
  %v4065 = vpack.c.bf16 %v4057, %v4049
  %v4066 = vpack.c.bf16 %v4058, %v4050
  %v4067 = vpack.c.bf16 %v4059, %v4051
  %v4068 = vpack.c.bf16 %v4060, %v4052
  %v4069 = vpack.c.bf16 %v4061, %v4053
  %v4070 = vpack.c.bf16 %v4062, %v4054
  %4072 = vst [vmem:[#allocation1] ss:$9 sm:$0xff] %v3998
  %v4073 = vld [vmem:[#allocation1] sm:$0xff]
  %4075 = vrot.lane.b32.xlu0 %v4073, 48
  %v4076 = vpop.permute.xlu0 %4075
  %v4078 = vsel %vm1416, %v4076, 0
  %4080 = vmatpush.bf16.msra.mxu0 0
  %4081 = vmatpush.bf16.msra.mxu0 0
  %4082 = vmatpush.bf16.msra.mxu0 0
  %4083 = vmatpush.bf16.msra.mxu0 0
  %4084 = vmatpush.bf16.msra.mxu0 0
  %4085 = vmatpush.bf16.msra.mxu0 0
  %4086 = vmatpush.bf16.msra.mxu0 0
  %4087 = vmatpush.bf16.msra.mxu0 %v4063
  %4088 = vmatmul.bf16.gmra.mxu0 %v4078
  %v4089 = vpop.f32.mrf.mxu0
  %v4090 = vadd.f32 0.0, %v4089
  %v4091 = vpop.f32.mrf.mxu0
  %4092 = vdwg.mxu0
  %4093 = vmatpush.bf16.msra.mxu0 0
  %4094 = vmatpush.bf16.msra.mxu0 0
  %4095 = vmatpush.bf16.msra.mxu0 0
  %4096 = vmatpush.bf16.msra.mxu0 0
  %4097 = vmatpush.bf16.msra.mxu0 0
  %4098 = vmatpush.bf16.msra.mxu0 0
  %4099 = vmatpush.bf16.msra.mxu0 0
  %4100 = vmatpush.bf16.msra.mxu0 %v4064
  %4101 = vmatmul.bf16.gmra.mxu0 %v4078
  %v4102 = vpop.f32.mrf.mxu0
  %v4103 = vadd.f32 0.0, %v4102
  %v4104 = vpop.f32.mrf.mxu0
  %4105 = vdwg.mxu0
  %4106 = vmatpush.bf16.msra.mxu0 0
  %4107 = vmatpush.bf16.msra.mxu0 0
  %4108 = vmatpush.bf16.msra.mxu0 0
  %4109 = vmatpush.bf16.msra.mxu0 0
  %4110 = vmatpush.bf16.msra.mxu0 0
  %4111 = vmatpush.bf16.msra.mxu0 0
  %4112 = vmatpush.bf16.msra.mxu0 0
  %4113 = vmatpush.bf16.msra.mxu0 %v4065
  %4114 = vmatmul.bf16.gmra.mxu0 %v4078
  %v4115 = vpop.f32.mrf.mxu0
  %v4116 = vadd.f32 0.0, %v4115
  %v4117 = vpop.f32.mrf.mxu0
  %4118 = vdwg.mxu0
  %4119 = vmatpush.bf16.msra.mxu0 0
  %4120 = vmatpush.bf16.msra.mxu0 0
  %4121 = vmatpush.bf16.msra.mxu0 0
  %4122 = vmatpush.bf16.msra.mxu0 0
  %4123 = vmatpush.bf16.msra.mxu0 0
  %4124 = vmatpush.bf16.msra.mxu0 0
  %4125 = vmatpush.bf16.msra.mxu0 0
  %4126 = vmatpush.bf16.msra.mxu0 %v4066
  %4127 = vmatmul.bf16.gmra.mxu0 %v4078
  %v4128 = vpop.f32.mrf.mxu0
  %v4129 = vadd.f32 0.0, %v4128
  %v4130 = vpop.f32.mrf.mxu0
  %4131 = vdwg.mxu0
  %4132 = vmatpush.bf16.msra.mxu0 0
  %4133 = vmatpush.bf16.msra.mxu0 0
  %4134 = vmatpush.bf16.msra.mxu0 0
  %4135 = vmatpush.bf16.msra.mxu0 0
  %4136 = vmatpush.bf16.msra.mxu0 0
  %4137 = vmatpush.bf16.msra.mxu0 0
  %4138 = vmatpush.bf16.msra.mxu0 0
  %4139 = vmatpush.bf16.msra.mxu0 %v4067
  %4140 = vmatmul.bf16.gmra.mxu0 %v4078
  %v4141 = vpop.f32.mrf.mxu0
  %v4142 = vadd.f32 0.0, %v4141
  %v4143 = vpop.f32.mrf.mxu0
  %4144 = vdwg.mxu0
  %4145 = vmatpush.bf16.msra.mxu0 0
  %4146 = vmatpush.bf16.msra.mxu0 0
  %4147 = vmatpush.bf16.msra.mxu0 0
  %4148 = vmatpush.bf16.msra.mxu0 0
  %4149 = vmatpush.bf16.msra.mxu0 0
  %4150 = vmatpush.bf16.msra.mxu0 0
  %4151 = vmatpush.bf16.msra.mxu0 0
  %4152 = vmatpush.bf16.msra.mxu0 %v4068
  %4153 = vmatmul.bf16.gmra.mxu0 %v4078
  %v4154 = vpop.f32.mrf.mxu0
  %v4155 = vadd.f32 0.0, %v4154
  %v4156 = vpop.f32.mrf.mxu0
  %4157 = vdwg.mxu0
  %4158 = vmatpush.bf16.msra.mxu0 0
  %4159 = vmatpush.bf16.msra.mxu0 0
  %4160 = vmatpush.bf16.msra.mxu0 0
  %4161 = vmatpush.bf16.msra.mxu0 0
  %4162 = vmatpush.bf16.msra.mxu0 0
  %4163 = vmatpush.bf16.msra.mxu0 0
  %4164 = vmatpush.bf16.msra.mxu0 0
  %4165 = vmatpush.bf16.msra.mxu0 %v4069
  %4166 = vmatmul.bf16.gmra.mxu0 %v4078
  %v4167 = vpop.f32.mrf.mxu0
  %v4168 = vadd.f32 0.0, %v4167
  %v4169 = vpop.f32.mrf.mxu0
  %4170 = vdwg.mxu0
  %4171 = vmatpush.bf16.msra.mxu0 0
  %4172 = vmatpush.bf16.msra.mxu0 0
  %4173 = vmatpush.bf16.msra.mxu0 0
  %4174 = vmatpush.bf16.msra.mxu0 0
  %4175 = vmatpush.bf16.msra.mxu0 0
  %4176 = vmatpush.bf16.msra.mxu0 0
  %4177 = vmatpush.bf16.msra.mxu0 0
  %4178 = vmatpush.bf16.msra.mxu0 %v4070
  %4179 = vmatmul.bf16.gmra.mxu0 %v4078
  %v4180 = vpop.f32.mrf.mxu0
  %v4181 = vadd.f32 0.0, %v4180
  %v4182 = vpop.f32.mrf.mxu0
  %4183 = vdwg.mxu0
  %v4184 = vadd.f32 %v3990, %v4090
  %v4185 = vadd.f32 %v3991, %v4103
  %v4186 = vadd.f32 %v3992, %v4116
  %v4187 = vadd.f32 %v3993, %v4129
  %v4188 = vadd.f32 %v3994, %v4142
  %v4189 = vadd.f32 %v3995, %v4155
  %v4190 = vadd.f32 %v3996, %v4168
  %v4191 = vadd.f32 %v3997, %v4181
  %v4192 = vld [vmem:[%s6] sm:$0x1]
  %4193 = vrot.lane.b32.xlu0 %v3084, 113
  %v4194 = vpop.permute.xlu0 %4193
  %4195 = vrot.lane.b32.xlu0 %v3092, 113
  %v4196 = vpop.permute.xlu0 %4195
  %4197 = vrot.lane.b32.xlu0 %v3085, 113
  %v4198 = vpop.permute.xlu0 %4197
  %4199 = vrot.lane.b32.xlu0 %v3093, 113
  %v4200 = vpop.permute.xlu0 %4199
  %4201 = vrot.lane.b32.xlu0 %v3086, 113
  %v4202 = vpop.permute.xlu0 %4201
  %4203 = vrot.lane.b32.xlu0 %v3094, 113
  %v4204 = vpop.permute.xlu0 %4203
  %4205 = vrot.lane.b32.xlu0 %v3087, 113
  %v4206 = vpop.permute.xlu0 %4205
  %4207 = vrot.lane.b32.xlu0 %v3095, 113
  %v4208 = vpop.permute.xlu0 %4207
  %4209 = vrot.lane.b32.xlu0 %v3088, 113
  %v4210 = vpop.permute.xlu0 %4209
  %4211 = vrot.lane.b32.xlu0 %v3096, 113
  %v4212 = vpop.permute.xlu0 %4211
  %4213 = vrot.lane.b32.xlu0 %v3089, 113
  %v4214 = vpop.permute.xlu0 %4213
  %4215 = vrot.lane.b32.xlu0 %v3097, 113
  %v4216 = vpop.permute.xlu0 %4215
  %4217 = vrot.lane.b32.xlu0 %v3090, 113
  %v4218 = vpop.permute.xlu0 %4217
  %4219 = vrot.lane.b32.xlu0 %v3098, 113
  %v4220 = vpop.permute.xlu0 %4219
  %4221 = vrot.lane.b32.xlu0 %v3091, 113
  %v4222 = vpop.permute.xlu0 %4221
  %4223 = vrot.lane.b32.xlu0 %v3099, 113
  %v4224 = vpop.permute.xlu0 %4223
  %v4225 = vsel %vm403, %v4218, %v4222
  %v4226 = vsel %vm403, %v4220, %v4224
  %v4227 = vsel %vm403, %v4214, %v4218
  %v4228 = vsel %vm403, %v4216, %v4220
  %v4229 = vsel %vm403, %v4210, %v4214
  %v4230 = vsel %vm403, %v4212, %v4216
  %v4231 = vsel %vm403, %v4206, %v4210
  %v4232 = vsel %vm403, %v4208, %v4212
  %v4233 = vsel %vm403, %v4202, %v4206
  %v4234 = vsel %vm403, %v4204, %v4208
  %v4235 = vsel %vm403, %v4198, %v4202
  %v4236 = vsel %vm403, %v4200, %v4204
  %v4237 = vsel %vm403, %v4194, %v4198
  %v4238 = vsel %vm403, %v4196, %v4200
  %v4239 = vsel %vm403, %v4222, %v4194
  %v4240 = vsel %vm403, %v4224, %v4196
  %v4241 = vmul.f32 %v4237, %v417
  %v4242 = vmul.f32 %v4235, %v418
  %v4243 = vmul.f32 %v4233, %v419
  %v4244 = vmul.f32 %v4231, %v420
  %v4245 = vmul.f32 %v4229, %v421
  %v4246 = vmul.f32 %v4227, %v422
  %v4247 = vmul.f32 %v4225, %v423
  %v4248 = vmul.f32 %v4239, %v424
  %v4249 = vmul.f32 %v4238, %v417
  %v4250 = vmul.f32 %v4236, %v418
  %v4251 = vmul.f32 %v4234, %v419
  %v4252 = vmul.f32 %v4232, %v420
  %v4253 = vmul.f32 %v4230, %v421
  %v4254 = vmul.f32 %v4228, %v422
  %v4255 = vmul.f32 %v4226, %v423
  %v4256 = vmul.f32 %v4240, %v424
  %v4257 = vpack.c.bf16 %v4249, %v4241
  %v4258 = vpack.c.bf16 %v4250, %v4242
  %v4259 = vpack.c.bf16 %v4251, %v4243
  %v4260 = vpack.c.bf16 %v4252, %v4244
  %v4261 = vpack.c.bf16 %v4253, %v4245
  %v4262 = vpack.c.bf16 %v4254, %v4246
  %v4263 = vpack.c.bf16 %v4255, %v4247
  %v4264 = vpack.c.bf16 %v4256, %v4248
  %4266 = vst [vmem:[#allocation1] ss:$9 sm:$0xff] %v4192
  %v4267 = vld [vmem:[#allocation1] sm:$0xff]
  %4269 = vrot.lane.b32.xlu0 %v4267, 32
  %v4270 = vpop.permute.xlu0 %4269
  %v4272 = vsel %vm1416, %v4270, 0
  %4274 = vmatpush.bf16.msra.mxu0 0
  %4275 = vmatpush.bf16.msra.mxu0 0
  %4276 = vmatpush.bf16.msra.mxu0 0
  %4277 = vmatpush.bf16.msra.mxu0 0
  %4278 = vmatpush.bf16.msra.mxu0 0
  %4279 = vmatpush.bf16.msra.mxu0 0
  %4280 = vmatpush.bf16.msra.mxu0 0
  %4281 = vmatpush.bf16.msra.mxu0 %v4257
  %4282 = vmatmul.bf16.gmra.mxu0 %v4272
  %v4283 = vpop.f32.mrf.mxu0
  %v4284 = vadd.f32 0.0, %v4283
  %v4285 = vpop.f32.mrf.mxu0
  %4286 = vdwg.mxu0
  %4287 = vmatpush.bf16.msra.mxu0 0
  %4288 = vmatpush.bf16.msra.mxu0 0
  %4289 = vmatpush.bf16.msra.mxu0 0
  %4290 = vmatpush.bf16.msra.mxu0 0
  %4291 = vmatpush.bf16.msra.mxu0 0
  %4292 = vmatpush.bf16.msra.mxu0 0
  %4293 = vmatpush.bf16.msra.mxu0 0
  %4294 = vmatpush.bf16.msra.mxu0 %v4258
  %4295 = vmatmul.bf16.gmra.mxu0 %v4272
  %v4296 = vpop.f32.mrf.mxu0
  %v4297 = vadd.f32 0.0, %v4296
  %v4298 = vpop.f32.mrf.mxu0
  %4299 = vdwg.mxu0
  %4300 = vmatpush.bf16.msra.mxu0 0
  %4301 = vmatpush.bf16.msra.mxu0 0
  %4302 = vmatpush.bf16.msra.mxu0 0
  %4303 = vmatpush.bf16.msra.mxu0 0
  %4304 = vmatpush.bf16.msra.mxu0 0
  %4305 = vmatpush.bf16.msra.mxu0 0
  %4306 = vmatpush.bf16.msra.mxu0 0
  %4307 = vmatpush.bf16.msra.mxu0 %v4259
  %4308 = vmatmul.bf16.gmra.mxu0 %v4272
  %v4309 = vpop.f32.mrf.mxu0
  %v4310 = vadd.f32 0.0, %v4309
  %v4311 = vpop.f32.mrf.mxu0
  %4312 = vdwg.mxu0
  %4313 = vmatpush.bf16.msra.mxu0 0
  %4314 = vmatpush.bf16.msra.mxu0 0
  %4315 = vmatpush.bf16.msra.mxu0 0
  %4316 = vmatpush.bf16.msra.mxu0 0
  %4317 = vmatpush.bf16.msra.mxu0 0
  %4318 = vmatpush.bf16.msra.mxu0 0
  %4319 = vmatpush.bf16.msra.mxu0 0
  %4320 = vmatpush.bf16.msra.mxu0 %v4260
  %4321 = vmatmul.bf16.gmra.mxu0 %v4272
  %v4322 = vpop.f32.mrf.mxu0
  %v4323 = vadd.f32 0.0, %v4322
  %v4324 = vpop.f32.mrf.mxu0
  %4325 = vdwg.mxu0
  %4326 = vmatpush.bf16.msra.mxu0 0
  %4327 = vmatpush.bf16.msra.mxu0 0
  %4328 = vmatpush.bf16.msra.mxu0 0
  %4329 = vmatpush.bf16.msra.mxu0 0
  %4330 = vmatpush.bf16.msra.mxu0 0
  %4331 = vmatpush.bf16.msra.mxu0 0
  %4332 = vmatpush.bf16.msra.mxu0 0
  %4333 = vmatpush.bf16.msra.mxu0 %v4261
  %4334 = vmatmul.bf16.gmra.mxu0 %v4272
  %v4335 = vpop.f32.mrf.mxu0
  %v4336 = vadd.f32 0.0, %v4335
  %v4337 = vpop.f32.mrf.mxu0
  %4338 = vdwg.mxu0
  %4339 = vmatpush.bf16.msra.mxu0 0
  %4340 = vmatpush.bf16.msra.mxu0 0
  %4341 = vmatpush.bf16.msra.mxu0 0
  %4342 = vmatpush.bf16.msra.mxu0 0
  %4343 = vmatpush.bf16.msra.mxu0 0
  %4344 = vmatpush.bf16.msra.mxu0 0
  %4345 = vmatpush.bf16.msra.mxu0 0
  %4346 = vmatpush.bf16.msra.mxu0 %v4262
  %4347 = vmatmul.bf16.gmra.mxu0 %v4272
  %v4348 = vpop.f32.mrf.mxu0
  %v4349 = vadd.f32 0.0, %v4348
  %v4350 = vpop.f32.mrf.mxu0
  %4351 = vdwg.mxu0
  %4352 = vmatpush.bf16.msra.mxu0 0
  %4353 = vmatpush.bf16.msra.mxu0 0
  %4354 = vmatpush.bf16.msra.mxu0 0
  %4355 = vmatpush.bf16.msra.mxu0 0
  %4356 = vmatpush.bf16.msra.mxu0 0
  %4357 = vmatpush.bf16.msra.mxu0 0
  %4358 = vmatpush.bf16.msra.mxu0 0
  %4359 = vmatpush.bf16.msra.mxu0 %v4263
  %4360 = vmatmul.bf16.gmra.mxu0 %v4272
  %v4361 = vpop.f32.mrf.mxu0
  %v4362 = vadd.f32 0.0, %v4361
  %v4363 = vpop.f32.mrf.mxu0
  %4364 = vdwg.mxu0
  %4365 = vmatpush.bf16.msra.mxu0 0
  %4366 = vmatpush.bf16.msra.mxu0 0
  %4367 = vmatpush.bf16.msra.mxu0 0
  %4368 = vmatpush.bf16.msra.mxu0 0
  %4369 = vmatpush.bf16.msra.mxu0 0
  %4370 = vmatpush.bf16.msra.mxu0 0
  %4371 = vmatpush.bf16.msra.mxu0 0
  %4372 = vmatpush.bf16.msra.mxu0 %v4264
  %4373 = vmatmul.bf16.gmra.mxu0 %v4272
  %v4374 = vpop.f32.mrf.mxu0
  %v4375 = vadd.f32 0.0, %v4374
  %v4376 = vpop.f32.mrf.mxu0
  %4377 = vdwg.mxu0
  %v4378 = vadd.f32 %v4184, %v4284
  %v4379 = vadd.f32 %v4185, %v4297
  %v4380 = vadd.f32 %v4186, %v4310
  %v4381 = vadd.f32 %v4187, %v4323
  %v4382 = vadd.f32 %v4188, %v4336
  %v4383 = vadd.f32 %v4189, %v4349
  %v4384 = vadd.f32 %v4190, %v4362
  %v4385 = vadd.f32 %v4191, %v4375
  %v4386 = vld [vmem:[%s6] sm:$0x1]
  %4387 = vrot.lane.b32.xlu0 %v3084, 112
  %v4388 = vpop.permute.xlu0 %4387
  %4389 = vrot.lane.b32.xlu0 %v3092, 112
  %v4390 = vpop.permute.xlu0 %4389
  %4391 = vrot.lane.b32.xlu0 %v3085, 112
  %v4392 = vpop.permute.xlu0 %4391
  %4393 = vrot.lane.b32.xlu0 %v3093, 112
  %v4394 = vpop.permute.xlu0 %4393
  %4395 = vrot.lane.b32.xlu0 %v3086, 112
  %v4396 = vpop.permute.xlu0 %4395
  %4397 = vrot.lane.b32.xlu0 %v3094, 112
  %v4398 = vpop.permute.xlu0 %4397
  %4399 = vrot.lane.b32.xlu0 %v3087, 112
  %v4400 = vpop.permute.xlu0 %4399
  %4401 = vrot.lane.b32.xlu0 %v3095, 112
  %v4402 = vpop.permute.xlu0 %4401
  %4403 = vrot.lane.b32.xlu0 %v3088, 112
  %v4404 = vpop.permute.xlu0 %4403
  %4405 = vrot.lane.b32.xlu0 %v3096, 112
  %v4406 = vpop.permute.xlu0 %4405
  %4407 = vrot.lane.b32.xlu0 %v3089, 112
  %v4408 = vpop.permute.xlu0 %4407
  %4409 = vrot.lane.b32.xlu0 %v3097, 112
  %v4410 = vpop.permute.xlu0 %4409
  %4411 = vrot.lane.b32.xlu0 %v3090, 112
  %v4412 = vpop.permute.xlu0 %4411
  %4413 = vrot.lane.b32.xlu0 %v3098, 112
  %v4414 = vpop.permute.xlu0 %4413
  %4415 = vrot.lane.b32.xlu0 %v3091, 112
  %v4416 = vpop.permute.xlu0 %4415
  %4417 = vrot.lane.b32.xlu0 %v3099, 112
  %v4418 = vpop.permute.xlu0 %4417
  %v4419 = vsel %vm461, %v4412, %v4416
  %v4420 = vsel %vm461, %v4414, %v4418
  %v4421 = vsel %vm461, %v4408, %v4412
  %v4422 = vsel %vm461, %v4410, %v4414
  %v4423 = vsel %vm461, %v4404, %v4408
  %v4424 = vsel %vm461, %v4406, %v4410
  %v4425 = vsel %vm461, %v4400, %v4404
  %v4426 = vsel %vm461, %v4402, %v4406
  %v4427 = vsel %vm461, %v4396, %v4400
  %v4428 = vsel %vm461, %v4398, %v4402
  %v4429 = vsel %vm461, %v4392, %v4396
  %v4430 = vsel %vm461, %v4394, %v4398
  %v4431 = vsel %vm461, %v4388, %v4392
  %v4432 = vsel %vm461, %v4390, %v4394
  %v4433 = vsel %vm461, %v4416, %v4388
  %v4434 = vsel %vm461, %v4418, %v4390
  %v4435 = vmul.f32 %v4431, %v475
  %v4436 = vmul.f32 %v4429, %v476
  %v4437 = vmul.f32 %v4427, %v477
  %v4438 = vmul.f32 %v4425, %v478
  %v4439 = vmul.f32 %v4423, %v479
  %v4440 = vmul.f32 %v4421, %v480
  %v4441 = vmul.f32 %v4419, %v481
  %v4442 = vmul.f32 %v4433, %v482
  %v4443 = vmul.f32 %v4432, %v475
  %v4444 = vmul.f32 %v4430, %v476
  %v4445 = vmul.f32 %v4428, %v477
  %v4446 = vmul.f32 %v4426, %v478
  %v4447 = vmul.f32 %v4424, %v479
  %v4448 = vmul.f32 %v4422, %v480
  %v4449 = vmul.f32 %v4420, %v481
  %v4450 = vmul.f32 %v4434, %v482
  %v4451 = vpack.c.bf16 %v4443, %v4435
  %v4452 = vpack.c.bf16 %v4444, %v4436
  %v4453 = vpack.c.bf16 %v4445, %v4437
  %v4454 = vpack.c.bf16 %v4446, %v4438
  %v4455 = vpack.c.bf16 %v4447, %v4439
  %v4456 = vpack.c.bf16 %v4448, %v4440
  %v4457 = vpack.c.bf16 %v4449, %v4441
  %v4458 = vpack.c.bf16 %v4450, %v4442
  %4460 = vst [vmem:[#allocation1] ss:$9 sm:$0xff] %v4386
  %v4461 = vld [vmem:[#allocation1] sm:$0xff]
  %4463 = vrot.lane.b32.xlu0 %v4461, 16
  %v4464 = vpop.permute.xlu0 %4463
  %v4466 = vsel %vm1416, %v4464, 0
  %4468 = vmatpush.bf16.msra.mxu0 0
  %4469 = vmatpush.bf16.msra.mxu0 0
  %4470 = vmatpush.bf16.msra.mxu0 0
  %4471 = vmatpush.bf16.msra.mxu0 0
  %4472 = vmatpush.bf16.msra.mxu0 0
  %4473 = vmatpush.bf16.msra.mxu0 0
  %4474 = vmatpush.bf16.msra.mxu0 0
  %4475 = vmatpush.bf16.msra.mxu0 %v4451
  %4476 = vmatmul.bf16.gmra.mxu0 %v4466
  %v4477 = vpop.f32.mrf.mxu0
  %v4478 = vadd.f32 0.0, %v4477
  %v4479 = vpop.f32.mrf.mxu0
  %4480 = vdwg.mxu0
  %4481 = vmatpush.bf16.msra.mxu0 0
  %4482 = vmatpush.bf16.msra.mxu0 0
  %4483 = vmatpush.bf16.msra.mxu0 0
  %4484 = vmatpush.bf16.msra.mxu0 0
  %4485 = vmatpush.bf16.msra.mxu0 0
  %4486 = vmatpush.bf16.msra.mxu0 0
  %4487 = vmatpush.bf16.msra.mxu0 0
  %4488 = vmatpush.bf16.msra.mxu0 %v4452
  %4489 = vmatmul.bf16.gmra.mxu0 %v4466
  %v4490 = vpop.f32.mrf.mxu0
  %v4491 = vadd.f32 0.0, %v4490
  %v4492 = vpop.f32.mrf.mxu0
  %4493 = vdwg.mxu0
  %4494 = vmatpush.bf16.msra.mxu0 0
  %4495 = vmatpush.bf16.msra.mxu0 0
  %4496 = vmatpush.bf16.msra.mxu0 0
  %4497 = vmatpush.bf16.msra.mxu0 0
  %4498 = vmatpush.bf16.msra.mxu0 0
  %4499 = vmatpush.bf16.msra.mxu0 0
  %4500 = vmatpush.bf16.msra.mxu0 0
  %4501 = vmatpush.bf16.msra.mxu0 %v4453
  %4502 = vmatmul.bf16.gmra.mxu0 %v4466
  %v4503 = vpop.f32.mrf.mxu0
  %v4504 = vadd.f32 0.0, %v4503
  %v4505 = vpop.f32.mrf.mxu0
  %4506 = vdwg.mxu0
  %4507 = vmatpush.bf16.msra.mxu0 0
  %4508 = vmatpush.bf16.msra.mxu0 0
  %4509 = vmatpush.bf16.msra.mxu0 0
  %4510 = vmatpush.bf16.msra.mxu0 0
  %4511 = vmatpush.bf16.msra.mxu0 0
  %4512 = vmatpush.bf16.msra.mxu0 0
  %4513 = vmatpush.bf16.msra.mxu0 0
  %4514 = vmatpush.bf16.msra.mxu0 %v4454
  %4515 = vmatmul.bf16.gmra.mxu0 %v4466
  %v4516 = vpop.f32.mrf.mxu0
  %v4517 = vadd.f32 0.0, %v4516
  %v4518 = vpop.f32.mrf.mxu0
  %4519 = vdwg.mxu0
  %4520 = vmatpush.bf16.msra.mxu0 0
  %4521 = vmatpush.bf16.msra.mxu0 0
  %4522 = vmatpush.bf16.msra.mxu0 0
  %4523 = vmatpush.bf16.msra.mxu0 0
  %4524 = vmatpush.bf16.msra.mxu0 0
  %4525 = vmatpush.bf16.msra.mxu0 0
  %4526 = vmatpush.bf16.msra.mxu0 0
  %4527 = vmatpush.bf16.msra.mxu0 %v4455
  %4528 = vmatmul.bf16.gmra.mxu0 %v4466
  %v4529 = vpop.f32.mrf.mxu0
  %v4530 = vadd.f32 0.0, %v4529
  %v4531 = vpop.f32.mrf.mxu0
  %4532 = vdwg.mxu0
  %4533 = vmatpush.bf16.msra.mxu0 0
  %4534 = vmatpush.bf16.msra.mxu0 0
  %4535 = vmatpush.bf16.msra.mxu0 0
  %4536 = vmatpush.bf16.msra.mxu0 0
  %4537 = vmatpush.bf16.msra.mxu0 0
  %4538 = vmatpush.bf16.msra.mxu0 0
  %4539 = vmatpush.bf16.msra.mxu0 0
  %4540 = vmatpush.bf16.msra.mxu0 %v4456
  %4541 = vmatmul.bf16.gmra.mxu0 %v4466
  %v4542 = vpop.f32.mrf.mxu0
  %v4543 = vadd.f32 0.0, %v4542
  %v4544 = vpop.f32.mrf.mxu0
  %4545 = vdwg.mxu0
  %4546 = vmatpush.bf16.msra.mxu0 0
  %4547 = vmatpush.bf16.msra.mxu0 0
  %4548 = vmatpush.bf16.msra.mxu0 0
  %4549 = vmatpush.bf16.msra.mxu0 0
  %4550 = vmatpush.bf16.msra.mxu0 0
  %4551 = vmatpush.bf16.msra.mxu0 0
  %4552 = vmatpush.bf16.msra.mxu0 0
  %4553 = vmatpush.bf16.msra.mxu0 %v4457
  %4554 = vmatmul.bf16.gmra.mxu0 %v4466
  %v4555 = vpop.f32.mrf.mxu0
  %v4556 = vadd.f32 0.0, %v4555
  %v4557 = vpop.f32.mrf.mxu0
  %4558 = vdwg.mxu0
  %4559 = vmatpush.bf16.msra.mxu0 0
  %4560 = vmatpush.bf16.msra.mxu0 0
  %4561 = vmatpush.bf16.msra.mxu0 0
  %4562 = vmatpush.bf16.msra.mxu0 0
  %4563 = vmatpush.bf16.msra.mxu0 0
  %4564 = vmatpush.bf16.msra.mxu0 0
  %4565 = vmatpush.bf16.msra.mxu0 0
  %4566 = vmatpush.bf16.msra.mxu0 %v4458
  %4567 = vmatmul.bf16.gmra.mxu0 %v4466
  %v4568 = vpop.f32.mrf.mxu0
  %v4569 = vadd.f32 0.0, %v4568
  %v4570 = vpop.f32.mrf.mxu0
  %4571 = vdwg.mxu0
  %v4572 = vadd.f32 %v4378, %v4478
  %v4573 = vadd.f32 %v4379, %v4491
  %v4574 = vadd.f32 %v4380, %v4504
  %v4575 = vadd.f32 %v4381, %v4517
  %v4576 = vadd.f32 %v4382, %v4530
  %v4577 = vadd.f32 %v4383, %v4543
  %v4578 = vadd.f32 %v4384, %v4556
  %v4579 = vadd.f32 %v4385, %v4569
  %v4580 = vld [vmem:[%s6 + $0x1] sm:$0x1]
  %4581 = vrot.lane.b32.xlu0 %v3084, 111
  %v4582 = vpop.permute.xlu0 %4581
  %4583 = vrot.lane.b32.xlu0 %v3092, 111
  %v4584 = vpop.permute.xlu0 %4583
  %4585 = vrot.lane.b32.xlu0 %v3085, 111
  %v4586 = vpop.permute.xlu0 %4585
  %4587 = vrot.lane.b32.xlu0 %v3093, 111
  %v4588 = vpop.permute.xlu0 %4587
  %4589 = vrot.lane.b32.xlu0 %v3086, 111
  %v4590 = vpop.permute.xlu0 %4589
  %4591 = vrot.lane.b32.xlu0 %v3094, 111
  %v4592 = vpop.permute.xlu0 %4591
  %4593 = vrot.lane.b32.xlu0 %v3087, 111
  %v4594 = vpop.permute.xlu0 %4593
  %4595 = vrot.lane.b32.xlu0 %v3095, 111
  %v4596 = vpop.permute.xlu0 %4595
  %4597 = vrot.lane.b32.xlu0 %v3088, 111
  %v4598 = vpop.permute.xlu0 %4597
  %4599 = vrot.lane.b32.xlu0 %v3096, 111
  %v4600 = vpop.permute.xlu0 %4599
  %4601 = vrot.lane.b32.xlu0 %v3089, 111
  %v4602 = vpop.permute.xlu0 %4601
  %4603 = vrot.lane.b32.xlu0 %v3097, 111
  %v4604 = vpop.permute.xlu0 %4603
  %4605 = vrot.lane.b32.xlu0 %v3090, 111
  %v4606 = vpop.permute.xlu0 %4605
  %4607 = vrot.lane.b32.xlu0 %v3098, 111
  %v4608 = vpop.permute.xlu0 %4607
  %4609 = vrot.lane.b32.xlu0 %v3091, 111
  %v4610 = vpop.permute.xlu0 %4609
  %4611 = vrot.lane.b32.xlu0 %v3099, 111
  %v4612 = vpop.permute.xlu0 %4611
  %v4613 = vsel %vm519, %v4606, %v4610
  %v4614 = vsel %vm519, %v4608, %v4612
  %v4615 = vsel %vm519, %v4602, %v4606
  %v4616 = vsel %vm519, %v4604, %v4608
  %v4617 = vsel %vm519, %v4598, %v4602
  %v4618 = vsel %vm519, %v4600, %v4604
  %v4619 = vsel %vm519, %v4594, %v4598
  %v4620 = vsel %vm519, %v4596, %v4600
  %v4621 = vsel %vm519, %v4590, %v4594
  %v4622 = vsel %vm519, %v4592, %v4596
  %v4623 = vsel %vm519, %v4586, %v4590
  %v4624 = vsel %vm519, %v4588, %v4592
  %v4625 = vsel %vm519, %v4582, %v4586
  %v4626 = vsel %vm519, %v4584, %v4588
  %v4627 = vsel %vm519, %v4610, %v4582
  %v4628 = vsel %vm519, %v4612, %v4584
  %v4629 = vmul.f32 %v4625, %v533
  %v4630 = vmul.f32 %v4623, %v534
  %v4631 = vmul.f32 %v4621, %v535
  %v4632 = vmul.f32 %v4619, %v536
  %v4633 = vmul.f32 %v4617, %v537
  %v4634 = vmul.f32 %v4615, %v538
  %v4635 = vmul.f32 %v4613, %v539
  %v4636 = vmul.f32 %v4627, %v540
  %v4637 = vmul.f32 %v4626, %v533
  %v4638 = vmul.f32 %v4624, %v534
  %v4639 = vmul.f32 %v4622, %v535
  %v4640 = vmul.f32 %v4620, %v536
  %v4641 = vmul.f32 %v4618, %v537
  %v4642 = vmul.f32 %v4616, %v538
  %v4643 = vmul.f32 %v4614, %v539
  %v4644 = vmul.f32 %v4628, %v540
  %v4645 = vpack.c.bf16 %v4637, %v4629
  %v4646 = vpack.c.bf16 %v4638, %v4630
  %v4647 = vpack.c.bf16 %v4639, %v4631
  %v4648 = vpack.c.bf16 %v4640, %v4632
  %v4649 = vpack.c.bf16 %v4641, %v4633
  %v4650 = vpack.c.bf16 %v4642, %v4634
  %v4651 = vpack.c.bf16 %v4643, %v4635
  %v4652 = vpack.c.bf16 %v4644, %v4636
  %v4654 = vsel %vm1416, %v4580, 0
  %4656 = vmatpush.bf16.msra.mxu0 0
  %4657 = vmatpush.bf16.msra.mxu0 0
  %4658 = vmatpush.bf16.msra.mxu0 0
  %4659 = vmatpush.bf16.msra.mxu0 0
  %4660 = vmatpush.bf16.msra.mxu0 0
  %4661 = vmatpush.bf16.msra.mxu0 0
  %4662 = vmatpush.bf16.msra.mxu0 0
  %4663 = vmatpush.bf16.msra.mxu0 %v4645
  %4664 = vmatmul.bf16.gmra.mxu0 %v4654
  %v4665 = vpop.f32.mrf.mxu0
  %v4666 = vadd.f32 0.0, %v4665
  %v4667 = vpop.f32.mrf.mxu0
  %4668 = vdwg.mxu0
  %4669 = vmatpush.bf16.msra.mxu0 0
  %4670 = vmatpush.bf16.msra.mxu0 0
  %4671 = vmatpush.bf16.msra.mxu0 0
  %4672 = vmatpush.bf16.msra.mxu0 0
  %4673 = vmatpush.bf16.msra.mxu0 0
  %4674 = vmatpush.bf16.msra.mxu0 0
  %4675 = vmatpush.bf16.msra.mxu0 0
  %4676 = vmatpush.bf16.msra.mxu0 %v4646
  %4677 = vmatmul.bf16.gmra.mxu0 %v4654
  %v4678 = vpop.f32.mrf.mxu0
  %v4679 = vadd.f32 0.0, %v4678
  %v4680 = vpop.f32.mrf.mxu0
  %4681 = vdwg.mxu0
  %4682 = vmatpush.bf16.msra.mxu0 0
  %4683 = vmatpush.bf16.msra.mxu0 0
  %4684 = vmatpush.bf16.msra.mxu0 0
  %4685 = vmatpush.bf16.msra.mxu0 0
  %4686 = vmatpush.bf16.msra.mxu0 0
  %4687 = vmatpush.bf16.msra.mxu0 0
  %4688 = vmatpush.bf16.msra.mxu0 0
  %4689 = vmatpush.bf16.msra.mxu0 %v4647
  %4690 = vmatmul.bf16.gmra.mxu0 %v4654
  %v4691 = vpop.f32.mrf.mxu0
  %v4692 = vadd.f32 0.0, %v4691
  %v4693 = vpop.f32.mrf.mxu0
  %4694 = vdwg.mxu0
  %4695 = vmatpush.bf16.msra.mxu0 0
  %4696 = vmatpush.bf16.msra.mxu0 0
  %4697 = vmatpush.bf16.msra.mxu0 0
  %4698 = vmatpush.bf16.msra.mxu0 0
  %4699 = vmatpush.bf16.msra.mxu0 0
  %4700 = vmatpush.bf16.msra.mxu0 0
  %4701 = vmatpush.bf16.msra.mxu0 0
  %4702 = vmatpush.bf16.msra.mxu0 %v4648
  %4703 = vmatmul.bf16.gmra.mxu0 %v4654
  %v4704 = vpop.f32.mrf.mxu0
  %v4705 = vadd.f32 0.0, %v4704
  %v4706 = vpop.f32.mrf.mxu0
  %4707 = vdwg.mxu0
  %4708 = vmatpush.bf16.msra.mxu0 0
  %4709 = vmatpush.bf16.msra.mxu0 0
  %4710 = vmatpush.bf16.msra.mxu0 0
  %4711 = vmatpush.bf16.msra.mxu0 0
  %4712 = vmatpush.bf16.msra.mxu0 0
  %4713 = vmatpush.bf16.msra.mxu0 0
  %4714 = vmatpush.bf16.msra.mxu0 0
  %4715 = vmatpush.bf16.msra.mxu0 %v4649
  %4716 = vmatmul.bf16.gmra.mxu0 %v4654
  %v4717 = vpop.f32.mrf.mxu0
  %v4718 = vadd.f32 0.0, %v4717
  %v4719 = vpop.f32.mrf.mxu0
  %4720 = vdwg.mxu0
  %4721 = vmatpush.bf16.msra.mxu0 0
  %4722 = vmatpush.bf16.msra.mxu0 0
  %4723 = vmatpush.bf16.msra.mxu0 0
  %4724 = vmatpush.bf16.msra.mxu0 0
  %4725 = vmatpush.bf16.msra.mxu0 0
  %4726 = vmatpush.bf16.msra.mxu0 0
  %4727 = vmatpush.bf16.msra.mxu0 0
  %4728 = vmatpush.bf16.msra.mxu0 %v4650
  %4729 = vmatmul.bf16.gmra.mxu0 %v4654
  %v4730 = vpop.f32.mrf.mxu0
  %v4731 = vadd.f32 0.0, %v4730
  %v4732 = vpop.f32.mrf.mxu0
  %4733 = vdwg.mxu0
  %4734 = vmatpush.bf16.msra.mxu0 0
  %4735 = vmatpush.bf16.msra.mxu0 0
  %4736 = vmatpush.bf16.msra.mxu0 0
  %4737 = vmatpush.bf16.msra.mxu0 0
  %4738 = vmatpush.bf16.msra.mxu0 0
  %4739 = vmatpush.bf16.msra.mxu0 0
  %4740 = vmatpush.bf16.msra.mxu0 0
  %4741 = vmatpush.bf16.msra.mxu0 %v4651
  %4742 = vmatmul.bf16.gmra.mxu0 %v4654
  %v4743 = vpop.f32.mrf.mxu0
  %v4744 = vadd.f32 0.0, %v4743
  %v4745 = vpop.f32.mrf.mxu0
  %4746 = vdwg.mxu0
  %4747 = vmatpush.bf16.msra.mxu0 0
  %4748 = vmatpush.bf16.msra.mxu0 0
  %4749 = vmatpush.bf16.msra.mxu0 0
  %4750 = vmatpush.bf16.msra.mxu0 0
  %4751 = vmatpush.bf16.msra.mxu0 0
  %4752 = vmatpush.bf16.msra.mxu0 0
  %4753 = vmatpush.bf16.msra.mxu0 0
  %4754 = vmatpush.bf16.msra.mxu0 %v4652
  %4755 = vmatmul.bf16.gmra.mxu0 %v4654
  %v4756 = vpop.f32.mrf.mxu0
  %v4757 = vadd.f32 0.0, %v4756
  %v4758 = vpop.f32.mrf.mxu0
  %4759 = vdwg.mxu0
  %v4760 = vadd.f32 %v4572, %v4666
  %v4761 = vadd.f32 %v4573, %v4679
  %v4762 = vadd.f32 %v4574, %v4692
  %v4763 = vadd.f32 %v4575, %v4705
  %v4764 = vadd.f32 %v4576, %v4718
  %v4765 = vadd.f32 %v4577, %v4731
  %v4766 = vadd.f32 %v4578, %v4744
  %v4767 = vadd.f32 %v4579, %v4757
  %v4768 = vld [vmem:[#allocation2] sm:$0x1]
  %4770 = vset.pattern.permute.xlu0 0
  %4771 = vperm.xlu0 %4770, %v4768
  %v4772 = vpop.permute.xlu0 %4771
  %v4774 = vperm.slane %v4772, 0
  %v4775 = vadd.f32 %v4760, %v4774
  %v4776 = vadd.f32 %v4761, %v4774
  %v4777 = vadd.f32 %v4762, %v4774
  %v4778 = vadd.f32 %v4763, %v4774
  %v4779 = vadd.f32 %v4764, %v4774
  %v4780 = vadd.f32 %v4765, %v4774
  %v4781 = vadd.f32 %v4766, %v4774
  %v4782 = vadd.f32 %v4767, %v4774
  %v4783 = vxor.u32 %v4775, 2147483648
  %v4784 = vxor.u32 %v4776, 2147483648
  %v4785 = vxor.u32 %v4777, 2147483648
  %v4786 = vxor.u32 %v4778, 2147483648
  %v4787 = vxor.u32 %v4779, 2147483648
  %v4788 = vxor.u32 %v4780, 2147483648
  %v4789 = vxor.u32 %v4781, 2147483648
  %v4790 = vxor.u32 %v4782, 2147483648
  %v4791 = vmul.f32 %v4783, 1.442695
  %v4792 = vpow.pop %v4791
  %v4793 = vmul.f32 %v4784, 1.442695
  %v4794 = vpow.pop %v4793
  %v4795 = vmul.f32 %v4785, 1.442695
  %v4796 = vpow.pop %v4795
  %v4797 = vmul.f32 %v4786, 1.442695
  %v4798 = vpow.pop %v4797
  %v4799 = vmul.f32 %v4787, 1.442695
  %v4800 = vpow.pop %v4799
  %v4801 = vmul.f32 %v4788, 1.442695
  %v4802 = vpow.pop %v4801
  %v4803 = vmul.f32 %v4789, 1.442695
  %v4804 = vpow.pop %v4803
  %v4805 = vmul.f32 %v4790, 1.442695
  %v4806 = vpow.pop %v4805
  %v4807 = vadd.f32 %v4792, 1.0
  %v4808 = vadd.f32 %v4794, 1.0
  %v4809 = vadd.f32 %v4796, 1.0
  %v4810 = vadd.f32 %v4798, 1.0
  %v4811 = vadd.f32 %v4800, 1.0
  %v4812 = vadd.f32 %v4802, 1.0
  %v4813 = vadd.f32 %v4804, 1.0
  %v4814 = vadd.f32 %v4806, 1.0
  %v4815 = vrcp.pop %v4807
  %v4816 = vmul.f32 %v4807, %v4815
  %v4817 = vsub.f32 1.0, %v4816
  %v4818 = vmul.f32 %v4815, %v4817
  %v4819 = vadd.f32 %v4815, %v4818
  %vm4820 = vweird.f32 %v4807
  %vm4821 = vweird.f32 %v4815
  %vm4822 = vmor %vm4820, %vm4821
  %v4823 = vsel %vm4822, %v4815, %v4819
  %v4824 = vand.u32 2147483647, %v4807
  %vm4825 = vcmp.eq.f32.partialorder %v4824, 8.507059e+37
  %v4826 = vand.u32 %v4807, 2147483648
  %v4827 = vor.u32 1.1754944e-38, %v4826
  %v4828 = vsel %vm4825, %v4827, %v4823
  %v4829 = vmul.f32 1.0, %v4828
  %v4830 = vrcp.pop %v4808
  %v4831 = vmul.f32 %v4808, %v4830
  %v4832 = vsub.f32 1.0, %v4831
  %v4833 = vmul.f32 %v4830, %v4832
  %v4834 = vadd.f32 %v4830, %v4833
  %vm4835 = vweird.f32 %v4808
  %vm4836 = vweird.f32 %v4830
  %vm4837 = vmor %vm4835, %vm4836
  %v4838 = vsel %vm4837, %v4830, %v4834
  %v4839 = vand.u32 2147483647, %v4808
  %vm4840 = vcmp.eq.f32.partialorder %v4839, 8.507059e+37
  %v4841 = vand.u32 %v4808, 2147483648
  %v4842 = vor.u32 1.1754944e-38, %v4841
  %v4843 = vsel %vm4840, %v4842, %v4838
  %v4844 = vmul.f32 1.0, %v4843
  %v4845 = vrcp.pop %v4809
  %v4846 = vmul.f32 %v4809, %v4845
  %v4847 = vsub.f32 1.0, %v4846
  %v4848 = vmul.f32 %v4845, %v4847
  %v4849 = vadd.f32 %v4845, %v4848
  %vm4850 = vweird.f32 %v4809
  %vm4851 = vweird.f32 %v4845
  %vm4852 = vmor %vm4850, %vm4851
  %v4853 = vsel %vm4852, %v4845, %v4849
  %v4854 = vand.u32 2147483647, %v4809
  %vm4855 = vcmp.eq.f32.partialorder %v4854, 8.507059e+37
  %v4856 = vand.u32 %v4809, 2147483648
  %v4857 = vor.u32 1.1754944e-38, %v4856
  %v4858 = vsel %vm4855, %v4857, %v4853
  %v4859 = vmul.f32 1.0, %v4858
  %v4860 = vrcp.pop %v4810
  %v4861 = vmul.f32 %v4810, %v4860
  %v4862 = vsub.f32 1.0, %v4861
  %v4863 = vmul.f32 %v4860, %v4862
  %v4864 = vadd.f32 %v4860, %v4863
  %vm4865 = vweird.f32 %v4810
  %vm4866 = vweird.f32 %v4860
  %vm4867 = vmor %vm4865, %vm4866
  %v4868 = vsel %vm4867, %v4860, %v4864
  %v4869 = vand.u32 2147483647, %v4810
  %vm4870 = vcmp.eq.f32.partialorder %v4869, 8.507059e+37
  %v4871 = vand.u32 %v4810, 2147483648
  %v4872 = vor.u32 1.1754944e-38, %v4871
  %v4873 = vsel %vm4870, %v4872, %v4868
  %v4874 = vmul.f32 1.0, %v4873
  %v4875 = vrcp.pop %v4811
  %v4876 = vmul.f32 %v4811, %v4875
  %v4877 = vsub.f32 1.0, %v4876
  %v4878 = vmul.f32 %v4875, %v4877
  %v4879 = vadd.f32 %v4875, %v4878
  %vm4880 = vweird.f32 %v4811
  %vm4881 = vweird.f32 %v4875
  %vm4882 = vmor %vm4880, %vm4881
  %v4883 = vsel %vm4882, %v4875, %v4879
  %v4884 = vand.u32 2147483647, %v4811
  %vm4885 = vcmp.eq.f32.partialorder %v4884, 8.507059e+37
  %v4886 = vand.u32 %v4811, 2147483648
  %v4887 = vor.u32 1.1754944e-38, %v4886
  %v4888 = vsel %vm4885, %v4887, %v4883
  %v4889 = vmul.f32 1.0, %v4888
  %v4890 = vrcp.pop %v4812
  %v4891 = vmul.f32 %v4812, %v4890
  %v4892 = vsub.f32 1.0, %v4891
  %v4893 = vmul.f32 %v4890, %v4892
  %v4894 = vadd.f32 %v4890, %v4893
  %vm4895 = vweird.f32 %v4812
  %vm4896 = vweird.f32 %v4890
  %vm4897 = vmor %vm4895, %vm4896
  %v4898 = vsel %vm4897, %v4890, %v4894
  %v4899 = vand.u32 2147483647, %v4812
  %vm4900 = vcmp.eq.f32.partialorder %v4899, 8.507059e+37
  %v4901 = vand.u32 %v4812, 2147483648
  %v4902 = vor.u32 1.1754944e-38, %v4901
  %v4903 = vsel %vm4900, %v4902, %v4898
  %v4904 = vmul.f32 1.0, %v4903
  %v4905 = vrcp.pop %v4813
  %v4906 = vmul.f32 %v4813, %v4905
  %v4907 = vsub.f32 1.0, %v4906
  %v4908 = vmul.f32 %v4905, %v4907
  %v4909 = vadd.f32 %v4905, %v4908
  %vm4910 = vweird.f32 %v4813
  %vm4911 = vweird.f32 %v4905
  %vm4912 = vmor %vm4910, %vm4911
  %v4913 = vsel %vm4912, %v4905, %v4909
  %v4914 = vand.u32 2147483647, %v4813
  %vm4915 = vcmp.eq.f32.partialorder %v4914, 8.507059e+37
  %v4916 = vand.u32 %v4813, 2147483648
  %v4917 = vor.u32 1.1754944e-38, %v4916
  %v4918 = vsel %vm4915, %v4917, %v4913
  %v4919 = vmul.f32 1.0, %v4918
  %v4920 = vrcp.pop %v4814
  %v4921 = vmul.f32 %v4814, %v4920
  %v4922 = vsub.f32 1.0, %v4921
  %v4923 = vmul.f32 %v4920, %v4922
  %v4924 = vadd.f32 %v4920, %v4923
  %vm4925 = vweird.f32 %v4814
  %vm4926 = vweird.f32 %v4920
  %vm4927 = vmor %vm4925, %vm4926
  %v4928 = vsel %vm4927, %v4920, %v4924
  %v4929 = vand.u32 2147483647, %v4814
  %vm4930 = vcmp.eq.f32.partialorder %v4929, 8.507059e+37
  %v4931 = vand.u32 %v4814, 2147483648
  %v4932 = vor.u32 1.1754944e-38, %v4931
  %v4933 = vsel %vm4930, %v4932, %v4928
  %v4934 = vmul.f32 1.0, %v4933
  %v4939 = vrot.slane %v4829, 7
  %v4940 = vrot.slane %v4844, 7
  %v4941 = vrot.slane %v4859, 7
  %v4942 = vrot.slane %v4874, 7
  %v4947 = vsel %vm936, %v58, %v4939
  %v4948 = vsel %vm936, %v59, %v4940
  %v4949 = vsel %vm936, %v60, %v4941
  %v4950 = vsel %vm936, %v61, %v4942
  %4951 = vrot.lane.b32.xlu0 %v4947, 17
  %v4952 = vpop.permute.xlu0 %4951
  %4953 = vrot.lane.b32.xlu0 %v4948, 17
  %v4954 = vpop.permute.xlu0 %4953
  %4955 = vrot.lane.b32.xlu0 %v4949, 17
  %v4956 = vpop.permute.xlu0 %4955
  %4957 = vrot.lane.b32.xlu0 %v4950, 17
  %v4958 = vpop.permute.xlu0 %4957
  %v4959 = vsel %vm88, %v4956, %v4958
  %v4960 = vsel %vm88, %v4954, %v4956
  %v4961 = vsel %vm88, %v4952, %v4954
  %v4962 = vsel %vm88, %v4958, %v4952
  %v4963 = vld [vmem:[%s1] ss:$8 sm:$0xf]
  %v4965 = vperm.slane %v4963, 0
  %v4966 = vperm.slane %v4963, 1
  %v4967 = vperm.slane %v4963, 2
  %v4968 = vperm.slane %v4963, 3
  %v4973 = vmul.f32 %v4962, %v4965
  %v4974 = vmul.f32 %v4961, %v4966
  %v4975 = vmul.f32 %v4960, %v4967
  %v4976 = vmul.f32 %v4959, %v4968
  %v4977 = vpack.c.bf16 %v4974, %v4973
  %v4978 = vpack.c.bf16 %v4976, %v4975
  %4979 = vrot.lane.b32.xlu0 %v4947, 16
  %v4980 = vpop.permute.xlu0 %4979
  %4981 = vrot.lane.b32.xlu0 %v4948, 16
  %v4982 = vpop.permute.xlu0 %4981
  %4983 = vrot.lane.b32.xlu0 %v4949, 16
  %v4984 = vpop.permute.xlu0 %4983
  %4985 = vrot.lane.b32.xlu0 %v4950, 16
  %v4986 = vpop.permute.xlu0 %4985
  %v4987 = vsel %vm145, %v4984, %v4986
  %v4988 = vsel %vm145, %v4982, %v4984
  %v4989 = vsel %vm145, %v4980, %v4982
  %v4990 = vsel %vm145, %v4986, %v4980
  %v4991 = vld [vmem:[%s154] ss:$8 sm:$0xf]
  %v4993 = vperm.slane %v4991, 0
  %v4994 = vperm.slane %v4991, 1
  %v4995 = vperm.slane %v4991, 2
  %v4996 = vperm.slane %v4991, 3
  %v5001 = vmul.f32 %v4990, %v4993
  %v5002 = vmul.f32 %v4989, %v4994
  %v5003 = vmul.f32 %v4988, %v4995
  %v5004 = vmul.f32 %v4987, %v4996
  %v5005 = vpack.c.bf16 %v5002, %v5001
  %v5006 = vpack.c.bf16 %v5004, %v5003
  %5007 = vrot.lane.b32.xlu0 %v4947, 15
  %v5008 = vpop.permute.xlu0 %5007
  %5009 = vrot.lane.b32.xlu0 %v4948, 15
  %v5010 = vpop.permute.xlu0 %5009
  %5011 = vrot.lane.b32.xlu0 %v4949, 15
  %v5012 = vpop.permute.xlu0 %5011
  %5013 = vrot.lane.b32.xlu0 %v4950, 15
  %v5014 = vpop.permute.xlu0 %5013
  %v5015 = vsel %vm203, %v5012, %v5014
  %v5016 = vsel %vm203, %v5010, %v5012
  %v5017 = vsel %vm203, %v5008, %v5010
  %v5018 = vsel %vm203, %v5014, %v5008
  %v5019 = vld [vmem:[%s212] ss:$8 sm:$0xf]
  %v5021 = vperm.slane %v5019, 0
  %v5022 = vperm.slane %v5019, 1
  %v5023 = vperm.slane %v5019, 2
  %v5024 = vperm.slane %v5019, 3
  %v5029 = vmul.f32 %v5018, %v5021
  %v5030 = vmul.f32 %v5017, %v5022
  %v5031 = vmul.f32 %v5016, %v5023
  %v5032 = vmul.f32 %v5015, %v5024
  %v5033 = vpack.c.bf16 %v5030, %v5029
  %v5034 = vpack.c.bf16 %v5032, %v5031
  %5035 = vrot.lane.b32.xlu0 %v4947, 1
  %v5036 = vpop.permute.xlu0 %5035
  %5037 = vrot.lane.b32.xlu0 %v4948, 1
  %v5038 = vpop.permute.xlu0 %5037
  %5039 = vrot.lane.b32.xlu0 %v4949, 1
  %v5040 = vpop.permute.xlu0 %5039
  %5041 = vrot.lane.b32.xlu0 %v4950, 1
  %v5042 = vpop.permute.xlu0 %5041
  %v5043 = vsel %vm261, %v5040, %v5042
  %v5044 = vsel %vm261, %v5038, %v5040
  %v5045 = vsel %vm261, %v5036, %v5038
  %v5046 = vsel %vm261, %v5042, %v5036
  %v5047 = vld [vmem:[%s270] ss:$8 sm:$0xf]
  %v5049 = vperm.slane %v5047, 0
  %v5050 = vperm.slane %v5047, 1
  %v5051 = vperm.slane %v5047, 2
  %v5052 = vperm.slane %v5047, 3
  %v5057 = vmul.f32 %v5046, %v5049
  %v5058 = vmul.f32 %v5045, %v5050
  %v5059 = vmul.f32 %v5044, %v5051
  %v5060 = vmul.f32 %v5043, %v5052
  %v5061 = vpack.c.bf16 %v5058, %v5057
  %v5062 = vpack.c.bf16 %v5060, %v5059
  %v5063 = vld [vmem:[%s303] ss:$8 sm:$0xf]
  %v5065 = vperm.slane %v5063, 0
  %v5066 = vperm.slane %v5063, 1
  %v5067 = vperm.slane %v5063, 2
  %v5068 = vperm.slane %v5063, 3
  %v5073 = vmul.f32 %v4947, %v5065
  %v5074 = vmul.f32 %v4948, %v5066
  %v5075 = vmul.f32 %v4949, %v5067
  %v5076 = vmul.f32 %v4950, %v5068
  %v5077 = vpack.c.bf16 %v5074, %v5073
  %v5078 = vpack.c.bf16 %v5076, %v5075
  %5079 = vrot.lane.b32.xlu0 %v4947, 127
  %v5080 = vpop.permute.xlu0 %5079
  %5081 = vrot.lane.b32.xlu0 %v4948, 127
  %v5082 = vpop.permute.xlu0 %5081
  %5083 = vrot.lane.b32.xlu0 %v4949, 127
  %v5084 = vpop.permute.xlu0 %5083
  %5085 = vrot.lane.b32.xlu0 %v4950, 127
  %v5086 = vpop.permute.xlu0 %5085
  %v5087 = vsel %vm345, %v5084, %v5086
  %v5088 = vsel %vm345, %v5082, %v5084
  %v5089 = vsel %vm345, %v5080, %v5082
  %v5090 = vsel %vm345, %v5086, %v5080
  %v5091 = vld [vmem:[%s354] ss:$8 sm:$0xf]
  %v5093 = vperm.slane %v5091, 0
  %v5094 = vperm.slane %v5091, 1
  %v5095 = vperm.slane %v5091, 2
  %v5096 = vperm.slane %v5091, 3
  %v5101 = vmul.f32 %v5089, %v5093
  %v5102 = vmul.f32 %v5088, %v5094
  %v5103 = vmul.f32 %v5087, %v5095
  %v5104 = vmul.f32 %v5090, %v5096
  %v5105 = vpack.c.bf16 %v5102, %v5101
  %v5106 = vpack.c.bf16 %v5104, %v5103
  %5107 = vrot.lane.b32.xlu0 %v4947, 113
  %v5108 = vpop.permute.xlu0 %5107
  %5109 = vrot.lane.b32.xlu0 %v4948, 113
  %v5110 = vpop.permute.xlu0 %5109
  %5111 = vrot.lane.b32.xlu0 %v4949, 113
  %v5112 = vpop.permute.xlu0 %5111
  %5113 = vrot.lane.b32.xlu0 %v4950, 113
  %v5114 = vpop.permute.xlu0 %5113
  %v5115 = vsel %vm403, %v5112, %v5114
  %v5116 = vsel %vm403, %v5110, %v5112
  %v5117 = vsel %vm403, %v5108, %v5110
  %v5118 = vsel %vm403, %v5114, %v5108
  %v5119 = vld [vmem:[%s412] ss:$8 sm:$0xf]
  %v5121 = vperm.slane %v5119, 0
  %v5122 = vperm.slane %v5119, 1
  %v5123 = vperm.slane %v5119, 2
  %v5124 = vperm.slane %v5119, 3
  %v5129 = vmul.f32 %v5117, %v5121
  %v5130 = vmul.f32 %v5116, %v5122
  %v5131 = vmul.f32 %v5115, %v5123
  %v5132 = vmul.f32 %v5118, %v5124
  %v5133 = vpack.c.bf16 %v5130, %v5129
  %v5134 = vpack.c.bf16 %v5132, %v5131
  %5135 = vrot.lane.b32.xlu0 %v4947, 112
  %v5136 = vpop.permute.xlu0 %5135
  %5137 = vrot.lane.b32.xlu0 %v4948, 112
  %v5138 = vpop.permute.xlu0 %5137
  %5139 = vrot.lane.b32.xlu0 %v4949, 112
  %v5140 = vpop.permute.xlu0 %5139
  %5141 = vrot.lane.b32.xlu0 %v4950, 112
  %v5142 = vpop.permute.xlu0 %5141
  %v5143 = vsel %vm461, %v5140, %v5142
  %v5144 = vsel %vm461, %v5138, %v5140
  %v5145 = vsel %vm461, %v5136, %v5138
  %v5146 = vsel %vm461, %v5142, %v5136
  %v5147 = vld [vmem:[%s470] ss:$8 sm:$0xf]
  %v5149 = vperm.slane %v5147, 0
  %v5150 = vperm.slane %v5147, 1
  %v5151 = vperm.slane %v5147, 2
  %v5152 = vperm.slane %v5147, 3
  %v5157 = vmul.f32 %v5145, %v5149
  %v5158 = vmul.f32 %v5144, %v5150
  %v5159 = vmul.f32 %v5143, %v5151
  %v5160 = vmul.f32 %v5146, %v5152
  %v5161 = vpack.c.bf16 %v5158, %v5157
  %v5162 = vpack.c.bf16 %v5160, %v5159
  %5163 = vrot.lane.b32.xlu0 %v4947, 111
  %v5164 = vpop.permute.xlu0 %5163
  %5165 = vrot.lane.b32.xlu0 %v4948, 111
  %v5166 = vpop.permute.xlu0 %5165
  %5167 = vrot.lane.b32.xlu0 %v4949, 111
  %v5168 = vpop.permute.xlu0 %5167
  %5169 = vrot.lane.b32.xlu0 %v4950, 111
  %v5170 = vpop.permute.xlu0 %5169
  %v5171 = vsel %vm519, %v5168, %v5170
  %v5172 = vsel %vm519, %v5166, %v5168
  %v5173 = vsel %vm519, %v5164, %v5166
  %v5174 = vsel %vm519, %v5170, %v5164
  %v5175 = vld [vmem:[%s528] ss:$8 sm:$0xf]
  %v5177 = vperm.slane %v5175, 0
  %v5178 = vperm.slane %v5175, 1
  %v5179 = vperm.slane %v5175, 2
  %v5180 = vperm.slane %v5175, 3
  %v5185 = vmul.f32 %v5173, %v5177
  %v5186 = vmul.f32 %v5172, %v5178
  %v5187 = vmul.f32 %v5171, %v5179
  %v5188 = vmul.f32 %v5174, %v5180
  %v5189 = vpack.c.bf16 %v5186, %v5185
  %v5190 = vpack.c.bf16 %v5188, %v5187
  %v5193 = vunpack.c.l.b16 %v4977
  %v5194 = vunpack.c.h.b16 %v4977
  %v5195 = vunpack.c.l.b16 %v4978
  %v5196 = vunpack.c.h.b16 %v4978
  %v5197 = vpack.c.b16 %v5193, %v5193
  %v5198 = vpack.c.b16 %v5194, %v5194
  %v5199 = vpack.c.b16 %v5195, %v5195
  %v5200 = vpack.c.b16 %v5196, %v5196
  %v5203 = vunpack.c.l.b16 %v5005
  %v5204 = vunpack.c.h.b16 %v5005
  %v5205 = vunpack.c.l.b16 %v5006
  %v5206 = vunpack.c.h.b16 %v5006
  %v5207 = vpack.c.b16 %v5203, %v5203
  %v5208 = vpack.c.b16 %v5204, %v5204
  %v5209 = vpack.c.b16 %v5205, %v5205
  %v5210 = vpack.c.b16 %v5206, %v5206
  %v5211 = vrot.slane %v5207, 7
  %v5212 = vrot.slane %v5208, 7
  %v5213 = vrot.slane %v5209, 7
  %v5214 = vrot.slane %v5210, 7
  %v5217 = vunpack.c.l.b16 %v5033
  %v5218 = vunpack.c.h.b16 %v5033
  %v5219 = vunpack.c.l.b16 %v5034
  %v5220 = vunpack.c.h.b16 %v5034
  %v5221 = vpack.c.b16 %v5217, %v5217
  %v5222 = vpack.c.b16 %v5218, %v5218
  %v5223 = vpack.c.b16 %v5219, %v5219
  %v5224 = vpack.c.b16 %v5220, %v5220
  %v5225 = vrot.slane %v5221, 6
  %v5226 = vrot.slane %v5222, 6
  %v5227 = vrot.slane %v5223, 6
  %v5228 = vrot.slane %v5224, 6
  %v5231 = vunpack.c.l.b16 %v5061
  %v5232 = vunpack.c.h.b16 %v5061
  %v5233 = vunpack.c.l.b16 %v5062
  %v5234 = vunpack.c.h.b16 %v5062
  %v5235 = vpack.c.b16 %v5231, %v5231
  %v5236 = vpack.c.b16 %v5232, %v5232
  %v5237 = vpack.c.b16 %v5233, %v5233
  %v5238 = vpack.c.b16 %v5234, %v5234
  %v5239 = vrot.slane %v5235, 5
  %v5240 = vrot.slane %v5236, 5
  %v5241 = vrot.slane %v5237, 5
  %v5242 = vrot.slane %v5238, 5
  %v5245 = vunpack.c.l.b16 %v5077
  %v5246 = vunpack.c.h.b16 %v5077
  %v5247 = vunpack.c.l.b16 %v5078
  %v5248 = vunpack.c.h.b16 %v5078
  %v5249 = vpack.c.b16 %v5245, %v5245
  %v5250 = vpack.c.b16 %v5246, %v5246
  %v5251 = vpack.c.b16 %v5247, %v5247
  %v5252 = vpack.c.b16 %v5248, %v5248
  %v5255 = vunpack.c.l.b16 %v5105
  %v5256 = vunpack.c.h.b16 %v5105
  %v5257 = vunpack.c.l.b16 %v5106
  %v5258 = vunpack.c.h.b16 %v5106
  %v5259 = vpack.c.b16 %v5255, %v5255
  %v5260 = vpack.c.b16 %v5256, %v5256
  %v5261 = vpack.c.b16 %v5257, %v5257
  %v5262 = vpack.c.b16 %v5258, %v5258
  %v5263 = vrot.slane %v5259, 3
  %v5264 = vrot.slane %v5260, 3
  %v5265 = vrot.slane %v5261, 3
  %v5266 = vrot.slane %v5262, 3
  %v5269 = vunpack.c.l.b16 %v5133
  %v5270 = vunpack.c.h.b16 %v5133
  %v5271 = vunpack.c.l.b16 %v5134
  %v5272 = vunpack.c.h.b16 %v5134
  %v5273 = vpack.c.b16 %v5269, %v5269
  %v5274 = vpack.c.b16 %v5270, %v5270
  %v5275 = vpack.c.b16 %v5271, %v5271
  %v5276 = vpack.c.b16 %v5272, %v5272
  %v5277 = vrot.slane %v5273, 2
  %v5278 = vrot.slane %v5274, 2
  %v5279 = vrot.slane %v5275, 2
  %v5280 = vrot.slane %v5276, 2
  %v5283 = vunpack.c.l.b16 %v5161
  %v5284 = vunpack.c.h.b16 %v5161
  %v5285 = vunpack.c.l.b16 %v5162
  %v5286 = vunpack.c.h.b16 %v5162
  %v5287 = vpack.c.b16 %v5283, %v5283
  %v5288 = vpack.c.b16 %v5284, %v5284
  %v5289 = vpack.c.b16 %v5285, %v5285
  %v5290 = vpack.c.b16 %v5286, %v5286
  %v5291 = vrot.slane %v5287, 1
  %v5292 = vrot.slane %v5288, 1
  %v5293 = vrot.slane %v5289, 1
  %v5294 = vrot.slane %v5290, 1
  %v5297 = vunpack.c.l.b16 %v5189
  %v5298 = vunpack.c.h.b16 %v5189
  %v5299 = vunpack.c.l.b16 %v5190
  %v5300 = vunpack.c.h.b16 %v5190
  %v5301 = vpack.c.b16 %v5297, %v5297
  %v5302 = vpack.c.b16 %v5298, %v5298
  %v5303 = vpack.c.b16 %v5299, %v5299
  %v5304 = vpack.c.b16 %v5300, %v5300
  %v5307 = vsel %vm936, %v5197, %v5211
  %v5310 = vsel %vm936, %v5198, %v5212
  %v5313 = vsel %vm936, %v5199, %v5213
  %v5316 = vsel %vm936, %v5200, %v5214
  %v5318 = vsel %vm980, %v5307, %v5225
  %v5320 = vsel %vm980, %v5310, %v5226
  %v5322 = vsel %vm980, %v5313, %v5227
  %v5324 = vsel %vm980, %v5316, %v5228
  %v5326 = vsel %vm1024, %v5318, %v5239
  %v5328 = vsel %vm1024, %v5320, %v5240
  %v5330 = vsel %vm1024, %v5322, %v5241
  %v5332 = vsel %vm1024, %v5324, %v5242
  %v5334 = vsel %vm1068, %v5326, %v5249
  %v5336 = vsel %vm1068, %v5328, %v5250
  %v5338 = vsel %vm1068, %v5330, %v5251
  %v5340 = vsel %vm1068, %v5332, %v5252
  %v5342 = vsel %vm1116, %v5334, %v5263
  %v5344 = vsel %vm1116, %v5336, %v5264
  %v5346 = vsel %vm1116, %v5338, %v5265
  %v5348 = vsel %vm1116, %v5340, %v5266
  %vm5349 = vcmask 1045504
  %v5351 = vsel %vm5349, %v5342, %v5277
  %v5353 = vsel %vm5349, %v5344, %v5278
  %v5355 = vsel %vm5349, %v5346, %v5279
  %v5357 = vsel %vm5349, %v5348, %v5280
  %vm5358 = vcmask 1046528
  %v5360 = vsel %vm5358, %v5351, %v5291
  %v5363 = vsel %vm5358, %v5353, %v5292
  %v5366 = vsel %vm5358, %v5355, %v5293
  %v5369 = vsel %vm5358, %v5357, %v5294
  %v5371 = vld [vmem:[%s8] sm:$0xf]
  %v5372 = vld [vmem:[%s8 + $0x4] sm:$0xf]
  %v5373 = vld [vmem:[%s9] sm:$0xff]
  %v5374 = vld [vmem:[%s9 + $0x8] sm:$0xff]
  %5376 = vset.pattern.permute.xlu0 0
  %5377 = vperm.xlu0 %5376, %v5373
  %v5378 = vpop.permute.xlu0 %5377
  %5381 = vset.pattern.permute.xlu0 0
  %5382 = vperm.xlu0 %5381, %v5374
  %v5383 = vpop.permute.xlu0 %5382
  %v5387 = vunpack.c.l.b16 %v5371
  %v5388 = vunpack.c.l.b16 %v5372
  %v5389 = vpack.c.b16 %v5388, %v5387
  %vm5390 = vcmask 146432
  %v5392 = vsel %vm5390, %v5389, 0
  %v5395 = vsel %vm936, %v5301, 0
  %v5398 = vsel %vm936, %v5302, 0
  %v5401 = vsel %vm936, %v5303, 0
  %v5404 = vsel %vm936, %v5304, 0
  %5406 = vmatpush.bf16.msra.mxu0 0
  %5407 = vmatpush.bf16.msra.mxu0 0
  %5408 = vmatpush.bf16.msra.mxu0 0
  %5409 = vmatpush.bf16.msra.mxu0 0
  %5410 = vmatpush.bf16.msra.mxu0 0
  %5411 = vmatpush.bf16.msra.mxu0 0
  %5412 = vmatpush.bf16.msra.mxu0 %v5395
  %5413 = vmatpush.bf16.msra.mxu0 %v5360
  %5414 = vmatmul.bf16.gmra.mxu0 %v5392
  %v5415 = vpop.f32.mrf.mxu0
  %v5416 = vadd.f32 %v5378, %v5415
  %v5417 = vpop.f32.mrf.mxu0
  %v5418 = vadd.f32 %v5383, %v5417
  %5419 = vdwg.mxu0
  %5420 = vmatpush.bf16.msra.mxu0 0
  %5421 = vmatpush.bf16.msra.mxu0 0
  %5422 = vmatpush.bf16.msra.mxu0 0
  %5423 = vmatpush.bf16.msra.mxu0 0
  %5424 = vmatpush.bf16.msra.mxu0 0
  %5425 = vmatpush.bf16.msra.mxu0 0
  %5426 = vmatpush.bf16.msra.mxu0 %v5398
  %5427 = vmatpush.bf16.msra.mxu0 %v5363
  %5428 = vmatmul.bf16.gmra.mxu0 %v5392
  %v5429 = vpop.f32.mrf.mxu0
  %v5430 = vadd.f32 %v5378, %v5429
  %v5431 = vpop.f32.mrf.mxu0
  %v5432 = vadd.f32 %v5383, %v5431
  %5433 = vdwg.mxu0
  %5434 = vmatpush.bf16.msra.mxu0 0
  %5435 = vmatpush.bf16.msra.mxu0 0
  %5436 = vmatpush.bf16.msra.mxu0 0
  %5437 = vmatpush.bf16.msra.mxu0 0
  %5438 = vmatpush.bf16.msra.mxu0 0
  %5439 = vmatpush.bf16.msra.mxu0 0
  %5440 = vmatpush.bf16.msra.mxu0 %v5401
  %5441 = vmatpush.bf16.msra.mxu0 %v5366
  %5442 = vmatmul.bf16.gmra.mxu0 %v5392
  %v5443 = vpop.f32.mrf.mxu0
  %v5444 = vadd.f32 %v5378, %v5443
  %v5445 = vpop.f32.mrf.mxu0
  %v5446 = vadd.f32 %v5383, %v5445
  %5447 = vdwg.mxu0
  %5448 = vmatpush.bf16.msra.mxu0 0
  %5449 = vmatpush.bf16.msra.mxu0 0
  %5450 = vmatpush.bf16.msra.mxu0 0
  %5451 = vmatpush.bf16.msra.mxu0 0
  %5452 = vmatpush.bf16.msra.mxu0 0
  %5453 = vmatpush.bf16.msra.mxu0 0
  %5454 = vmatpush.bf16.msra.mxu0 %v5404
  %5455 = vmatpush.bf16.msra.mxu0 %v5369
  %5456 = vmatmul.bf16.gmra.mxu0 %v5392
  %v5457 = vpop.f32.mrf.mxu0
  %v5458 = vadd.f32 %v5378, %v5457
  %v5459 = vpop.f32.mrf.mxu0
  %v5460 = vadd.f32 %v5383, %v5459
  %5461 = vdwg.mxu0
  %v5462 = vmax.f32 %v5416, 0.0
  %v5463 = vmax.f32 %v5430, 0.0
  %v5464 = vmax.f32 %v5444, 0.0
  %v5465 = vmax.f32 %v5458, 0.0
  %v5466 = vmax.f32 %v5418, 0.0
  %v5467 = vmax.f32 %v5432, 0.0
  %v5468 = vmax.f32 %v5446, 0.0
  %v5469 = vmax.f32 %v5460, 0.0
  %v5470 = vld [vmem:[%s10] sm:$0xf]
  %v5471 = vld [vmem:[%s10 + $0x8] sm:$0xf]
  %5472 = vrot.lane.b32.xlu0 %v5462, 17
  %v5473 = vpop.permute.xlu0 %5472
  %5474 = vrot.lane.b32.xlu0 %v5466, 17
  %v5475 = vpop.permute.xlu0 %5474
  %5476 = vrot.lane.b32.xlu0 %v5463, 17
  %v5477 = vpop.permute.xlu0 %5476
  %5478 = vrot.lane.b32.xlu0 %v5467, 17
  %v5479 = vpop.permute.xlu0 %5478
  %5480 = vrot.lane.b32.xlu0 %v5464, 17
  %v5481 = vpop.permute.xlu0 %5480
  %5482 = vrot.lane.b32.xlu0 %v5468, 17
  %v5483 = vpop.permute.xlu0 %5482
  %5484 = vrot.lane.b32.xlu0 %v5465, 17
  %v5485 = vpop.permute.xlu0 %5484
  %5486 = vrot.lane.b32.xlu0 %v5469, 17
  %v5487 = vpop.permute.xlu0 %5486
  %v5488 = vsel %vm88, %v5481, %v5485
  %v5489 = vsel %vm88, %v5483, %v5487
  %v5490 = vsel %vm88, %v5477, %v5481
  %v5491 = vsel %vm88, %v5479, %v5483
  %v5492 = vsel %vm88, %v5473, %v5477
  %v5493 = vsel %vm88, %v5475, %v5479
  %v5494 = vsel %vm88, %v5485, %v5473
  %v5495 = vsel %vm88, %v5487, %v5475
  %v5496 = vmul.f32 %v5494, %v4965
  %v5497 = vmul.f32 %v5492, %v4966
  %v5498 = vmul.f32 %v5490, %v4967
  %v5499 = vmul.f32 %v5488, %v4968
  %v5500 = vmul.f32 %v5495, %v4965
  %v5501 = vmul.f32 %v5493, %v4966
  %v5502 = vmul.f32 %v5491, %v4967
  %v5503 = vmul.f32 %v5489, %v4968
  %v5504 = vpack.c.bf16 %v5500, %v5496
  %v5505 = vpack.c.bf16 %v5501, %v5497
  %v5506 = vpack.c.bf16 %v5502, %v5498
  %v5507 = vpack.c.bf16 %v5503, %v5499
  %5508 = vrot.lane.b32.xlu0 %v5462, 16
  %v5509 = vpop.permute.xlu0 %5508
  %5510 = vrot.lane.b32.xlu0 %v5466, 16
  %v5511 = vpop.permute.xlu0 %5510
  %5512 = vrot.lane.b32.xlu0 %v5463, 16
  %v5513 = vpop.permute.xlu0 %5512
  %5514 = vrot.lane.b32.xlu0 %v5467, 16
  %v5515 = vpop.permute.xlu0 %5514
  %5516 = vrot.lane.b32.xlu0 %v5464, 16
  %v5517 = vpop.permute.xlu0 %5516
  %5518 = vrot.lane.b32.xlu0 %v5468, 16
  %v5519 = vpop.permute.xlu0 %5518
  %5520 = vrot.lane.b32.xlu0 %v5465, 16
  %v5521 = vpop.permute.xlu0 %5520
  %5522 = vrot.lane.b32.xlu0 %v5469, 16
  %v5523 = vpop.permute.xlu0 %5522
  %v5524 = vsel %vm145, %v5517, %v5521
  %v5525 = vsel %vm145, %v5519, %v5523
  %v5526 = vsel %vm145, %v5513, %v5517
  %v5527 = vsel %vm145, %v5515, %v5519
  %v5528 = vsel %vm145, %v5509, %v5513
  %v5529 = vsel %vm145, %v5511, %v5515
  %v5530 = vsel %vm145, %v5521, %v5509
  %v5531 = vsel %vm145, %v5523, %v5511
  %v5532 = vmul.f32 %v5530, %v4993
  %v5533 = vmul.f32 %v5528, %v4994
  %v5534 = vmul.f32 %v5526, %v4995
  %v5535 = vmul.f32 %v5524, %v4996
  %v5536 = vmul.f32 %v5531, %v4993
  %v5537 = vmul.f32 %v5529, %v4994
  %v5538 = vmul.f32 %v5527, %v4995
  %v5539 = vmul.f32 %v5525, %v4996
  %v5540 = vpack.c.bf16 %v5536, %v5532
  %v5541 = vpack.c.bf16 %v5537, %v5533
  %v5542 = vpack.c.bf16 %v5538, %v5534
  %v5543 = vpack.c.bf16 %v5539, %v5535
  %v5546 = vunpack.c.l.b16 %v5470
  %v5547 = vunpack.c.l.b16 %v5471
  %v5548 = vpack.c.b16 %v5547, %v5546
  %5549 = vrot.lane.b32.xlu0 %v5548, 112
  %v5550 = vpop.permute.xlu0 %5549
  %v5552 = vsel %vm1416, %v5550, 0
  %5554 = vmatpush.bf16.msra.mxu0 0
  %5555 = vmatpush.bf16.msra.mxu0 0
  %5556 = vmatpush.bf16.msra.mxu0 0
  %5557 = vmatpush.bf16.msra.mxu0 0
  %5558 = vmatpush.bf16.msra.mxu0 0
  %5559 = vmatpush.bf16.msra.mxu0 0
  %5560 = vmatpush.bf16.msra.mxu0 0
  %5561 = vmatpush.bf16.msra.mxu0 %v5540
  %5562 = vmatmul.bf16.gmra.mxu0 %v5552
  %v5563 = vpop.f32.mrf.mxu0
  %v5564 = vadd.f32 0.0, %v5563
  %v5565 = vpop.f32.mrf.mxu0
  %v5566 = vadd.f32 0.0, %v5565
  %5567 = vdwg.mxu0
  %5568 = vmatpush.bf16.msra.mxu0 0
  %5569 = vmatpush.bf16.msra.mxu0 0
  %5570 = vmatpush.bf16.msra.mxu0 0
  %5571 = vmatpush.bf16.msra.mxu0 0
  %5572 = vmatpush.bf16.msra.mxu0 0
  %5573 = vmatpush.bf16.msra.mxu0 0
  %5574 = vmatpush.bf16.msra.mxu0 0
  %5575 = vmatpush.bf16.msra.mxu0 %v5541
  %5576 = vmatmul.bf16.gmra.mxu0 %v5552
  %v5577 = vpop.f32.mrf.mxu0
  %v5578 = vadd.f32 0.0, %v5577
  %v5579 = vpop.f32.mrf.mxu0
  %v5580 = vadd.f32 0.0, %v5579
  %5581 = vdwg.mxu0
  %5582 = vmatpush.bf16.msra.mxu0 0
  %5583 = vmatpush.bf16.msra.mxu0 0
  %5584 = vmatpush.bf16.msra.mxu0 0
  %5585 = vmatpush.bf16.msra.mxu0 0
  %5586 = vmatpush.bf16.msra.mxu0 0
  %5587 = vmatpush.bf16.msra.mxu0 0
  %5588 = vmatpush.bf16.msra.mxu0 0
  %5589 = vmatpush.bf16.msra.mxu0 %v5542
  %5590 = vmatmul.bf16.gmra.mxu0 %v5552
  %v5591 = vpop.f32.mrf.mxu0
  %v5592 = vadd.f32 0.0, %v5591
  %v5593 = vpop.f32.mrf.mxu0
  %v5594 = vadd.f32 0.0, %v5593
  %5595 = vdwg.mxu0
  %5596 = vmatpush.bf16.msra.mxu0 0
  %5597 = vmatpush.bf16.msra.mxu0 0
  %5598 = vmatpush.bf16.msra.mxu0 0
  %5599 = vmatpush.bf16.msra.mxu0 0
  %5600 = vmatpush.bf16.msra.mxu0 0
  %5601 = vmatpush.bf16.msra.mxu0 0
  %5602 = vmatpush.bf16.msra.mxu0 0
  %5603 = vmatpush.bf16.msra.mxu0 %v5543
  %5604 = vmatmul.bf16.gmra.mxu0 %v5552
  %v5605 = vpop.f32.mrf.mxu0
  %v5606 = vadd.f32 0.0, %v5605
  %v5607 = vpop.f32.mrf.mxu0
  %v5608 = vadd.f32 0.0, %v5607
  %5609 = vdwg.mxu0
  %v5611 = vsel %vm1416, %v5548, 0
  %5613 = vmatpush.bf16.msra.mxu0 0
  %5614 = vmatpush.bf16.msra.mxu0 0
  %5615 = vmatpush.bf16.msra.mxu0 0
  %5616 = vmatpush.bf16.msra.mxu0 0
  %5617 = vmatpush.bf16.msra.mxu0 0
  %5618 = vmatpush.bf16.msra.mxu0 0
  %5619 = vmatpush.bf16.msra.mxu0 0
  %5620 = vmatpush.bf16.msra.mxu0 %v5504
  %5621 = vmatmul.bf16.gmra.mxu0 %v5611
  %v5622 = vpop.f32.mrf.mxu0
  %v5623 = vadd.f32 %v5564, %v5622
  %v5624 = vpop.f32.mrf.mxu0
  %v5625 = vadd.f32 %v5566, %v5624
  %5626 = vdwg.mxu0
  %5627 = vmatpush.bf16.msra.mxu0 0
  %5628 = vmatpush.bf16.msra.mxu0 0
  %5629 = vmatpush.bf16.msra.mxu0 0
  %5630 = vmatpush.bf16.msra.mxu0 0
  %5631 = vmatpush.bf16.msra.mxu0 0
  %5632 = vmatpush.bf16.msra.mxu0 0
  %5633 = vmatpush.bf16.msra.mxu0 0
  %5634 = vmatpush.bf16.msra.mxu0 %v5505
  %5635 = vmatmul.bf16.gmra.mxu0 %v5611
  %v5636 = vpop.f32.mrf.mxu0
  %v5637 = vadd.f32 %v5578, %v5636
  %v5638 = vpop.f32.mrf.mxu0
  %v5639 = vadd.f32 %v5580, %v5638
  %5640 = vdwg.mxu0
  %5641 = vmatpush.bf16.msra.mxu0 0
  %5642 = vmatpush.bf16.msra.mxu0 0
  %5643 = vmatpush.bf16.msra.mxu0 0
  %5644 = vmatpush.bf16.msra.mxu0 0
  %5645 = vmatpush.bf16.msra.mxu0 0
  %5646 = vmatpush.bf16.msra.mxu0 0
  %5647 = vmatpush.bf16.msra.mxu0 0
  %5648 = vmatpush.bf16.msra.mxu0 %v5506
  %5649 = vmatmul.bf16.gmra.mxu0 %v5611
  %v5650 = vpop.f32.mrf.mxu0
  %v5651 = vadd.f32 %v5592, %v5650
  %v5652 = vpop.f32.mrf.mxu0
  %v5653 = vadd.f32 %v5594, %v5652
  %5654 = vdwg.mxu0
  %5655 = vmatpush.bf16.msra.mxu0 0
  %5656 = vmatpush.bf16.msra.mxu0 0
  %5657 = vmatpush.bf16.msra.mxu0 0
  %5658 = vmatpush.bf16.msra.mxu0 0
  %5659 = vmatpush.bf16.msra.mxu0 0
  %5660 = vmatpush.bf16.msra.mxu0 0
  %5661 = vmatpush.bf16.msra.mxu0 0
  %5662 = vmatpush.bf16.msra.mxu0 %v5507
  %5663 = vmatmul.bf16.gmra.mxu0 %v5611
  %v5664 = vpop.f32.mrf.mxu0
  %v5665 = vadd.f32 %v5606, %v5664
  %v5666 = vpop.f32.mrf.mxu0
  %v5667 = vadd.f32 %v5608, %v5666
  %5668 = vdwg.mxu0
  %5669 = vrot.lane.b32.xlu0 %v5462, 15
  %v5670 = vpop.permute.xlu0 %5669
  %5671 = vrot.lane.b32.xlu0 %v5466, 15
  %v5672 = vpop.permute.xlu0 %5671
  %5673 = vrot.lane.b32.xlu0 %v5463, 15
  %v5674 = vpop.permute.xlu0 %5673
  %5675 = vrot.lane.b32.xlu0 %v5467, 15
  %v5676 = vpop.permute.xlu0 %5675
  %5677 = vrot.lane.b32.xlu0 %v5464, 15
  %v5678 = vpop.permute.xlu0 %5677
  %5679 = vrot.lane.b32.xlu0 %v5468, 15
  %v5680 = vpop.permute.xlu0 %5679
  %5681 = vrot.lane.b32.xlu0 %v5465, 15
  %v5682 = vpop.permute.xlu0 %5681
  %5683 = vrot.lane.b32.xlu0 %v5469, 15
  %v5684 = vpop.permute.xlu0 %5683
  %v5685 = vsel %vm203, %v5678, %v5682
  %v5686 = vsel %vm203, %v5680, %v5684
  %v5687 = vsel %vm203, %v5674, %v5678
  %v5688 = vsel %vm203, %v5676, %v5680
  %v5689 = vsel %vm203, %v5670, %v5674
  %v5690 = vsel %vm203, %v5672, %v5676
  %v5691 = vsel %vm203, %v5682, %v5670
  %v5692 = vsel %vm203, %v5684, %v5672
  %v5693 = vmul.f32 %v5691, %v5021
  %v5694 = vmul.f32 %v5689, %v5022
  %v5695 = vmul.f32 %v5687, %v5023
  %v5696 = vmul.f32 %v5685, %v5024
  %v5697 = vmul.f32 %v5692, %v5021
  %v5698 = vmul.f32 %v5690, %v5022
  %v5699 = vmul.f32 %v5688, %v5023
  %v5700 = vmul.f32 %v5686, %v5024
  %v5701 = vpack.c.bf16 %v5697, %v5693
  %v5702 = vpack.c.bf16 %v5698, %v5694
  %v5703 = vpack.c.bf16 %v5699, %v5695
  %v5704 = vpack.c.bf16 %v5700, %v5696
  %5705 = vrot.lane.b32.xlu0 %v5548, 96
  %v5706 = vpop.permute.xlu0 %5705
  %v5708 = vsel %vm1416, %v5706, 0
  %5710 = vmatpush.bf16.msra.mxu0 0
  %5711 = vmatpush.bf16.msra.mxu0 0
  %5712 = vmatpush.bf16.msra.mxu0 0
  %5713 = vmatpush.bf16.msra.mxu0 0
  %5714 = vmatpush.bf16.msra.mxu0 0
  %5715 = vmatpush.bf16.msra.mxu0 0
  %5716 = vmatpush.bf16.msra.mxu0 0
  %5717 = vmatpush.bf16.msra.mxu0 %v5701
  %5718 = vmatmul.bf16.gmra.mxu0 %v5708
  %v5719 = vpop.f32.mrf.mxu0
  %v5720 = vadd.f32 0.0, %v5719
  %v5721 = vpop.f32.mrf.mxu0
  %v5722 = vadd.f32 0.0, %v5721
  %5723 = vdwg.mxu0
  %5724 = vmatpush.bf16.msra.mxu0 0
  %5725 = vmatpush.bf16.msra.mxu0 0
  %5726 = vmatpush.bf16.msra.mxu0 0
  %5727 = vmatpush.bf16.msra.mxu0 0
  %5728 = vmatpush.bf16.msra.mxu0 0
  %5729 = vmatpush.bf16.msra.mxu0 0
  %5730 = vmatpush.bf16.msra.mxu0 0
  %5731 = vmatpush.bf16.msra.mxu0 %v5702
  %5732 = vmatmul.bf16.gmra.mxu0 %v5708
  %v5733 = vpop.f32.mrf.mxu0
  %v5734 = vadd.f32 0.0, %v5733
  %v5735 = vpop.f32.mrf.mxu0
  %v5736 = vadd.f32 0.0, %v5735
  %5737 = vdwg.mxu0
  %5738 = vmatpush.bf16.msra.mxu0 0
  %5739 = vmatpush.bf16.msra.mxu0 0
  %5740 = vmatpush.bf16.msra.mxu0 0
  %5741 = vmatpush.bf16.msra.mxu0 0
  %5742 = vmatpush.bf16.msra.mxu0 0
  %5743 = vmatpush.bf16.msra.mxu0 0
  %5744 = vmatpush.bf16.msra.mxu0 0
  %5745 = vmatpush.bf16.msra.mxu0 %v5703
  %5746 = vmatmul.bf16.gmra.mxu0 %v5708
  %v5747 = vpop.f32.mrf.mxu0
  %v5748 = vadd.f32 0.0, %v5747
  %v5749 = vpop.f32.mrf.mxu0
  %v5750 = vadd.f32 0.0, %v5749
  %5751 = vdwg.mxu0
  %5752 = vmatpush.bf16.msra.mxu0 0
  %5753 = vmatpush.bf16.msra.mxu0 0
  %5754 = vmatpush.bf16.msra.mxu0 0
  %5755 = vmatpush.bf16.msra.mxu0 0
  %5756 = vmatpush.bf16.msra.mxu0 0
  %5757 = vmatpush.bf16.msra.mxu0 0
  %5758 = vmatpush.bf16.msra.mxu0 0
  %5759 = vmatpush.bf16.msra.mxu0 %v5704
  %5760 = vmatmul.bf16.gmra.mxu0 %v5708
  %v5761 = vpop.f32.mrf.mxu0
  %v5762 = vadd.f32 0.0, %v5761
  %v5763 = vpop.f32.mrf.mxu0
  %v5764 = vadd.f32 0.0, %v5763
  %5765 = vdwg.mxu0
  %v5766 = vadd.f32 %v5623, %v5720
  %v5767 = vadd.f32 %v5637, %v5734
  %v5768 = vadd.f32 %v5651, %v5748
  %v5769 = vadd.f32 %v5665, %v5762
  %v5770 = vadd.f32 %v5625, %v5722
  %v5771 = vadd.f32 %v5639, %v5736
  %v5772 = vadd.f32 %v5653, %v5750
  %v5773 = vadd.f32 %v5667, %v5764
  %5774 = vrot.lane.b32.xlu0 %v5462, 1
  %v5775 = vpop.permute.xlu0 %5774
  %5776 = vrot.lane.b32.xlu0 %v5466, 1
  %v5777 = vpop.permute.xlu0 %5776
  %5778 = vrot.lane.b32.xlu0 %v5463, 1
  %v5779 = vpop.permute.xlu0 %5778
  %5780 = vrot.lane.b32.xlu0 %v5467, 1
  %v5781 = vpop.permute.xlu0 %5780
  %5782 = vrot.lane.b32.xlu0 %v5464, 1
  %v5783 = vpop.permute.xlu0 %5782
  %5784 = vrot.lane.b32.xlu0 %v5468, 1
  %v5785 = vpop.permute.xlu0 %5784
  %5786 = vrot.lane.b32.xlu0 %v5465, 1
  %v5787 = vpop.permute.xlu0 %5786
  %5788 = vrot.lane.b32.xlu0 %v5469, 1
  %v5789 = vpop.permute.xlu0 %5788
  %v5790 = vsel %vm261, %v5783, %v5787
  %v5791 = vsel %vm261, %v5785, %v5789
  %v5792 = vsel %vm261, %v5779, %v5783
  %v5793 = vsel %vm261, %v5781, %v5785
  %v5794 = vsel %vm261, %v5775, %v5779
  %v5795 = vsel %vm261, %v5777, %v5781
  %v5796 = vsel %vm261, %v5787, %v5775
  %v5797 = vsel %vm261, %v5789, %v5777
  %v5798 = vmul.f32 %v5796, %v5049
  %v5799 = vmul.f32 %v5794, %v5050
  %v5800 = vmul.f32 %v5792, %v5051
  %v5801 = vmul.f32 %v5790, %v5052
  %v5802 = vmul.f32 %v5797, %v5049
  %v5803 = vmul.f32 %v5795, %v5050
  %v5804 = vmul.f32 %v5793, %v5051
  %v5805 = vmul.f32 %v5791, %v5052
  %v5806 = vpack.c.bf16 %v5802, %v5798
  %v5807 = vpack.c.bf16 %v5803, %v5799
  %v5808 = vpack.c.bf16 %v5804, %v5800
  %v5809 = vpack.c.bf16 %v5805, %v5801
  %5810 = vrot.lane.b32.xlu0 %v5548, 80
  %v5811 = vpop.permute.xlu0 %5810
  %v5813 = vsel %vm1416, %v5811, 0
  %5815 = vmatpush.bf16.msra.mxu0 0
  %5816 = vmatpush.bf16.msra.mxu0 0
  %5817 = vmatpush.bf16.msra.mxu0 0
  %5818 = vmatpush.bf16.msra.mxu0 0
  %5819 = vmatpush.bf16.msra.mxu0 0
  %5820 = vmatpush.bf16.msra.mxu0 0
  %5821 = vmatpush.bf16.msra.mxu0 0
  %5822 = vmatpush.bf16.msra.mxu0 %v5806
  %5823 = vmatmul.bf16.gmra.mxu0 %v5813
  %v5824 = vpop.f32.mrf.mxu0
  %v5825 = vadd.f32 0.0, %v5824
  %v5826 = vpop.f32.mrf.mxu0
  %v5827 = vadd.f32 0.0, %v5826
  %5828 = vdwg.mxu0
  %5829 = vmatpush.bf16.msra.mxu0 0
  %5830 = vmatpush.bf16.msra.mxu0 0
  %5831 = vmatpush.bf16.msra.mxu0 0
  %5832 = vmatpush.bf16.msra.mxu0 0
  %5833 = vmatpush.bf16.msra.mxu0 0
  %5834 = vmatpush.bf16.msra.mxu0 0
  %5835 = vmatpush.bf16.msra.mxu0 0
  %5836 = vmatpush.bf16.msra.mxu0 %v5807
  %5837 = vmatmul.bf16.gmra.mxu0 %v5813
  %v5838 = vpop.f32.mrf.mxu0
  %v5839 = vadd.f32 0.0, %v5838
  %v5840 = vpop.f32.mrf.mxu0
  %v5841 = vadd.f32 0.0, %v5840
  %5842 = vdwg.mxu0
  %5843 = vmatpush.bf16.msra.mxu0 0
  %5844 = vmatpush.bf16.msra.mxu0 0
  %5845 = vmatpush.bf16.msra.mxu0 0
  %5846 = vmatpush.bf16.msra.mxu0 0
  %5847 = vmatpush.bf16.msra.mxu0 0
  %5848 = vmatpush.bf16.msra.mxu0 0
  %5849 = vmatpush.bf16.msra.mxu0 0
  %5850 = vmatpush.bf16.msra.mxu0 %v5808
  %5851 = vmatmul.bf16.gmra.mxu0 %v5813
  %v5852 = vpop.f32.mrf.mxu0
  %v5853 = vadd.f32 0.0, %v5852
  %v5854 = vpop.f32.mrf.mxu0
  %v5855 = vadd.f32 0.0, %v5854
  %5856 = vdwg.mxu0
  %5857 = vmatpush.bf16.msra.mxu0 0
  %5858 = vmatpush.bf16.msra.mxu0 0
  %5859 = vmatpush.bf16.msra.mxu0 0
  %5860 = vmatpush.bf16.msra.mxu0 0
  %5861 = vmatpush.bf16.msra.mxu0 0
  %5862 = vmatpush.bf16.msra.mxu0 0
  %5863 = vmatpush.bf16.msra.mxu0 0
  %5864 = vmatpush.bf16.msra.mxu0 %v5809
  %5865 = vmatmul.bf16.gmra.mxu0 %v5813
  %v5866 = vpop.f32.mrf.mxu0
  %v5867 = vadd.f32 0.0, %v5866
  %v5868 = vpop.f32.mrf.mxu0
  %v5869 = vadd.f32 0.0, %v5868
  %5870 = vdwg.mxu0
  %v5871 = vadd.f32 %v5766, %v5825
  %v5872 = vadd.f32 %v5767, %v5839
  %v5873 = vadd.f32 %v5768, %v5853
  %v5874 = vadd.f32 %v5769, %v5867
  %v5875 = vadd.f32 %v5770, %v5827
  %v5876 = vadd.f32 %v5771, %v5841
  %v5877 = vadd.f32 %v5772, %v5855
  %v5878 = vadd.f32 %v5773, %v5869
  %v5879 = vmul.f32 %v5462, %v5065
  %v5880 = vmul.f32 %v5463, %v5066
  %v5881 = vmul.f32 %v5464, %v5067
  %v5882 = vmul.f32 %v5465, %v5068
  %v5883 = vmul.f32 %v5466, %v5065
  %v5884 = vmul.f32 %v5467, %v5066
  %v5885 = vmul.f32 %v5468, %v5067
  %v5886 = vmul.f32 %v5469, %v5068
  %v5887 = vpack.c.bf16 %v5883, %v5879
  %v5888 = vpack.c.bf16 %v5884, %v5880
  %v5889 = vpack.c.bf16 %v5885, %v5881
  %v5890 = vpack.c.bf16 %v5886, %v5882
  %5891 = vrot.lane.b32.xlu0 %v5548, 64
  %v5892 = vpop.permute.xlu0 %5891
  %v5894 = vsel %vm1416, %v5892, 0
  %5896 = vmatpush.bf16.msra.mxu0 0
  %5897 = vmatpush.bf16.msra.mxu0 0
  %5898 = vmatpush.bf16.msra.mxu0 0
  %5899 = vmatpush.bf16.msra.mxu0 0
  %5900 = vmatpush.bf16.msra.mxu0 0
  %5901 = vmatpush.bf16.msra.mxu0 0
  %5902 = vmatpush.bf16.msra.mxu0 0
  %5903 = vmatpush.bf16.msra.mxu0 %v5887
  %5904 = vmatmul.bf16.gmra.mxu0 %v5894
  %v5905 = vpop.f32.mrf.mxu0
  %v5906 = vadd.f32 0.0, %v5905
  %v5907 = vpop.f32.mrf.mxu0
  %v5908 = vadd.f32 0.0, %v5907
  %5909 = vdwg.mxu0
  %5910 = vmatpush.bf16.msra.mxu0 0
  %5911 = vmatpush.bf16.msra.mxu0 0
  %5912 = vmatpush.bf16.msra.mxu0 0
  %5913 = vmatpush.bf16.msra.mxu0 0
  %5914 = vmatpush.bf16.msra.mxu0 0
  %5915 = vmatpush.bf16.msra.mxu0 0
  %5916 = vmatpush.bf16.msra.mxu0 0
  %5917 = vmatpush.bf16.msra.mxu0 %v5888
  %5918 = vmatmul.bf16.gmra.mxu0 %v5894
  %v5919 = vpop.f32.mrf.mxu0
  %v5920 = vadd.f32 0.0, %v5919
  %v5921 = vpop.f32.mrf.mxu0
  %v5922 = vadd.f32 0.0, %v5921
  %5923 = vdwg.mxu0
  %5924 = vmatpush.bf16.msra.mxu0 0
  %5925 = vmatpush.bf16.msra.mxu0 0
  %5926 = vmatpush.bf16.msra.mxu0 0
  %5927 = vmatpush.bf16.msra.mxu0 0
  %5928 = vmatpush.bf16.msra.mxu0 0
  %5929 = vmatpush.bf16.msra.mxu0 0
  %5930 = vmatpush.bf16.msra.mxu0 0
  %5931 = vmatpush.bf16.msra.mxu0 %v5889
  %5932 = vmatmul.bf16.gmra.mxu0 %v5894
  %v5933 = vpop.f32.mrf.mxu0
  %v5934 = vadd.f32 0.0, %v5933
  %v5935 = vpop.f32.mrf.mxu0
  %v5936 = vadd.f32 0.0, %v5935
  %5937 = vdwg.mxu0
  %5938 = vmatpush.bf16.msra.mxu0 0
  %5939 = vmatpush.bf16.msra.mxu0 0
  %5940 = vmatpush.bf16.msra.mxu0 0
  %5941 = vmatpush.bf16.msra.mxu0 0
  %5942 = vmatpush.bf16.msra.mxu0 0
  %5943 = vmatpush.bf16.msra.mxu0 0
  %5944 = vmatpush.bf16.msra.mxu0 0
  %5945 = vmatpush.bf16.msra.mxu0 %v5890
  %5946 = vmatmul.bf16.gmra.mxu0 %v5894
  %v5947 = vpop.f32.mrf.mxu0
  %v5948 = vadd.f32 0.0, %v5947
  %v5949 = vpop.f32.mrf.mxu0
  %v5950 = vadd.f32 0.0, %v5949
  %5951 = vdwg.mxu0
  %v5952 = vadd.f32 %v5871, %v5906
  %v5953 = vadd.f32 %v5872, %v5920
  %v5954 = vadd.f32 %v5873, %v5934
  %v5955 = vadd.f32 %v5874, %v5948
  %v5956 = vadd.f32 %v5875, %v5908
  %v5957 = vadd.f32 %v5876, %v5922
  %v5958 = vadd.f32 %v5877, %v5936
  %v5959 = vadd.f32 %v5878, %v5950
  %5960 = vrot.lane.b32.xlu0 %v5462, 127
  %v5961 = vpop.permute.xlu0 %5960
  %5962 = vrot.lane.b32.xlu0 %v5466, 127
  %v5963 = vpop.permute.xlu0 %5962
  %5964 = vrot.lane.b32.xlu0 %v5463, 127
  %v5965 = vpop.permute.xlu0 %5964
  %5966 = vrot.lane.b32.xlu0 %v5467, 127
  %v5967 = vpop.permute.xlu0 %5966
  %5968 = vrot.lane.b32.xlu0 %v5464, 127
  %v5969 = vpop.permute.xlu0 %5968
  %5970 = vrot.lane.b32.xlu0 %v5468, 127
  %v5971 = vpop.permute.xlu0 %5970
  %5972 = vrot.lane.b32.xlu0 %v5465, 127
  %v5973 = vpop.permute.xlu0 %5972
  %5974 = vrot.lane.b32.xlu0 %v5469, 127
  %v5975 = vpop.permute.xlu0 %5974
  %v5976 = vsel %vm345, %v5969, %v5973
  %v5977 = vsel %vm345, %v5971, %v5975
  %v5978 = vsel %vm345, %v5965, %v5969
  %v5979 = vsel %vm345, %v5967, %v5971
  %v5980 = vsel %vm345, %v5961, %v5965
  %v5981 = vsel %vm345, %v5963, %v5967
  %v5982 = vsel %vm345, %v5973, %v5961
  %v5983 = vsel %vm345, %v5975, %v5963
  %v5984 = vmul.f32 %v5980, %v5093
  %v5985 = vmul.f32 %v5978, %v5094
  %v5986 = vmul.f32 %v5976, %v5095
  %v5987 = vmul.f32 %v5982, %v5096
  %v5988 = vmul.f32 %v5981, %v5093
  %v5989 = vmul.f32 %v5979, %v5094
  %v5990 = vmul.f32 %v5977, %v5095
  %v5991 = vmul.f32 %v5983, %v5096
  %v5992 = vpack.c.bf16 %v5988, %v5984
  %v5993 = vpack.c.bf16 %v5989, %v5985
  %v5994 = vpack.c.bf16 %v5990, %v5986
  %v5995 = vpack.c.bf16 %v5991, %v5987
  %5996 = vrot.lane.b32.xlu0 %v5548, 48
  %v5997 = vpop.permute.xlu0 %5996
  %v5999 = vsel %vm1416, %v5997, 0
  %6001 = vmatpush.bf16.msra.mxu0 0
  %6002 = vmatpush.bf16.msra.mxu0 0
  %6003 = vmatpush.bf16.msra.mxu0 0
  %6004 = vmatpush.bf16.msra.mxu0 0
  %6005 = vmatpush.bf16.msra.mxu0 0
  %6006 = vmatpush.bf16.msra.mxu0 0
  %6007 = vmatpush.bf16.msra.mxu0 0
  %6008 = vmatpush.bf16.msra.mxu0 %v5992
  %6009 = vmatmul.bf16.gmra.mxu0 %v5999
  %v6010 = vpop.f32.mrf.mxu0
  %v6011 = vadd.f32 0.0, %v6010
  %v6012 = vpop.f32.mrf.mxu0
  %v6013 = vadd.f32 0.0, %v6012
  %6014 = vdwg.mxu0
  %6015 = vmatpush.bf16.msra.mxu0 0
  %6016 = vmatpush.bf16.msra.mxu0 0
  %6017 = vmatpush.bf16.msra.mxu0 0
  %6018 = vmatpush.bf16.msra.mxu0 0
  %6019 = vmatpush.bf16.msra.mxu0 0
  %6020 = vmatpush.bf16.msra.mxu0 0
  %6021 = vmatpush.bf16.msra.mxu0 0
  %6022 = vmatpush.bf16.msra.mxu0 %v5993
  %6023 = vmatmul.bf16.gmra.mxu0 %v5999
  %v6024 = vpop.f32.mrf.mxu0
  %v6025 = vadd.f32 0.0, %v6024
  %v6026 = vpop.f32.mrf.mxu0
  %v6027 = vadd.f32 0.0, %v6026
  %6028 = vdwg.mxu0
  %6029 = vmatpush.bf16.msra.mxu0 0
  %6030 = vmatpush.bf16.msra.mxu0 0
  %6031 = vmatpush.bf16.msra.mxu0 0
  %6032 = vmatpush.bf16.msra.mxu0 0
  %6033 = vmatpush.bf16.msra.mxu0 0
  %6034 = vmatpush.bf16.msra.mxu0 0
  %6035 = vmatpush.bf16.msra.mxu0 0
  %6036 = vmatpush.bf16.msra.mxu0 %v5994
  %6037 = vmatmul.bf16.gmra.mxu0 %v5999
  %v6038 = vpop.f32.mrf.mxu0
  %v6039 = vadd.f32 0.0, %v6038
  %v6040 = vpop.f32.mrf.mxu0
  %v6041 = vadd.f32 0.0, %v6040
  %6042 = vdwg.mxu0
  %6043 = vmatpush.bf16.msra.mxu0 0
  %6044 = vmatpush.bf16.msra.mxu0 0
  %6045 = vmatpush.bf16.msra.mxu0 0
  %6046 = vmatpush.bf16.msra.mxu0 0
  %6047 = vmatpush.bf16.msra.mxu0 0
  %6048 = vmatpush.bf16.msra.mxu0 0
  %6049 = vmatpush.bf16.msra.mxu0 0
  %6050 = vmatpush.bf16.msra.mxu0 %v5995
  %6051 = vmatmul.bf16.gmra.mxu0 %v5999
  %v6052 = vpop.f32.mrf.mxu0
  %v6053 = vadd.f32 0.0, %v6052
  %v6054 = vpop.f32.mrf.mxu0
  %v6055 = vadd.f32 0.0, %v6054
  %6056 = vdwg.mxu0
  %v6057 = vadd.f32 %v5952, %v6011
  %v6058 = vadd.f32 %v5953, %v6025
  %v6059 = vadd.f32 %v5954, %v6039
  %v6060 = vadd.f32 %v5955, %v6053
  %v6061 = vadd.f32 %v5956, %v6013
  %v6062 = vadd.f32 %v5957, %v6027
  %v6063 = vadd.f32 %v5958, %v6041
  %v6064 = vadd.f32 %v5959, %v6055
  %6065 = vrot.lane.b32.xlu0 %v5462, 113
  %v6066 = vpop.permute.xlu0 %6065
  %6067 = vrot.lane.b32.xlu0 %v5466, 113
  %v6068 = vpop.permute.xlu0 %6067
  %6069 = vrot.lane.b32.xlu0 %v5463, 113
  %v6070 = vpop.permute.xlu0 %6069
  %6071 = vrot.lane.b32.xlu0 %v5467, 113
  %v6072 = vpop.permute.xlu0 %6071
  %6073 = vrot.lane.b32.xlu0 %v5464, 113
  %v6074 = vpop.permute.xlu0 %6073
  %6075 = vrot.lane.b32.xlu0 %v5468, 113
  %v6076 = vpop.permute.xlu0 %6075
  %6077 = vrot.lane.b32.xlu0 %v5465, 113
  %v6078 = vpop.permute.xlu0 %6077
  %6079 = vrot.lane.b32.xlu0 %v5469, 113
  %v6080 = vpop.permute.xlu0 %6079
  %v6081 = vsel %vm403, %v6074, %v6078
  %v6082 = vsel %vm403, %v6076, %v6080
  %v6083 = vsel %vm403, %v6070, %v6074
  %v6084 = vsel %vm403, %v6072, %v6076
  %v6085 = vsel %vm403, %v6066, %v6070
  %v6086 = vsel %vm403, %v6068, %v6072
  %v6087 = vsel %vm403, %v6078, %v6066
  %v6088 = vsel %vm403, %v6080, %v6068
  %v6089 = vmul.f32 %v6085, %v5121
  %v6090 = vmul.f32 %v6083, %v5122
  %v6091 = vmul.f32 %v6081, %v5123
  %v6092 = vmul.f32 %v6087, %v5124
  %v6093 = vmul.f32 %v6086, %v5121
  %v6094 = vmul.f32 %v6084, %v5122
  %v6095 = vmul.f32 %v6082, %v5123
  %v6096 = vmul.f32 %v6088, %v5124
  %v6097 = vpack.c.bf16 %v6093, %v6089
  %v6098 = vpack.c.bf16 %v6094, %v6090
  %v6099 = vpack.c.bf16 %v6095, %v6091
  %v6100 = vpack.c.bf16 %v6096, %v6092
  %6101 = vrot.lane.b32.xlu0 %v5548, 32
  %v6102 = vpop.permute.xlu0 %6101
  %v6104 = vsel %vm1416, %v6102, 0
  %6106 = vmatpush.bf16.msra.mxu0 0
  %6107 = vmatpush.bf16.msra.mxu0 0
  %6108 = vmatpush.bf16.msra.mxu0 0
  %6109 = vmatpush.bf16.msra.mxu0 0
  %6110 = vmatpush.bf16.msra.mxu0 0
  %6111 = vmatpush.bf16.msra.mxu0 0
  %6112 = vmatpush.bf16.msra.mxu0 0
  %6113 = vmatpush.bf16.msra.mxu0 %v6097
  %6114 = vmatmul.bf16.gmra.mxu0 %v6104
  %v6115 = vpop.f32.mrf.mxu0
  %v6116 = vadd.f32 0.0, %v6115
  %v6117 = vpop.f32.mrf.mxu0
  %v6118 = vadd.f32 0.0, %v6117
  %6119 = vdwg.mxu0
  %6120 = vmatpush.bf16.msra.mxu0 0
  %6121 = vmatpush.bf16.msra.mxu0 0
  %6122 = vmatpush.bf16.msra.mxu0 0
  %6123 = vmatpush.bf16.msra.mxu0 0
  %6124 = vmatpush.bf16.msra.mxu0 0
  %6125 = vmatpush.bf16.msra.mxu0 0
  %6126 = vmatpush.bf16.msra.mxu0 0
  %6127 = vmatpush.bf16.msra.mxu0 %v6098
  %6128 = vmatmul.bf16.gmra.mxu0 %v6104
  %v6129 = vpop.f32.mrf.mxu0
  %v6130 = vadd.f32 0.0, %v6129
  %v6131 = vpop.f32.mrf.mxu0
  %v6132 = vadd.f32 0.0, %v6131
  %6133 = vdwg.mxu0
  %6134 = vmatpush.bf16.msra.mxu0 0
  %6135 = vmatpush.bf16.msra.mxu0 0
  %6136 = vmatpush.bf16.msra.mxu0 0
  %6137 = vmatpush.bf16.msra.mxu0 0
  %6138 = vmatpush.bf16.msra.mxu0 0
  %6139 = vmatpush.bf16.msra.mxu0 0
  %6140 = vmatpush.bf16.msra.mxu0 0
  %6141 = vmatpush.bf16.msra.mxu0 %v6099
  %6142 = vmatmul.bf16.gmra.mxu0 %v6104
  %v6143 = vpop.f32.mrf.mxu0
  %v6144 = vadd.f32 0.0, %v6143
  %v6145 = vpop.f32.mrf.mxu0
  %v6146 = vadd.f32 0.0, %v6145
  %6147 = vdwg.mxu0
  %6148 = vmatpush.bf16.msra.mxu0 0
  %6149 = vmatpush.bf16.msra.mxu0 0
  %6150 = vmatpush.bf16.msra.mxu0 0
  %6151 = vmatpush.bf16.msra.mxu0 0
  %6152 = vmatpush.bf16.msra.mxu0 0
  %6153 = vmatpush.bf16.msra.mxu0 0
  %6154 = vmatpush.bf16.msra.mxu0 0
  %6155 = vmatpush.bf16.msra.mxu0 %v6100
  %6156 = vmatmul.bf16.gmra.mxu0 %v6104
  %v6157 = vpop.f32.mrf.mxu0
  %v6158 = vadd.f32 0.0, %v6157
  %v6159 = vpop.f32.mrf.mxu0
  %v6160 = vadd.f32 0.0, %v6159
  %6161 = vdwg.mxu0
  %v6162 = vadd.f32 %v6057, %v6116
  %v6163 = vadd.f32 %v6058, %v6130
  %v6164 = vadd.f32 %v6059, %v6144
  %v6165 = vadd.f32 %v6060, %v6158
  %v6166 = vadd.f32 %v6061, %v6118
  %v6167 = vadd.f32 %v6062, %v6132
  %v6168 = vadd.f32 %v6063, %v6146
  %v6169 = vadd.f32 %v6064, %v6160
  %6170 = vrot.lane.b32.xlu0 %v5462, 112
  %v6171 = vpop.permute.xlu0 %6170
  %6172 = vrot.lane.b32.xlu0 %v5466, 112
  %v6173 = vpop.permute.xlu0 %6172
  %6174 = vrot.lane.b32.xlu0 %v5463, 112
  %v6175 = vpop.permute.xlu0 %6174
  %6176 = vrot.lane.b32.xlu0 %v5467, 112
  %v6177 = vpop.permute.xlu0 %6176
  %6178 = vrot.lane.b32.xlu0 %v5464, 112
  %v6179 = vpop.permute.xlu0 %6178
  %6180 = vrot.lane.b32.xlu0 %v5468, 112
  %v6181 = vpop.permute.xlu0 %6180
  %6182 = vrot.lane.b32.xlu0 %v5465, 112
  %v6183 = vpop.permute.xlu0 %6182
  %6184 = vrot.lane.b32.xlu0 %v5469, 112
  %v6185 = vpop.permute.xlu0 %6184
  %v6186 = vsel %vm461, %v6179, %v6183
  %v6187 = vsel %vm461, %v6181, %v6185
  %v6188 = vsel %vm461, %v6175, %v6179
  %v6189 = vsel %vm461, %v6177, %v6181
  %v6190 = vsel %vm461, %v6171, %v6175
  %v6191 = vsel %vm461, %v6173, %v6177
  %v6192 = vsel %vm461, %v6183, %v6171
  %v6193 = vsel %vm461, %v6185, %v6173
  %v6194 = vmul.f32 %v6190, %v5149
  %v6195 = vmul.f32 %v6188, %v5150
  %v6196 = vmul.f32 %v6186, %v5151
  %v6197 = vmul.f32 %v6192, %v5152
  %v6198 = vmul.f32 %v6191, %v5149
  %v6199 = vmul.f32 %v6189, %v5150
  %v6200 = vmul.f32 %v6187, %v5151
  %v6201 = vmul.f32 %v6193, %v5152
  %v6202 = vpack.c.bf16 %v6198, %v6194
  %v6203 = vpack.c.bf16 %v6199, %v6195
  %v6204 = vpack.c.bf16 %v6200, %v6196
  %v6205 = vpack.c.bf16 %v6201, %v6197
  %6206 = vrot.lane.b32.xlu0 %v5548, 16
  %v6207 = vpop.permute.xlu0 %6206
  %v6209 = vsel %vm1416, %v6207, 0
  %6211 = vmatpush.bf16.msra.mxu0 0
  %6212 = vmatpush.bf16.msra.mxu0 0
  %6213 = vmatpush.bf16.msra.mxu0 0
  %6214 = vmatpush.bf16.msra.mxu0 0
  %6215 = vmatpush.bf16.msra.mxu0 0
  %6216 = vmatpush.bf16.msra.mxu0 0
  %6217 = vmatpush.bf16.msra.mxu0 0
  %6218 = vmatpush.bf16.msra.mxu0 %v6202
  %6219 = vmatmul.bf16.gmra.mxu0 %v6209
  %v6220 = vpop.f32.mrf.mxu0
  %v6221 = vadd.f32 0.0, %v6220
  %v6222 = vpop.f32.mrf.mxu0
  %v6223 = vadd.f32 0.0, %v6222
  %6224 = vdwg.mxu0
  %6225 = vmatpush.bf16.msra.mxu0 0
  %6226 = vmatpush.bf16.msra.mxu0 0
  %6227 = vmatpush.bf16.msra.mxu0 0
  %6228 = vmatpush.bf16.msra.mxu0 0
  %6229 = vmatpush.bf16.msra.mxu0 0
  %6230 = vmatpush.bf16.msra.mxu0 0
  %6231 = vmatpush.bf16.msra.mxu0 0
  %6232 = vmatpush.bf16.msra.mxu0 %v6203
  %6233 = vmatmul.bf16.gmra.mxu0 %v6209
  %v6234 = vpop.f32.mrf.mxu0
  %v6235 = vadd.f32 0.0, %v6234
  %v6236 = vpop.f32.mrf.mxu0
  %v6237 = vadd.f32 0.0, %v6236
  %6238 = vdwg.mxu0
  %6239 = vmatpush.bf16.msra.mxu0 0
  %6240 = vmatpush.bf16.msra.mxu0 0
  %6241 = vmatpush.bf16.msra.mxu0 0
  %6242 = vmatpush.bf16.msra.mxu0 0
  %6243 = vmatpush.bf16.msra.mxu0 0
  %6244 = vmatpush.bf16.msra.mxu0 0
  %6245 = vmatpush.bf16.msra.mxu0 0
  %6246 = vmatpush.bf16.msra.mxu0 %v6204
  %6247 = vmatmul.bf16.gmra.mxu0 %v6209
  %v6248 = vpop.f32.mrf.mxu0
  %v6249 = vadd.f32 0.0, %v6248
  %v6250 = vpop.f32.mrf.mxu0
  %v6251 = vadd.f32 0.0, %v6250
  %6252 = vdwg.mxu0
  %6253 = vmatpush.bf16.msra.mxu0 0
  %6254 = vmatpush.bf16.msra.mxu0 0
  %6255 = vmatpush.bf16.msra.mxu0 0
  %6256 = vmatpush.bf16.msra.mxu0 0
  %6257 = vmatpush.bf16.msra.mxu0 0
  %6258 = vmatpush.bf16.msra.mxu0 0
  %6259 = vmatpush.bf16.msra.mxu0 0
  %6260 = vmatpush.bf16.msra.mxu0 %v6205
  %6261 = vmatmul.bf16.gmra.mxu0 %v6209
  %v6262 = vpop.f32.mrf.mxu0
  %v6263 = vadd.f32 0.0, %v6262
  %v6264 = vpop.f32.mrf.mxu0
  %v6265 = vadd.f32 0.0, %v6264
  %6266 = vdwg.mxu0
  %v6267 = vadd.f32 %v6162, %v6221
  %v6268 = vadd.f32 %v6163, %v6235
  %v6269 = vadd.f32 %v6164, %v6249
  %v6270 = vadd.f32 %v6165, %v6263
  %v6271 = vadd.f32 %v6166, %v6223
  %v6272 = vadd.f32 %v6167, %v6237
  %v6273 = vadd.f32 %v6168, %v6251
  %v6274 = vadd.f32 %v6169, %v6265
  %v6275 = vld [vmem:[%s10 + $0x4] sm:$0xf]
  %v6276 = vld [vmem:[%s10 + $0xc] sm:$0xf]
  %6277 = vrot.lane.b32.xlu0 %v5462, 111
  %v6278 = vpop.permute.xlu0 %6277
  %6279 = vrot.lane.b32.xlu0 %v5466, 111
  %v6280 = vpop.permute.xlu0 %6279
  %6281 = vrot.lane.b32.xlu0 %v5463, 111
  %v6282 = vpop.permute.xlu0 %6281
  %6283 = vrot.lane.b32.xlu0 %v5467, 111
  %v6284 = vpop.permute.xlu0 %6283
  %6285 = vrot.lane.b32.xlu0 %v5464, 111
  %v6286 = vpop.permute.xlu0 %6285
  %6287 = vrot.lane.b32.xlu0 %v5468, 111
  %v6288 = vpop.permute.xlu0 %6287
  %6289 = vrot.lane.b32.xlu0 %v5465, 111
  %v6290 = vpop.permute.xlu0 %6289
  %6291 = vrot.lane.b32.xlu0 %v5469, 111
  %v6292 = vpop.permute.xlu0 %6291
  %v6293 = vsel %vm519, %v6286, %v6290
  %v6294 = vsel %vm519, %v6288, %v6292
  %v6295 = vsel %vm519, %v6282, %v6286
  %v6296 = vsel %vm519, %v6284, %v6288
  %v6297 = vsel %vm519, %v6278, %v6282
  %v6298 = vsel %vm519, %v6280, %v6284
  %v6299 = vsel %vm519, %v6290, %v6278
  %v6300 = vsel %vm519, %v6292, %v6280
  %v6301 = vmul.f32 %v6297, %v5177
  %v6302 = vmul.f32 %v6295, %v5178
  %v6303 = vmul.f32 %v6293, %v5179
  %v6304 = vmul.f32 %v6299, %v5180
  %v6305 = vmul.f32 %v6298, %v5177
  %v6306 = vmul.f32 %v6296, %v5178
  %v6307 = vmul.f32 %v6294, %v5179
  %v6308 = vmul.f32 %v6300, %v5180
  %v6309 = vpack.c.bf16 %v6305, %v6301
  %v6310 = vpack.c.bf16 %v6306, %v6302
  %v6311 = vpack.c.bf16 %v6307, %v6303
  %v6312 = vpack.c.bf16 %v6308, %v6304
  %v6315 = vunpack.c.l.b16 %v6275
  %v6316 = vunpack.c.l.b16 %v6276
  %v6317 = vpack.c.b16 %v6316, %v6315
  %v6319 = vsel %vm1416, %v6317, 0
  %6321 = vmatpush.bf16.msra.mxu0 0
  %6322 = vmatpush.bf16.msra.mxu0 0
  %6323 = vmatpush.bf16.msra.mxu0 0
  %6324 = vmatpush.bf16.msra.mxu0 0
  %6325 = vmatpush.bf16.msra.mxu0 0
  %6326 = vmatpush.bf16.msra.mxu0 0
  %6327 = vmatpush.bf16.msra.mxu0 0
  %6328 = vmatpush.bf16.msra.mxu0 %v6309
  %6329 = vmatmul.bf16.gmra.mxu0 %v6319
  %v6330 = vpop.f32.mrf.mxu0
  %v6331 = vadd.f32 0.0, %v6330
  %v6332 = vpop.f32.mrf.mxu0
  %v6333 = vadd.f32 0.0, %v6332
  %6334 = vdwg.mxu0
  %6335 = vmatpush.bf16.msra.mxu0 0
  %6336 = vmatpush.bf16.msra.mxu0 0
  %6337 = vmatpush.bf16.msra.mxu0 0
  %6338 = vmatpush.bf16.msra.mxu0 0
  %6339 = vmatpush.bf16.msra.mxu0 0
  %6340 = vmatpush.bf16.msra.mxu0 0
  %6341 = vmatpush.bf16.msra.mxu0 0
  %6342 = vmatpush.bf16.msra.mxu0 %v6310
  %6343 = vmatmul.bf16.gmra.mxu0 %v6319
  %v6344 = vpop.f32.mrf.mxu0
  %v6345 = vadd.f32 0.0, %v6344
  %v6346 = vpop.f32.mrf.mxu0
  %v6347 = vadd.f32 0.0, %v6346
  %6348 = vdwg.mxu0
  %6349 = vmatpush.bf16.msra.mxu0 0
  %6350 = vmatpush.bf16.msra.mxu0 0
  %6351 = vmatpush.bf16.msra.mxu0 0
  %6352 = vmatpush.bf16.msra.mxu0 0
  %6353 = vmatpush.bf16.msra.mxu0 0
  %6354 = vmatpush.bf16.msra.mxu0 0
  %6355 = vmatpush.bf16.msra.mxu0 0
  %6356 = vmatpush.bf16.msra.mxu0 %v6311
  %6357 = vmatmul.bf16.gmra.mxu0 %v6319
  %v6358 = vpop.f32.mrf.mxu0
  %v6359 = vadd.f32 0.0, %v6358
  %v6360 = vpop.f32.mrf.mxu0
  %v6361 = vadd.f32 0.0, %v6360
  %6362 = vdwg.mxu0
  %6363 = vmatpush.bf16.msra.mxu0 0
  %6364 = vmatpush.bf16.msra.mxu0 0
  %6365 = vmatpush.bf16.msra.mxu0 0
  %6366 = vmatpush.bf16.msra.mxu0 0
  %6367 = vmatpush.bf16.msra.mxu0 0
  %6368 = vmatpush.bf16.msra.mxu0 0
  %6369 = vmatpush.bf16.msra.mxu0 0
  %6370 = vmatpush.bf16.msra.mxu0 %v6312
  %6371 = vmatmul.bf16.gmra.mxu0 %v6319
  %v6372 = vpop.f32.mrf.mxu0
  %v6373 = vadd.f32 0.0, %v6372
  %v6374 = vpop.f32.mrf.mxu0
  %v6375 = vadd.f32 0.0, %v6374
  %6376 = vdwg.mxu0
  %v6377 = vadd.f32 %v6267, %v6331
  %v6378 = vadd.f32 %v6268, %v6345
  %v6379 = vadd.f32 %v6269, %v6359
  %v6380 = vadd.f32 %v6270, %v6373
  %v6381 = vadd.f32 %v6271, %v6333
  %v6382 = vadd.f32 %v6272, %v6347
  %v6383 = vadd.f32 %v6273, %v6361
  %v6384 = vadd.f32 %v6274, %v6375
  %v6385 = vld [vmem:[%s11] sm:$0xff]
  %v6386 = vld [vmem:[%s11 + $0x8] sm:$0xff]
  %6388 = vset.pattern.permute.xlu0 0
  %6389 = vperm.xlu0 %6388, %v6385
  %v6390 = vpop.permute.xlu0 %6389
  %6393 = vset.pattern.permute.xlu0 0
  %6394 = vperm.xlu0 %6393, %v6386
  %v6395 = vpop.permute.xlu0 %6394
  %v6397 = vadd.f32 %v6377, %v6390
  %v6398 = vadd.f32 %v6378, %v6390
  %v6399 = vadd.f32 %v6379, %v6390
  %v6400 = vadd.f32 %v6380, %v6390
  %v6401 = vadd.f32 %v6381, %v6395
  %v6402 = vadd.f32 %v6382, %v6395
  %v6403 = vadd.f32 %v6383, %v6395
  %v6404 = vadd.f32 %v6384, %v6395
  %v6405 = vmax.f32 %v6397, 0.0
  %v6406 = vmax.f32 %v6398, 0.0
  %v6407 = vmax.f32 %v6399, 0.0
  %v6408 = vmax.f32 %v6400, 0.0
  %v6409 = vmax.f32 %v6401, 0.0
  %v6410 = vmax.f32 %v6402, 0.0
  %v6411 = vmax.f32 %v6403, 0.0
  %v6412 = vmax.f32 %v6404, 0.0
  %v6413 = vld [vmem:[%s12] sm:$0x1]
  %6414 = vrot.lane.b32.xlu0 %v6405, 17
  %v6415 = vpop.permute.xlu0 %6414
  %6416 = vrot.lane.b32.xlu0 %v6409, 17
  %v6417 = vpop.permute.xlu0 %6416
  %6418 = vrot.lane.b32.xlu0 %v6406, 17
  %v6419 = vpop.permute.xlu0 %6418
  %6420 = vrot.lane.b32.xlu0 %v6410, 17
  %v6421 = vpop.permute.xlu0 %6420
  %6422 = vrot.lane.b32.xlu0 %v6407, 17
  %v6423 = vpop.permute.xlu0 %6422
  %6424 = vrot.lane.b32.xlu0 %v6411, 17
  %v6425 = vpop.permute.xlu0 %6424
  %6426 = vrot.lane.b32.xlu0 %v6408, 17
  %v6427 = vpop.permute.xlu0 %6426
  %6428 = vrot.lane.b32.xlu0 %v6412, 17
  %v6429 = vpop.permute.xlu0 %6428
  %v6430 = vsel %vm88, %v6423, %v6427
  %v6431 = vsel %vm88, %v6425, %v6429
  %v6432 = vsel %vm88, %v6419, %v6423
  %v6433 = vsel %vm88, %v6421, %v6425
  %v6434 = vsel %vm88, %v6415, %v6419
  %v6435 = vsel %vm88, %v6417, %v6421
  %v6436 = vsel %vm88, %v6427, %v6415
  %v6437 = vsel %vm88, %v6429, %v6417
  %v6438 = vmul.f32 %v6436, %v4965
  %v6439 = vmul.f32 %v6434, %v4966
  %v6440 = vmul.f32 %v6432, %v4967
  %v6441 = vmul.f32 %v6430, %v4968
  %v6442 = vmul.f32 %v6437, %v4965
  %v6443 = vmul.f32 %v6435, %v4966
  %v6444 = vmul.f32 %v6433, %v4967
  %v6445 = vmul.f32 %v6431, %v4968
  %v6446 = vpack.c.bf16 %v6442, %v6438
  %v6447 = vpack.c.bf16 %v6443, %v6439
  %v6448 = vpack.c.bf16 %v6444, %v6440
  %v6449 = vpack.c.bf16 %v6445, %v6441
  %6450 = vrot.lane.b32.xlu0 %v6405, 16
  %v6451 = vpop.permute.xlu0 %6450
  %6452 = vrot.lane.b32.xlu0 %v6409, 16
  %v6453 = vpop.permute.xlu0 %6452
  %6454 = vrot.lane.b32.xlu0 %v6406, 16
  %v6455 = vpop.permute.xlu0 %6454
  %6456 = vrot.lane.b32.xlu0 %v6410, 16
  %v6457 = vpop.permute.xlu0 %6456
  %6458 = vrot.lane.b32.xlu0 %v6407, 16
  %v6459 = vpop.permute.xlu0 %6458
  %6460 = vrot.lane.b32.xlu0 %v6411, 16
  %v6461 = vpop.permute.xlu0 %6460
  %6462 = vrot.lane.b32.xlu0 %v6408, 16
  %v6463 = vpop.permute.xlu0 %6462
  %6464 = vrot.lane.b32.xlu0 %v6412, 16
  %v6465 = vpop.permute.xlu0 %6464
  %v6466 = vsel %vm145, %v6459, %v6463
  %v6467 = vsel %vm145, %v6461, %v6465
  %v6468 = vsel %vm145, %v6455, %v6459
  %v6469 = vsel %vm145, %v6457, %v6461
  %v6470 = vsel %vm145, %v6451, %v6455
  %v6471 = vsel %vm145, %v6453, %v6457
  %v6472 = vsel %vm145, %v6463, %v6451
  %v6473 = vsel %vm145, %v6465, %v6453
  %v6474 = vmul.f32 %v6472, %v4993
  %v6475 = vmul.f32 %v6470, %v4994
  %v6476 = vmul.f32 %v6468, %v4995
  %v6477 = vmul.f32 %v6466, %v4996
  %v6478 = vmul.f32 %v6473, %v4993
  %v6479 = vmul.f32 %v6471, %v4994
  %v6480 = vmul.f32 %v6469, %v4995
  %v6481 = vmul.f32 %v6467, %v4996
  %v6482 = vpack.c.bf16 %v6478, %v6474
  %v6483 = vpack.c.bf16 %v6479, %v6475
  %v6484 = vpack.c.bf16 %v6480, %v6476
  %v6485 = vpack.c.bf16 %v6481, %v6477
  %6487 = vst [vmem:[#allocation1] ss:$9 sm:$0xff] %v6413
  %v6488 = vld [vmem:[#allocation1] sm:$0xff]
  %6490 = vrot.lane.b32.xlu0 %v6488, 112
  %v6491 = vpop.permute.xlu0 %6490
  %v6493 = vsel %vm1416, %v6491, 0
  %6495 = vmatpush.bf16.msra.mxu0 0
  %6496 = vmatpush.bf16.msra.mxu0 0
  %6497 = vmatpush.bf16.msra.mxu0 0
  %6498 = vmatpush.bf16.msra.mxu0 0
  %6499 = vmatpush.bf16.msra.mxu0 0
  %6500 = vmatpush.bf16.msra.mxu0 0
  %6501 = vmatpush.bf16.msra.mxu0 0
  %6502 = vmatpush.bf16.msra.mxu0 %v6482
  %6503 = vmatmul.bf16.gmra.mxu0 %v6493
  %v6504 = vpop.f32.mrf.mxu0
  %v6505 = vadd.f32 0.0, %v6504
  %v6506 = vpop.f32.mrf.mxu0
  %6507 = vdwg.mxu0
  %6508 = vmatpush.bf16.msra.mxu0 0
  %6509 = vmatpush.bf16.msra.mxu0 0
  %6510 = vmatpush.bf16.msra.mxu0 0
  %6511 = vmatpush.bf16.msra.mxu0 0
  %6512 = vmatpush.bf16.msra.mxu0 0
  %6513 = vmatpush.bf16.msra.mxu0 0
  %6514 = vmatpush.bf16.msra.mxu0 0
  %6515 = vmatpush.bf16.msra.mxu0 %v6483
  %6516 = vmatmul.bf16.gmra.mxu0 %v6493
  %v6517 = vpop.f32.mrf.mxu0
  %v6518 = vadd.f32 0.0, %v6517
  %v6519 = vpop.f32.mrf.mxu0
  %6520 = vdwg.mxu0
  %6521 = vmatpush.bf16.msra.mxu0 0
  %6522 = vmatpush.bf16.msra.mxu0 0
  %6523 = vmatpush.bf16.msra.mxu0 0
  %6524 = vmatpush.bf16.msra.mxu0 0
  %6525 = vmatpush.bf16.msra.mxu0 0
  %6526 = vmatpush.bf16.msra.mxu0 0
  %6527 = vmatpush.bf16.msra.mxu0 0
  %6528 = vmatpush.bf16.msra.mxu0 %v6484
  %6529 = vmatmul.bf16.gmra.mxu0 %v6493
  %v6530 = vpop.f32.mrf.mxu0
  %v6531 = vadd.f32 0.0, %v6530
  %v6532 = vpop.f32.mrf.mxu0
  %6533 = vdwg.mxu0
  %6534 = vmatpush.bf16.msra.mxu0 0
  %6535 = vmatpush.bf16.msra.mxu0 0
  %6536 = vmatpush.bf16.msra.mxu0 0
  %6537 = vmatpush.bf16.msra.mxu0 0
  %6538 = vmatpush.bf16.msra.mxu0 0
  %6539 = vmatpush.bf16.msra.mxu0 0
  %6540 = vmatpush.bf16.msra.mxu0 0
  %6541 = vmatpush.bf16.msra.mxu0 %v6485
  %6542 = vmatmul.bf16.gmra.mxu0 %v6493
  %v6543 = vpop.f32.mrf.mxu0
  %v6544 = vadd.f32 0.0, %v6543
  %v6545 = vpop.f32.mrf.mxu0
  %6546 = vdwg.mxu0
  %v6547 = vsel %vm1416, %v6413, 0
  %6549 = vmatpush.bf16.msra.mxu0 0
  %6550 = vmatpush.bf16.msra.mxu0 0
  %6551 = vmatpush.bf16.msra.mxu0 0
  %6552 = vmatpush.bf16.msra.mxu0 0
  %6553 = vmatpush.bf16.msra.mxu0 0
  %6554 = vmatpush.bf16.msra.mxu0 0
  %6555 = vmatpush.bf16.msra.mxu0 0
  %6556 = vmatpush.bf16.msra.mxu0 %v6446
  %6557 = vmatmul.bf16.gmra.mxu0 %v6547
  %v6558 = vpop.f32.mrf.mxu0
  %v6559 = vadd.f32 %v6505, %v6558
  %v6560 = vpop.f32.mrf.mxu0
  %6561 = vdwg.mxu0
  %6562 = vmatpush.bf16.msra.mxu0 0
  %6563 = vmatpush.bf16.msra.mxu0 0
  %6564 = vmatpush.bf16.msra.mxu0 0
  %6565 = vmatpush.bf16.msra.mxu0 0
  %6566 = vmatpush.bf16.msra.mxu0 0
  %6567 = vmatpush.bf16.msra.mxu0 0
  %6568 = vmatpush.bf16.msra.mxu0 0
  %6569 = vmatpush.bf16.msra.mxu0 %v6447
  %6570 = vmatmul.bf16.gmra.mxu0 %v6547
  %v6571 = vpop.f32.mrf.mxu0
  %v6572 = vadd.f32 %v6518, %v6571
  %v6573 = vpop.f32.mrf.mxu0
  %6574 = vdwg.mxu0
  %6575 = vmatpush.bf16.msra.mxu0 0
  %6576 = vmatpush.bf16.msra.mxu0 0
  %6577 = vmatpush.bf16.msra.mxu0 0
  %6578 = vmatpush.bf16.msra.mxu0 0
  %6579 = vmatpush.bf16.msra.mxu0 0
  %6580 = vmatpush.bf16.msra.mxu0 0
  %6581 = vmatpush.bf16.msra.mxu0 0
  %6582 = vmatpush.bf16.msra.mxu0 %v6448
  %6583 = vmatmul.bf16.gmra.mxu0 %v6547
  %v6584 = vpop.f32.mrf.mxu0
  %v6585 = vadd.f32 %v6531, %v6584
  %v6586 = vpop.f32.mrf.mxu0
  %6587 = vdwg.mxu0
  %6588 = vmatpush.bf16.msra.mxu0 0
  %6589 = vmatpush.bf16.msra.mxu0 0
  %6590 = vmatpush.bf16.msra.mxu0 0
  %6591 = vmatpush.bf16.msra.mxu0 0
  %6592 = vmatpush.bf16.msra.mxu0 0
  %6593 = vmatpush.bf16.msra.mxu0 0
  %6594 = vmatpush.bf16.msra.mxu0 0
  %6595 = vmatpush.bf16.msra.mxu0 %v6449
  %6596 = vmatmul.bf16.gmra.mxu0 %v6547
  %v6597 = vpop.f32.mrf.mxu0
  %v6598 = vadd.f32 %v6544, %v6597
  %v6599 = vpop.f32.mrf.mxu0
  %6600 = vdwg.mxu0
  %v6601 = vld [vmem:[%s12] sm:$0x1]
  %6602 = vrot.lane.b32.xlu0 %v6405, 15
  %v6603 = vpop.permute.xlu0 %6602
  %6604 = vrot.lane.b32.xlu0 %v6409, 15
  %v6605 = vpop.permute.xlu0 %6604
  %6606 = vrot.lane.b32.xlu0 %v6406, 15
  %v6607 = vpop.permute.xlu0 %6606
  %6608 = vrot.lane.b32.xlu0 %v6410, 15
  %v6609 = vpop.permute.xlu0 %6608
  %6610 = vrot.lane.b32.xlu0 %v6407, 15
  %v6611 = vpop.permute.xlu0 %6610
  %6612 = vrot.lane.b32.xlu0 %v6411, 15
  %v6613 = vpop.permute.xlu0 %6612
  %6614 = vrot.lane.b32.xlu0 %v6408, 15
  %v6615 = vpop.permute.xlu0 %6614
  %6616 = vrot.lane.b32.xlu0 %v6412, 15
  %v6617 = vpop.permute.xlu0 %6616
  %v6618 = vsel %vm203, %v6611, %v6615
  %v6619 = vsel %vm203, %v6613, %v6617
  %v6620 = vsel %vm203, %v6607, %v6611
  %v6621 = vsel %vm203, %v6609, %v6613
  %v6622 = vsel %vm203, %v6603, %v6607
  %v6623 = vsel %vm203, %v6605, %v6609
  %v6624 = vsel %vm203, %v6615, %v6603
  %v6625 = vsel %vm203, %v6617, %v6605
  %v6626 = vmul.f32 %v6624, %v5021
  %v6627 = vmul.f32 %v6622, %v5022
  %v6628 = vmul.f32 %v6620, %v5023
  %v6629 = vmul.f32 %v6618, %v5024
  %v6630 = vmul.f32 %v6625, %v5021
  %v6631 = vmul.f32 %v6623, %v5022
  %v6632 = vmul.f32 %v6621, %v5023
  %v6633 = vmul.f32 %v6619, %v5024
  %v6634 = vpack.c.bf16 %v6630, %v6626
  %v6635 = vpack.c.bf16 %v6631, %v6627
  %v6636 = vpack.c.bf16 %v6632, %v6628
  %v6637 = vpack.c.bf16 %v6633, %v6629
  %6639 = vst [vmem:[#allocation1] ss:$9 sm:$0xff] %v6601
  %v6640 = vld [vmem:[#allocation1] sm:$0xff]
  %6642 = vrot.lane.b32.xlu0 %v6640, 96
  %v6643 = vpop.permute.xlu0 %6642
  %v6645 = vsel %vm1416, %v6643, 0
  %6647 = vmatpush.bf16.msra.mxu0 0
  %6648 = vmatpush.bf16.msra.mxu0 0
  %6649 = vmatpush.bf16.msra.mxu0 0
  %6650 = vmatpush.bf16.msra.mxu0 0
  %6651 = vmatpush.bf16.msra.mxu0 0
  %6652 = vmatpush.bf16.msra.mxu0 0
  %6653 = vmatpush.bf16.msra.mxu0 0
  %6654 = vmatpush.bf16.msra.mxu0 %v6634
  %6655 = vmatmul.bf16.gmra.mxu0 %v6645
  %v6656 = vpop.f32.mrf.mxu0
  %v6657 = vadd.f32 0.0, %v6656
  %v6658 = vpop.f32.mrf.mxu0
  %6659 = vdwg.mxu0
  %6660 = vmatpush.bf16.msra.mxu0 0
  %6661 = vmatpush.bf16.msra.mxu0 0
  %6662 = vmatpush.bf16.msra.mxu0 0
  %6663 = vmatpush.bf16.msra.mxu0 0
  %6664 = vmatpush.bf16.msra.mxu0 0
  %6665 = vmatpush.bf16.msra.mxu0 0
  %6666 = vmatpush.bf16.msra.mxu0 0
  %6667 = vmatpush.bf16.msra.mxu0 %v6635
  %6668 = vmatmul.bf16.gmra.mxu0 %v6645
  %v6669 = vpop.f32.mrf.mxu0
  %v6670 = vadd.f32 0.0, %v6669
  %v6671 = vpop.f32.mrf.mxu0
  %6672 = vdwg.mxu0
  %6673 = vmatpush.bf16.msra.mxu0 0
  %6674 = vmatpush.bf16.msra.mxu0 0
  %6675 = vmatpush.bf16.msra.mxu0 0
  %6676 = vmatpush.bf16.msra.mxu0 0
  %6677 = vmatpush.bf16.msra.mxu0 0
  %6678 = vmatpush.bf16.msra.mxu0 0
  %6679 = vmatpush.bf16.msra.mxu0 0
  %6680 = vmatpush.bf16.msra.mxu0 %v6636
  %6681 = vmatmul.bf16.gmra.mxu0 %v6645
  %v6682 = vpop.f32.mrf.mxu0
  %v6683 = vadd.f32 0.0, %v6682
  %v6684 = vpop.f32.mrf.mxu0
  %6685 = vdwg.mxu0
  %6686 = vmatpush.bf16.msra.mxu0 0
  %6687 = vmatpush.bf16.msra.mxu0 0
  %6688 = vmatpush.bf16.msra.mxu0 0
  %6689 = vmatpush.bf16.msra.mxu0 0
  %6690 = vmatpush.bf16.msra.mxu0 0
  %6691 = vmatpush.bf16.msra.mxu0 0
  %6692 = vmatpush.bf16.msra.mxu0 0
  %6693 = vmatpush.bf16.msra.mxu0 %v6637
  %6694 = vmatmul.bf16.gmra.mxu0 %v6645
  %v6695 = vpop.f32.mrf.mxu0
  %v6696 = vadd.f32 0.0, %v6695
  %v6697 = vpop.f32.mrf.mxu0
  %6698 = vdwg.mxu0
  %v6699 = vadd.f32 %v6559, %v6657
  %v6700 = vadd.f32 %v6572, %v6670
  %v6701 = vadd.f32 %v6585, %v6683
  %v6702 = vadd.f32 %v6598, %v6696
  %v6703 = vld [vmem:[%s12] sm:$0x1]
  %6704 = vrot.lane.b32.xlu0 %v6405, 1
  %v6705 = vpop.permute.xlu0 %6704
  %6706 = vrot.lane.b32.xlu0 %v6409, 1
  %v6707 = vpop.permute.xlu0 %6706
  %6708 = vrot.lane.b32.xlu0 %v6406, 1
  %v6709 = vpop.permute.xlu0 %6708
  %6710 = vrot.lane.b32.xlu0 %v6410, 1
  %v6711 = vpop.permute.xlu0 %6710
  %6712 = vrot.lane.b32.xlu0 %v6407, 1
  %v6713 = vpop.permute.xlu0 %6712
  %6714 = vrot.lane.b32.xlu0 %v6411, 1
  %v6715 = vpop.permute.xlu0 %6714
  %6716 = vrot.lane.b32.xlu0 %v6408, 1
  %v6717 = vpop.permute.xlu0 %6716
  %6718 = vrot.lane.b32.xlu0 %v6412, 1
  %v6719 = vpop.permute.xlu0 %6718
  %v6720 = vsel %vm261, %v6713, %v6717
  %v6721 = vsel %vm261, %v6715, %v6719
  %v6722 = vsel %vm261, %v6709, %v6713
  %v6723 = vsel %vm261, %v6711, %v6715
  %v6724 = vsel %vm261, %v6705, %v6709
  %v6725 = vsel %vm261, %v6707, %v6711
  %v6726 = vsel %vm261, %v6717, %v6705
  %v6727 = vsel %vm261, %v6719, %v6707
  %v6728 = vmul.f32 %v6726, %v5049
  %v6729 = vmul.f32 %v6724, %v5050
  %v6730 = vmul.f32 %v6722, %v5051
  %v6731 = vmul.f32 %v6720, %v5052
  %v6732 = vmul.f32 %v6727, %v5049
  %v6733 = vmul.f32 %v6725, %v5050
  %v6734 = vmul.f32 %v6723, %v5051
  %v6735 = vmul.f32 %v6721, %v5052
  %v6736 = vpack.c.bf16 %v6732, %v6728
  %v6737 = vpack.c.bf16 %v6733, %v6729
  %v6738 = vpack.c.bf16 %v6734, %v6730
  %v6739 = vpack.c.bf16 %v6735, %v6731
  %6741 = vst [vmem:[#allocation1] ss:$9 sm:$0xff] %v6703
  %v6742 = vld [vmem:[#allocation1] sm:$0xff]
  %6744 = vrot.lane.b32.xlu0 %v6742, 80
  %v6745 = vpop.permute.xlu0 %6744
  %v6747 = vsel %vm1416, %v6745, 0
  %6749 = vmatpush.bf16.msra.mxu0 0
  %6750 = vmatpush.bf16.msra.mxu0 0
  %6751 = vmatpush.bf16.msra.mxu0 0
  %6752 = vmatpush.bf16.msra.mxu0 0
  %6753 = vmatpush.bf16.msra.mxu0 0
  %6754 = vmatpush.bf16.msra.mxu0 0
  %6755 = vmatpush.bf16.msra.mxu0 0
  %6756 = vmatpush.bf16.msra.mxu0 %v6736
  %6757 = vmatmul.bf16.gmra.mxu0 %v6747
  %v6758 = vpop.f32.mrf.mxu0
  %v6759 = vadd.f32 0.0, %v6758
  %v6760 = vpop.f32.mrf.mxu0
  %6761 = vdwg.mxu0
  %6762 = vmatpush.bf16.msra.mxu0 0
  %6763 = vmatpush.bf16.msra.mxu0 0
  %6764 = vmatpush.bf16.msra.mxu0 0
  %6765 = vmatpush.bf16.msra.mxu0 0
  %6766 = vmatpush.bf16.msra.mxu0 0
  %6767 = vmatpush.bf16.msra.mxu0 0
  %6768 = vmatpush.bf16.msra.mxu0 0
  %6769 = vmatpush.bf16.msra.mxu0 %v6737
  %6770 = vmatmul.bf16.gmra.mxu0 %v6747
  %v6771 = vpop.f32.mrf.mxu0
  %v6772 = vadd.f32 0.0, %v6771
  %v6773 = vpop.f32.mrf.mxu0
  %6774 = vdwg.mxu0
  %6775 = vmatpush.bf16.msra.mxu0 0
  %6776 = vmatpush.bf16.msra.mxu0 0
  %6777 = vmatpush.bf16.msra.mxu0 0
  %6778 = vmatpush.bf16.msra.mxu0 0
  %6779 = vmatpush.bf16.msra.mxu0 0
  %6780 = vmatpush.bf16.msra.mxu0 0
  %6781 = vmatpush.bf16.msra.mxu0 0
  %6782 = vmatpush.bf16.msra.mxu0 %v6738
  %6783 = vmatmul.bf16.gmra.mxu0 %v6747
  %v6784 = vpop.f32.mrf.mxu0
  %v6785 = vadd.f32 0.0, %v6784
  %v6786 = vpop.f32.mrf.mxu0
  %6787 = vdwg.mxu0
  %6788 = vmatpush.bf16.msra.mxu0 0
  %6789 = vmatpush.bf16.msra.mxu0 0
  %6790 = vmatpush.bf16.msra.mxu0 0
  %6791 = vmatpush.bf16.msra.mxu0 0
  %6792 = vmatpush.bf16.msra.mxu0 0
  %6793 = vmatpush.bf16.msra.mxu0 0
  %6794 = vmatpush.bf16.msra.mxu0 0
  %6795 = vmatpush.bf16.msra.mxu0 %v6739
  %6796 = vmatmul.bf16.gmra.mxu0 %v6747
  %v6797 = vpop.f32.mrf.mxu0
  %v6798 = vadd.f32 0.0, %v6797
  %v6799 = vpop.f32.mrf.mxu0
  %6800 = vdwg.mxu0
  %v6801 = vadd.f32 %v6699, %v6759
  %v6802 = vadd.f32 %v6700, %v6772
  %v6803 = vadd.f32 %v6701, %v6785
  %v6804 = vadd.f32 %v6702, %v6798
  %v6805 = vld [vmem:[%s12] sm:$0x1]
  %v6806 = vmul.f32 %v6405, %v5065
  %v6807 = vmul.f32 %v6406, %v5066
  %v6808 = vmul.f32 %v6407, %v5067
  %v6809 = vmul.f32 %v6408, %v5068
  %v6810 = vmul.f32 %v6409, %v5065
  %v6811 = vmul.f32 %v6410, %v5066
  %v6812 = vmul.f32 %v6411, %v5067
  %v6813 = vmul.f32 %v6412, %v5068
  %v6814 = vpack.c.bf16 %v6810, %v6806
  %v6815 = vpack.c.bf16 %v6811, %v6807
  %v6816 = vpack.c.bf16 %v6812, %v6808
  %v6817 = vpack.c.bf16 %v6813, %v6809
  %6819 = vst [vmem:[#allocation1] ss:$9 sm:$0xff] %v6805
  %v6820 = vld [vmem:[#allocation1] sm:$0xff]
  %6822 = vrot.lane.b32.xlu0 %v6820, 64
  %v6823 = vpop.permute.xlu0 %6822
  %v6825 = vsel %vm1416, %v6823, 0
  %6827 = vmatpush.bf16.msra.mxu0 0
  %6828 = vmatpush.bf16.msra.mxu0 0
  %6829 = vmatpush.bf16.msra.mxu0 0
  %6830 = vmatpush.bf16.msra.mxu0 0
  %6831 = vmatpush.bf16.msra.mxu0 0
  %6832 = vmatpush.bf16.msra.mxu0 0
  %6833 = vmatpush.bf16.msra.mxu0 0
  %6834 = vmatpush.bf16.msra.mxu0 %v6814
  %6835 = vmatmul.bf16.gmra.mxu0 %v6825
  %v6836 = vpop.f32.mrf.mxu0
  %v6837 = vadd.f32 0.0, %v6836
  %v6838 = vpop.f32.mrf.mxu0
  %6839 = vdwg.mxu0
  %6840 = vmatpush.bf16.msra.mxu0 0
  %6841 = vmatpush.bf16.msra.mxu0 0
  %6842 = vmatpush.bf16.msra.mxu0 0
  %6843 = vmatpush.bf16.msra.mxu0 0
  %6844 = vmatpush.bf16.msra.mxu0 0
  %6845 = vmatpush.bf16.msra.mxu0 0
  %6846 = vmatpush.bf16.msra.mxu0 0
  %6847 = vmatpush.bf16.msra.mxu0 %v6815
  %6848 = vmatmul.bf16.gmra.mxu0 %v6825
  %v6849 = vpop.f32.mrf.mxu0
  %v6850 = vadd.f32 0.0, %v6849
  %v6851 = vpop.f32.mrf.mxu0
  %6852 = vdwg.mxu0
  %6853 = vmatpush.bf16.msra.mxu0 0
  %6854 = vmatpush.bf16.msra.mxu0 0
  %6855 = vmatpush.bf16.msra.mxu0 0
  %6856 = vmatpush.bf16.msra.mxu0 0
  %6857 = vmatpush.bf16.msra.mxu0 0
  %6858 = vmatpush.bf16.msra.mxu0 0
  %6859 = vmatpush.bf16.msra.mxu0 0
  %6860 = vmatpush.bf16.msra.mxu0 %v6816
  %6861 = vmatmul.bf16.gmra.mxu0 %v6825
  %v6862 = vpop.f32.mrf.mxu0
  %v6863 = vadd.f32 0.0, %v6862
  %v6864 = vpop.f32.mrf.mxu0
  %6865 = vdwg.mxu0
  %6866 = vmatpush.bf16.msra.mxu0 0
  %6867 = vmatpush.bf16.msra.mxu0 0
  %6868 = vmatpush.bf16.msra.mxu0 0
  %6869 = vmatpush.bf16.msra.mxu0 0
  %6870 = vmatpush.bf16.msra.mxu0 0
  %6871 = vmatpush.bf16.msra.mxu0 0
  %6872 = vmatpush.bf16.msra.mxu0 0
  %6873 = vmatpush.bf16.msra.mxu0 %v6817
  %6874 = vmatmul.bf16.gmra.mxu0 %v6825
  %v6875 = vpop.f32.mrf.mxu0
  %v6876 = vadd.f32 0.0, %v6875
  %v6877 = vpop.f32.mrf.mxu0
  %6878 = vdwg.mxu0
  %v6879 = vadd.f32 %v6801, %v6837
  %v6880 = vadd.f32 %v6802, %v6850
  %v6881 = vadd.f32 %v6803, %v6863
  %v6882 = vadd.f32 %v6804, %v6876
  %v6883 = vld [vmem:[%s12] sm:$0x1]
  %6884 = vrot.lane.b32.xlu0 %v6405, 127
  %v6885 = vpop.permute.xlu0 %6884
  %6886 = vrot.lane.b32.xlu0 %v6409, 127
  %v6887 = vpop.permute.xlu0 %6886
  %6888 = vrot.lane.b32.xlu0 %v6406, 127
  %v6889 = vpop.permute.xlu0 %6888
  %6890 = vrot.lane.b32.xlu0 %v6410, 127
  %v6891 = vpop.permute.xlu0 %6890
  %6892 = vrot.lane.b32.xlu0 %v6407, 127
  %v6893 = vpop.permute.xlu0 %6892
  %6894 = vrot.lane.b32.xlu0 %v6411, 127
  %v6895 = vpop.permute.xlu0 %6894
  %6896 = vrot.lane.b32.xlu0 %v6408, 127
  %v6897 = vpop.permute.xlu0 %6896
  %6898 = vrot.lane.b32.xlu0 %v6412, 127
  %v6899 = vpop.permute.xlu0 %6898
  %v6900 = vsel %vm345, %v6893, %v6897
  %v6901 = vsel %vm345, %v6895, %v6899
  %v6902 = vsel %vm345, %v6889, %v6893
  %v6903 = vsel %vm345, %v6891, %v6895
  %v6904 = vsel %vm345, %v6885, %v6889
  %v6905 = vsel %vm345, %v6887, %v6891
  %v6906 = vsel %vm345, %v6897, %v6885
  %v6907 = vsel %vm345, %v6899, %v6887
  %v6908 = vmul.f32 %v6904, %v5093
  %v6909 = vmul.f32 %v6902, %v5094
  %v6910 = vmul.f32 %v6900, %v5095
  %v6911 = vmul.f32 %v6906, %v5096
  %v6912 = vmul.f32 %v6905, %v5093
  %v6913 = vmul.f32 %v6903, %v5094
  %v6914 = vmul.f32 %v6901, %v5095
  %v6915 = vmul.f32 %v6907, %v5096
  %v6916 = vpack.c.bf16 %v6912, %v6908
  %v6917 = vpack.c.bf16 %v6913, %v6909
  %v6918 = vpack.c.bf16 %v6914, %v6910
  %v6919 = vpack.c.bf16 %v6915, %v6911
  %6921 = vst [vmem:[#allocation1] ss:$9 sm:$0xff] %v6883
  %v6922 = vld [vmem:[#allocation1] sm:$0xff]
  %6924 = vrot.lane.b32.xlu0 %v6922, 48
  %v6925 = vpop.permute.xlu0 %6924
  %v6927 = vsel %vm1416, %v6925, 0
  %6929 = vmatpush.bf16.msra.mxu0 0
  %6930 = vmatpush.bf16.msra.mxu0 0
  %6931 = vmatpush.bf16.msra.mxu0 0
  %6932 = vmatpush.bf16.msra.mxu0 0
  %6933 = vmatpush.bf16.msra.mxu0 0
  %6934 = vmatpush.bf16.msra.mxu0 0
  %6935 = vmatpush.bf16.msra.mxu0 0
  %6936 = vmatpush.bf16.msra.mxu0 %v6916
  %6937 = vmatmul.bf16.gmra.mxu0 %v6927
  %v6938 = vpop.f32.mrf.mxu0
  %v6939 = vadd.f32 0.0, %v6938
  %v6940 = vpop.f32.mrf.mxu0
  %6941 = vdwg.mxu0
  %6942 = vmatpush.bf16.msra.mxu0 0
  %6943 = vmatpush.bf16.msra.mxu0 0
  %6944 = vmatpush.bf16.msra.mxu0 0
  %6945 = vmatpush.bf16.msra.mxu0 0
  %6946 = vmatpush.bf16.msra.mxu0 0
  %6947 = vmatpush.bf16.msra.mxu0 0
  %6948 = vmatpush.bf16.msra.mxu0 0
  %6949 = vmatpush.bf16.msra.mxu0 %v6917
  %6950 = vmatmul.bf16.gmra.mxu0 %v6927
  %v6951 = vpop.f32.mrf.mxu0
  %v6952 = vadd.f32 0.0, %v6951
  %v6953 = vpop.f32.mrf.mxu0
  %6954 = vdwg.mxu0
  %6955 = vmatpush.bf16.msra.mxu0 0
  %6956 = vmatpush.bf16.msra.mxu0 0
  %6957 = vmatpush.bf16.msra.mxu0 0
  %6958 = vmatpush.bf16.msra.mxu0 0
  %6959 = vmatpush.bf16.msra.mxu0 0
  %6960 = vmatpush.bf16.msra.mxu0 0
  %6961 = vmatpush.bf16.msra.mxu0 0
  %6962 = vmatpush.bf16.msra.mxu0 %v6918
  %6963 = vmatmul.bf16.gmra.mxu0 %v6927
  %v6964 = vpop.f32.mrf.mxu0
  %v6965 = vadd.f32 0.0, %v6964
  %v6966 = vpop.f32.mrf.mxu0
  %6967 = vdwg.mxu0
  %6968 = vmatpush.bf16.msra.mxu0 0
  %6969 = vmatpush.bf16.msra.mxu0 0
  %6970 = vmatpush.bf16.msra.mxu0 0
  %6971 = vmatpush.bf16.msra.mxu0 0
  %6972 = vmatpush.bf16.msra.mxu0 0
  %6973 = vmatpush.bf16.msra.mxu0 0
  %6974 = vmatpush.bf16.msra.mxu0 0
  %6975 = vmatpush.bf16.msra.mxu0 %v6919
  %6976 = vmatmul.bf16.gmra.mxu0 %v6927
  %v6977 = vpop.f32.mrf.mxu0
  %v6978 = vadd.f32 0.0, %v6977
  %v6979 = vpop.f32.mrf.mxu0
  %6980 = vdwg.mxu0
  %v6981 = vadd.f32 %v6879, %v6939
  %v6982 = vadd.f32 %v6880, %v6952
  %v6983 = vadd.f32 %v6881, %v6965
  %v6984 = vadd.f32 %v6882, %v6978
  %v6985 = vld [vmem:[%s12] sm:$0x1]
  %6986 = vrot.lane.b32.xlu0 %v6405, 113
  %v6987 = vpop.permute.xlu0 %6986
  %6988 = vrot.lane.b32.xlu0 %v6409, 113
  %v6989 = vpop.permute.xlu0 %6988
  %6990 = vrot.lane.b32.xlu0 %v6406, 113
  %v6991 = vpop.permute.xlu0 %6990
  %6992 = vrot.lane.b32.xlu0 %v6410, 113
  %v6993 = vpop.permute.xlu0 %6992
  %6994 = vrot.lane.b32.xlu0 %v6407, 113
  %v6995 = vpop.permute.xlu0 %6994
  %6996 = vrot.lane.b32.xlu0 %v6411, 113
  %v6997 = vpop.permute.xlu0 %6996
  %6998 = vrot.lane.b32.xlu0 %v6408, 113
  %v6999 = vpop.permute.xlu0 %6998
  %7000 = vrot.lane.b32.xlu0 %v6412, 113
  %v7001 = vpop.permute.xlu0 %7000
  %v7002 = vsel %vm403, %v6995, %v6999
  %v7003 = vsel %vm403, %v6997, %v7001
  %v7004 = vsel %vm403, %v6991, %v6995
  %v7005 = vsel %vm403, %v6993, %v6997
  %v7006 = vsel %vm403, %v6987, %v6991
  %v7007 = vsel %vm403, %v6989, %v6993
  %v7008 = vsel %vm403, %v6999, %v6987
  %v7009 = vsel %vm403, %v7001, %v6989
  %v7010 = vmul.f32 %v7006, %v5121
  %v7011 = vmul.f32 %v7004, %v5122
  %v7012 = vmul.f32 %v7002, %v5123
  %v7013 = vmul.f32 %v7008, %v5124
  %v7014 = vmul.f32 %v7007, %v5121
  %v7015 = vmul.f32 %v7005, %v5122
  %v7016 = vmul.f32 %v7003, %v5123
  %v7017 = vmul.f32 %v7009, %v5124
  %v7018 = vpack.c.bf16 %v7014, %v7010
  %v7019 = vpack.c.bf16 %v7015, %v7011
  %v7020 = vpack.c.bf16 %v7016, %v7012
  %v7021 = vpack.c.bf16 %v7017, %v7013
  %7023 = vst [vmem:[#allocation1] ss:$9 sm:$0xff] %v6985
  %v7024 = vld [vmem:[#allocation1] sm:$0xff]
  %7026 = vrot.lane.b32.xlu0 %v7024, 32
  %v7027 = vpop.permute.xlu0 %7026
  %v7029 = vsel %vm1416, %v7027, 0
  %7031 = vmatpush.bf16.msra.mxu0 0
  %7032 = vmatpush.bf16.msra.mxu0 0
  %7033 = vmatpush.bf16.msra.mxu0 0
  %7034 = vmatpush.bf16.msra.mxu0 0
  %7035 = vmatpush.bf16.msra.mxu0 0
  %7036 = vmatpush.bf16.msra.mxu0 0
  %7037 = vmatpush.bf16.msra.mxu0 0
  %7038 = vmatpush.bf16.msra.mxu0 %v7018
  %7039 = vmatmul.bf16.gmra.mxu0 %v7029
  %v7040 = vpop.f32.mrf.mxu0
  %v7041 = vadd.f32 0.0, %v7040
  %v7042 = vpop.f32.mrf.mxu0
  %7043 = vdwg.mxu0
  %7044 = vmatpush.bf16.msra.mxu0 0
  %7045 = vmatpush.bf16.msra.mxu0 0
  %7046 = vmatpush.bf16.msra.mxu0 0
  %7047 = vmatpush.bf16.msra.mxu0 0
  %7048 = vmatpush.bf16.msra.mxu0 0
  %7049 = vmatpush.bf16.msra.mxu0 0
  %7050 = vmatpush.bf16.msra.mxu0 0
  %7051 = vmatpush.bf16.msra.mxu0 %v7019
  %7052 = vmatmul.bf16.gmra.mxu0 %v7029
  %v7053 = vpop.f32.mrf.mxu0
  %v7054 = vadd.f32 0.0, %v7053
  %v7055 = vpop.f32.mrf.mxu0
  %7056 = vdwg.mxu0
  %7057 = vmatpush.bf16.msra.mxu0 0
  %7058 = vmatpush.bf16.msra.mxu0 0
  %7059 = vmatpush.bf16.msra.mxu0 0
  %7060 = vmatpush.bf16.msra.mxu0 0
  %7061 = vmatpush.bf16.msra.mxu0 0
  %7062 = vmatpush.bf16.msra.mxu0 0
  %7063 = vmatpush.bf16.msra.mxu0 0
  %7064 = vmatpush.bf16.msra.mxu0 %v7020
  %7065 = vmatmul.bf16.gmra.mxu0 %v7029
  %v7066 = vpop.f32.mrf.mxu0
  %v7067 = vadd.f32 0.0, %v7066
  %v7068 = vpop.f32.mrf.mxu0
  %7069 = vdwg.mxu0
  %7070 = vmatpush.bf16.msra.mxu0 0
  %7071 = vmatpush.bf16.msra.mxu0 0
  %7072 = vmatpush.bf16.msra.mxu0 0
  %7073 = vmatpush.bf16.msra.mxu0 0
  %7074 = vmatpush.bf16.msra.mxu0 0
  %7075 = vmatpush.bf16.msra.mxu0 0
  %7076 = vmatpush.bf16.msra.mxu0 0
  %7077 = vmatpush.bf16.msra.mxu0 %v7021
  %7078 = vmatmul.bf16.gmra.mxu0 %v7029
  %v7079 = vpop.f32.mrf.mxu0
  %v7080 = vadd.f32 0.0, %v7079
  %v7081 = vpop.f32.mrf.mxu0
  %7082 = vdwg.mxu0
  %v7083 = vadd.f32 %v6981, %v7041
  %v7084 = vadd.f32 %v6982, %v7054
  %v7085 = vadd.f32 %v6983, %v7067
  %v7086 = vadd.f32 %v6984, %v7080
  %v7087 = vld [vmem:[%s12] sm:$0x1]
  %7088 = vrot.lane.b32.xlu0 %v6405, 112
  %v7089 = vpop.permute.xlu0 %7088
  %7090 = vrot.lane.b32.xlu0 %v6409, 112
  %v7091 = vpop.permute.xlu0 %7090
  %7092 = vrot.lane.b32.xlu0 %v6406, 112
  %v7093 = vpop.permute.xlu0 %7092
  %7094 = vrot.lane.b32.xlu0 %v6410, 112
  %v7095 = vpop.permute.xlu0 %7094
  %7096 = vrot.lane.b32.xlu0 %v6407, 112
  %v7097 = vpop.permute.xlu0 %7096
  %7098 = vrot.lane.b32.xlu0 %v6411, 112
  %v7099 = vpop.permute.xlu0 %7098
  %7100 = vrot.lane.b32.xlu0 %v6408, 112
  %v7101 = vpop.permute.xlu0 %7100
  %7102 = vrot.lane.b32.xlu0 %v6412, 112
  %v7103 = vpop.permute.xlu0 %7102
  %v7104 = vsel %vm461, %v7097, %v7101
  %v7105 = vsel %vm461, %v7099, %v7103
  %v7106 = vsel %vm461, %v7093, %v7097
  %v7107 = vsel %vm461, %v7095, %v7099
  %v7108 = vsel %vm461, %v7089, %v7093
  %v7109 = vsel %vm461, %v7091, %v7095
  %v7110 = vsel %vm461, %v7101, %v7089
  %v7111 = vsel %vm461, %v7103, %v7091
  %v7112 = vmul.f32 %v7108, %v5149
  %v7113 = vmul.f32 %v7106, %v5150
  %v7114 = vmul.f32 %v7104, %v5151
  %v7115 = vmul.f32 %v7110, %v5152
  %v7116 = vmul.f32 %v7109, %v5149
  %v7117 = vmul.f32 %v7107, %v5150
  %v7118 = vmul.f32 %v7105, %v5151
  %v7119 = vmul.f32 %v7111, %v5152
  %v7120 = vpack.c.bf16 %v7116, %v7112
  %v7121 = vpack.c.bf16 %v7117, %v7113
  %v7122 = vpack.c.bf16 %v7118, %v7114
  %v7123 = vpack.c.bf16 %v7119, %v7115
  %7125 = vst [vmem:[#allocation1] ss:$9 sm:$0xff] %v7087
  %v7126 = vld [vmem:[#allocation1] sm:$0xff]
  %7128 = vrot.lane.b32.xlu0 %v7126, 16
  %v7129 = vpop.permute.xlu0 %7128
  %v7131 = vsel %vm1416, %v7129, 0
  %7133 = vmatpush.bf16.msra.mxu0 0
  %7134 = vmatpush.bf16.msra.mxu0 0
  %7135 = vmatpush.bf16.msra.mxu0 0
  %7136 = vmatpush.bf16.msra.mxu0 0
  %7137 = vmatpush.bf16.msra.mxu0 0
  %7138 = vmatpush.bf16.msra.mxu0 0
  %7139 = vmatpush.bf16.msra.mxu0 0
  %7140 = vmatpush.bf16.msra.mxu0 %v7120
  %7141 = vmatmul.bf16.gmra.mxu0 %v7131
  %v7142 = vpop.f32.mrf.mxu0
  %v7143 = vadd.f32 0.0, %v7142
  %v7144 = vpop.f32.mrf.mxu0
  %7145 = vdwg.mxu0
  %7146 = vmatpush.bf16.msra.mxu0 0
  %7147 = vmatpush.bf16.msra.mxu0 0
  %7148 = vmatpush.bf16.msra.mxu0 0
  %7149 = vmatpush.bf16.msra.mxu0 0
  %7150 = vmatpush.bf16.msra.mxu0 0
  %7151 = vmatpush.bf16.msra.mxu0 0
  %7152 = vmatpush.bf16.msra.mxu0 0
  %7153 = vmatpush.bf16.msra.mxu0 %v7121
  %7154 = vmatmul.bf16.gmra.mxu0 %v7131
  %v7155 = vpop.f32.mrf.mxu0
  %v7156 = vadd.f32 0.0, %v7155
  %v7157 = vpop.f32.mrf.mxu0
  %7158 = vdwg.mxu0
  %7159 = vmatpush.bf16.msra.mxu0 0
  %7160 = vmatpush.bf16.msra.mxu0 0
  %7161 = vmatpush.bf16.msra.mxu0 0
  %7162 = vmatpush.bf16.msra.mxu0 0
  %7163 = vmatpush.bf16.msra.mxu0 0
  %7164 = vmatpush.bf16.msra.mxu0 0
  %7165 = vmatpush.bf16.msra.mxu0 0
  %7166 = vmatpush.bf16.msra.mxu0 %v7122
  %7167 = vmatmul.bf16.gmra.mxu0 %v7131
  %v7168 = vpop.f32.mrf.mxu0
  %v7169 = vadd.f32 0.0, %v7168
  %v7170 = vpop.f32.mrf.mxu0
  %7171 = vdwg.mxu0
  %7172 = vmatpush.bf16.msra.mxu0 0
  %7173 = vmatpush.bf16.msra.mxu0 0
  %7174 = vmatpush.bf16.msra.mxu0 0
  %7175 = vmatpush.bf16.msra.mxu0 0
  %7176 = vmatpush.bf16.msra.mxu0 0
  %7177 = vmatpush.bf16.msra.mxu0 0
  %7178 = vmatpush.bf16.msra.mxu0 0
  %7179 = vmatpush.bf16.msra.mxu0 %v7123
  %7180 = vmatmul.bf16.gmra.mxu0 %v7131
  %v7181 = vpop.f32.mrf.mxu0
  %v7182 = vadd.f32 0.0, %v7181
  %v7183 = vpop.f32.mrf.mxu0
  %7184 = vdwg.mxu0
  %v7185 = vadd.f32 %v7083, %v7143
  %v7186 = vadd.f32 %v7084, %v7156
  %v7187 = vadd.f32 %v7085, %v7169
  %v7188 = vadd.f32 %v7086, %v7182
  %v7189 = vld [vmem:[%s12 + $0x1] sm:$0x1]
  %7190 = vrot.lane.b32.xlu0 %v6405, 111
  %v7191 = vpop.permute.xlu0 %7190
  %7192 = vrot.lane.b32.xlu0 %v6409, 111
  %v7193 = vpop.permute.xlu0 %7192
  %7194 = vrot.lane.b32.xlu0 %v6406, 111
  %v7195 = vpop.permute.xlu0 %7194
  %7196 = vrot.lane.b32.xlu0 %v6410, 111
  %v7197 = vpop.permute.xlu0 %7196
  %7198 = vrot.lane.b32.xlu0 %v6407, 111
  %v7199 = vpop.permute.xlu0 %7198
  %7200 = vrot.lane.b32.xlu0 %v6411, 111
  %v7201 = vpop.permute.xlu0 %7200
  %7202 = vrot.lane.b32.xlu0 %v6408, 111
  %v7203 = vpop.permute.xlu0 %7202
  %7204 = vrot.lane.b32.xlu0 %v6412, 111
  %v7205 = vpop.permute.xlu0 %7204
  %v7206 = vsel %vm519, %v7199, %v7203
  %v7207 = vsel %vm519, %v7201, %v7205
  %v7208 = vsel %vm519, %v7195, %v7199
  %v7209 = vsel %vm519, %v7197, %v7201
  %v7210 = vsel %vm519, %v7191, %v7195
  %v7211 = vsel %vm519, %v7193, %v7197
  %v7212 = vsel %vm519, %v7203, %v7191
  %v7213 = vsel %vm519, %v7205, %v7193
  %v7214 = vmul.f32 %v7210, %v5177
  %v7215 = vmul.f32 %v7208, %v5178
  %v7216 = vmul.f32 %v7206, %v5179
  %v7217 = vmul.f32 %v7212, %v5180
  %v7218 = vmul.f32 %v7211, %v5177
  %v7219 = vmul.f32 %v7209, %v5178
  %v7220 = vmul.f32 %v7207, %v5179
  %v7221 = vmul.f32 %v7213, %v5180
  %v7222 = vpack.c.bf16 %v7218, %v7214
  %v7223 = vpack.c.bf16 %v7219, %v7215
  %v7224 = vpack.c.bf16 %v7220, %v7216
  %v7225 = vpack.c.bf16 %v7221, %v7217
  %v7227 = vsel %vm1416, %v7189, 0
  %7229 = vmatpush.bf16.msra.mxu0 0
  %7230 = vmatpush.bf16.msra.mxu0 0
  %7231 = vmatpush.bf16.msra.mxu0 0
  %7232 = vmatpush.bf16.msra.mxu0 0
  %7233 = vmatpush.bf16.msra.mxu0 0
  %7234 = vmatpush.bf16.msra.mxu0 0
  %7235 = vmatpush.bf16.msra.mxu0 0
  %7236 = vmatpush.bf16.msra.mxu0 %v7222
  %7237 = vmatmul.bf16.gmra.mxu0 %v7227
  %v7238 = vpop.f32.mrf.mxu0
  %v7239 = vadd.f32 0.0, %v7238
  %v7240 = vpop.f32.mrf.mxu0
  %7241 = vdwg.mxu0
  %7242 = vmatpush.bf16.msra.mxu0 0
  %7243 = vmatpush.bf16.msra.mxu0 0
  %7244 = vmatpush.bf16.msra.mxu0 0
  %7245 = vmatpush.bf16.msra.mxu0 0
  %7246 = vmatpush.bf16.msra.mxu0 0
  %7247 = vmatpush.bf16.msra.mxu0 0
  %7248 = vmatpush.bf16.msra.mxu0 0
  %7249 = vmatpush.bf16.msra.mxu0 %v7223
  %7250 = vmatmul.bf16.gmra.mxu0 %v7227
  %v7251 = vpop.f32.mrf.mxu0
  %v7252 = vadd.f32 0.0, %v7251
  %v7253 = vpop.f32.mrf.mxu0
  %7254 = vdwg.mxu0
  %7255 = vmatpush.bf16.msra.mxu0 0
  %7256 = vmatpush.bf16.msra.mxu0 0
  %7257 = vmatpush.bf16.msra.mxu0 0
  %7258 = vmatpush.bf16.msra.mxu0 0
  %7259 = vmatpush.bf16.msra.mxu0 0
  %7260 = vmatpush.bf16.msra.mxu0 0
  %7261 = vmatpush.bf16.msra.mxu0 0
  %7262 = vmatpush.bf16.msra.mxu0 %v7224
  %7263 = vmatmul.bf16.gmra.mxu0 %v7227
  %v7264 = vpop.f32.mrf.mxu0
  %v7265 = vadd.f32 0.0, %v7264
  %v7266 = vpop.f32.mrf.mxu0
  %7267 = vdwg.mxu0
  %7268 = vmatpush.bf16.msra.mxu0 0
  %7269 = vmatpush.bf16.msra.mxu0 0
  %7270 = vmatpush.bf16.msra.mxu0 0
  %7271 = vmatpush.bf16.msra.mxu0 0
  %7272 = vmatpush.bf16.msra.mxu0 0
  %7273 = vmatpush.bf16.msra.mxu0 0
  %7274 = vmatpush.bf16.msra.mxu0 0
  %7275 = vmatpush.bf16.msra.mxu0 %v7225
  %7276 = vmatmul.bf16.gmra.mxu0 %v7227
  %v7277 = vpop.f32.mrf.mxu0
  %v7278 = vadd.f32 0.0, %v7277
  %v7279 = vpop.f32.mrf.mxu0
  %7280 = vdwg.mxu0
  %v7281 = vadd.f32 %v7185, %v7239
  %v7282 = vadd.f32 %v7186, %v7252
  %v7283 = vadd.f32 %v7187, %v7265
  %v7284 = vadd.f32 %v7188, %v7278
  %v7285 = vld [vmem:[#allocation3] sm:$0x1]
  %7287 = vset.pattern.permute.xlu0 0
  %7288 = vperm.xlu0 %7287, %v7285
  %v7289 = vpop.permute.xlu0 %7288
  %v7291 = vperm.slane %v7289, 0
  %v7292 = vadd.f32 %v7281, %v7291
  %v7293 = vadd.f32 %v7282, %v7291
  %v7294 = vadd.f32 %v7283, %v7291
  %v7295 = vadd.f32 %v7284, %v7291
  %v7296 = vxor.u32 %v7292, 2147483648
  %v7297 = vxor.u32 %v7293, 2147483648
  %v7298 = vxor.u32 %v7294, 2147483648
  %v7299 = vxor.u32 %v7295, 2147483648
  %v7300 = vmul.f32 %v7296, 1.442695
  %v7301 = vpow.pop %v7300
  %v7302 = vmul.f32 %v7297, 1.442695
  %v7303 = vpow.pop %v7302
  %v7304 = vmul.f32 %v7298, 1.442695
  %v7305 = vpow.pop %v7304
  %v7306 = vmul.f32 %v7299, 1.442695
  %v7307 = vpow.pop %v7306
  %v7308 = vadd.f32 %v7301, 1.0
  %v7309 = vadd.f32 %v7303, 1.0
  %v7310 = vadd.f32 %v7305, 1.0
  %v7311 = vadd.f32 %v7307, 1.0
  %v7312 = vrcp.pop %v7308
  %v7313 = vmul.f32 %v7308, %v7312
  %v7314 = vsub.f32 1.0, %v7313
  %v7315 = vmul.f32 %v7312, %v7314
  %v7316 = vadd.f32 %v7312, %v7315
  %vm7317 = vweird.f32 %v7308
  %vm7318 = vweird.f32 %v7312
  %vm7319 = vmor %vm7317, %vm7318
  %v7320 = vsel %vm7319, %v7312, %v7316
  %v7321 = vand.u32 2147483647, %v7308
  %vm7322 = vcmp.eq.f32.partialorder %v7321, 8.507059e+37
  %v7323 = vand.u32 %v7308, 2147483648
  %v7324 = vor.u32 1.1754944e-38, %v7323
  %v7325 = vsel %vm7322, %v7324, %v7320
  %v7326 = vmul.f32 1.0, %v7325
  %v7327 = vrcp.pop %v7309
  %v7328 = vmul.f32 %v7309, %v7327
  %v7329 = vsub.f32 1.0, %v7328
  %v7330 = vmul.f32 %v7327, %v7329
  %v7331 = vadd.f32 %v7327, %v7330
  %vm7332 = vweird.f32 %v7309
  %vm7333 = vweird.f32 %v7327
  %vm7334 = vmor %vm7332, %vm7333
  %v7335 = vsel %vm7334, %v7327, %v7331
  %v7336 = vand.u32 2147483647, %v7309
  %vm7337 = vcmp.eq.f32.partialorder %v7336, 8.507059e+37
  %v7338 = vand.u32 %v7309, 2147483648
  %v7339 = vor.u32 1.1754944e-38, %v7338
  %v7340 = vsel %vm7337, %v7339, %v7335
  %v7341 = vmul.f32 1.0, %v7340
  %v7342 = vrcp.pop %v7310
  %v7343 = vmul.f32 %v7310, %v7342
  %v7344 = vsub.f32 1.0, %v7343
  %v7345 = vmul.f32 %v7342, %v7344
  %v7346 = vadd.f32 %v7342, %v7345
  %vm7347 = vweird.f32 %v7310
  %vm7348 = vweird.f32 %v7342
  %vm7349 = vmor %vm7347, %vm7348
  %v7350 = vsel %vm7349, %v7342, %v7346
  %v7351 = vand.u32 2147483647, %v7310
  %vm7352 = vcmp.eq.f32.partialorder %v7351, 8.507059e+37
  %v7353 = vand.u32 %v7310, 2147483648
  %v7354 = vor.u32 1.1754944e-38, %v7353
  %v7355 = vsel %vm7352, %v7354, %v7350
  %v7356 = vmul.f32 1.0, %v7355
  %v7357 = vrcp.pop %v7311
  %v7358 = vmul.f32 %v7311, %v7357
  %v7359 = vsub.f32 1.0, %v7358
  %v7360 = vmul.f32 %v7357, %v7359
  %v7361 = vadd.f32 %v7357, %v7360
  %vm7362 = vweird.f32 %v7311
  %vm7363 = vweird.f32 %v7357
  %vm7364 = vmor %vm7362, %vm7363
  %v7365 = vsel %vm7364, %v7357, %v7361
  %v7366 = vand.u32 2147483647, %v7311
  %vm7367 = vcmp.eq.f32.partialorder %v7366, 8.507059e+37
  %v7368 = vand.u32 %v7311, 2147483648
  %v7369 = vor.u32 1.1754944e-38, %v7368
  %v7370 = vsel %vm7367, %v7369, %v7365
  %v7371 = vmul.f32 1.0, %v7370
  %v7376 = vrot.slane %v7326, 7
  %v7377 = vrot.slane %v7341, 7
  %v7378 = vrot.slane %v7356, 7
  %v7379 = vrot.slane %v7371, 7
  %v7388 = vrot.slane %v4889, 6
  %v7389 = vrot.slane %v4904, 6
  %v7390 = vrot.slane %v4919, 6
  %v7391 = vrot.slane %v4934, 6
  %v7396 = vsel %vm936, %v4829, %v7376
  %v7397 = vsel %vm936, %v4844, %v7377
  %v7398 = vsel %vm936, %v4859, %v7378
  %v7399 = vsel %vm936, %v4874, %v7379
  %v7400 = vsel %vm980, %v7396, %v7388
  %v7401 = vsel %vm980, %v7397, %v7389
  %v7402 = vsel %vm980, %v7398, %v7390
  %v7403 = vsel %vm980, %v7399, %v7391
  %v7408 = vrot.slane %v7401, 4
  %v7409 = vrot.slane %v7403, 4
  %v7410 = vsel %vm1068, %v7400, %v7408
  %v7411 = vsel %vm1068, %v7402, %v7409
  %7414 = vst [vmem:[%s14] sm:$0x77] %v7410
  %7415 = vst [vmem:[%s14 + $0x8] sm:$0x77] %v7411
  // Predicated region
  $region58: #{psi_forward.1} parent=0 // pred_check
    _
  $region59: #{psi_forward.1} parent=0 // pred_check_branch
    %7417 = sbr.rel (0) target = $region61
  $region60: #{psi_forward.1} parent=0 // pred_region
    _
  $region61: #{psi_forward.1} parent=0 // pred_fallthru
    _
  // Predicated region
  $region62: #{psi_forward.1} parent=0 // pred_check
    _
  $region63: #{psi_forward.1} parent=0 // pred_check_branch
    %7419 = sbr.rel (0) target = $region65
  $region64: #{psi_forward.1} parent=0 // pred_region
    _
  $region65: #{psi_forward.1} parent=0 // pred_fallthru
    _

</llo_original>
